<compile_context>
chip_gen: v7x
topology: tpu7x:2x2x1
jax: 0.10.0
libtpu: 0.0.40
codegen_flags: <defaults>
</compile_context>

<pallas_src>
import jax
import jax.numpy as jnp
from jax.experimental import pallas as pl
from jax.experimental.pallas import tpu as pltpu

IN_FEATURES = 32 * 32   # 1024
OUT_FEATURES = 10


def _fc_sigmoid_kernel(x_ref, w_ref, b_ref, o_ref):
    # x_ref: (TB, K)  w_ref: (K, N)  b_ref: (1, N)  o_ref: (TB, N)
    z = jnp.dot(
        x_ref[...], w_ref[...],
        preferred_element_type=jnp.float32,
        precision=jax.lax.Precision.HIGHEST,   # free: MXU has huge slack here
    )
    z = z + b_ref[...]                 # broadcast bias row over batch tile
    o_ref[...] = jax.nn.sigmoid(z)     # EUP exp/recip; numerically safe lowering


def _max_batch_tile():
    """HBM-BW / VMEM-aware tile cap per TPU generation."""
    try:
        kind = jax.devices()[0].device_kind.lower()
    except Exception:
        return 1024
    if "7" in kind:
        # v7x: ~3.2 TB/s HBM drains a 4 MiB tile in ~1.3 us, so go to 8 MiB
        # tiles (2x8 MiB x buffers fit the 32 MiB scoped-VMEM default).
        return 2048
    # v5e (16 MiB scoped default) / v6e: 1024-wide tiles (2x4 MiB) are safe
    # and already sit at ~85% of the measured mem-bound roofline.
    return 1024


def _round_up8(n):
    return -(-n // 8) * 8


def _pick_batch_tile(B, max_tb):
    if B <= 8:
        return B  # block == full array dim: legal even if < 8
    # Ensure >= 2 grid steps so the "parallel" axis can shard across v7x's two
    # TensorCores; harmless on v5e/v6e.  Tile stays a multiple of 8.
    half_up8 = _round_up8(-(-B // 2))
    return min(max_tb, half_up8)


def dnn_single_forward(x, w_t, b):
    """x: (B, 1024) f32/bf16; w_t: (1024, 10) f32/bf16 (pre-transposed); b: (10,)."""
    B, K = x.shape
    assert K == IN_FEATURES
    assert w_t.shape == (IN_FEATURES, OUT_FEATURES)
    assert x.dtype in (jnp.float32, jnp.bfloat16)

    b_row = b.reshape(1, OUT_FEATURES).astype(jnp.float32)  # tiny, one-time
    TB = _pick_batch_tile(B, _max_batch_tile())
    grid = (pl.cdiv(B, TB),)

    cost = pl.CostEstimate(
        flops=2 * B * K * OUT_FEATURES,
        transcendentals=B * OUT_FEATURES,
        bytes_accessed=(x.dtype.itemsize * B * K
                        + w_t.dtype.itemsize * K * OUT_FEATURES
                        + 4 * OUT_FEATURES
                        + 4 * B * OUT_FEATURES),
    )

    def build(single_buffer_residents):
        wb_kwargs = (
            {"pipeline_mode": pl.Buffered(1)} if single_buffer_residents else {}
        )
        return pl.pallas_call(
            _fc_sigmoid_kernel,
            out_shape=jax.ShapeDtypeStruct((B, OUT_FEATURES), jnp.float32),
            grid=grid,
            in_specs=[
                pl.BlockSpec((TB, K), lambda i: (i, 0)),                 # batch tile
                pl.BlockSpec((K, OUT_FEATURES), lambda i: (0, 0),        # resident weight
                             **wb_kwargs),
                pl.BlockSpec((1, OUT_FEATURES), lambda i: (0, 0),        # resident bias
                             **wb_kwargs),
            ],
            out_specs=pl.BlockSpec((TB, OUT_FEATURES), lambda i: (i, 0)),
            compiler_params=pltpu.CompilerParams(
                dimension_semantics=("parallel",)),
            cost_estimate=cost,
        )

    try:
        out = build(True)(x, w_t, b_row)
        jax.block_until_ready(out)
        return out
    except Exception:
        # Fallback if this Pallas build rejects Buffered(1) on resident inputs.
        return build(False)(x, w_t, b_row)


def init_params(key):
    """PyTorch nn.Linear default init (U(-1/sqrt(K), 1/sqrt(K))); weight stored
    transposed ONCE as (K, N) so no per-call layout work is needed."""
    kw, kb = jax.random.split(key)
    bound = 1.0 / jnp.sqrt(jnp.float32(IN_FEATURES))
    w = jax.random.uniform(kw, (OUT_FEATURES, IN_FEATURES), jnp.float32,
                           minval=-bound, maxval=bound)
    b = jax.random.uniform(kb, (OUT_FEATURES,), jnp.float32,
                           minval=-bound, maxval=bound)
    w_t = jnp.asarray(w.T)   # (1024, 10), computed once at init
    return w_t, b


if __name__ == "__main__":
    key = jax.random.PRNGKey(0)
    k_x, k_p = jax.random.split(key)

    B = 8
    x = jax.random.normal(k_x, (B, IN_FEATURES), jnp.float32)
    w_t, b = init_params(k_p)

    out = dnn_single_forward(x, w_t, b)
    jax.block_until_ready(out)

    # sanity check against pure-JAX reference
    ref = jax.nn.sigmoid(x @ w_t + b)
    assert out.shape == (B, OUT_FEATURES)
    assert jnp.allclose(out, ref, atol=1e-5, rtol=1e-5)

    print("KERNEL_OK")
</pallas_src>

<mosaic_0001>
module attributes {stable_mosaic.version = 11 : i64} {
  func.func @_fc_sigmoid_kernel(%arg0: i32, %arg1: memref<8x1024xf32, #tpu.memory_space<vmem>>, %arg2: memref<1024x10xf32, #tpu.memory_space<vmem>>, %arg3: memref<1x10xf32, #tpu.memory_space<vmem>>, %arg4: memref<8x10xf32, #tpu.memory_space<vmem>>) attributes {dimension_semantics = [#tpu.dimension_semantics<parallel>], iteration_bounds = array<i64: 1>, scalar_prefetch = 0 : i64, scratch_operands = 0 : i64, tpu.core_type = #tpu.core_type<tc>, window_params = [{transform_indices = @transform_0, window_bounds = array<i64: 8, 1024>}, {pipeline_mode = #tpu.pipeline_mode<synchronous>, transform_indices = @transform_1, window_bounds = array<i64: 1024, 10>}, {pipeline_mode = #tpu.pipeline_mode<synchronous>, transform_indices = @transform_2, window_bounds = array<i64: 1, 10>}, {transform_indices = @transform_3, window_bounds = array<i64: 8, 10>}]} {
    %c0 = arith.constant 0 : index
    %c0_0 = arith.constant 0 : index
    %0 = vector.load %arg1[%c0, %c0_0] : memref<8x1024xf32, #tpu.memory_space<vmem>>, vector<8x1024xf32>
    %c0_1 = arith.constant 0 : index
    %c0_2 = arith.constant 0 : index
    %1 = vector.load %arg2[%c0_1, %c0_2] : memref<1024x10xf32, #tpu.memory_space<vmem>>, vector<1024x10xf32>
    %cst = arith.constant dense<0.000000e+00> : vector<8x10xf32>
    %2 = tpu.matmul %0, %1, %cst {dimension_numbers = #tpu.dot_dimension_numbers<[1], [0], [0], [1], [0, 0, 1, 1], [], []>, precision = #tpu.contract_precision<fp32>} : vector<8x1024xf32>, vector<1024x10xf32>, vector<8x10xf32> -> vector<8x10xf32>
    %c0_3 = arith.constant 0 : index
    %c0_4 = arith.constant 0 : index
    %3 = vector.load %arg3[%c0_3, %c0_4] : memref<1x10xf32, #tpu.memory_space<vmem>>, vector<1x10xf32>
    %4 = vector.broadcast %3 : vector<1x10xf32> to vector<8x10xf32>
    %5 = arith.addf %2, %4 : vector<8x10xf32>
    %6 = arith.negf %5 : vector<8x10xf32>
    %7 = math.exp %6 : vector<8x10xf32>
    %cst_5 = arith.constant 1.000000e+00 : f32
    %8 = vector.broadcast %cst_5 : f32 to vector<8x10xf32>
    %9 = arith.addf %8, %7 : vector<8x10xf32>
    %10 = arith.divf %8, %9 : vector<8x10xf32>
    %c0_6 = arith.constant 0 : index
    %c0_7 = arith.constant 0 : index
    %11 = vector.load %arg4[%c0_6, %c0_7] : memref<8x10xf32, #tpu.memory_space<vmem>>, vector<8x10xf32>
    tpu.vector_store %arg4[%c0_6, %c0_7], %10 {strides = array<i32>} : memref<8x10xf32, #tpu.memory_space<vmem>>, vector<8x10xf32>,
    return
  }
  func.func @transform_0(%arg0: i32) -> (i32, i32) {
    %c0_i32 = arith.constant 0 : i32
    %c0_i32_0 = arith.constant 0 : i32
    return %arg0, %c0_i32 : i32, i32
  }
  func.func @transform_1(%arg0: i32) -> (i32, i32) {
    %c0_i32 = arith.constant 0 : i32
    %c0_i32_0 = arith.constant 0 : i32
    %c0_i32_1 = arith.constant 0 : i32
    return %c0_i32, %c0_i32_0 : i32, i32
  }
  func.func @transform_2(%arg0: i32) -> (i32, i32) {
    %c0_i32 = arith.constant 0 : i32
    %c0_i32_0 = arith.constant 0 : i32
    %c0_i32_1 = arith.constant 0 : i32
    return %c0_i32, %c0_i32_0 : i32, i32
  }
  func.func @transform_3(%arg0: i32) -> (i32, i32) {
    %c0_i32 = arith.constant 0 : i32
    %c0_i32_0 = arith.constant 0 : i32
    return %arg0, %c0_i32 : i32, i32
  }
}

module attributes {stable_mosaic.version = 11 : i64} {
  func.func @_fc_sigmoid_kernel(%arg0: i32, %arg1: memref<8x1024xf32, #tpu.memory_space<vmem>>, %arg2: memref<1024x10xf32, #tpu.memory_space<vmem>>, %arg3: memref<1x10xf32, #tpu.memory_space<vmem>>, %arg4: memref<8x10xf32, #tpu.memory_space<vmem>>) attributes {dimension_semantics = [#tpu.dimension_semantics<parallel>], iteration_bounds = array<i64: 1>, scalar_prefetch = 0 : i64, scratch_operands = 0 : i64, tpu.core_type = #tpu.core_type<tc>, window_params = [{transform_indices = @transform_0, window_bounds = array<i64: 8, 1024>}, {pipeline_mode = #tpu.pipeline_mode<synchronous>, transform_indices = @transform_1, window_bounds = array<i64: 1024, 10>}, {pipeline_mode = #tpu.pipeline_mode<synchronous>, transform_indices = @transform_2, window_bounds = array<i64: 1, 10>}, {transform_indices = @transform_3, window_bounds = array<i64: 8, 10>}]} {
    %c0 = arith.constant 0 : index
    %c0_0 = arith.constant 0 : index
    %0 = vector.load %arg1[%c0, %c0_0] : memref<8x1024xf32, #tpu.memory_space<vmem>>, vector<8x1024xf32>
    %c0_1 = arith.constant 0 : index
    %c0_2 = arith.constant 0 : index
    %1 = vector.load %arg2[%c0_1, %c0_2] : memref<1024x10xf32, #tpu.memory_space<vmem>>, vector<1024x10xf32>
    %cst = arith.constant dense<0.000000e+00> : vector<8x10xf32>
    %2 = tpu.matmul %0, %1, %cst {dimension_numbers = #tpu.dot_dimension_numbers<[1], [0], [0], [1], [0, 0, 1, 1], [], []>, precision = #tpu.contract_precision<fp32>} : vector<8x1024xf32>, vector<1024x10xf32>, vector<8x10xf32> -> vector<8x10xf32>
    %c0_3 = arith.constant 0 : index
    %c0_4 = arith.constant 0 : index
    %3 = vector.load %arg3[%c0_3, %c0_4] : memref<1x10xf32, #tpu.memory_space<vmem>>, vector<1x10xf32>
    %4 = vector.broadcast %3 : vector<1x10xf32> to vector<8x10xf32>
    %5 = arith.addf %2, %4 : vector<8x10xf32>
    %6 = arith.negf %5 : vector<8x10xf32>
    %7 = math.exp %6 : vector<8x10xf32>
    %cst_5 = arith.constant 1.000000e+00 : f32
    %8 = vector.broadcast %cst_5 : f32 to vector<8x10xf32>
    %9 = arith.addf %8, %7 : vector<8x10xf32>
    %10 = arith.divf %8, %9 : vector<8x10xf32>
    %c0_6 = arith.constant 0 : index
    %c0_7 = arith.constant 0 : index
    %11 = vector.load %arg4[%c0_6, %c0_7] : memref<8x10xf32, #tpu.memory_space<vmem>>, vector<8x10xf32>
    tpu.vector_store %arg4[%c0_6, %c0_7], %10 {strides = array<i32>} : memref<8x10xf32, #tpu.memory_space<vmem>>, vector<8x10xf32>,
    return
  }
  func.func @transform_0(%arg0: i32) -> (i32, i32) {
    %c0_i32 = arith.constant 0 : i32
    %c0_i32_0 = arith.constant 0 : i32
    return %arg0, %c0_i32 : i32, i32
  }
  func.func @transform_1(%arg0: i32) -> (i32, i32) {
    %c0_i32 = arith.constant 0 : i32
    %c0_i32_0 = arith.constant 0 : i32
    %c0_i32_1 = arith.constant 0 : i32
    return %c0_i32, %c0_i32_0 : i32, i32
  }
  func.func @transform_2(%arg0: i32) -> (i32, i32) {
    %c0_i32 = arith.constant 0 : i32
    %c0_i32_0 = arith.constant 0 : i32
    %c0_i32_1 = arith.constant 0 : i32
    return %c0_i32, %c0_i32_0 : i32, i32
  }
  func.func @transform_3(%arg0: i32) -> (i32, i32) {
    %c0_i32 = arith.constant 0 : i32
    %c0_i32_0 = arith.constant 0 : i32
    return %arg0, %c0_i32 : i32, i32
  }
}

</mosaic_0001>

<llo_original>
// kernel: tpu_custom_call.1
$region0: #{tpu_custom_call.1}
  #allocation0 [shape = 'u32[]', space=smem, size = 0x4, offset = 0x4, fixed_abs, tag = 'smem constant byte address 0x4 - core index']
  #allocation1 [shape = 'u32[144,128]{1,0:T(1,128)}', space=vmem, size = 0x12000, scoped, tag = 'internal scratch']
  %s0 = inlined_call_operand.vmem [shape: f32[8,1024], index: 0, kind: input, shape index: {}]
  %s1 = inlined_call_operand.vmem [shape: f32[1024,10], index: 1, kind: input, shape index: {}]
  %s2 = inlined_call_operand.vmem [shape: f32[1,10], index: 2, kind: input, shape index: {}]
  %s3 = inlined_call_operand.hbm [shape: f32[8,10], index: 3, kind: output, shape index: {}]
  %s4 = sld [smem:[#allocation0]]
  $region22: #{tpu_custom_call.1} parent=0
    _
  %s6 = ssub.s32 1, %s4
  %s7 = scalar_select 0, %s6, %s4
  $region1: #{tpu_custom_call.1} parent=0
    #allocation2 [shape = 'u8[4096]{0}', space=vmem, size = 0x1000, scoped, tag = 'output window, operand 0, single buffered']
    #allocation3 [shape = 's32[1]{0}', space=sflag, size = 0x4, scoped, tag = 'scoped memory for tpu_custom_call.1']
    %8 = vsyncpa [#allocation3], 0
    // Predicated region
    $region2: #{tpu_custom_call.1} parent=1 // pred_check
      _
    $region3: #{tpu_custom_call.1} parent=1 // pred_check_branch
      %10 = sbr.rel (0) target = $region5
    $region4: #{tpu_custom_call.1} parent=1 // pred_region
      _
    $region5: #{tpu_custom_call.1} parent=1 // pred_fallthru
      _
    // Predicated region
    $region6: #{tpu_custom_call.1} parent=1 // pred_check
      _
    $region7: #{tpu_custom_call.1} parent=1 // pred_check_branch
      %12 = sbr.rel (0) target = $region9
    $region8: #{tpu_custom_call.1} parent=1 // pred_region
      _
    $region9: #{tpu_custom_call.1} parent=1 // pred_fallthru
      _
    // Predicated region
    $region10: #{tpu_custom_call.1} parent=1 // pred_check
      _
    $region11: #{tpu_custom_call.1} parent=1 // pred_check_branch
      %14 = sbr.rel (0) target = $region13
    $region12: #{tpu_custom_call.1} parent=1 // pred_region
      _
    $region13: #{tpu_custom_call.1} parent=1 // pred_fallthru
      _
    %v15 = vld [vmem:[%s0] sm:$0xff]
    %v16 = vld [vmem:[%s0 + $0x8] sm:$0xff]
    %v17 = vld [vmem:[%s0 + $0x10] sm:$0xff]
    %v18 = vld [vmem:[%s0 + $0x18] sm:$0xff]
    %v19 = vld [vmem:[%s0 + $0x20] sm:$0xff]
    %v20 = vld [vmem:[%s0 + $0x28] sm:$0xff]
    %v21 = vld [vmem:[%s0 + $0x30] sm:$0xff]
    %v22 = vld [vmem:[%s0 + $0x38] sm:$0xff]
    %v23 = vld [vmem:[%s1] sm:$0xff]
    %v24 = vld [vmem:[%s1 + $0x8] sm:$0xff]
    %v25 = vld [vmem:[%s1 + $0x10] sm:$0xff]
    %v26 = vld [vmem:[%s1 + $0x18] sm:$0xff]
    %v27 = vld [vmem:[%s1 + $0x20] sm:$0xff]
    %v28 = vld [vmem:[%s1 + $0x28] sm:$0xff]
    %v29 = vld [vmem:[%s1 + $0x30] sm:$0xff]
    %v30 = vld [vmem:[%s1 + $0x38] sm:$0xff]
    %v31 = vld [vmem:[%s1 + $0x40] sm:$0xff]
    %v32 = vld [vmem:[%s1 + $0x48] sm:$0xff]
    %v33 = vld [vmem:[%s1 + $0x50] sm:$0xff]
    %v34 = vld [vmem:[%s1 + $0x58] sm:$0xff]
    %v35 = vld [vmem:[%s1 + $0x60] sm:$0xff]
    %v36 = vld [vmem:[%s1 + $0x68] sm:$0xff]
    %v37 = vld [vmem:[%s1 + $0x70] sm:$0xff]
    %v38 = vld [vmem:[%s1 + $0x78] sm:$0xff]
    %v39 = vld [vmem:[%s1 + $0x80] sm:$0xff]
    %v40 = vld [vmem:[%s1 + $0x88] sm:$0xff]
    %v41 = vld [vmem:[%s1 + $0x90] sm:$0xff]
    %v42 = vld [vmem:[%s1 + $0x98] sm:$0xff]
    %v43 = vld [vmem:[%s1 + $0xa0] sm:$0xff]
    %v44 = vld [vmem:[%s1 + $0xa8] sm:$0xff]
    %v45 = vld [vmem:[%s1 + $0xb0] sm:$0xff]
    %v46 = vld [vmem:[%s1 + $0xb8] sm:$0xff]
    %v47 = vld [vmem:[%s1 + $0xc0] sm:$0xff]
    %v48 = vld [vmem:[%s1 + $0xc8] sm:$0xff]
    %v49 = vld [vmem:[%s1 + $0xd0] sm:$0xff]
    %v50 = vld [vmem:[%s1 + $0xd8] sm:$0xff]
    %v51 = vld [vmem:[%s1 + $0xe0] sm:$0xff]
    %v52 = vld [vmem:[%s1 + $0xe8] sm:$0xff]
    %v53 = vld [vmem:[%s1 + $0xf0] sm:$0xff]
    %v54 = vld [vmem:[%s1 + $0xf8] sm:$0xff]
    %v55 = vld [vmem:[%s1 + $0x100] sm:$0xff]
    %v56 = vld [vmem:[%s1 + $0x108] sm:$0xff]
    %v57 = vld [vmem:[%s1 + $0x110] sm:$0xff]
    %v58 = vld [vmem:[%s1 + $0x118] sm:$0xff]
    %v59 = vld [vmem:[%s1 + $0x120] sm:$0xff]
    %v60 = vld [vmem:[%s1 + $0x128] sm:$0xff]
    %v61 = vld [vmem:[%s1 + $0x130] sm:$0xff]
    %v62 = vld [vmem:[%s1 + $0x138] sm:$0xff]
    %v63 = vld [vmem:[%s1 + $0x140] sm:$0xff]
    %v64 = vld [vmem:[%s1 + $0x148] sm:$0xff]
    %v65 = vld [vmem:[%s1 + $0x150] sm:$0xff]
    %v66 = vld [vmem:[%s1 + $0x158] sm:$0xff]
    %v67 = vld [vmem:[%s1 + $0x160] sm:$0xff]
    %v68 = vld [vmem:[%s1 + $0x168] sm:$0xff]
    %v69 = vld [vmem:[%s1 + $0x170] sm:$0xff]
    %v70 = vld [vmem:[%s1 + $0x178] sm:$0xff]
    %v71 = vld [vmem:[%s1 + $0x180] sm:$0xff]
    %v72 = vld [vmem:[%s1 + $0x188] sm:$0xff]
    %v73 = vld [vmem:[%s1 + $0x190] sm:$0xff]
    %v74 = vld [vmem:[%s1 + $0x198] sm:$0xff]
    %v75 = vld [vmem:[%s1 + $0x1a0] sm:$0xff]
    %v76 = vld [vmem:[%s1 + $0x1a8] sm:$0xff]
    %v77 = vld [vmem:[%s1 + $0x1b0] sm:$0xff]
    %v78 = vld [vmem:[%s1 + $0x1b8] sm:$0xff]
    %v79 = vld [vmem:[%s1 + $0x1c0] sm:$0xff]
    %v80 = vld [vmem:[%s1 + $0x1c8] sm:$0xff]
    %v81 = vld [vmem:[%s1 + $0x1d0] sm:$0xff]
    %v82 = vld [vmem:[%s1 + $0x1d8] sm:$0xff]
    %v83 = vld [vmem:[%s1 + $0x1e0] sm:$0xff]
    %v84 = vld [vmem:[%s1 + $0x1e8] sm:$0xff]
    %v85 = vld [vmem:[%s1 + $0x1f0] sm:$0xff]
    %v86 = vld [vmem:[%s1 + $0x1f8] sm:$0xff]
    %v87 = vld [vmem:[%s1 + $0x200] sm:$0xff]
    %v88 = vld [vmem:[%s1 + $0x208] sm:$0xff]
    %v89 = vld [vmem:[%s1 + $0x210] sm:$0xff]
    %v90 = vld [vmem:[%s1 + $0x218] sm:$0xff]
    %v91 = vld [vmem:[%s1 + $0x220] sm:$0xff]
    %v92 = vld [vmem:[%s1 + $0x228] sm:$0xff]
    %v93 = vld [vmem:[%s1 + $0x230] sm:$0xff]
    %v94 = vld [vmem:[%s1 + $0x238] sm:$0xff]
    %v95 = vld [vmem:[%s1 + $0x240] sm:$0xff]
    %v96 = vld [vmem:[%s1 + $0x248] sm:$0xff]
    %v97 = vld [vmem:[%s1 + $0x250] sm:$0xff]
    %v98 = vld [vmem:[%s1 + $0x258] sm:$0xff]
    %v99 = vld [vmem:[%s1 + $0x260] sm:$0xff]
    %v100 = vld [vmem:[%s1 + $0x268] sm:$0xff]
    %v101 = vld [vmem:[%s1 + $0x270] sm:$0xff]
    %v102 = vld [vmem:[%s1 + $0x278] sm:$0xff]
    %v103 = vld [vmem:[%s1 + $0x280] sm:$0xff]
    %v104 = vld [vmem:[%s1 + $0x288] sm:$0xff]
    %v105 = vld [vmem:[%s1 + $0x290] sm:$0xff]
    %v106 = vld [vmem:[%s1 + $0x298] sm:$0xff]
    %v107 = vld [vmem:[%s1 + $0x2a0] sm:$0xff]
    %v108 = vld [vmem:[%s1 + $0x2a8] sm:$0xff]
    %v109 = vld [vmem:[%s1 + $0x2b0] sm:$0xff]
    %v110 = vld [vmem:[%s1 + $0x2b8] sm:$0xff]
    %v111 = vld [vmem:[%s1 + $0x2c0] sm:$0xff]
    %v112 = vld [vmem:[%s1 + $0x2c8] sm:$0xff]
    %v113 = vld [vmem:[%s1 + $0x2d0] sm:$0xff]
    %v114 = vld [vmem:[%s1 + $0x2d8] sm:$0xff]
    %v115 = vld [vmem:[%s1 + $0x2e0] sm:$0xff]
    %v116 = vld [vmem:[%s1 + $0x2e8] sm:$0xff]
    %v117 = vld [vmem:[%s1 + $0x2f0] sm:$0xff]
    %v118 = vld [vmem:[%s1 + $0x2f8] sm:$0xff]
    %v119 = vld [vmem:[%s1 + $0x300] sm:$0xff]
    %v120 = vld [vmem:[%s1 + $0x308] sm:$0xff]
    %v121 = vld [vmem:[%s1 + $0x310] sm:$0xff]
    %v122 = vld [vmem:[%s1 + $0x318] sm:$0xff]
    %v123 = vld [vmem:[%s1 + $0x320] sm:$0xff]
    %v124 = vld [vmem:[%s1 + $0x328] sm:$0xff]
    %v125 = vld [vmem:[%s1 + $0x330] sm:$0xff]
    %v126 = vld [vmem:[%s1 + $0x338] sm:$0xff]
    %v127 = vld [vmem:[%s1 + $0x340] sm:$0xff]
    %v128 = vld [vmem:[%s1 + $0x348] sm:$0xff]
    %v129 = vld [vmem:[%s1 + $0x350] sm:$0xff]
    %v130 = vld [vmem:[%s1 + $0x358] sm:$0xff]
    %v131 = vld [vmem:[%s1 + $0x360] sm:$0xff]
    %v132 = vld [vmem:[%s1 + $0x368] sm:$0xff]
    %v133 = vld [vmem:[%s1 + $0x370] sm:$0xff]
    %v134 = vld [vmem:[%s1 + $0x378] sm:$0xff]
    %v135 = vld [vmem:[%s1 + $0x380] sm:$0xff]
    %v136 = vld [vmem:[%s1 + $0x388] sm:$0xff]
    %v137 = vld [vmem:[%s1 + $0x390] sm:$0xff]
    %v138 = vld [vmem:[%s1 + $0x398] sm:$0xff]
    %v139 = vld [vmem:[%s1 + $0x3a0] sm:$0xff]
    %v140 = vld [vmem:[%s1 + $0x3a8] sm:$0xff]
    %v141 = vld [vmem:[%s1 + $0x3b0] sm:$0xff]
    %v142 = vld [vmem:[%s1 + $0x3b8] sm:$0xff]
    %v143 = vld [vmem:[%s1 + $0x3c0] sm:$0xff]
    %v144 = vld [vmem:[%s1 + $0x3c8] sm:$0xff]
    %v145 = vld [vmem:[%s1 + $0x3d0] sm:$0xff]
    %v146 = vld [vmem:[%s1 + $0x3d8] sm:$0xff]
    %v147 = vld [vmem:[%s1 + $0x3e0] sm:$0xff]
    %v148 = vld [vmem:[%s1 + $0x3e8] sm:$0xff]
    %v149 = vld [vmem:[%s1 + $0x3f0] sm:$0xff]
    %v150 = vld [vmem:[%s1 + $0x3f8] sm:$0xff]
    %v151 = vld [vmem:[%s2] sm:$0x1]
    %v153 = vlaneseq
    %v154 = vshrl.u32 %v153, 7
    %v155 = vsub.s32 0, %v154
    %v156 = vrot.slane %v151, %v155
    %158 = vmatprep.subr.mxu0 0.0
    %v159 = vand.u32 %v23, 4294901760
    %160 = vmatpush1.msra.mxu0 %v159
    %161 = vmatprep.subr.mxu0 0.0
    %v162 = vand.u32 %v24, 4294901760
    %163 = vmatpush1.msra.mxu0 %v162
    %164 = vmatprep.subr.mxu0 0.0
    %v165 = vand.u32 %v25, 4294901760
    %166 = vmatpush1.msra.mxu0 %v165
    %167 = vmatprep.subr.mxu0 0.0
    %v168 = vand.u32 %v26, 4294901760
    %169 = vmatpush1.msra.mxu0 %v168
    %170 = vmatprep.subr.mxu0 0.0
    %v171 = vand.u32 %v27, 4294901760
    %172 = vmatpush1.msra.mxu0 %v171
    %173 = vmatprep.subr.mxu0 0.0
    %v174 = vand.u32 %v28, 4294901760
    %175 = vmatpush1.msra.mxu0 %v174
    %176 = vmatprep.subr.mxu0 0.0
    %v177 = vand.u32 %v29, 4294901760
    %178 = vmatpush1.msra.mxu0 %v177
    %179 = vmatprep.subr.mxu0 0.0
    %v180 = vand.u32 %v30, 4294901760
    %181 = vmatpush1.msra.mxu0 %v180
    %182 = vmatprep.subr.mxu0 0.0
    %v183 = vand.u32 %v31, 4294901760
    %184 = vmatpush1.msra.mxu0 %v183
    %185 = vmatprep.subr.mxu0 0.0
    %v186 = vand.u32 %v32, 4294901760
    %187 = vmatpush1.msra.mxu0 %v186
    %188 = vmatprep.subr.mxu0 0.0
    %v189 = vand.u32 %v33, 4294901760
    %190 = vmatpush1.msra.mxu0 %v189
    %191 = vmatprep.subr.mxu0 0.0
    %v192 = vand.u32 %v34, 4294901760
    %193 = vmatpush1.msra.mxu0 %v192
    %194 = vmatprep.subr.mxu0 0.0
    %v195 = vand.u32 %v35, 4294901760
    %196 = vmatpush1.msra.mxu0 %v195
    %197 = vmatprep.subr.mxu0 0.0
    %v198 = vand.u32 %v36, 4294901760
    %199 = vmatpush1.msra.mxu0 %v198
    %200 = vmatprep.subr.mxu0 0.0
    %v201 = vand.u32 %v37, 4294901760
    %202 = vmatpush1.msra.mxu0 %v201
    %203 = vmatprep.subr.mxu0 0.0
    %v204 = vand.u32 %v38, 4294901760
    %205 = vmatpush1.msra.mxu0 %v204
    %206 = vmatprep.subr.mxu0 0.0
    %v207 = vand.u32 %v39, 4294901760
    %208 = vmatpush1.msra.mxu0 %v207
    %209 = vmatprep.subr.mxu0 0.0
    %v210 = vand.u32 %v40, 4294901760
    %211 = vmatpush1.msra.mxu0 %v210
    %212 = vmatprep.subr.mxu0 0.0
    %v213 = vand.u32 %v41, 4294901760
    %214 = vmatpush1.msra.mxu0 %v213
    %215 = vmatprep.subr.mxu0 0.0
    %v216 = vand.u32 %v42, 4294901760
    %217 = vmatpush1.msra.mxu0 %v216
    %218 = vmatprep.subr.mxu0 0.0
    %v219 = vand.u32 %v43, 4294901760
    %220 = vmatpush1.msra.mxu0 %v219
    %221 = vmatprep.subr.mxu0 0.0
    %v222 = vand.u32 %v44, 4294901760
    %223 = vmatpush1.msra.mxu0 %v222
    %224 = vmatprep.subr.mxu0 0.0
    %v225 = vand.u32 %v45, 4294901760
    %226 = vmatpush1.msra.mxu0 %v225
    %227 = vmatprep.subr.mxu0 0.0
    %v228 = vand.u32 %v46, 4294901760
    %229 = vmatpush1.msra.mxu0 %v228
    %230 = vmatprep.subr.mxu0 0.0
    %v231 = vand.u32 %v47, 4294901760
    %232 = vmatpush1.msra.mxu0 %v231
    %233 = vmatprep.subr.mxu0 0.0
    %v234 = vand.u32 %v48, 4294901760
    %235 = vmatpush1.msra.mxu0 %v234
    %236 = vmatprep.subr.mxu0 0.0
    %v237 = vand.u32 %v49, 4294901760
    %238 = vmatpush1.msra.mxu0 %v237
    %239 = vmatprep.subr.mxu0 0.0
    %v240 = vand.u32 %v50, 4294901760
    %241 = vmatpush1.msra.mxu0 %v240
    %242 = vmatprep.subr.mxu0 0.0
    %v243 = vand.u32 %v51, 4294901760
    %244 = vmatpush1.msra.mxu0 %v243
    %245 = vmatprep.subr.mxu0 0.0
    %v246 = vand.u32 %v52, 4294901760
    %247 = vmatpush1.msra.mxu0 %v246
    %248 = vmatprep.subr.mxu0 0.0
    %v249 = vand.u32 %v53, 4294901760
    %250 = vmatpush1.msra.mxu0 %v249
    %251 = vmatprep.subr.mxu0 0.0
    %v252 = vand.u32 %v54, 4294901760
    %253 = vmatpush1.msra.mxu0 %v252
    %v254 = vand.u32 %v16, 4294901760
    %v255 = vsub.f32 %v16, %v254
    %v256 = vand.u32 %v255, 4294901760
    %v257 = vsub.f32 %v255, %v256
    %v258 = vand.u32 %v257, 4294901760
    %259 = vmatprep.mubr.f32.mxu0 %v258
    %v260 = vand.u32 %v15, 4294901760
    %v261 = vsub.f32 %v15, %v260
    %v262 = vand.u32 %v261, 4294901760
    %v263 = vsub.f32 %v261, %v262
    %v264 = vand.u32 %v263, 4294901760
    %265 = vmatmul.mubr.f32.gmra.mrb[0].mxu0 %v264
    %v266 = vpop.f32.mrb[0].mxu0
    %v267 = vadd.f32 %v156, %v266
    %v268 = vpop.f32.mrb[0].mxu0
    %269 = vdwg.mxu0
    %270 = vmatprep.subr.mxu0 0.0
    %v271 = vand.u32 %v23, 4294901760
    %v272 = vsub.f32 %v23, %v271
    %v273 = vand.u32 %v272, 4294901760
    %v274 = vsub.f32 %v272, %v273
    %v275 = vand.u32 %v274, 4294901760
    %276 = vmatpush1.msra.mxu0 %v275
    %277 = vmatprep.subr.mxu0 0.0
    %v278 = vand.u32 %v24, 4294901760
    %v279 = vsub.f32 %v24, %v278
    %v280 = vand.u32 %v279, 4294901760
    %v281 = vsub.f32 %v279, %v280
    %v282 = vand.u32 %v281, 4294901760
    %283 = vmatpush1.msra.mxu0 %v282
    %284 = vmatprep.subr.mxu0 0.0
    %v285 = vand.u32 %v25, 4294901760
    %v286 = vsub.f32 %v25, %v285
    %v287 = vand.u32 %v286, 4294901760
    %v288 = vsub.f32 %v286, %v287
    %v289 = vand.u32 %v288, 4294901760
    %290 = vmatpush1.msra.mxu0 %v289
    %291 = vmatprep.subr.mxu0 0.0
    %v292 = vand.u32 %v26, 4294901760
    %v293 = vsub.f32 %v26, %v292
    %v294 = vand.u32 %v293, 4294901760
    %v295 = vsub.f32 %v293, %v294
    %v296 = vand.u32 %v295, 4294901760
    %297 = vmatpush1.msra.mxu0 %v296
    %298 = vmatprep.subr.mxu0 0.0
    %v299 = vand.u32 %v27, 4294901760
    %v300 = vsub.f32 %v27, %v299
    %v301 = vand.u32 %v300, 4294901760
    %v302 = vsub.f32 %v300, %v301
    %v303 = vand.u32 %v302, 4294901760
    %304 = vmatpush1.msra.mxu0 %v303
    %305 = vmatprep.subr.mxu0 0.0
    %v306 = vand.u32 %v28, 4294901760
    %v307 = vsub.f32 %v28, %v306
    %v308 = vand.u32 %v307, 4294901760
    %v309 = vsub.f32 %v307, %v308
    %v310 = vand.u32 %v309, 4294901760
    %311 = vmatpush1.msra.mxu0 %v310
    %312 = vmatprep.subr.mxu0 0.0
    %v313 = vand.u32 %v29, 4294901760
    %v314 = vsub.f32 %v29, %v313
    %v315 = vand.u32 %v314, 4294901760
    %v316 = vsub.f32 %v314, %v315
    %v317 = vand.u32 %v316, 4294901760
    %318 = vmatpush1.msra.mxu0 %v317
    %319 = vmatprep.subr.mxu0 0.0
    %v320 = vand.u32 %v30, 4294901760
    %v321 = vsub.f32 %v30, %v320
    %v322 = vand.u32 %v321, 4294901760
    %v323 = vsub.f32 %v321, %v322
    %v324 = vand.u32 %v323, 4294901760
    %325 = vmatpush1.msra.mxu0 %v324
    %326 = vmatprep.subr.mxu0 0.0
    %v327 = vand.u32 %v31, 4294901760
    %v328 = vsub.f32 %v31, %v327
    %v329 = vand.u32 %v328, 4294901760
    %v330 = vsub.f32 %v328, %v329
    %v331 = vand.u32 %v330, 4294901760
    %332 = vmatpush1.msra.mxu0 %v331
    %333 = vmatprep.subr.mxu0 0.0
    %v334 = vand.u32 %v32, 4294901760
    %v335 = vsub.f32 %v32, %v334
    %v336 = vand.u32 %v335, 4294901760
    %v337 = vsub.f32 %v335, %v336
    %v338 = vand.u32 %v337, 4294901760
    %339 = vmatpush1.msra.mxu0 %v338
    %340 = vmatprep.subr.mxu0 0.0
    %v341 = vand.u32 %v33, 4294901760
    %v342 = vsub.f32 %v33, %v341
    %v343 = vand.u32 %v342, 4294901760
    %v344 = vsub.f32 %v342, %v343
    %v345 = vand.u32 %v344, 4294901760
    %346 = vmatpush1.msra.mxu0 %v345
    %347 = vmatprep.subr.mxu0 0.0
    %v348 = vand.u32 %v34, 4294901760
    %v349 = vsub.f32 %v34, %v348
    %v350 = vand.u32 %v349, 4294901760
    %v351 = vsub.f32 %v349, %v350
    %v352 = vand.u32 %v351, 4294901760
    %353 = vmatpush1.msra.mxu0 %v352
    %354 = vmatprep.subr.mxu0 0.0
    %v355 = vand.u32 %v35, 4294901760
    %v356 = vsub.f32 %v35, %v355
    %v357 = vand.u32 %v356, 4294901760
    %v358 = vsub.f32 %v356, %v357
    %v359 = vand.u32 %v358, 4294901760
    %360 = vmatpush1.msra.mxu0 %v359
    %361 = vmatprep.subr.mxu0 0.0
    %v362 = vand.u32 %v36, 4294901760
    %v363 = vsub.f32 %v36, %v362
    %v364 = vand.u32 %v363, 4294901760
    %v365 = vsub.f32 %v363, %v364
    %v366 = vand.u32 %v365, 4294901760
    %367 = vmatpush1.msra.mxu0 %v366
    %368 = vmatprep.subr.mxu0 0.0
    %v369 = vand.u32 %v37, 4294901760
    %v370 = vsub.f32 %v37, %v369
    %v371 = vand.u32 %v370, 4294901760
    %v372 = vsub.f32 %v370, %v371
    %v373 = vand.u32 %v372, 4294901760
    %374 = vmatpush1.msra.mxu0 %v373
    %375 = vmatprep.subr.mxu0 0.0
    %v376 = vand.u32 %v38, 4294901760
    %v377 = vsub.f32 %v38, %v376
    %v378 = vand.u32 %v377, 4294901760
    %v379 = vsub.f32 %v377, %v378
    %v380 = vand.u32 %v379, 4294901760
    %381 = vmatpush1.msra.mxu0 %v380
    %382 = vmatprep.subr.mxu0 0.0
    %v383 = vand.u32 %v39, 4294901760
    %v384 = vsub.f32 %v39, %v383
    %v385 = vand.u32 %v384, 4294901760
    %v386 = vsub.f32 %v384, %v385
    %v387 = vand.u32 %v386, 4294901760
    %388 = vmatpush1.msra.mxu0 %v387
    %389 = vmatprep.subr.mxu0 0.0
    %v390 = vand.u32 %v40, 4294901760
    %v391 = vsub.f32 %v40, %v390
    %v392 = vand.u32 %v391, 4294901760
    %v393 = vsub.f32 %v391, %v392
    %v394 = vand.u32 %v393, 4294901760
    %395 = vmatpush1.msra.mxu0 %v394
    %396 = vmatprep.subr.mxu0 0.0
    %v397 = vand.u32 %v41, 4294901760
    %v398 = vsub.f32 %v41, %v397
    %v399 = vand.u32 %v398, 4294901760
    %v400 = vsub.f32 %v398, %v399
    %v401 = vand.u32 %v400, 4294901760
    %402 = vmatpush1.msra.mxu0 %v401
    %403 = vmatprep.subr.mxu0 0.0
    %v404 = vand.u32 %v42, 4294901760
    %v405 = vsub.f32 %v42, %v404
    %v406 = vand.u32 %v405, 4294901760
    %v407 = vsub.f32 %v405, %v406
    %v408 = vand.u32 %v407, 4294901760
    %409 = vmatpush1.msra.mxu0 %v408
    %410 = vmatprep.subr.mxu0 0.0
    %v411 = vand.u32 %v43, 4294901760
    %v412 = vsub.f32 %v43, %v411
    %v413 = vand.u32 %v412, 4294901760
    %v414 = vsub.f32 %v412, %v413
    %v415 = vand.u32 %v414, 4294901760
    %416 = vmatpush1.msra.mxu0 %v415
    %417 = vmatprep.subr.mxu0 0.0
    %v418 = vand.u32 %v44, 4294901760
    %v419 = vsub.f32 %v44, %v418
    %v420 = vand.u32 %v419, 4294901760
    %v421 = vsub.f32 %v419, %v420
    %v422 = vand.u32 %v421, 4294901760
    %423 = vmatpush1.msra.mxu0 %v422
    %424 = vmatprep.subr.mxu0 0.0
    %v425 = vand.u32 %v45, 4294901760
    %v426 = vsub.f32 %v45, %v425
    %v427 = vand.u32 %v426, 4294901760
    %v428 = vsub.f32 %v426, %v427
    %v429 = vand.u32 %v428, 4294901760
    %430 = vmatpush1.msra.mxu0 %v429
    %431 = vmatprep.subr.mxu0 0.0
    %v432 = vand.u32 %v46, 4294901760
    %v433 = vsub.f32 %v46, %v432
    %v434 = vand.u32 %v433, 4294901760
    %v435 = vsub.f32 %v433, %v434
    %v436 = vand.u32 %v435, 4294901760
    %437 = vmatpush1.msra.mxu0 %v436
    %438 = vmatprep.subr.mxu0 0.0
    %v439 = vand.u32 %v47, 4294901760
    %v440 = vsub.f32 %v47, %v439
    %v441 = vand.u32 %v440, 4294901760
    %v442 = vsub.f32 %v440, %v441
    %v443 = vand.u32 %v442, 4294901760
    %444 = vmatpush1.msra.mxu0 %v443
    %445 = vmatprep.subr.mxu0 0.0
    %v446 = vand.u32 %v48, 4294901760
    %v447 = vsub.f32 %v48, %v446
    %v448 = vand.u32 %v447, 4294901760
    %v449 = vsub.f32 %v447, %v448
    %v450 = vand.u32 %v449, 4294901760
    %451 = vmatpush1.msra.mxu0 %v450
    %452 = vmatprep.subr.mxu0 0.0
    %v453 = vand.u32 %v49, 4294901760
    %v454 = vsub.f32 %v49, %v453
    %v455 = vand.u32 %v454, 4294901760
    %v456 = vsub.f32 %v454, %v455
    %v457 = vand.u32 %v456, 4294901760
    %458 = vmatpush1.msra.mxu0 %v457
    %459 = vmatprep.subr.mxu0 0.0
    %v460 = vand.u32 %v50, 4294901760
    %v461 = vsub.f32 %v50, %v460
    %v462 = vand.u32 %v461, 4294901760
    %v463 = vsub.f32 %v461, %v462
    %v464 = vand.u32 %v463, 4294901760
    %465 = vmatpush1.msra.mxu0 %v464
    %466 = vmatprep.subr.mxu0 0.0
    %v467 = vand.u32 %v51, 4294901760
    %v468 = vsub.f32 %v51, %v467
    %v469 = vand.u32 %v468, 4294901760
    %v470 = vsub.f32 %v468, %v469
    %v471 = vand.u32 %v470, 4294901760
    %472 = vmatpush1.msra.mxu0 %v471
    %473 = vmatprep.subr.mxu0 0.0
    %v474 = vand.u32 %v52, 4294901760
    %v475 = vsub.f32 %v52, %v474
    %v476 = vand.u32 %v475, 4294901760
    %v477 = vsub.f32 %v475, %v476
    %v478 = vand.u32 %v477, 4294901760
    %479 = vmatpush1.msra.mxu0 %v478
    %480 = vmatprep.subr.mxu0 0.0
    %v481 = vand.u32 %v53, 4294901760
    %v482 = vsub.f32 %v53, %v481
    %v483 = vand.u32 %v482, 4294901760
    %v484 = vsub.f32 %v482, %v483
    %v485 = vand.u32 %v484, 4294901760
    %486 = vmatpush1.msra.mxu0 %v485
    %487 = vmatprep.subr.mxu0 0.0
    %v488 = vand.u32 %v54, 4294901760
    %v489 = vsub.f32 %v54, %v488
    %v490 = vand.u32 %v489, 4294901760
    %v491 = vsub.f32 %v489, %v490
    %v492 = vand.u32 %v491, 4294901760
    %493 = vmatpush1.msra.mxu0 %v492
    %v494 = vand.u32 %v16, 4294901760
    %495 = vmatprep.mubr.f32.mxu0 %v494
    %v496 = vand.u32 %v15, 4294901760
    %497 = vmatmul.mubr.f32.gmra.mrb[0].mxu0 %v496
    %v498 = vpop.f32.mrb[0].mxu0
    %v499 = vadd.f32 %v267, %v498
    %v500 = vpop.f32.mrb[0].mxu0
    %501 = vdwg.mxu0
    %502 = vmatprep.subr.mxu0 0.0
    %v503 = vand.u32 %v23, 4294901760
    %v504 = vsub.f32 %v23, %v503
    %505 = vmatpush1.msra.mxu0 %v504
    %506 = vmatprep.subr.mxu0 0.0
    %v507 = vand.u32 %v24, 4294901760
    %v508 = vsub.f32 %v24, %v507
    %509 = vmatpush1.msra.mxu0 %v508
    %510 = vmatprep.subr.mxu0 0.0
    %v511 = vand.u32 %v25, 4294901760
    %v512 = vsub.f32 %v25, %v511
    %513 = vmatpush1.msra.mxu0 %v512
    %514 = vmatprep.subr.mxu0 0.0
    %v515 = vand.u32 %v26, 4294901760
    %v516 = vsub.f32 %v26, %v515
    %517 = vmatpush1.msra.mxu0 %v516
    %518 = vmatprep.subr.mxu0 0.0
    %v519 = vand.u32 %v27, 4294901760
    %v520 = vsub.f32 %v27, %v519
    %521 = vmatpush1.msra.mxu0 %v520
    %522 = vmatprep.subr.mxu0 0.0
    %v523 = vand.u32 %v28, 4294901760
    %v524 = vsub.f32 %v28, %v523
    %525 = vmatpush1.msra.mxu0 %v524
    %526 = vmatprep.subr.mxu0 0.0
    %v527 = vand.u32 %v29, 4294901760
    %v528 = vsub.f32 %v29, %v527
    %529 = vmatpush1.msra.mxu0 %v528
    %530 = vmatprep.subr.mxu0 0.0
    %v531 = vand.u32 %v30, 4294901760
    %v532 = vsub.f32 %v30, %v531
    %533 = vmatpush1.msra.mxu0 %v532
    %534 = vmatprep.subr.mxu0 0.0
    %v535 = vand.u32 %v31, 4294901760
    %v536 = vsub.f32 %v31, %v535
    %537 = vmatpush1.msra.mxu0 %v536
    %538 = vmatprep.subr.mxu0 0.0
    %v539 = vand.u32 %v32, 4294901760
    %v540 = vsub.f32 %v32, %v539
    %541 = vmatpush1.msra.mxu0 %v540
    %542 = vmatprep.subr.mxu0 0.0
    %v543 = vand.u32 %v33, 4294901760
    %v544 = vsub.f32 %v33, %v543
    %545 = vmatpush1.msra.mxu0 %v544
    %546 = vmatprep.subr.mxu0 0.0
    %v547 = vand.u32 %v34, 4294901760
    %v548 = vsub.f32 %v34, %v547
    %549 = vmatpush1.msra.mxu0 %v548
    %550 = vmatprep.subr.mxu0 0.0
    %v551 = vand.u32 %v35, 4294901760
    %v552 = vsub.f32 %v35, %v551
    %553 = vmatpush1.msra.mxu0 %v552
    %554 = vmatprep.subr.mxu0 0.0
    %v555 = vand.u32 %v36, 4294901760
    %v556 = vsub.f32 %v36, %v555
    %557 = vmatpush1.msra.mxu0 %v556
    %558 = vmatprep.subr.mxu0 0.0
    %v559 = vand.u32 %v37, 4294901760
    %v560 = vsub.f32 %v37, %v559
    %561 = vmatpush1.msra.mxu0 %v560
    %562 = vmatprep.subr.mxu0 0.0
    %v563 = vand.u32 %v38, 4294901760
    %v564 = vsub.f32 %v38, %v563
    %565 = vmatpush1.msra.mxu0 %v564
    %566 = vmatprep.subr.mxu0 0.0
    %v567 = vand.u32 %v39, 4294901760
    %v568 = vsub.f32 %v39, %v567
    %569 = vmatpush1.msra.mxu0 %v568
    %570 = vmatprep.subr.mxu0 0.0
    %v571 = vand.u32 %v40, 4294901760
    %v572 = vsub.f32 %v40, %v571
    %573 = vmatpush1.msra.mxu0 %v572
    %574 = vmatprep.subr.mxu0 0.0
    %v575 = vand.u32 %v41, 4294901760
    %v576 = vsub.f32 %v41, %v575
    %577 = vmatpush1.msra.mxu0 %v576
    %578 = vmatprep.subr.mxu0 0.0
    %v579 = vand.u32 %v42, 4294901760
    %v580 = vsub.f32 %v42, %v579
    %581 = vmatpush1.msra.mxu0 %v580
    %582 = vmatprep.subr.mxu0 0.0
    %v583 = vand.u32 %v43, 4294901760
    %v584 = vsub.f32 %v43, %v583
    %585 = vmatpush1.msra.mxu0 %v584
    %586 = vmatprep.subr.mxu0 0.0
    %v587 = vand.u32 %v44, 4294901760
    %v588 = vsub.f32 %v44, %v587
    %589 = vmatpush1.msra.mxu0 %v588
    %590 = vmatprep.subr.mxu0 0.0
    %v591 = vand.u32 %v45, 4294901760
    %v592 = vsub.f32 %v45, %v591
    %593 = vmatpush1.msra.mxu0 %v592
    %594 = vmatprep.subr.mxu0 0.0
    %v595 = vand.u32 %v46, 4294901760
    %v596 = vsub.f32 %v46, %v595
    %597 = vmatpush1.msra.mxu0 %v596
    %598 = vmatprep.subr.mxu0 0.0
    %v599 = vand.u32 %v47, 4294901760
    %v600 = vsub.f32 %v47, %v599
    %601 = vmatpush1.msra.mxu0 %v600
    %602 = vmatprep.subr.mxu0 0.0
    %v603 = vand.u32 %v48, 4294901760
    %v604 = vsub.f32 %v48, %v603
    %605 = vmatpush1.msra.mxu0 %v604
    %606 = vmatprep.subr.mxu0 0.0
    %v607 = vand.u32 %v49, 4294901760
    %v608 = vsub.f32 %v49, %v607
    %609 = vmatpush1.msra.mxu0 %v608
    %610 = vmatprep.subr.mxu0 0.0
    %v611 = vand.u32 %v50, 4294901760
    %v612 = vsub.f32 %v50, %v611
    %613 = vmatpush1.msra.mxu0 %v612
    %614 = vmatprep.subr.mxu0 0.0
    %v615 = vand.u32 %v51, 4294901760
    %v616 = vsub.f32 %v51, %v615
    %617 = vmatpush1.msra.mxu0 %v616
    %618 = vmatprep.subr.mxu0 0.0
    %v619 = vand.u32 %v52, 4294901760
    %v620 = vsub.f32 %v52, %v619
    %621 = vmatpush1.msra.mxu0 %v620
    %622 = vmatprep.subr.mxu0 0.0
    %v623 = vand.u32 %v53, 4294901760
    %v624 = vsub.f32 %v53, %v623
    %625 = vmatpush1.msra.mxu0 %v624
    %626 = vmatprep.subr.mxu0 0.0
    %v627 = vand.u32 %v54, 4294901760
    %v628 = vsub.f32 %v54, %v627
    %629 = vmatpush1.msra.mxu0 %v628
    %v630 = vand.u32 %v16, 4294901760
    %v631 = vsub.f32 %v16, %v630
    %632 = vmatprep.mubr.f32.mxu0 %v631
    %v633 = vand.u32 %v15, 4294901760
    %v634 = vsub.f32 %v15, %v633
    %635 = vmatmul.mubr.f32.gmra.mrb[0].mxu0 %v634
    %v636 = vpop.f32.mrb[0].mxu0
    %v637 = vadd.f32 %v499, %v636
    %v638 = vpop.f32.mrb[0].mxu0
    %639 = vdwg.mxu0
    %640 = vmatprep.subr.mxu0 0.0
    %v641 = vand.u32 %v23, 4294901760
    %642 = vmatpush1.msra.mxu0 %v641
    %643 = vmatprep.subr.mxu0 0.0
    %v644 = vand.u32 %v24, 4294901760
    %645 = vmatpush1.msra.mxu0 %v644
    %646 = vmatprep.subr.mxu0 0.0
    %v647 = vand.u32 %v25, 4294901760
    %648 = vmatpush1.msra.mxu0 %v647
    %649 = vmatprep.subr.mxu0 0.0
    %v650 = vand.u32 %v26, 4294901760
    %651 = vmatpush1.msra.mxu0 %v650
    %652 = vmatprep.subr.mxu0 0.0
    %v653 = vand.u32 %v27, 4294901760
    %654 = vmatpush1.msra.mxu0 %v653
    %655 = vmatprep.subr.mxu0 0.0
    %v656 = vand.u32 %v28, 4294901760
    %657 = vmatpush1.msra.mxu0 %v656
    %658 = vmatprep.subr.mxu0 0.0
    %v659 = vand.u32 %v29, 4294901760
    %660 = vmatpush1.msra.mxu0 %v659
    %661 = vmatprep.subr.mxu0 0.0
    %v662 = vand.u32 %v30, 4294901760
    %663 = vmatpush1.msra.mxu0 %v662
    %664 = vmatprep.subr.mxu0 0.0
    %v665 = vand.u32 %v31, 4294901760
    %666 = vmatpush1.msra.mxu0 %v665
    %667 = vmatprep.subr.mxu0 0.0
    %v668 = vand.u32 %v32, 4294901760
    %669 = vmatpush1.msra.mxu0 %v668
    %670 = vmatprep.subr.mxu0 0.0
    %v671 = vand.u32 %v33, 4294901760
    %672 = vmatpush1.msra.mxu0 %v671
    %673 = vmatprep.subr.mxu0 0.0
    %v674 = vand.u32 %v34, 4294901760
    %675 = vmatpush1.msra.mxu0 %v674
    %676 = vmatprep.subr.mxu0 0.0
    %v677 = vand.u32 %v35, 4294901760
    %678 = vmatpush1.msra.mxu0 %v677
    %679 = vmatprep.subr.mxu0 0.0
    %v680 = vand.u32 %v36, 4294901760
    %681 = vmatpush1.msra.mxu0 %v680
    %682 = vmatprep.subr.mxu0 0.0
    %v683 = vand.u32 %v37, 4294901760
    %684 = vmatpush1.msra.mxu0 %v683
    %685 = vmatprep.subr.mxu0 0.0
    %v686 = vand.u32 %v38, 4294901760
    %687 = vmatpush1.msra.mxu0 %v686
    %688 = vmatprep.subr.mxu0 0.0
    %v689 = vand.u32 %v39, 4294901760
    %690 = vmatpush1.msra.mxu0 %v689
    %691 = vmatprep.subr.mxu0 0.0
    %v692 = vand.u32 %v40, 4294901760
    %693 = vmatpush1.msra.mxu0 %v692
    %694 = vmatprep.subr.mxu0 0.0
    %v695 = vand.u32 %v41, 4294901760
    %696 = vmatpush1.msra.mxu0 %v695
    %697 = vmatprep.subr.mxu0 0.0
    %v698 = vand.u32 %v42, 4294901760
    %699 = vmatpush1.msra.mxu0 %v698
    %700 = vmatprep.subr.mxu0 0.0
    %v701 = vand.u32 %v43, 4294901760
    %702 = vmatpush1.msra.mxu0 %v701
    %703 = vmatprep.subr.mxu0 0.0
    %v704 = vand.u32 %v44, 4294901760
    %705 = vmatpush1.msra.mxu0 %v704
    %706 = vmatprep.subr.mxu0 0.0
    %v707 = vand.u32 %v45, 4294901760
    %708 = vmatpush1.msra.mxu0 %v707
    %709 = vmatprep.subr.mxu0 0.0
    %v710 = vand.u32 %v46, 4294901760
    %711 = vmatpush1.msra.mxu0 %v710
    %712 = vmatprep.subr.mxu0 0.0
    %v713 = vand.u32 %v47, 4294901760
    %714 = vmatpush1.msra.mxu0 %v713
    %715 = vmatprep.subr.mxu0 0.0
    %v716 = vand.u32 %v48, 4294901760
    %717 = vmatpush1.msra.mxu0 %v716
    %718 = vmatprep.subr.mxu0 0.0
    %v719 = vand.u32 %v49, 4294901760
    %720 = vmatpush1.msra.mxu0 %v719
    %721 = vmatprep.subr.mxu0 0.0
    %v722 = vand.u32 %v50, 4294901760
    %723 = vmatpush1.msra.mxu0 %v722
    %724 = vmatprep.subr.mxu0 0.0
    %v725 = vand.u32 %v51, 4294901760
    %726 = vmatpush1.msra.mxu0 %v725
    %727 = vmatprep.subr.mxu0 0.0
    %v728 = vand.u32 %v52, 4294901760
    %729 = vmatpush1.msra.mxu0 %v728
    %730 = vmatprep.subr.mxu0 0.0
    %v731 = vand.u32 %v53, 4294901760
    %732 = vmatpush1.msra.mxu0 %v731
    %733 = vmatprep.subr.mxu0 0.0
    %v734 = vand.u32 %v54, 4294901760
    %735 = vmatpush1.msra.mxu0 %v734
    %v736 = vand.u32 %v16, 4294901760
    %v737 = vsub.f32 %v16, %v736
    %v738 = vand.u32 %v737, 4294901760
    %739 = vmatprep.mubr.f32.mxu0 %v738
    %v740 = vand.u32 %v15, 4294901760
    %v741 = vsub.f32 %v15, %v740
    %v742 = vand.u32 %v741, 4294901760
    %743 = vmatmul.mubr.f32.gmra.mrb[0].mxu0 %v742
    %v744 = vpop.f32.mrb[0].mxu0
    %v745 = vadd.f32 %v637, %v744
    %v746 = vpop.f32.mrb[0].mxu0
    %747 = vdwg.mxu0
    %748 = vmatprep.subr.mxu0 0.0
    %v749 = vand.u32 %v23, 4294901760
    %v750 = vsub.f32 %v23, %v749
    %v751 = vand.u32 %v750, 4294901760
    %752 = vmatpush1.msra.mxu0 %v751
    %753 = vmatprep.subr.mxu0 0.0
    %v754 = vand.u32 %v24, 4294901760
    %v755 = vsub.f32 %v24, %v754
    %v756 = vand.u32 %v755, 4294901760
    %757 = vmatpush1.msra.mxu0 %v756
    %758 = vmatprep.subr.mxu0 0.0
    %v759 = vand.u32 %v25, 4294901760
    %v760 = vsub.f32 %v25, %v759
    %v761 = vand.u32 %v760, 4294901760
    %762 = vmatpush1.msra.mxu0 %v761
    %763 = vmatprep.subr.mxu0 0.0
    %v764 = vand.u32 %v26, 4294901760
    %v765 = vsub.f32 %v26, %v764
    %v766 = vand.u32 %v765, 4294901760
    %767 = vmatpush1.msra.mxu0 %v766
    %768 = vmatprep.subr.mxu0 0.0
    %v769 = vand.u32 %v27, 4294901760
    %v770 = vsub.f32 %v27, %v769
    %v771 = vand.u32 %v770, 4294901760
    %772 = vmatpush1.msra.mxu0 %v771
    %773 = vmatprep.subr.mxu0 0.0
    %v774 = vand.u32 %v28, 4294901760
    %v775 = vsub.f32 %v28, %v774
    %v776 = vand.u32 %v775, 4294901760
    %777 = vmatpush1.msra.mxu0 %v776
    %778 = vmatprep.subr.mxu0 0.0
    %v779 = vand.u32 %v29, 4294901760
    %v780 = vsub.f32 %v29, %v779
    %v781 = vand.u32 %v780, 4294901760
    %782 = vmatpush1.msra.mxu0 %v781
    %783 = vmatprep.subr.mxu0 0.0
    %v784 = vand.u32 %v30, 4294901760
    %v785 = vsub.f32 %v30, %v784
    %v786 = vand.u32 %v785, 4294901760
    %787 = vmatpush1.msra.mxu0 %v786
    %788 = vmatprep.subr.mxu0 0.0
    %v789 = vand.u32 %v31, 4294901760
    %v790 = vsub.f32 %v31, %v789
    %v791 = vand.u32 %v790, 4294901760
    %792 = vmatpush1.msra.mxu0 %v791
    %793 = vmatprep.subr.mxu0 0.0
    %v794 = vand.u32 %v32, 4294901760
    %v795 = vsub.f32 %v32, %v794
    %v796 = vand.u32 %v795, 4294901760
    %797 = vmatpush1.msra.mxu0 %v796
    %798 = vmatprep.subr.mxu0 0.0
    %v799 = vand.u32 %v33, 4294901760
    %v800 = vsub.f32 %v33, %v799
    %v801 = vand.u32 %v800, 4294901760
    %802 = vmatpush1.msra.mxu0 %v801
    %803 = vmatprep.subr.mxu0 0.0
    %v804 = vand.u32 %v34, 4294901760
    %v805 = vsub.f32 %v34, %v804
    %v806 = vand.u32 %v805, 4294901760
    %807 = vmatpush1.msra.mxu0 %v806
    %808 = vmatprep.subr.mxu0 0.0
    %v809 = vand.u32 %v35, 4294901760
    %v810 = vsub.f32 %v35, %v809
    %v811 = vand.u32 %v810, 4294901760
    %812 = vmatpush1.msra.mxu0 %v811
    %813 = vmatprep.subr.mxu0 0.0
    %v814 = vand.u32 %v36, 4294901760
    %v815 = vsub.f32 %v36, %v814
    %v816 = vand.u32 %v815, 4294901760
    %817 = vmatpush1.msra.mxu0 %v816
    %818 = vmatprep.subr.mxu0 0.0
    %v819 = vand.u32 %v37, 4294901760
    %v820 = vsub.f32 %v37, %v819
    %v821 = vand.u32 %v820, 4294901760
    %822 = vmatpush1.msra.mxu0 %v821
    %823 = vmatprep.subr.mxu0 0.0
    %v824 = vand.u32 %v38, 4294901760
    %v825 = vsub.f32 %v38, %v824
    %v826 = vand.u32 %v825, 4294901760
    %827 = vmatpush1.msra.mxu0 %v826
    %828 = vmatprep.subr.mxu0 0.0
    %v829 = vand.u32 %v39, 4294901760
    %v830 = vsub.f32 %v39, %v829
    %v831 = vand.u32 %v830, 4294901760
    %832 = vmatpush1.msra.mxu0 %v831
    %833 = vmatprep.subr.mxu0 0.0
    %v834 = vand.u32 %v40, 4294901760
    %v835 = vsub.f32 %v40, %v834
    %v836 = vand.u32 %v835, 4294901760
    %837 = vmatpush1.msra.mxu0 %v836
    %838 = vmatprep.subr.mxu0 0.0
    %v839 = vand.u32 %v41, 4294901760
    %v840 = vsub.f32 %v41, %v839
    %v841 = vand.u32 %v840, 4294901760
    %842 = vmatpush1.msra.mxu0 %v841
    %843 = vmatprep.subr.mxu0 0.0
    %v844 = vand.u32 %v42, 4294901760
    %v845 = vsub.f32 %v42, %v844
    %v846 = vand.u32 %v845, 4294901760
    %847 = vmatpush1.msra.mxu0 %v846
    %848 = vmatprep.subr.mxu0 0.0
    %v849 = vand.u32 %v43, 4294901760
    %v850 = vsub.f32 %v43, %v849
    %v851 = vand.u32 %v850, 4294901760
    %852 = vmatpush1.msra.mxu0 %v851
    %853 = vmatprep.subr.mxu0 0.0
    %v854 = vand.u32 %v44, 4294901760
    %v855 = vsub.f32 %v44, %v854
    %v856 = vand.u32 %v855, 4294901760
    %857 = vmatpush1.msra.mxu0 %v856
    %858 = vmatprep.subr.mxu0 0.0
    %v859 = vand.u32 %v45, 4294901760
    %v860 = vsub.f32 %v45, %v859
    %v861 = vand.u32 %v860, 4294901760
    %862 = vmatpush1.msra.mxu0 %v861
    %863 = vmatprep.subr.mxu0 0.0
    %v864 = vand.u32 %v46, 4294901760
    %v865 = vsub.f32 %v46, %v864
    %v866 = vand.u32 %v865, 4294901760
    %867 = vmatpush1.msra.mxu0 %v866
    %868 = vmatprep.subr.mxu0 0.0
    %v869 = vand.u32 %v47, 4294901760
    %v870 = vsub.f32 %v47, %v869
    %v871 = vand.u32 %v870, 4294901760
    %872 = vmatpush1.msra.mxu0 %v871
    %873 = vmatprep.subr.mxu0 0.0
    %v874 = vand.u32 %v48, 4294901760
    %v875 = vsub.f32 %v48, %v874
    %v876 = vand.u32 %v875, 4294901760
    %877 = vmatpush1.msra.mxu0 %v876
    %878 = vmatprep.subr.mxu0 0.0
    %v879 = vand.u32 %v49, 4294901760
    %v880 = vsub.f32 %v49, %v879
    %v881 = vand.u32 %v880, 4294901760
    %882 = vmatpush1.msra.mxu0 %v881
    %883 = vmatprep.subr.mxu0 0.0
    %v884 = vand.u32 %v50, 4294901760
    %v885 = vsub.f32 %v50, %v884
    %v886 = vand.u32 %v885, 4294901760
    %887 = vmatpush1.msra.mxu0 %v886
    %888 = vmatprep.subr.mxu0 0.0
    %v889 = vand.u32 %v51, 4294901760
    %v890 = vsub.f32 %v51, %v889
    %v891 = vand.u32 %v890, 4294901760
    %892 = vmatpush1.msra.mxu0 %v891
    %893 = vmatprep.subr.mxu0 0.0
    %v894 = vand.u32 %v52, 4294901760
    %v895 = vsub.f32 %v52, %v894
    %v896 = vand.u32 %v895, 4294901760
    %897 = vmatpush1.msra.mxu0 %v896
    %898 = vmatprep.subr.mxu0 0.0
    %v899 = vand.u32 %v53, 4294901760
    %v900 = vsub.f32 %v53, %v899
    %v901 = vand.u32 %v900, 4294901760
    %902 = vmatpush1.msra.mxu0 %v901
    %903 = vmatprep.subr.mxu0 0.0
    %v904 = vand.u32 %v54, 4294901760
    %v905 = vsub.f32 %v54, %v904
    %v906 = vand.u32 %v905, 4294901760
    %907 = vmatpush1.msra.mxu0 %v906
    %v908 = vand.u32 %v16, 4294901760
    %909 = vmatprep.mubr.f32.mxu0 %v908
    %v910 = vand.u32 %v15, 4294901760
    %911 = vmatmul.mubr.f32.gmra.mrb[0].mxu0 %v910
    %v912 = vpop.f32.mrb[0].mxu0
    %v913 = vadd.f32 %v745, %v912
    %v914 = vpop.f32.mrb[0].mxu0
    %915 = vdwg.mxu0
    %916 = vmatprep.subr.mxu0 0.0
    %v917 = vand.u32 %v23, 4294901760
    %918 = vmatpush1.msra.mxu0 %v917
    %919 = vmatprep.subr.mxu0 0.0
    %v920 = vand.u32 %v24, 4294901760
    %921 = vmatpush1.msra.mxu0 %v920
    %922 = vmatprep.subr.mxu0 0.0
    %v923 = vand.u32 %v25, 4294901760
    %924 = vmatpush1.msra.mxu0 %v923
    %925 = vmatprep.subr.mxu0 0.0
    %v926 = vand.u32 %v26, 4294901760
    %927 = vmatpush1.msra.mxu0 %v926
    %928 = vmatprep.subr.mxu0 0.0
    %v929 = vand.u32 %v27, 4294901760
    %930 = vmatpush1.msra.mxu0 %v929
    %931 = vmatprep.subr.mxu0 0.0
    %v932 = vand.u32 %v28, 4294901760
    %933 = vmatpush1.msra.mxu0 %v932
    %934 = vmatprep.subr.mxu0 0.0
    %v935 = vand.u32 %v29, 4294901760
    %936 = vmatpush1.msra.mxu0 %v935
    %937 = vmatprep.subr.mxu0 0.0
    %v938 = vand.u32 %v30, 4294901760
    %939 = vmatpush1.msra.mxu0 %v938
    %940 = vmatprep.subr.mxu0 0.0
    %v941 = vand.u32 %v31, 4294901760
    %942 = vmatpush1.msra.mxu0 %v941
    %943 = vmatprep.subr.mxu0 0.0
    %v944 = vand.u32 %v32, 4294901760
    %945 = vmatpush1.msra.mxu0 %v944
    %946 = vmatprep.subr.mxu0 0.0
    %v947 = vand.u32 %v33, 4294901760
    %948 = vmatpush1.msra.mxu0 %v947
    %949 = vmatprep.subr.mxu0 0.0
    %v950 = vand.u32 %v34, 4294901760
    %951 = vmatpush1.msra.mxu0 %v950
    %952 = vmatprep.subr.mxu0 0.0
    %v953 = vand.u32 %v35, 4294901760
    %954 = vmatpush1.msra.mxu0 %v953
    %955 = vmatprep.subr.mxu0 0.0
    %v956 = vand.u32 %v36, 4294901760
    %957 = vmatpush1.msra.mxu0 %v956
    %958 = vmatprep.subr.mxu0 0.0
    %v959 = vand.u32 %v37, 4294901760
    %960 = vmatpush1.msra.mxu0 %v959
    %961 = vmatprep.subr.mxu0 0.0
    %v962 = vand.u32 %v38, 4294901760
    %963 = vmatpush1.msra.mxu0 %v962
    %964 = vmatprep.subr.mxu0 0.0
    %v965 = vand.u32 %v39, 4294901760
    %966 = vmatpush1.msra.mxu0 %v965
    %967 = vmatprep.subr.mxu0 0.0
    %v968 = vand.u32 %v40, 4294901760
    %969 = vmatpush1.msra.mxu0 %v968
    %970 = vmatprep.subr.mxu0 0.0
    %v971 = vand.u32 %v41, 4294901760
    %972 = vmatpush1.msra.mxu0 %v971
    %973 = vmatprep.subr.mxu0 0.0
    %v974 = vand.u32 %v42, 4294901760
    %975 = vmatpush1.msra.mxu0 %v974
    %976 = vmatprep.subr.mxu0 0.0
    %v977 = vand.u32 %v43, 4294901760
    %978 = vmatpush1.msra.mxu0 %v977
    %979 = vmatprep.subr.mxu0 0.0
    %v980 = vand.u32 %v44, 4294901760
    %981 = vmatpush1.msra.mxu0 %v980
    %982 = vmatprep.subr.mxu0 0.0
    %v983 = vand.u32 %v45, 4294901760
    %984 = vmatpush1.msra.mxu0 %v983
    %985 = vmatprep.subr.mxu0 0.0
    %v986 = vand.u32 %v46, 4294901760
    %987 = vmatpush1.msra.mxu0 %v986
    %988 = vmatprep.subr.mxu0 0.0
    %v989 = vand.u32 %v47, 4294901760
    %990 = vmatpush1.msra.mxu0 %v989
    %991 = vmatprep.subr.mxu0 0.0
    %v992 = vand.u32 %v48, 4294901760
    %993 = vmatpush1.msra.mxu0 %v992
    %994 = vmatprep.subr.mxu0 0.0
    %v995 = vand.u32 %v49, 4294901760
    %996 = vmatpush1.msra.mxu0 %v995
    %997 = vmatprep.subr.mxu0 0.0
    %v998 = vand.u32 %v50, 4294901760
    %999 = vmatpush1.msra.mxu0 %v998
    %1000 = vmatprep.subr.mxu0 0.0
    %v1001 = vand.u32 %v51, 4294901760
    %1002 = vmatpush1.msra.mxu0 %v1001
    %1003 = vmatprep.subr.mxu0 0.0
    %v1004 = vand.u32 %v52, 4294901760
    %1005 = vmatpush1.msra.mxu0 %v1004
    %1006 = vmatprep.subr.mxu0 0.0
    %v1007 = vand.u32 %v53, 4294901760
    %1008 = vmatpush1.msra.mxu0 %v1007
    %1009 = vmatprep.subr.mxu0 0.0
    %v1010 = vand.u32 %v54, 4294901760
    %1011 = vmatpush1.msra.mxu0 %v1010
    %v1012 = vand.u32 %v16, 4294901760
    %1013 = vmatprep.mubr.f32.mxu0 %v1012
    %v1014 = vand.u32 %v15, 4294901760
    %1015 = vmatmul.mubr.f32.gmra.mrb[0].mxu0 %v1014
    %v1016 = vpop.f32.mrb[0].mxu0
    %v1017 = vadd.f32 %v913, %v1016
    %v1018 = vpop.f32.mrb[0].mxu0
    %1019 = vdwg.mxu0
    %1020 = vmatprep.subr.mxu0 0.0
    %v1021 = vand.u32 %v55, 4294901760
    %1022 = vmatpush1.msra.mxu0 %v1021
    %1023 = vmatprep.subr.mxu0 0.0
    %v1024 = vand.u32 %v56, 4294901760
    %1025 = vmatpush1.msra.mxu0 %v1024
    %1026 = vmatprep.subr.mxu0 0.0
    %v1027 = vand.u32 %v57, 4294901760
    %1028 = vmatpush1.msra.mxu0 %v1027
    %1029 = vmatprep.subr.mxu0 0.0
    %v1030 = vand.u32 %v58, 4294901760
    %1031 = vmatpush1.msra.mxu0 %v1030
    %1032 = vmatprep.subr.mxu0 0.0
    %v1033 = vand.u32 %v59, 4294901760
    %1034 = vmatpush1.msra.mxu0 %v1033
    %1035 = vmatprep.subr.mxu0 0.0
    %v1036 = vand.u32 %v60, 4294901760
    %1037 = vmatpush1.msra.mxu0 %v1036
    %1038 = vmatprep.subr.mxu0 0.0
    %v1039 = vand.u32 %v61, 4294901760
    %1040 = vmatpush1.msra.mxu0 %v1039
    %1041 = vmatprep.subr.mxu0 0.0
    %v1042 = vand.u32 %v62, 4294901760
    %1043 = vmatpush1.msra.mxu0 %v1042
    %1044 = vmatprep.subr.mxu0 0.0
    %v1045 = vand.u32 %v63, 4294901760
    %1046 = vmatpush1.msra.mxu0 %v1045
    %1047 = vmatprep.subr.mxu0 0.0
    %v1048 = vand.u32 %v64, 4294901760
    %1049 = vmatpush1.msra.mxu0 %v1048
    %1050 = vmatprep.subr.mxu0 0.0
    %v1051 = vand.u32 %v65, 4294901760
    %1052 = vmatpush1.msra.mxu0 %v1051
    %1053 = vmatprep.subr.mxu0 0.0
    %v1054 = vand.u32 %v66, 4294901760
    %1055 = vmatpush1.msra.mxu0 %v1054
    %1056 = vmatprep.subr.mxu0 0.0
    %v1057 = vand.u32 %v67, 4294901760
    %1058 = vmatpush1.msra.mxu0 %v1057
    %1059 = vmatprep.subr.mxu0 0.0
    %v1060 = vand.u32 %v68, 4294901760
    %1061 = vmatpush1.msra.mxu0 %v1060
    %1062 = vmatprep.subr.mxu0 0.0
    %v1063 = vand.u32 %v69, 4294901760
    %1064 = vmatpush1.msra.mxu0 %v1063
    %1065 = vmatprep.subr.mxu0 0.0
    %v1066 = vand.u32 %v70, 4294901760
    %1067 = vmatpush1.msra.mxu0 %v1066
    %1068 = vmatprep.subr.mxu0 0.0
    %v1069 = vand.u32 %v71, 4294901760
    %1070 = vmatpush1.msra.mxu0 %v1069
    %1071 = vmatprep.subr.mxu0 0.0
    %v1072 = vand.u32 %v72, 4294901760
    %1073 = vmatpush1.msra.mxu0 %v1072
    %1074 = vmatprep.subr.mxu0 0.0
    %v1075 = vand.u32 %v73, 4294901760
    %1076 = vmatpush1.msra.mxu0 %v1075
    %1077 = vmatprep.subr.mxu0 0.0
    %v1078 = vand.u32 %v74, 4294901760
    %1079 = vmatpush1.msra.mxu0 %v1078
    %1080 = vmatprep.subr.mxu0 0.0
    %v1081 = vand.u32 %v75, 4294901760
    %1082 = vmatpush1.msra.mxu0 %v1081
    %1083 = vmatprep.subr.mxu0 0.0
    %v1084 = vand.u32 %v76, 4294901760
    %1085 = vmatpush1.msra.mxu0 %v1084
    %1086 = vmatprep.subr.mxu0 0.0
    %v1087 = vand.u32 %v77, 4294901760
    %1088 = vmatpush1.msra.mxu0 %v1087
    %1089 = vmatprep.subr.mxu0 0.0
    %v1090 = vand.u32 %v78, 4294901760
    %1091 = vmatpush1.msra.mxu0 %v1090
    %1092 = vmatprep.subr.mxu0 0.0
    %v1093 = vand.u32 %v79, 4294901760
    %1094 = vmatpush1.msra.mxu0 %v1093
    %1095 = vmatprep.subr.mxu0 0.0
    %v1096 = vand.u32 %v80, 4294901760
    %1097 = vmatpush1.msra.mxu0 %v1096
    %1098 = vmatprep.subr.mxu0 0.0
    %v1099 = vand.u32 %v81, 4294901760
    %1100 = vmatpush1.msra.mxu0 %v1099
    %1101 = vmatprep.subr.mxu0 0.0
    %v1102 = vand.u32 %v82, 4294901760
    %1103 = vmatpush1.msra.mxu0 %v1102
    %1104 = vmatprep.subr.mxu0 0.0
    %v1105 = vand.u32 %v83, 4294901760
    %1106 = vmatpush1.msra.mxu0 %v1105
    %1107 = vmatprep.subr.mxu0 0.0
    %v1108 = vand.u32 %v84, 4294901760
    %1109 = vmatpush1.msra.mxu0 %v1108
    %1110 = vmatprep.subr.mxu0 0.0
    %v1111 = vand.u32 %v85, 4294901760
    %1112 = vmatpush1.msra.mxu0 %v1111
    %1113 = vmatprep.subr.mxu0 0.0
    %v1114 = vand.u32 %v86, 4294901760
    %1115 = vmatpush1.msra.mxu0 %v1114
    %v1116 = vand.u32 %v18, 4294901760
    %v1117 = vsub.f32 %v18, %v1116
    %v1118 = vand.u32 %v1117, 4294901760
    %v1119 = vsub.f32 %v1117, %v1118
    %v1120 = vand.u32 %v1119, 4294901760
    %1121 = vmatprep.mubr.f32.mxu0 %v1120
    %v1122 = vand.u32 %v17, 4294901760
    %v1123 = vsub.f32 %v17, %v1122
    %v1124 = vand.u32 %v1123, 4294901760
    %v1125 = vsub.f32 %v1123, %v1124
    %v1126 = vand.u32 %v1125, 4294901760
    %1127 = vmatmul.mubr.f32.gmra.mrb[0].mxu0 %v1126
    %v1128 = vpop.f32.mrb[0].mxu0
    %v1129 = vadd.f32 %v1017, %v1128
    %v1130 = vpop.f32.mrb[0].mxu0
    %1131 = vdwg.mxu0
    %1132 = vmatprep.subr.mxu0 0.0
    %v1133 = vand.u32 %v55, 4294901760
    %v1134 = vsub.f32 %v55, %v1133
    %v1135 = vand.u32 %v1134, 4294901760
    %v1136 = vsub.f32 %v1134, %v1135
    %v1137 = vand.u32 %v1136, 4294901760
    %1138 = vmatpush1.msra.mxu0 %v1137
    %1139 = vmatprep.subr.mxu0 0.0
    %v1140 = vand.u32 %v56, 4294901760
    %v1141 = vsub.f32 %v56, %v1140
    %v1142 = vand.u32 %v1141, 4294901760
    %v1143 = vsub.f32 %v1141, %v1142
    %v1144 = vand.u32 %v1143, 4294901760
    %1145 = vmatpush1.msra.mxu0 %v1144
    %1146 = vmatprep.subr.mxu0 0.0
    %v1147 = vand.u32 %v57, 4294901760
    %v1148 = vsub.f32 %v57, %v1147
    %v1149 = vand.u32 %v1148, 4294901760
    %v1150 = vsub.f32 %v1148, %v1149
    %v1151 = vand.u32 %v1150, 4294901760
    %1152 = vmatpush1.msra.mxu0 %v1151
    %1153 = vmatprep.subr.mxu0 0.0
    %v1154 = vand.u32 %v58, 4294901760
    %v1155 = vsub.f32 %v58, %v1154
    %v1156 = vand.u32 %v1155, 4294901760
    %v1157 = vsub.f32 %v1155, %v1156
    %v1158 = vand.u32 %v1157, 4294901760
    %1159 = vmatpush1.msra.mxu0 %v1158
    %1160 = vmatprep.subr.mxu0 0.0
    %v1161 = vand.u32 %v59, 4294901760
    %v1162 = vsub.f32 %v59, %v1161
    %v1163 = vand.u32 %v1162, 4294901760
    %v1164 = vsub.f32 %v1162, %v1163
    %v1165 = vand.u32 %v1164, 4294901760
    %1166 = vmatpush1.msra.mxu0 %v1165
    %1167 = vmatprep.subr.mxu0 0.0
    %v1168 = vand.u32 %v60, 4294901760
    %v1169 = vsub.f32 %v60, %v1168
    %v1170 = vand.u32 %v1169, 4294901760
    %v1171 = vsub.f32 %v1169, %v1170
    %v1172 = vand.u32 %v1171, 4294901760
    %1173 = vmatpush1.msra.mxu0 %v1172
    %1174 = vmatprep.subr.mxu0 0.0
    %v1175 = vand.u32 %v61, 4294901760
    %v1176 = vsub.f32 %v61, %v1175
    %v1177 = vand.u32 %v1176, 4294901760
    %v1178 = vsub.f32 %v1176, %v1177
    %v1179 = vand.u32 %v1178, 4294901760
    %1180 = vmatpush1.msra.mxu0 %v1179
    %1181 = vmatprep.subr.mxu0 0.0
    %v1182 = vand.u32 %v62, 4294901760
    %v1183 = vsub.f32 %v62, %v1182
    %v1184 = vand.u32 %v1183, 4294901760
    %v1185 = vsub.f32 %v1183, %v1184
    %v1186 = vand.u32 %v1185, 4294901760
    %1187 = vmatpush1.msra.mxu0 %v1186
    %1188 = vmatprep.subr.mxu0 0.0
    %v1189 = vand.u32 %v63, 4294901760
    %v1190 = vsub.f32 %v63, %v1189
    %v1191 = vand.u32 %v1190, 4294901760
    %v1192 = vsub.f32 %v1190, %v1191
    %v1193 = vand.u32 %v1192, 4294901760
    %1194 = vmatpush1.msra.mxu0 %v1193
    %1195 = vmatprep.subr.mxu0 0.0
    %v1196 = vand.u32 %v64, 4294901760
    %v1197 = vsub.f32 %v64, %v1196
    %v1198 = vand.u32 %v1197, 4294901760
    %v1199 = vsub.f32 %v1197, %v1198
    %v1200 = vand.u32 %v1199, 4294901760
    %1201 = vmatpush1.msra.mxu0 %v1200
    %1202 = vmatprep.subr.mxu0 0.0
    %v1203 = vand.u32 %v65, 4294901760
    %v1204 = vsub.f32 %v65, %v1203
    %v1205 = vand.u32 %v1204, 4294901760
    %v1206 = vsub.f32 %v1204, %v1205
    %v1207 = vand.u32 %v1206, 4294901760
    %1208 = vmatpush1.msra.mxu0 %v1207
    %1209 = vmatprep.subr.mxu0 0.0
    %v1210 = vand.u32 %v66, 4294901760
    %v1211 = vsub.f32 %v66, %v1210
    %v1212 = vand.u32 %v1211, 4294901760
    %v1213 = vsub.f32 %v1211, %v1212
    %v1214 = vand.u32 %v1213, 4294901760
    %1215 = vmatpush1.msra.mxu0 %v1214
    %1216 = vmatprep.subr.mxu0 0.0
    %v1217 = vand.u32 %v67, 4294901760
    %v1218 = vsub.f32 %v67, %v1217
    %v1219 = vand.u32 %v1218, 4294901760
    %v1220 = vsub.f32 %v1218, %v1219
    %v1221 = vand.u32 %v1220, 4294901760
    %1222 = vmatpush1.msra.mxu0 %v1221
    %1223 = vmatprep.subr.mxu0 0.0
    %v1224 = vand.u32 %v68, 4294901760
    %v1225 = vsub.f32 %v68, %v1224
    %v1226 = vand.u32 %v1225, 4294901760
    %v1227 = vsub.f32 %v1225, %v1226
    %v1228 = vand.u32 %v1227, 4294901760
    %1229 = vmatpush1.msra.mxu0 %v1228
    %1230 = vmatprep.subr.mxu0 0.0
    %v1231 = vand.u32 %v69, 4294901760
    %v1232 = vsub.f32 %v69, %v1231
    %v1233 = vand.u32 %v1232, 4294901760
    %v1234 = vsub.f32 %v1232, %v1233
    %v1235 = vand.u32 %v1234, 4294901760
    %1236 = vmatpush1.msra.mxu0 %v1235
    %1237 = vmatprep.subr.mxu0 0.0
    %v1238 = vand.u32 %v70, 4294901760
    %v1239 = vsub.f32 %v70, %v1238
    %v1240 = vand.u32 %v1239, 4294901760
    %v1241 = vsub.f32 %v1239, %v1240
    %v1242 = vand.u32 %v1241, 4294901760
    %1243 = vmatpush1.msra.mxu0 %v1242
    %1244 = vmatprep.subr.mxu0 0.0
    %v1245 = vand.u32 %v71, 4294901760
    %v1246 = vsub.f32 %v71, %v1245
    %v1247 = vand.u32 %v1246, 4294901760
    %v1248 = vsub.f32 %v1246, %v1247
    %v1249 = vand.u32 %v1248, 4294901760
    %1250 = vmatpush1.msra.mxu0 %v1249
    %1251 = vmatprep.subr.mxu0 0.0
    %v1252 = vand.u32 %v72, 4294901760
    %v1253 = vsub.f32 %v72, %v1252
    %v1254 = vand.u32 %v1253, 4294901760
    %v1255 = vsub.f32 %v1253, %v1254
    %v1256 = vand.u32 %v1255, 4294901760
    %1257 = vmatpush1.msra.mxu0 %v1256
    %1258 = vmatprep.subr.mxu0 0.0
    %v1259 = vand.u32 %v73, 4294901760
    %v1260 = vsub.f32 %v73, %v1259
    %v1261 = vand.u32 %v1260, 4294901760
    %v1262 = vsub.f32 %v1260, %v1261
    %v1263 = vand.u32 %v1262, 4294901760
    %1264 = vmatpush1.msra.mxu0 %v1263
    %1265 = vmatprep.subr.mxu0 0.0
    %v1266 = vand.u32 %v74, 4294901760
    %v1267 = vsub.f32 %v74, %v1266
    %v1268 = vand.u32 %v1267, 4294901760
    %v1269 = vsub.f32 %v1267, %v1268
    %v1270 = vand.u32 %v1269, 4294901760
    %1271 = vmatpush1.msra.mxu0 %v1270
    %1272 = vmatprep.subr.mxu0 0.0
    %v1273 = vand.u32 %v75, 4294901760
    %v1274 = vsub.f32 %v75, %v1273
    %v1275 = vand.u32 %v1274, 4294901760
    %v1276 = vsub.f32 %v1274, %v1275
    %v1277 = vand.u32 %v1276, 4294901760
    %1278 = vmatpush1.msra.mxu0 %v1277
    %1279 = vmatprep.subr.mxu0 0.0
    %v1280 = vand.u32 %v76, 4294901760
    %v1281 = vsub.f32 %v76, %v1280
    %v1282 = vand.u32 %v1281, 4294901760
    %v1283 = vsub.f32 %v1281, %v1282
    %v1284 = vand.u32 %v1283, 4294901760
    %1285 = vmatpush1.msra.mxu0 %v1284
    %1286 = vmatprep.subr.mxu0 0.0
    %v1287 = vand.u32 %v77, 4294901760
    %v1288 = vsub.f32 %v77, %v1287
    %v1289 = vand.u32 %v1288, 4294901760
    %v1290 = vsub.f32 %v1288, %v1289
    %v1291 = vand.u32 %v1290, 4294901760
    %1292 = vmatpush1.msra.mxu0 %v1291
    %1293 = vmatprep.subr.mxu0 0.0
    %v1294 = vand.u32 %v78, 4294901760
    %v1295 = vsub.f32 %v78, %v1294
    %v1296 = vand.u32 %v1295, 4294901760
    %v1297 = vsub.f32 %v1295, %v1296
    %v1298 = vand.u32 %v1297, 4294901760
    %1299 = vmatpush1.msra.mxu0 %v1298
    %1300 = vmatprep.subr.mxu0 0.0
    %v1301 = vand.u32 %v79, 4294901760
    %v1302 = vsub.f32 %v79, %v1301
    %v1303 = vand.u32 %v1302, 4294901760
    %v1304 = vsub.f32 %v1302, %v1303
    %v1305 = vand.u32 %v1304, 4294901760
    %1306 = vmatpush1.msra.mxu0 %v1305
    %1307 = vmatprep.subr.mxu0 0.0
    %v1308 = vand.u32 %v80, 4294901760
    %v1309 = vsub.f32 %v80, %v1308
    %v1310 = vand.u32 %v1309, 4294901760
    %v1311 = vsub.f32 %v1309, %v1310
    %v1312 = vand.u32 %v1311, 4294901760
    %1313 = vmatpush1.msra.mxu0 %v1312
    %1314 = vmatprep.subr.mxu0 0.0
    %v1315 = vand.u32 %v81, 4294901760
    %v1316 = vsub.f32 %v81, %v1315
    %v1317 = vand.u32 %v1316, 4294901760
    %v1318 = vsub.f32 %v1316, %v1317
    %v1319 = vand.u32 %v1318, 4294901760
    %1320 = vmatpush1.msra.mxu0 %v1319
    %1321 = vmatprep.subr.mxu0 0.0
    %v1322 = vand.u32 %v82, 4294901760
    %v1323 = vsub.f32 %v82, %v1322
    %v1324 = vand.u32 %v1323, 4294901760
    %v1325 = vsub.f32 %v1323, %v1324
    %v1326 = vand.u32 %v1325, 4294901760
    %1327 = vmatpush1.msra.mxu0 %v1326
    %1328 = vmatprep.subr.mxu0 0.0
    %v1329 = vand.u32 %v83, 4294901760
    %v1330 = vsub.f32 %v83, %v1329
    %v1331 = vand.u32 %v1330, 4294901760
    %v1332 = vsub.f32 %v1330, %v1331
    %v1333 = vand.u32 %v1332, 4294901760
    %1334 = vmatpush1.msra.mxu0 %v1333
    %1335 = vmatprep.subr.mxu0 0.0
    %v1336 = vand.u32 %v84, 4294901760
    %v1337 = vsub.f32 %v84, %v1336
    %v1338 = vand.u32 %v1337, 4294901760
    %v1339 = vsub.f32 %v1337, %v1338
    %v1340 = vand.u32 %v1339, 4294901760
    %1341 = vmatpush1.msra.mxu0 %v1340
    %1342 = vmatprep.subr.mxu0 0.0
    %v1343 = vand.u32 %v85, 4294901760
    %v1344 = vsub.f32 %v85, %v1343
    %v1345 = vand.u32 %v1344, 4294901760
    %v1346 = vsub.f32 %v1344, %v1345
    %v1347 = vand.u32 %v1346, 4294901760
    %1348 = vmatpush1.msra.mxu0 %v1347
    %1349 = vmatprep.subr.mxu0 0.0
    %v1350 = vand.u32 %v86, 4294901760
    %v1351 = vsub.f32 %v86, %v1350
    %v1352 = vand.u32 %v1351, 4294901760
    %v1353 = vsub.f32 %v1351, %v1352
    %v1354 = vand.u32 %v1353, 4294901760
    %1355 = vmatpush1.msra.mxu0 %v1354
    %v1356 = vand.u32 %v18, 4294901760
    %1357 = vmatprep.mubr.f32.mxu0 %v1356
    %v1358 = vand.u32 %v17, 4294901760
    %1359 = vmatmul.mubr.f32.gmra.mrb[0].mxu0 %v1358
    %v1360 = vpop.f32.mrb[0].mxu0
    %v1361 = vadd.f32 %v1129, %v1360
    %v1362 = vpop.f32.mrb[0].mxu0
    %1363 = vdwg.mxu0
    %1364 = vmatprep.subr.mxu0 0.0
    %v1365 = vand.u32 %v55, 4294901760
    %v1366 = vsub.f32 %v55, %v1365
    %1367 = vmatpush1.msra.mxu0 %v1366
    %1368 = vmatprep.subr.mxu0 0.0
    %v1369 = vand.u32 %v56, 4294901760
    %v1370 = vsub.f32 %v56, %v1369
    %1371 = vmatpush1.msra.mxu0 %v1370
    %1372 = vmatprep.subr.mxu0 0.0
    %v1373 = vand.u32 %v57, 4294901760
    %v1374 = vsub.f32 %v57, %v1373
    %1375 = vmatpush1.msra.mxu0 %v1374
    %1376 = vmatprep.subr.mxu0 0.0
    %v1377 = vand.u32 %v58, 4294901760
    %v1378 = vsub.f32 %v58, %v1377
    %1379 = vmatpush1.msra.mxu0 %v1378
    %1380 = vmatprep.subr.mxu0 0.0
    %v1381 = vand.u32 %v59, 4294901760
    %v1382 = vsub.f32 %v59, %v1381
    %1383 = vmatpush1.msra.mxu0 %v1382
    %1384 = vmatprep.subr.mxu0 0.0
    %v1385 = vand.u32 %v60, 4294901760
    %v1386 = vsub.f32 %v60, %v1385
    %1387 = vmatpush1.msra.mxu0 %v1386
    %1388 = vmatprep.subr.mxu0 0.0
    %v1389 = vand.u32 %v61, 4294901760
    %v1390 = vsub.f32 %v61, %v1389
    %1391 = vmatpush1.msra.mxu0 %v1390
    %1392 = vmatprep.subr.mxu0 0.0
    %v1393 = vand.u32 %v62, 4294901760
    %v1394 = vsub.f32 %v62, %v1393
    %1395 = vmatpush1.msra.mxu0 %v1394
    %1396 = vmatprep.subr.mxu0 0.0
    %v1397 = vand.u32 %v63, 4294901760
    %v1398 = vsub.f32 %v63, %v1397
    %1399 = vmatpush1.msra.mxu0 %v1398
    %1400 = vmatprep.subr.mxu0 0.0
    %v1401 = vand.u32 %v64, 4294901760
    %v1402 = vsub.f32 %v64, %v1401
    %1403 = vmatpush1.msra.mxu0 %v1402
    %1404 = vmatprep.subr.mxu0 0.0
    %v1405 = vand.u32 %v65, 4294901760
    %v1406 = vsub.f32 %v65, %v1405
    %1407 = vmatpush1.msra.mxu0 %v1406
    %1408 = vmatprep.subr.mxu0 0.0
    %v1409 = vand.u32 %v66, 4294901760
    %v1410 = vsub.f32 %v66, %v1409
    %1411 = vmatpush1.msra.mxu0 %v1410
    %1412 = vmatprep.subr.mxu0 0.0
    %v1413 = vand.u32 %v67, 4294901760
    %v1414 = vsub.f32 %v67, %v1413
    %1415 = vmatpush1.msra.mxu0 %v1414
    %1416 = vmatprep.subr.mxu0 0.0
    %v1417 = vand.u32 %v68, 4294901760
    %v1418 = vsub.f32 %v68, %v1417
    %1419 = vmatpush1.msra.mxu0 %v1418
    %1420 = vmatprep.subr.mxu0 0.0
    %v1421 = vand.u32 %v69, 4294901760
    %v1422 = vsub.f32 %v69, %v1421
    %1423 = vmatpush1.msra.mxu0 %v1422
    %1424 = vmatprep.subr.mxu0 0.0
    %v1425 = vand.u32 %v70, 4294901760
    %v1426 = vsub.f32 %v70, %v1425
    %1427 = vmatpush1.msra.mxu0 %v1426
    %1428 = vmatprep.subr.mxu0 0.0
    %v1429 = vand.u32 %v71, 4294901760
    %v1430 = vsub.f32 %v71, %v1429
    %1431 = vmatpush1.msra.mxu0 %v1430
    %1432 = vmatprep.subr.mxu0 0.0
    %v1433 = vand.u32 %v72, 4294901760
    %v1434 = vsub.f32 %v72, %v1433
    %1435 = vmatpush1.msra.mxu0 %v1434
    %1436 = vmatprep.subr.mxu0 0.0
    %v1437 = vand.u32 %v73, 4294901760
    %v1438 = vsub.f32 %v73, %v1437
    %1439 = vmatpush1.msra.mxu0 %v1438
    %1440 = vmatprep.subr.mxu0 0.0
    %v1441 = vand.u32 %v74, 4294901760
    %v1442 = vsub.f32 %v74, %v1441
    %1443 = vmatpush1.msra.mxu0 %v1442
    %1444 = vmatprep.subr.mxu0 0.0
    %v1445 = vand.u32 %v75, 4294901760
    %v1446 = vsub.f32 %v75, %v1445
    %1447 = vmatpush1.msra.mxu0 %v1446
    %1448 = vmatprep.subr.mxu0 0.0
    %v1449 = vand.u32 %v76, 4294901760
    %v1450 = vsub.f32 %v76, %v1449
    %1451 = vmatpush1.msra.mxu0 %v1450
    %1452 = vmatprep.subr.mxu0 0.0
    %v1453 = vand.u32 %v77, 4294901760
    %v1454 = vsub.f32 %v77, %v1453
    %1455 = vmatpush1.msra.mxu0 %v1454
    %1456 = vmatprep.subr.mxu0 0.0
    %v1457 = vand.u32 %v78, 4294901760
    %v1458 = vsub.f32 %v78, %v1457
    %1459 = vmatpush1.msra.mxu0 %v1458
    %1460 = vmatprep.subr.mxu0 0.0
    %v1461 = vand.u32 %v79, 4294901760
    %v1462 = vsub.f32 %v79, %v1461
    %1463 = vmatpush1.msra.mxu0 %v1462
    %1464 = vmatprep.subr.mxu0 0.0
    %v1465 = vand.u32 %v80, 4294901760
    %v1466 = vsub.f32 %v80, %v1465
    %1467 = vmatpush1.msra.mxu0 %v1466
    %1468 = vmatprep.subr.mxu0 0.0
    %v1469 = vand.u32 %v81, 4294901760
    %v1470 = vsub.f32 %v81, %v1469
    %1471 = vmatpush1.msra.mxu0 %v1470
    %1472 = vmatprep.subr.mxu0 0.0
    %v1473 = vand.u32 %v82, 4294901760
    %v1474 = vsub.f32 %v82, %v1473
    %1475 = vmatpush1.msra.mxu0 %v1474
    %1476 = vmatprep.subr.mxu0 0.0
    %v1477 = vand.u32 %v83, 4294901760
    %v1478 = vsub.f32 %v83, %v1477
    %1479 = vmatpush1.msra.mxu0 %v1478
    %1480 = vmatprep.subr.mxu0 0.0
    %v1481 = vand.u32 %v84, 4294901760
    %v1482 = vsub.f32 %v84, %v1481
    %1483 = vmatpush1.msra.mxu0 %v1482
    %1484 = vmatprep.subr.mxu0 0.0
    %v1485 = vand.u32 %v85, 4294901760
    %v1486 = vsub.f32 %v85, %v1485
    %1487 = vmatpush1.msra.mxu0 %v1486
    %1488 = vmatprep.subr.mxu0 0.0
    %v1489 = vand.u32 %v86, 4294901760
    %v1490 = vsub.f32 %v86, %v1489
    %1491 = vmatpush1.msra.mxu0 %v1490
    %v1492 = vand.u32 %v18, 4294901760
    %v1493 = vsub.f32 %v18, %v1492
    %1494 = vmatprep.mubr.f32.mxu0 %v1493
    %v1495 = vand.u32 %v17, 4294901760
    %v1496 = vsub.f32 %v17, %v1495
    %1497 = vmatmul.mubr.f32.gmra.mrb[0].mxu0 %v1496
    %v1498 = vpop.f32.mrb[0].mxu0
    %v1499 = vadd.f32 %v1361, %v1498
    %v1500 = vpop.f32.mrb[0].mxu0
    %1501 = vdwg.mxu0
    %1502 = vmatprep.subr.mxu0 0.0
    %v1503 = vand.u32 %v55, 4294901760
    %1504 = vmatpush1.msra.mxu0 %v1503
    %1505 = vmatprep.subr.mxu0 0.0
    %v1506 = vand.u32 %v56, 4294901760
    %1507 = vmatpush1.msra.mxu0 %v1506
    %1508 = vmatprep.subr.mxu0 0.0
    %v1509 = vand.u32 %v57, 4294901760
    %1510 = vmatpush1.msra.mxu0 %v1509
    %1511 = vmatprep.subr.mxu0 0.0
    %v1512 = vand.u32 %v58, 4294901760
    %1513 = vmatpush1.msra.mxu0 %v1512
    %1514 = vmatprep.subr.mxu0 0.0
    %v1515 = vand.u32 %v59, 4294901760
    %1516 = vmatpush1.msra.mxu0 %v1515
    %1517 = vmatprep.subr.mxu0 0.0
    %v1518 = vand.u32 %v60, 4294901760
    %1519 = vmatpush1.msra.mxu0 %v1518
    %1520 = vmatprep.subr.mxu0 0.0
    %v1521 = vand.u32 %v61, 4294901760
    %1522 = vmatpush1.msra.mxu0 %v1521
    %1523 = vmatprep.subr.mxu0 0.0
    %v1524 = vand.u32 %v62, 4294901760
    %1525 = vmatpush1.msra.mxu0 %v1524
    %1526 = vmatprep.subr.mxu0 0.0
    %v1527 = vand.u32 %v63, 4294901760
    %1528 = vmatpush1.msra.mxu0 %v1527
    %1529 = vmatprep.subr.mxu0 0.0
    %v1530 = vand.u32 %v64, 4294901760
    %1531 = vmatpush1.msra.mxu0 %v1530
    %1532 = vmatprep.subr.mxu0 0.0
    %v1533 = vand.u32 %v65, 4294901760
    %1534 = vmatpush1.msra.mxu0 %v1533
    %1535 = vmatprep.subr.mxu0 0.0
    %v1536 = vand.u32 %v66, 4294901760
    %1537 = vmatpush1.msra.mxu0 %v1536
    %1538 = vmatprep.subr.mxu0 0.0
    %v1539 = vand.u32 %v67, 4294901760
    %1540 = vmatpush1.msra.mxu0 %v1539
    %1541 = vmatprep.subr.mxu0 0.0
    %v1542 = vand.u32 %v68, 4294901760
    %1543 = vmatpush1.msra.mxu0 %v1542
    %1544 = vmatprep.subr.mxu0 0.0
    %v1545 = vand.u32 %v69, 4294901760
    %1546 = vmatpush1.msra.mxu0 %v1545
    %1547 = vmatprep.subr.mxu0 0.0
    %v1548 = vand.u32 %v70, 4294901760
    %1549 = vmatpush1.msra.mxu0 %v1548
    %1550 = vmatprep.subr.mxu0 0.0
    %v1551 = vand.u32 %v71, 4294901760
    %1552 = vmatpush1.msra.mxu0 %v1551
    %1553 = vmatprep.subr.mxu0 0.0
    %v1554 = vand.u32 %v72, 4294901760
    %1555 = vmatpush1.msra.mxu0 %v1554
    %1556 = vmatprep.subr.mxu0 0.0
    %v1557 = vand.u32 %v73, 4294901760
    %1558 = vmatpush1.msra.mxu0 %v1557
    %1559 = vmatprep.subr.mxu0 0.0
    %v1560 = vand.u32 %v74, 4294901760
    %1561 = vmatpush1.msra.mxu0 %v1560
    %1562 = vmatprep.subr.mxu0 0.0
    %v1563 = vand.u32 %v75, 4294901760
    %1564 = vmatpush1.msra.mxu0 %v1563
    %1565 = vmatprep.subr.mxu0 0.0
    %v1566 = vand.u32 %v76, 4294901760
    %1567 = vmatpush1.msra.mxu0 %v1566
    %1568 = vmatprep.subr.mxu0 0.0
    %v1569 = vand.u32 %v77, 4294901760
    %1570 = vmatpush1.msra.mxu0 %v1569
    %1571 = vmatprep.subr.mxu0 0.0
    %v1572 = vand.u32 %v78, 4294901760
    %1573 = vmatpush1.msra.mxu0 %v1572
    %1574 = vmatprep.subr.mxu0 0.0
    %v1575 = vand.u32 %v79, 4294901760
    %1576 = vmatpush1.msra.mxu0 %v1575
    %1577 = vmatprep.subr.mxu0 0.0
    %v1578 = vand.u32 %v80, 4294901760
    %1579 = vmatpush1.msra.mxu0 %v1578
    %1580 = vmatprep.subr.mxu0 0.0
    %v1581 = vand.u32 %v81, 4294901760
    %1582 = vmatpush1.msra.mxu0 %v1581
    %1583 = vmatprep.subr.mxu0 0.0
    %v1584 = vand.u32 %v82, 4294901760
    %1585 = vmatpush1.msra.mxu0 %v1584
    %1586 = vmatprep.subr.mxu0 0.0
    %v1587 = vand.u32 %v83, 4294901760
    %1588 = vmatpush1.msra.mxu0 %v1587
    %1589 = vmatprep.subr.mxu0 0.0
    %v1590 = vand.u32 %v84, 4294901760
    %1591 = vmatpush1.msra.mxu0 %v1590
    %1592 = vmatprep.subr.mxu0 0.0
    %v1593 = vand.u32 %v85, 4294901760
    %1594 = vmatpush1.msra.mxu0 %v1593
    %1595 = vmatprep.subr.mxu0 0.0
    %v1596 = vand.u32 %v86, 4294901760
    %1597 = vmatpush1.msra.mxu0 %v1596
    %v1598 = vand.u32 %v18, 4294901760
    %v1599 = vsub.f32 %v18, %v1598
    %v1600 = vand.u32 %v1599, 4294901760
    %1601 = vmatprep.mubr.f32.mxu0 %v1600
    %v1602 = vand.u32 %v17, 4294901760
    %v1603 = vsub.f32 %v17, %v1602
    %v1604 = vand.u32 %v1603, 4294901760
    %1605 = vmatmul.mubr.f32.gmra.mrb[0].mxu0 %v1604
    %v1606 = vpop.f32.mrb[0].mxu0
    %v1607 = vadd.f32 %v1499, %v1606
    %v1608 = vpop.f32.mrb[0].mxu0
    %1609 = vdwg.mxu0
    %1610 = vmatprep.subr.mxu0 0.0
    %v1611 = vand.u32 %v55, 4294901760
    %v1612 = vsub.f32 %v55, %v1611
    %v1613 = vand.u32 %v1612, 4294901760
    %1614 = vmatpush1.msra.mxu0 %v1613
    %1615 = vmatprep.subr.mxu0 0.0
    %v1616 = vand.u32 %v56, 4294901760
    %v1617 = vsub.f32 %v56, %v1616
    %v1618 = vand.u32 %v1617, 4294901760
    %1619 = vmatpush1.msra.mxu0 %v1618
    %1620 = vmatprep.subr.mxu0 0.0
    %v1621 = vand.u32 %v57, 4294901760
    %v1622 = vsub.f32 %v57, %v1621
    %v1623 = vand.u32 %v1622, 4294901760
    %1624 = vmatpush1.msra.mxu0 %v1623
    %1625 = vmatprep.subr.mxu0 0.0
    %v1626 = vand.u32 %v58, 4294901760
    %v1627 = vsub.f32 %v58, %v1626
    %v1628 = vand.u32 %v1627, 4294901760
    %1629 = vmatpush1.msra.mxu0 %v1628
    %1630 = vmatprep.subr.mxu0 0.0
    %v1631 = vand.u32 %v59, 4294901760
    %v1632 = vsub.f32 %v59, %v1631
    %v1633 = vand.u32 %v1632, 4294901760
    %1634 = vmatpush1.msra.mxu0 %v1633
    %1635 = vmatprep.subr.mxu0 0.0
    %v1636 = vand.u32 %v60, 4294901760
    %v1637 = vsub.f32 %v60, %v1636
    %v1638 = vand.u32 %v1637, 4294901760
    %1639 = vmatpush1.msra.mxu0 %v1638
    %1640 = vmatprep.subr.mxu0 0.0
    %v1641 = vand.u32 %v61, 4294901760
    %v1642 = vsub.f32 %v61, %v1641
    %v1643 = vand.u32 %v1642, 4294901760
    %1644 = vmatpush1.msra.mxu0 %v1643
    %1645 = vmatprep.subr.mxu0 0.0
    %v1646 = vand.u32 %v62, 4294901760
    %v1647 = vsub.f32 %v62, %v1646
    %v1648 = vand.u32 %v1647, 4294901760
    %1649 = vmatpush1.msra.mxu0 %v1648
    %1650 = vmatprep.subr.mxu0 0.0
    %v1651 = vand.u32 %v63, 4294901760
    %v1652 = vsub.f32 %v63, %v1651
    %v1653 = vand.u32 %v1652, 4294901760
    %1654 = vmatpush1.msra.mxu0 %v1653
    %1655 = vmatprep.subr.mxu0 0.0
    %v1656 = vand.u32 %v64, 4294901760
    %v1657 = vsub.f32 %v64, %v1656
    %v1658 = vand.u32 %v1657, 4294901760
    %1659 = vmatpush1.msra.mxu0 %v1658
    %1660 = vmatprep.subr.mxu0 0.0
    %v1661 = vand.u32 %v65, 4294901760
    %v1662 = vsub.f32 %v65, %v1661
    %v1663 = vand.u32 %v1662, 4294901760
    %1664 = vmatpush1.msra.mxu0 %v1663
    %1665 = vmatprep.subr.mxu0 0.0
    %v1666 = vand.u32 %v66, 4294901760
    %v1667 = vsub.f32 %v66, %v1666
    %v1668 = vand.u32 %v1667, 4294901760
    %1669 = vmatpush1.msra.mxu0 %v1668
    %1670 = vmatprep.subr.mxu0 0.0
    %v1671 = vand.u32 %v67, 4294901760
    %v1672 = vsub.f32 %v67, %v1671
    %v1673 = vand.u32 %v1672, 4294901760
    %1674 = vmatpush1.msra.mxu0 %v1673
    %1675 = vmatprep.subr.mxu0 0.0
    %v1676 = vand.u32 %v68, 4294901760
    %v1677 = vsub.f32 %v68, %v1676
    %v1678 = vand.u32 %v1677, 4294901760
    %1679 = vmatpush1.msra.mxu0 %v1678
    %1680 = vmatprep.subr.mxu0 0.0
    %v1681 = vand.u32 %v69, 4294901760
    %v1682 = vsub.f32 %v69, %v1681
    %v1683 = vand.u32 %v1682, 4294901760
    %1684 = vmatpush1.msra.mxu0 %v1683
    %1685 = vmatprep.subr.mxu0 0.0
    %v1686 = vand.u32 %v70, 4294901760
    %v1687 = vsub.f32 %v70, %v1686
    %v1688 = vand.u32 %v1687, 4294901760
    %1689 = vmatpush1.msra.mxu0 %v1688
    %1690 = vmatprep.subr.mxu0 0.0
    %v1691 = vand.u32 %v71, 4294901760
    %v1692 = vsub.f32 %v71, %v1691
    %v1693 = vand.u32 %v1692, 4294901760
    %1694 = vmatpush1.msra.mxu0 %v1693
    %1695 = vmatprep.subr.mxu0 0.0
    %v1696 = vand.u32 %v72, 4294901760
    %v1697 = vsub.f32 %v72, %v1696
    %v1698 = vand.u32 %v1697, 4294901760
    %1699 = vmatpush1.msra.mxu0 %v1698
    %1700 = vmatprep.subr.mxu0 0.0
    %v1701 = vand.u32 %v73, 4294901760
    %v1702 = vsub.f32 %v73, %v1701
    %v1703 = vand.u32 %v1702, 4294901760
    %1704 = vmatpush1.msra.mxu0 %v1703
    %1705 = vmatprep.subr.mxu0 0.0
    %v1706 = vand.u32 %v74, 4294901760
    %v1707 = vsub.f32 %v74, %v1706
    %v1708 = vand.u32 %v1707, 4294901760
    %1709 = vmatpush1.msra.mxu0 %v1708
    %1710 = vmatprep.subr.mxu0 0.0
    %v1711 = vand.u32 %v75, 4294901760
    %v1712 = vsub.f32 %v75, %v1711
    %v1713 = vand.u32 %v1712, 4294901760
    %1714 = vmatpush1.msra.mxu0 %v1713
    %1715 = vmatprep.subr.mxu0 0.0
    %v1716 = vand.u32 %v76, 4294901760
    %v1717 = vsub.f32 %v76, %v1716
    %v1718 = vand.u32 %v1717, 4294901760
    %1719 = vmatpush1.msra.mxu0 %v1718
    %1720 = vmatprep.subr.mxu0 0.0
    %v1721 = vand.u32 %v77, 4294901760
    %v1722 = vsub.f32 %v77, %v1721
    %v1723 = vand.u32 %v1722, 4294901760
    %1724 = vmatpush1.msra.mxu0 %v1723
    %1725 = vmatprep.subr.mxu0 0.0
    %v1726 = vand.u32 %v78, 4294901760
    %v1727 = vsub.f32 %v78, %v1726
    %v1728 = vand.u32 %v1727, 4294901760
    %1729 = vmatpush1.msra.mxu0 %v1728
    %1730 = vmatprep.subr.mxu0 0.0
    %v1731 = vand.u32 %v79, 4294901760
    %v1732 = vsub.f32 %v79, %v1731
    %v1733 = vand.u32 %v1732, 4294901760
    %1734 = vmatpush1.msra.mxu0 %v1733
    %1735 = vmatprep.subr.mxu0 0.0
    %v1736 = vand.u32 %v80, 4294901760
    %v1737 = vsub.f32 %v80, %v1736
    %v1738 = vand.u32 %v1737, 4294901760
    %1739 = vmatpush1.msra.mxu0 %v1738
    %1740 = vmatprep.subr.mxu0 0.0
    %v1741 = vand.u32 %v81, 4294901760
    %v1742 = vsub.f32 %v81, %v1741
    %v1743 = vand.u32 %v1742, 4294901760
    %1744 = vmatpush1.msra.mxu0 %v1743
    %1745 = vmatprep.subr.mxu0 0.0
    %v1746 = vand.u32 %v82, 4294901760
    %v1747 = vsub.f32 %v82, %v1746
    %v1748 = vand.u32 %v1747, 4294901760
    %1749 = vmatpush1.msra.mxu0 %v1748
    %1750 = vmatprep.subr.mxu0 0.0
    %v1751 = vand.u32 %v83, 4294901760
    %v1752 = vsub.f32 %v83, %v1751
    %v1753 = vand.u32 %v1752, 4294901760
    %1754 = vmatpush1.msra.mxu0 %v1753
    %1755 = vmatprep.subr.mxu0 0.0
    %v1756 = vand.u32 %v84, 4294901760
    %v1757 = vsub.f32 %v84, %v1756
    %v1758 = vand.u32 %v1757, 4294901760
    %1759 = vmatpush1.msra.mxu0 %v1758
    %1760 = vmatprep.subr.mxu0 0.0
    %v1761 = vand.u32 %v85, 4294901760
    %v1762 = vsub.f32 %v85, %v1761
    %v1763 = vand.u32 %v1762, 4294901760
    %1764 = vmatpush1.msra.mxu0 %v1763
    %1765 = vmatprep.subr.mxu0 0.0
    %v1766 = vand.u32 %v86, 4294901760
    %v1767 = vsub.f32 %v86, %v1766
    %v1768 = vand.u32 %v1767, 4294901760
    %1769 = vmatpush1.msra.mxu0 %v1768
    %v1770 = vand.u32 %v18, 4294901760
    %1771 = vmatprep.mubr.f32.mxu0 %v1770
    %v1772 = vand.u32 %v17, 4294901760
    %1773 = vmatmul.mubr.f32.gmra.mrb[0].mxu0 %v1772
    %v1774 = vpop.f32.mrb[0].mxu0
    %v1775 = vadd.f32 %v1607, %v1774
    %v1776 = vpop.f32.mrb[0].mxu0
    %1777 = vdwg.mxu0
    %1778 = vmatprep.subr.mxu0 0.0
    %v1779 = vand.u32 %v55, 4294901760
    %1780 = vmatpush1.msra.mxu0 %v1779
    %1781 = vmatprep.subr.mxu0 0.0
    %v1782 = vand.u32 %v56, 4294901760
    %1783 = vmatpush1.msra.mxu0 %v1782
    %1784 = vmatprep.subr.mxu0 0.0
    %v1785 = vand.u32 %v57, 4294901760
    %1786 = vmatpush1.msra.mxu0 %v1785
    %1787 = vmatprep.subr.mxu0 0.0
    %v1788 = vand.u32 %v58, 4294901760
    %1789 = vmatpush1.msra.mxu0 %v1788
    %1790 = vmatprep.subr.mxu0 0.0
    %v1791 = vand.u32 %v59, 4294901760
    %1792 = vmatpush1.msra.mxu0 %v1791
    %1793 = vmatprep.subr.mxu0 0.0
    %v1794 = vand.u32 %v60, 4294901760
    %1795 = vmatpush1.msra.mxu0 %v1794
    %1796 = vmatprep.subr.mxu0 0.0
    %v1797 = vand.u32 %v61, 4294901760
    %1798 = vmatpush1.msra.mxu0 %v1797
    %1799 = vmatprep.subr.mxu0 0.0
    %v1800 = vand.u32 %v62, 4294901760
    %1801 = vmatpush1.msra.mxu0 %v1800
    %1802 = vmatprep.subr.mxu0 0.0
    %v1803 = vand.u32 %v63, 4294901760
    %1804 = vmatpush1.msra.mxu0 %v1803
    %1805 = vmatprep.subr.mxu0 0.0
    %v1806 = vand.u32 %v64, 4294901760
    %1807 = vmatpush1.msra.mxu0 %v1806
    %1808 = vmatprep.subr.mxu0 0.0
    %v1809 = vand.u32 %v65, 4294901760
    %1810 = vmatpush1.msra.mxu0 %v1809
    %1811 = vmatprep.subr.mxu0 0.0
    %v1812 = vand.u32 %v66, 4294901760
    %1813 = vmatpush1.msra.mxu0 %v1812
    %1814 = vmatprep.subr.mxu0 0.0
    %v1815 = vand.u32 %v67, 4294901760
    %1816 = vmatpush1.msra.mxu0 %v1815
    %1817 = vmatprep.subr.mxu0 0.0
    %v1818 = vand.u32 %v68, 4294901760
    %1819 = vmatpush1.msra.mxu0 %v1818
    %1820 = vmatprep.subr.mxu0 0.0
    %v1821 = vand.u32 %v69, 4294901760
    %1822 = vmatpush1.msra.mxu0 %v1821
    %1823 = vmatprep.subr.mxu0 0.0
    %v1824 = vand.u32 %v70, 4294901760
    %1825 = vmatpush1.msra.mxu0 %v1824
    %1826 = vmatprep.subr.mxu0 0.0
    %v1827 = vand.u32 %v71, 4294901760
    %1828 = vmatpush1.msra.mxu0 %v1827
    %1829 = vmatprep.subr.mxu0 0.0
    %v1830 = vand.u32 %v72, 4294901760
    %1831 = vmatpush1.msra.mxu0 %v1830
    %1832 = vmatprep.subr.mxu0 0.0
    %v1833 = vand.u32 %v73, 4294901760
    %1834 = vmatpush1.msra.mxu0 %v1833
    %1835 = vmatprep.subr.mxu0 0.0
    %v1836 = vand.u32 %v74, 4294901760
    %1837 = vmatpush1.msra.mxu0 %v1836
    %1838 = vmatprep.subr.mxu0 0.0
    %v1839 = vand.u32 %v75, 4294901760
    %1840 = vmatpush1.msra.mxu0 %v1839
    %1841 = vmatprep.subr.mxu0 0.0
    %v1842 = vand.u32 %v76, 4294901760
    %1843 = vmatpush1.msra.mxu0 %v1842
    %1844 = vmatprep.subr.mxu0 0.0
    %v1845 = vand.u32 %v77, 4294901760
    %1846 = vmatpush1.msra.mxu0 %v1845
    %1847 = vmatprep.subr.mxu0 0.0
    %v1848 = vand.u32 %v78, 4294901760
    %1849 = vmatpush1.msra.mxu0 %v1848
    %1850 = vmatprep.subr.mxu0 0.0
    %v1851 = vand.u32 %v79, 4294901760
    %1852 = vmatpush1.msra.mxu0 %v1851
    %1853 = vmatprep.subr.mxu0 0.0
    %v1854 = vand.u32 %v80, 4294901760
    %1855 = vmatpush1.msra.mxu0 %v1854
    %1856 = vmatprep.subr.mxu0 0.0
    %v1857 = vand.u32 %v81, 4294901760
    %1858 = vmatpush1.msra.mxu0 %v1857
    %1859 = vmatprep.subr.mxu0 0.0
    %v1860 = vand.u32 %v82, 4294901760
    %1861 = vmatpush1.msra.mxu0 %v1860
    %1862 = vmatprep.subr.mxu0 0.0
    %v1863 = vand.u32 %v83, 4294901760
    %1864 = vmatpush1.msra.mxu0 %v1863
    %1865 = vmatprep.subr.mxu0 0.0
    %v1866 = vand.u32 %v84, 4294901760
    %1867 = vmatpush1.msra.mxu0 %v1866
    %1868 = vmatprep.subr.mxu0 0.0
    %v1869 = vand.u32 %v85, 4294901760
    %1870 = vmatpush1.msra.mxu0 %v1869
    %1871 = vmatprep.subr.mxu0 0.0
    %v1872 = vand.u32 %v86, 4294901760
    %1873 = vmatpush1.msra.mxu0 %v1872
    %v1874 = vand.u32 %v18, 4294901760
    %1875 = vmatprep.mubr.f32.mxu0 %v1874
    %v1876 = vand.u32 %v17, 4294901760
    %1877 = vmatmul.mubr.f32.gmra.mrb[0].mxu0 %v1876
    %v1878 = vpop.f32.mrb[0].mxu0
    %v1879 = vadd.f32 %v1775, %v1878
    %v1880 = vpop.f32.mrb[0].mxu0
    %1881 = vdwg.mxu0
    %1882 = vmatprep.subr.mxu0 0.0
    %v1883 = vand.u32 %v87, 4294901760
    %1884 = vmatpush1.msra.mxu0 %v1883
    %1885 = vmatprep.subr.mxu0 0.0
    %v1886 = vand.u32 %v88, 4294901760
    %1887 = vmatpush1.msra.mxu0 %v1886
    %1888 = vmatprep.subr.mxu0 0.0
    %v1889 = vand.u32 %v89, 4294901760
    %1890 = vmatpush1.msra.mxu0 %v1889
    %1891 = vmatprep.subr.mxu0 0.0
    %v1892 = vand.u32 %v90, 4294901760
    %1893 = vmatpush1.msra.mxu0 %v1892
    %1894 = vmatprep.subr.mxu0 0.0
    %v1895 = vand.u32 %v91, 4294901760
    %1896 = vmatpush1.msra.mxu0 %v1895
    %1897 = vmatprep.subr.mxu0 0.0
    %v1898 = vand.u32 %v92, 4294901760
    %1899 = vmatpush1.msra.mxu0 %v1898
    %1900 = vmatprep.subr.mxu0 0.0
    %v1901 = vand.u32 %v93, 4294901760
    %1902 = vmatpush1.msra.mxu0 %v1901
    %1903 = vmatprep.subr.mxu0 0.0
    %v1904 = vand.u32 %v94, 4294901760
    %1905 = vmatpush1.msra.mxu0 %v1904
    %1906 = vmatprep.subr.mxu0 0.0
    %v1907 = vand.u32 %v95, 4294901760
    %1908 = vmatpush1.msra.mxu0 %v1907
    %1909 = vmatprep.subr.mxu0 0.0
    %v1910 = vand.u32 %v96, 4294901760
    %1911 = vmatpush1.msra.mxu0 %v1910
    %1912 = vmatprep.subr.mxu0 0.0
    %v1913 = vand.u32 %v97, 4294901760
    %1914 = vmatpush1.msra.mxu0 %v1913
    %1915 = vmatprep.subr.mxu0 0.0
    %v1916 = vand.u32 %v98, 4294901760
    %1917 = vmatpush1.msra.mxu0 %v1916
    %1918 = vmatprep.subr.mxu0 0.0
    %v1919 = vand.u32 %v99, 4294901760
    %1920 = vmatpush1.msra.mxu0 %v1919
    %1921 = vmatprep.subr.mxu0 0.0
    %v1922 = vand.u32 %v100, 4294901760
    %1923 = vmatpush1.msra.mxu0 %v1922
    %1924 = vmatprep.subr.mxu0 0.0
    %v1925 = vand.u32 %v101, 4294901760
    %1926 = vmatpush1.msra.mxu0 %v1925
    %1927 = vmatprep.subr.mxu0 0.0
    %v1928 = vand.u32 %v102, 4294901760
    %1929 = vmatpush1.msra.mxu0 %v1928
    %1930 = vmatprep.subr.mxu0 0.0
    %v1931 = vand.u32 %v103, 4294901760
    %1932 = vmatpush1.msra.mxu0 %v1931
    %1933 = vmatprep.subr.mxu0 0.0
    %v1934 = vand.u32 %v104, 4294901760
    %1935 = vmatpush1.msra.mxu0 %v1934
    %1936 = vmatprep.subr.mxu0 0.0
    %v1937 = vand.u32 %v105, 4294901760
    %1938 = vmatpush1.msra.mxu0 %v1937
    %1939 = vmatprep.subr.mxu0 0.0
    %v1940 = vand.u32 %v106, 4294901760
    %1941 = vmatpush1.msra.mxu0 %v1940
    %1942 = vmatprep.subr.mxu0 0.0
    %v1943 = vand.u32 %v107, 4294901760
    %1944 = vmatpush1.msra.mxu0 %v1943
    %1945 = vmatprep.subr.mxu0 0.0
    %v1946 = vand.u32 %v108, 4294901760
    %1947 = vmatpush1.msra.mxu0 %v1946
    %1948 = vmatprep.subr.mxu0 0.0
    %v1949 = vand.u32 %v109, 4294901760
    %1950 = vmatpush1.msra.mxu0 %v1949
    %1951 = vmatprep.subr.mxu0 0.0
    %v1952 = vand.u32 %v110, 4294901760
    %1953 = vmatpush1.msra.mxu0 %v1952
    %1954 = vmatprep.subr.mxu0 0.0
    %v1955 = vand.u32 %v111, 4294901760
    %1956 = vmatpush1.msra.mxu0 %v1955
    %1957 = vmatprep.subr.mxu0 0.0
    %v1958 = vand.u32 %v112, 4294901760
    %1959 = vmatpush1.msra.mxu0 %v1958
    %1960 = vmatprep.subr.mxu0 0.0
    %v1961 = vand.u32 %v113, 4294901760
    %1962 = vmatpush1.msra.mxu0 %v1961
    %1963 = vmatprep.subr.mxu0 0.0
    %v1964 = vand.u32 %v114, 4294901760
    %1965 = vmatpush1.msra.mxu0 %v1964
    %1966 = vmatprep.subr.mxu0 0.0
    %v1967 = vand.u32 %v115, 4294901760
    %1968 = vmatpush1.msra.mxu0 %v1967
    %1969 = vmatprep.subr.mxu0 0.0
    %v1970 = vand.u32 %v116, 4294901760
    %1971 = vmatpush1.msra.mxu0 %v1970
    %1972 = vmatprep.subr.mxu0 0.0
    %v1973 = vand.u32 %v117, 4294901760
    %1974 = vmatpush1.msra.mxu0 %v1973
    %1975 = vmatprep.subr.mxu0 0.0
    %v1976 = vand.u32 %v118, 4294901760
    %1977 = vmatpush1.msra.mxu0 %v1976
    %v1978 = vand.u32 %v20, 4294901760
    %v1979 = vsub.f32 %v20, %v1978
    %v1980 = vand.u32 %v1979, 4294901760
    %v1981 = vsub.f32 %v1979, %v1980
    %v1982 = vand.u32 %v1981, 4294901760
    %1983 = vmatprep.mubr.f32.mxu0 %v1982
    %v1984 = vand.u32 %v19, 4294901760
    %v1985 = vsub.f32 %v19, %v1984
    %v1986 = vand.u32 %v1985, 4294901760
    %v1987 = vsub.f32 %v1985, %v1986
    %v1988 = vand.u32 %v1987, 4294901760
    %1989 = vmatmul.mubr.f32.gmra.mrb[0].mxu0 %v1988
    %v1990 = vpop.f32.mrb[0].mxu0
    %v1991 = vadd.f32 %v1879, %v1990
    %v1992 = vpop.f32.mrb[0].mxu0
    %1993 = vdwg.mxu0
    %1994 = vmatprep.subr.mxu0 0.0
    %v1995 = vand.u32 %v87, 4294901760
    %v1996 = vsub.f32 %v87, %v1995
    %v1997 = vand.u32 %v1996, 4294901760
    %v1998 = vsub.f32 %v1996, %v1997
    %v1999 = vand.u32 %v1998, 4294901760
    %2000 = vmatpush1.msra.mxu0 %v1999
    %2001 = vmatprep.subr.mxu0 0.0
    %v2002 = vand.u32 %v88, 4294901760
    %v2003 = vsub.f32 %v88, %v2002
    %v2004 = vand.u32 %v2003, 4294901760
    %v2005 = vsub.f32 %v2003, %v2004
    %v2006 = vand.u32 %v2005, 4294901760
    %2007 = vmatpush1.msra.mxu0 %v2006
    %2008 = vmatprep.subr.mxu0 0.0
    %v2009 = vand.u32 %v89, 4294901760
    %v2010 = vsub.f32 %v89, %v2009
    %v2011 = vand.u32 %v2010, 4294901760
    %v2012 = vsub.f32 %v2010, %v2011
    %v2013 = vand.u32 %v2012, 4294901760
    %2014 = vmatpush1.msra.mxu0 %v2013
    %2015 = vmatprep.subr.mxu0 0.0
    %v2016 = vand.u32 %v90, 4294901760
    %v2017 = vsub.f32 %v90, %v2016
    %v2018 = vand.u32 %v2017, 4294901760
    %v2019 = vsub.f32 %v2017, %v2018
    %v2020 = vand.u32 %v2019, 4294901760
    %2021 = vmatpush1.msra.mxu0 %v2020
    %2022 = vmatprep.subr.mxu0 0.0
    %v2023 = vand.u32 %v91, 4294901760
    %v2024 = vsub.f32 %v91, %v2023
    %v2025 = vand.u32 %v2024, 4294901760
    %v2026 = vsub.f32 %v2024, %v2025
    %v2027 = vand.u32 %v2026, 4294901760
    %2028 = vmatpush1.msra.mxu0 %v2027
    %2029 = vmatprep.subr.mxu0 0.0
    %v2030 = vand.u32 %v92, 4294901760
    %v2031 = vsub.f32 %v92, %v2030
    %v2032 = vand.u32 %v2031, 4294901760
    %v2033 = vsub.f32 %v2031, %v2032
    %v2034 = vand.u32 %v2033, 4294901760
    %2035 = vmatpush1.msra.mxu0 %v2034
    %2036 = vmatprep.subr.mxu0 0.0
    %v2037 = vand.u32 %v93, 4294901760
    %v2038 = vsub.f32 %v93, %v2037
    %v2039 = vand.u32 %v2038, 4294901760
    %v2040 = vsub.f32 %v2038, %v2039
    %v2041 = vand.u32 %v2040, 4294901760
    %2042 = vmatpush1.msra.mxu0 %v2041
    %2043 = vmatprep.subr.mxu0 0.0
    %v2044 = vand.u32 %v94, 4294901760
    %v2045 = vsub.f32 %v94, %v2044
    %v2046 = vand.u32 %v2045, 4294901760
    %v2047 = vsub.f32 %v2045, %v2046
    %v2048 = vand.u32 %v2047, 4294901760
    %2049 = vmatpush1.msra.mxu0 %v2048
    %2050 = vmatprep.subr.mxu0 0.0
    %v2051 = vand.u32 %v95, 4294901760
    %v2052 = vsub.f32 %v95, %v2051
    %v2053 = vand.u32 %v2052, 4294901760
    %v2054 = vsub.f32 %v2052, %v2053
    %v2055 = vand.u32 %v2054, 4294901760
    %2056 = vmatpush1.msra.mxu0 %v2055
    %2057 = vmatprep.subr.mxu0 0.0
    %v2058 = vand.u32 %v96, 4294901760
    %v2059 = vsub.f32 %v96, %v2058
    %v2060 = vand.u32 %v2059, 4294901760
    %v2061 = vsub.f32 %v2059, %v2060
    %v2062 = vand.u32 %v2061, 4294901760
    %2063 = vmatpush1.msra.mxu0 %v2062
    %2064 = vmatprep.subr.mxu0 0.0
    %v2065 = vand.u32 %v97, 4294901760
    %v2066 = vsub.f32 %v97, %v2065
    %v2067 = vand.u32 %v2066, 4294901760
    %v2068 = vsub.f32 %v2066, %v2067
    %v2069 = vand.u32 %v2068, 4294901760
    %2070 = vmatpush1.msra.mxu0 %v2069
    %2071 = vmatprep.subr.mxu0 0.0
    %v2072 = vand.u32 %v98, 4294901760
    %v2073 = vsub.f32 %v98, %v2072
    %v2074 = vand.u32 %v2073, 4294901760
    %v2075 = vsub.f32 %v2073, %v2074
    %v2076 = vand.u32 %v2075, 4294901760
    %2077 = vmatpush1.msra.mxu0 %v2076
    %2078 = vmatprep.subr.mxu0 0.0
    %v2079 = vand.u32 %v99, 4294901760
    %v2080 = vsub.f32 %v99, %v2079
    %v2081 = vand.u32 %v2080, 4294901760
    %v2082 = vsub.f32 %v2080, %v2081
    %v2083 = vand.u32 %v2082, 4294901760
    %2084 = vmatpush1.msra.mxu0 %v2083
    %2085 = vmatprep.subr.mxu0 0.0
    %v2086 = vand.u32 %v100, 4294901760
    %v2087 = vsub.f32 %v100, %v2086
    %v2088 = vand.u32 %v2087, 4294901760
    %v2089 = vsub.f32 %v2087, %v2088
    %v2090 = vand.u32 %v2089, 4294901760
    %2091 = vmatpush1.msra.mxu0 %v2090
    %2092 = vmatprep.subr.mxu0 0.0
    %v2093 = vand.u32 %v101, 4294901760
    %v2094 = vsub.f32 %v101, %v2093
    %v2095 = vand.u32 %v2094, 4294901760
    %v2096 = vsub.f32 %v2094, %v2095
    %v2097 = vand.u32 %v2096, 4294901760
    %2098 = vmatpush1.msra.mxu0 %v2097
    %2099 = vmatprep.subr.mxu0 0.0
    %v2100 = vand.u32 %v102, 4294901760
    %v2101 = vsub.f32 %v102, %v2100
    %v2102 = vand.u32 %v2101, 4294901760
    %v2103 = vsub.f32 %v2101, %v2102
    %v2104 = vand.u32 %v2103, 4294901760
    %2105 = vmatpush1.msra.mxu0 %v2104
    %2106 = vmatprep.subr.mxu0 0.0
    %v2107 = vand.u32 %v103, 4294901760
    %v2108 = vsub.f32 %v103, %v2107
    %v2109 = vand.u32 %v2108, 4294901760
    %v2110 = vsub.f32 %v2108, %v2109
    %v2111 = vand.u32 %v2110, 4294901760
    %2112 = vmatpush1.msra.mxu0 %v2111
    %2113 = vmatprep.subr.mxu0 0.0
    %v2114 = vand.u32 %v104, 4294901760
    %v2115 = vsub.f32 %v104, %v2114
    %v2116 = vand.u32 %v2115, 4294901760
    %v2117 = vsub.f32 %v2115, %v2116
    %v2118 = vand.u32 %v2117, 4294901760
    %2119 = vmatpush1.msra.mxu0 %v2118
    %2120 = vmatprep.subr.mxu0 0.0
    %v2121 = vand.u32 %v105, 4294901760
    %v2122 = vsub.f32 %v105, %v2121
    %v2123 = vand.u32 %v2122, 4294901760
    %v2124 = vsub.f32 %v2122, %v2123
    %v2125 = vand.u32 %v2124, 4294901760
    %2126 = vmatpush1.msra.mxu0 %v2125
    %2127 = vmatprep.subr.mxu0 0.0
    %v2128 = vand.u32 %v106, 4294901760
    %v2129 = vsub.f32 %v106, %v2128
    %v2130 = vand.u32 %v2129, 4294901760
    %v2131 = vsub.f32 %v2129, %v2130
    %v2132 = vand.u32 %v2131, 4294901760
    %2133 = vmatpush1.msra.mxu0 %v2132
    %2134 = vmatprep.subr.mxu0 0.0
    %v2135 = vand.u32 %v107, 4294901760
    %v2136 = vsub.f32 %v107, %v2135
    %v2137 = vand.u32 %v2136, 4294901760
    %v2138 = vsub.f32 %v2136, %v2137
    %v2139 = vand.u32 %v2138, 4294901760
    %2140 = vmatpush1.msra.mxu0 %v2139
    %2141 = vmatprep.subr.mxu0 0.0
    %v2142 = vand.u32 %v108, 4294901760
    %v2143 = vsub.f32 %v108, %v2142
    %v2144 = vand.u32 %v2143, 4294901760
    %v2145 = vsub.f32 %v2143, %v2144
    %v2146 = vand.u32 %v2145, 4294901760
    %2147 = vmatpush1.msra.mxu0 %v2146
    %2148 = vmatprep.subr.mxu0 0.0
    %v2149 = vand.u32 %v109, 4294901760
    %v2150 = vsub.f32 %v109, %v2149
    %v2151 = vand.u32 %v2150, 4294901760
    %v2152 = vsub.f32 %v2150, %v2151
    %v2153 = vand.u32 %v2152, 4294901760
    %2154 = vmatpush1.msra.mxu0 %v2153
    %2155 = vmatprep.subr.mxu0 0.0
    %v2156 = vand.u32 %v110, 4294901760
    %v2157 = vsub.f32 %v110, %v2156
    %v2158 = vand.u32 %v2157, 4294901760
    %v2159 = vsub.f32 %v2157, %v2158
    %v2160 = vand.u32 %v2159, 4294901760
    %2161 = vmatpush1.msra.mxu0 %v2160
    %2162 = vmatprep.subr.mxu0 0.0
    %v2163 = vand.u32 %v111, 4294901760
    %v2164 = vsub.f32 %v111, %v2163
    %v2165 = vand.u32 %v2164, 4294901760
    %v2166 = vsub.f32 %v2164, %v2165
    %v2167 = vand.u32 %v2166, 4294901760
    %2168 = vmatpush1.msra.mxu0 %v2167
    %2169 = vmatprep.subr.mxu0 0.0
    %v2170 = vand.u32 %v112, 4294901760
    %v2171 = vsub.f32 %v112, %v2170
    %v2172 = vand.u32 %v2171, 4294901760
    %v2173 = vsub.f32 %v2171, %v2172
    %v2174 = vand.u32 %v2173, 4294901760
    %2175 = vmatpush1.msra.mxu0 %v2174
    %2176 = vmatprep.subr.mxu0 0.0
    %v2177 = vand.u32 %v113, 4294901760
    %v2178 = vsub.f32 %v113, %v2177
    %v2179 = vand.u32 %v2178, 4294901760
    %v2180 = vsub.f32 %v2178, %v2179
    %v2181 = vand.u32 %v2180, 4294901760
    %2182 = vmatpush1.msra.mxu0 %v2181
    %2183 = vmatprep.subr.mxu0 0.0
    %v2184 = vand.u32 %v114, 4294901760
    %v2185 = vsub.f32 %v114, %v2184
    %v2186 = vand.u32 %v2185, 4294901760
    %v2187 = vsub.f32 %v2185, %v2186
    %v2188 = vand.u32 %v2187, 4294901760
    %2189 = vmatpush1.msra.mxu0 %v2188
    %2190 = vmatprep.subr.mxu0 0.0
    %v2191 = vand.u32 %v115, 4294901760
    %v2192 = vsub.f32 %v115, %v2191
    %v2193 = vand.u32 %v2192, 4294901760
    %v2194 = vsub.f32 %v2192, %v2193
    %v2195 = vand.u32 %v2194, 4294901760
    %2196 = vmatpush1.msra.mxu0 %v2195
    %2197 = vmatprep.subr.mxu0 0.0
    %v2198 = vand.u32 %v116, 4294901760
    %v2199 = vsub.f32 %v116, %v2198
    %v2200 = vand.u32 %v2199, 4294901760
    %v2201 = vsub.f32 %v2199, %v2200
    %v2202 = vand.u32 %v2201, 4294901760
    %2203 = vmatpush1.msra.mxu0 %v2202
    %2204 = vmatprep.subr.mxu0 0.0
    %v2205 = vand.u32 %v117, 4294901760
    %v2206 = vsub.f32 %v117, %v2205
    %v2207 = vand.u32 %v2206, 4294901760
    %v2208 = vsub.f32 %v2206, %v2207
    %v2209 = vand.u32 %v2208, 4294901760
    %2210 = vmatpush1.msra.mxu0 %v2209
    %2211 = vmatprep.subr.mxu0 0.0
    %v2212 = vand.u32 %v118, 4294901760
    %v2213 = vsub.f32 %v118, %v2212
    %v2214 = vand.u32 %v2213, 4294901760
    %v2215 = vsub.f32 %v2213, %v2214
    %v2216 = vand.u32 %v2215, 4294901760
    %2217 = vmatpush1.msra.mxu0 %v2216
    %v2218 = vand.u32 %v20, 4294901760
    %2219 = vmatprep.mubr.f32.mxu0 %v2218
    %v2220 = vand.u32 %v19, 4294901760
    %2221 = vmatmul.mubr.f32.gmra.mrb[0].mxu0 %v2220
    %v2222 = vpop.f32.mrb[0].mxu0
    %v2223 = vadd.f32 %v1991, %v2222
    %v2224 = vpop.f32.mrb[0].mxu0
    %2225 = vdwg.mxu0
    %2226 = vmatprep.subr.mxu0 0.0
    %v2227 = vand.u32 %v87, 4294901760
    %v2228 = vsub.f32 %v87, %v2227
    %2229 = vmatpush1.msra.mxu0 %v2228
    %2230 = vmatprep.subr.mxu0 0.0
    %v2231 = vand.u32 %v88, 4294901760
    %v2232 = vsub.f32 %v88, %v2231
    %2233 = vmatpush1.msra.mxu0 %v2232
    %2234 = vmatprep.subr.mxu0 0.0
    %v2235 = vand.u32 %v89, 4294901760
    %v2236 = vsub.f32 %v89, %v2235
    %2237 = vmatpush1.msra.mxu0 %v2236
    %2238 = vmatprep.subr.mxu0 0.0
    %v2239 = vand.u32 %v90, 4294901760
    %v2240 = vsub.f32 %v90, %v2239
    %2241 = vmatpush1.msra.mxu0 %v2240
    %2242 = vmatprep.subr.mxu0 0.0
    %v2243 = vand.u32 %v91, 4294901760
    %v2244 = vsub.f32 %v91, %v2243
    %2245 = vmatpush1.msra.mxu0 %v2244
    %2246 = vmatprep.subr.mxu0 0.0
    %v2247 = vand.u32 %v92, 4294901760
    %v2248 = vsub.f32 %v92, %v2247
    %2249 = vmatpush1.msra.mxu0 %v2248
    %2250 = vmatprep.subr.mxu0 0.0
    %v2251 = vand.u32 %v93, 4294901760
    %v2252 = vsub.f32 %v93, %v2251
    %2253 = vmatpush1.msra.mxu0 %v2252
    %2254 = vmatprep.subr.mxu0 0.0
    %v2255 = vand.u32 %v94, 4294901760
    %v2256 = vsub.f32 %v94, %v2255
    %2257 = vmatpush1.msra.mxu0 %v2256
    %2258 = vmatprep.subr.mxu0 0.0
    %v2259 = vand.u32 %v95, 4294901760
    %v2260 = vsub.f32 %v95, %v2259
    %2261 = vmatpush1.msra.mxu0 %v2260
    %2262 = vmatprep.subr.mxu0 0.0
    %v2263 = vand.u32 %v96, 4294901760
    %v2264 = vsub.f32 %v96, %v2263
    %2265 = vmatpush1.msra.mxu0 %v2264
    %2266 = vmatprep.subr.mxu0 0.0
    %v2267 = vand.u32 %v97, 4294901760
    %v2268 = vsub.f32 %v97, %v2267
    %2269 = vmatpush1.msra.mxu0 %v2268
    %2270 = vmatprep.subr.mxu0 0.0
    %v2271 = vand.u32 %v98, 4294901760
    %v2272 = vsub.f32 %v98, %v2271
    %2273 = vmatpush1.msra.mxu0 %v2272
    %2274 = vmatprep.subr.mxu0 0.0
    %v2275 = vand.u32 %v99, 4294901760
    %v2276 = vsub.f32 %v99, %v2275
    %2277 = vmatpush1.msra.mxu0 %v2276
    %2278 = vmatprep.subr.mxu0 0.0
    %v2279 = vand.u32 %v100, 4294901760
    %v2280 = vsub.f32 %v100, %v2279
    %2281 = vmatpush1.msra.mxu0 %v2280
    %2282 = vmatprep.subr.mxu0 0.0
    %v2283 = vand.u32 %v101, 4294901760
    %v2284 = vsub.f32 %v101, %v2283
    %2285 = vmatpush1.msra.mxu0 %v2284
    %2286 = vmatprep.subr.mxu0 0.0
    %v2287 = vand.u32 %v102, 4294901760
    %v2288 = vsub.f32 %v102, %v2287
    %2289 = vmatpush1.msra.mxu0 %v2288
    %2290 = vmatprep.subr.mxu0 0.0
    %v2291 = vand.u32 %v103, 4294901760
    %v2292 = vsub.f32 %v103, %v2291
    %2293 = vmatpush1.msra.mxu0 %v2292
    %2294 = vmatprep.subr.mxu0 0.0
    %v2295 = vand.u32 %v104, 4294901760
    %v2296 = vsub.f32 %v104, %v2295
    %2297 = vmatpush1.msra.mxu0 %v2296
    %2298 = vmatprep.subr.mxu0 0.0
    %v2299 = vand.u32 %v105, 4294901760
    %v2300 = vsub.f32 %v105, %v2299
    %2301 = vmatpush1.msra.mxu0 %v2300
    %2302 = vmatprep.subr.mxu0 0.0
    %v2303 = vand.u32 %v106, 4294901760
    %v2304 = vsub.f32 %v106, %v2303
    %2305 = vmatpush1.msra.mxu0 %v2304
    %2306 = vmatprep.subr.mxu0 0.0
    %v2307 = vand.u32 %v107, 4294901760
    %v2308 = vsub.f32 %v107, %v2307
    %2309 = vmatpush1.msra.mxu0 %v2308
    %2310 = vmatprep.subr.mxu0 0.0
    %v2311 = vand.u32 %v108, 4294901760
    %v2312 = vsub.f32 %v108, %v2311
    %2313 = vmatpush1.msra.mxu0 %v2312
    %2314 = vmatprep.subr.mxu0 0.0
    %v2315 = vand.u32 %v109, 4294901760
    %v2316 = vsub.f32 %v109, %v2315
    %2317 = vmatpush1.msra.mxu0 %v2316
    %2318 = vmatprep.subr.mxu0 0.0
    %v2319 = vand.u32 %v110, 4294901760
    %v2320 = vsub.f32 %v110, %v2319
    %2321 = vmatpush1.msra.mxu0 %v2320
    %2322 = vmatprep.subr.mxu0 0.0
    %v2323 = vand.u32 %v111, 4294901760
    %v2324 = vsub.f32 %v111, %v2323
    %2325 = vmatpush1.msra.mxu0 %v2324
    %2326 = vmatprep.subr.mxu0 0.0
    %v2327 = vand.u32 %v112, 4294901760
    %v2328 = vsub.f32 %v112, %v2327
    %2329 = vmatpush1.msra.mxu0 %v2328
    %2330 = vmatprep.subr.mxu0 0.0
    %v2331 = vand.u32 %v113, 4294901760
    %v2332 = vsub.f32 %v113, %v2331
    %2333 = vmatpush1.msra.mxu0 %v2332
    %2334 = vmatprep.subr.mxu0 0.0
    %v2335 = vand.u32 %v114, 4294901760
    %v2336 = vsub.f32 %v114, %v2335
    %2337 = vmatpush1.msra.mxu0 %v2336
    %2338 = vmatprep.subr.mxu0 0.0
    %v2339 = vand.u32 %v115, 4294901760
    %v2340 = vsub.f32 %v115, %v2339
    %2341 = vmatpush1.msra.mxu0 %v2340
    %2342 = vmatprep.subr.mxu0 0.0
    %v2343 = vand.u32 %v116, 4294901760
    %v2344 = vsub.f32 %v116, %v2343
    %2345 = vmatpush1.msra.mxu0 %v2344
    %2346 = vmatprep.subr.mxu0 0.0
    %v2347 = vand.u32 %v117, 4294901760
    %v2348 = vsub.f32 %v117, %v2347
    %2349 = vmatpush1.msra.mxu0 %v2348
    %2350 = vmatprep.subr.mxu0 0.0
    %v2351 = vand.u32 %v118, 4294901760
    %v2352 = vsub.f32 %v118, %v2351
    %2353 = vmatpush1.msra.mxu0 %v2352
    %v2354 = vand.u32 %v20, 4294901760
    %v2355 = vsub.f32 %v20, %v2354
    %2356 = vmatprep.mubr.f32.mxu0 %v2355
    %v2357 = vand.u32 %v19, 4294901760
    %v2358 = vsub.f32 %v19, %v2357
    %2359 = vmatmul.mubr.f32.gmra.mrb[0].mxu0 %v2358
    %v2360 = vpop.f32.mrb[0].mxu0
    %v2361 = vadd.f32 %v2223, %v2360
    %v2362 = vpop.f32.mrb[0].mxu0
    %2363 = vdwg.mxu0
    %2364 = vmatprep.subr.mxu0 0.0
    %v2365 = vand.u32 %v87, 4294901760
    %2366 = vmatpush1.msra.mxu0 %v2365
    %2367 = vmatprep.subr.mxu0 0.0
    %v2368 = vand.u32 %v88, 4294901760
    %2369 = vmatpush1.msra.mxu0 %v2368
    %2370 = vmatprep.subr.mxu0 0.0
    %v2371 = vand.u32 %v89, 4294901760
    %2372 = vmatpush1.msra.mxu0 %v2371
    %2373 = vmatprep.subr.mxu0 0.0
    %v2374 = vand.u32 %v90, 4294901760
    %2375 = vmatpush1.msra.mxu0 %v2374
    %2376 = vmatprep.subr.mxu0 0.0
    %v2377 = vand.u32 %v91, 4294901760
    %2378 = vmatpush1.msra.mxu0 %v2377
    %2379 = vmatprep.subr.mxu0 0.0
    %v2380 = vand.u32 %v92, 4294901760
    %2381 = vmatpush1.msra.mxu0 %v2380
    %2382 = vmatprep.subr.mxu0 0.0
    %v2383 = vand.u32 %v93, 4294901760
    %2384 = vmatpush1.msra.mxu0 %v2383
    %2385 = vmatprep.subr.mxu0 0.0
    %v2386 = vand.u32 %v94, 4294901760
    %2387 = vmatpush1.msra.mxu0 %v2386
    %2388 = vmatprep.subr.mxu0 0.0
    %v2389 = vand.u32 %v95, 4294901760
    %2390 = vmatpush1.msra.mxu0 %v2389
    %2391 = vmatprep.subr.mxu0 0.0
    %v2392 = vand.u32 %v96, 4294901760
    %2393 = vmatpush1.msra.mxu0 %v2392
    %2394 = vmatprep.subr.mxu0 0.0
    %v2395 = vand.u32 %v97, 4294901760
    %2396 = vmatpush1.msra.mxu0 %v2395
    %2397 = vmatprep.subr.mxu0 0.0
    %v2398 = vand.u32 %v98, 4294901760
    %2399 = vmatpush1.msra.mxu0 %v2398
    %2400 = vmatprep.subr.mxu0 0.0
    %v2401 = vand.u32 %v99, 4294901760
    %2402 = vmatpush1.msra.mxu0 %v2401
    %2403 = vmatprep.subr.mxu0 0.0
    %v2404 = vand.u32 %v100, 4294901760
    %2405 = vmatpush1.msra.mxu0 %v2404
    %2406 = vmatprep.subr.mxu0 0.0
    %v2407 = vand.u32 %v101, 4294901760
    %2408 = vmatpush1.msra.mxu0 %v2407
    %2409 = vmatprep.subr.mxu0 0.0
    %v2410 = vand.u32 %v102, 4294901760
    %2411 = vmatpush1.msra.mxu0 %v2410
    %2412 = vmatprep.subr.mxu0 0.0
    %v2413 = vand.u32 %v103, 4294901760
    %2414 = vmatpush1.msra.mxu0 %v2413
    %2415 = vmatprep.subr.mxu0 0.0
    %v2416 = vand.u32 %v104, 4294901760
    %2417 = vmatpush1.msra.mxu0 %v2416
    %2418 = vmatprep.subr.mxu0 0.0
    %v2419 = vand.u32 %v105, 4294901760
    %2420 = vmatpush1.msra.mxu0 %v2419
    %2421 = vmatprep.subr.mxu0 0.0
    %v2422 = vand.u32 %v106, 4294901760
    %2423 = vmatpush1.msra.mxu0 %v2422
    %2424 = vmatprep.subr.mxu0 0.0
    %v2425 = vand.u32 %v107, 4294901760
    %2426 = vmatpush1.msra.mxu0 %v2425
    %2427 = vmatprep.subr.mxu0 0.0
    %v2428 = vand.u32 %v108, 4294901760
    %2429 = vmatpush1.msra.mxu0 %v2428
    %2430 = vmatprep.subr.mxu0 0.0
    %v2431 = vand.u32 %v109, 4294901760
    %2432 = vmatpush1.msra.mxu0 %v2431
    %2433 = vmatprep.subr.mxu0 0.0
    %v2434 = vand.u32 %v110, 4294901760
    %2435 = vmatpush1.msra.mxu0 %v2434
    %2436 = vmatprep.subr.mxu0 0.0
    %v2437 = vand.u32 %v111, 4294901760
    %2438 = vmatpush1.msra.mxu0 %v2437
    %2439 = vmatprep.subr.mxu0 0.0
    %v2440 = vand.u32 %v112, 4294901760
    %2441 = vmatpush1.msra.mxu0 %v2440
    %2442 = vmatprep.subr.mxu0 0.0
    %v2443 = vand.u32 %v113, 4294901760
    %2444 = vmatpush1.msra.mxu0 %v2443
    %2445 = vmatprep.subr.mxu0 0.0
    %v2446 = vand.u32 %v114, 4294901760
    %2447 = vmatpush1.msra.mxu0 %v2446
    %2448 = vmatprep.subr.mxu0 0.0
    %v2449 = vand.u32 %v115, 4294901760
    %2450 = vmatpush1.msra.mxu0 %v2449
    %2451 = vmatprep.subr.mxu0 0.0
    %v2452 = vand.u32 %v116, 4294901760
    %2453 = vmatpush1.msra.mxu0 %v2452
    %2454 = vmatprep.subr.mxu0 0.0
    %v2455 = vand.u32 %v117, 4294901760
    %2456 = vmatpush1.msra.mxu0 %v2455
    %2457 = vmatprep.subr.mxu0 0.0
    %v2458 = vand.u32 %v118, 4294901760
    %2459 = vmatpush1.msra.mxu0 %v2458
    %v2460 = vand.u32 %v20, 4294901760
    %v2461 = vsub.f32 %v20, %v2460
    %v2462 = vand.u32 %v2461, 4294901760
    %2463 = vmatprep.mubr.f32.mxu0 %v2462
    %v2464 = vand.u32 %v19, 4294901760
    %v2465 = vsub.f32 %v19, %v2464
    %v2466 = vand.u32 %v2465, 4294901760
    %2467 = vmatmul.mubr.f32.gmra.mrb[0].mxu0 %v2466
    %v2468 = vpop.f32.mrb[0].mxu0
    %v2469 = vadd.f32 %v2361, %v2468
    %v2470 = vpop.f32.mrb[0].mxu0
    %2471 = vdwg.mxu0
    %2472 = vmatprep.subr.mxu0 0.0
    %v2473 = vand.u32 %v87, 4294901760
    %v2474 = vsub.f32 %v87, %v2473
    %v2475 = vand.u32 %v2474, 4294901760
    %2476 = vmatpush1.msra.mxu0 %v2475
    %2477 = vmatprep.subr.mxu0 0.0
    %v2478 = vand.u32 %v88, 4294901760
    %v2479 = vsub.f32 %v88, %v2478
    %v2480 = vand.u32 %v2479, 4294901760
    %2481 = vmatpush1.msra.mxu0 %v2480
    %2482 = vmatprep.subr.mxu0 0.0
    %v2483 = vand.u32 %v89, 4294901760
    %v2484 = vsub.f32 %v89, %v2483
    %v2485 = vand.u32 %v2484, 4294901760
    %2486 = vmatpush1.msra.mxu0 %v2485
    %2487 = vmatprep.subr.mxu0 0.0
    %v2488 = vand.u32 %v90, 4294901760
    %v2489 = vsub.f32 %v90, %v2488
    %v2490 = vand.u32 %v2489, 4294901760
    %2491 = vmatpush1.msra.mxu0 %v2490
    %2492 = vmatprep.subr.mxu0 0.0
    %v2493 = vand.u32 %v91, 4294901760
    %v2494 = vsub.f32 %v91, %v2493
    %v2495 = vand.u32 %v2494, 4294901760
    %2496 = vmatpush1.msra.mxu0 %v2495
    %2497 = vmatprep.subr.mxu0 0.0
    %v2498 = vand.u32 %v92, 4294901760
    %v2499 = vsub.f32 %v92, %v2498
    %v2500 = vand.u32 %v2499, 4294901760
    %2501 = vmatpush1.msra.mxu0 %v2500
    %2502 = vmatprep.subr.mxu0 0.0
    %v2503 = vand.u32 %v93, 4294901760
    %v2504 = vsub.f32 %v93, %v2503
    %v2505 = vand.u32 %v2504, 4294901760
    %2506 = vmatpush1.msra.mxu0 %v2505
    %2507 = vmatprep.subr.mxu0 0.0
    %v2508 = vand.u32 %v94, 4294901760
    %v2509 = vsub.f32 %v94, %v2508
    %v2510 = vand.u32 %v2509, 4294901760
    %2511 = vmatpush1.msra.mxu0 %v2510
    %2512 = vmatprep.subr.mxu0 0.0
    %v2513 = vand.u32 %v95, 4294901760
    %v2514 = vsub.f32 %v95, %v2513
    %v2515 = vand.u32 %v2514, 4294901760
    %2516 = vmatpush1.msra.mxu0 %v2515
    %2517 = vmatprep.subr.mxu0 0.0
    %v2518 = vand.u32 %v96, 4294901760
    %v2519 = vsub.f32 %v96, %v2518
    %v2520 = vand.u32 %v2519, 4294901760
    %2521 = vmatpush1.msra.mxu0 %v2520
    %2522 = vmatprep.subr.mxu0 0.0
    %v2523 = vand.u32 %v97, 4294901760
    %v2524 = vsub.f32 %v97, %v2523
    %v2525 = vand.u32 %v2524, 4294901760
    %2526 = vmatpush1.msra.mxu0 %v2525
    %2527 = vmatprep.subr.mxu0 0.0
    %v2528 = vand.u32 %v98, 4294901760
    %v2529 = vsub.f32 %v98, %v2528
    %v2530 = vand.u32 %v2529, 4294901760
    %2531 = vmatpush1.msra.mxu0 %v2530
    %2532 = vmatprep.subr.mxu0 0.0
    %v2533 = vand.u32 %v99, 4294901760
    %v2534 = vsub.f32 %v99, %v2533
    %v2535 = vand.u32 %v2534, 4294901760
    %2536 = vmatpush1.msra.mxu0 %v2535
    %2537 = vmatprep.subr.mxu0 0.0
    %v2538 = vand.u32 %v100, 4294901760
    %v2539 = vsub.f32 %v100, %v2538
    %v2540 = vand.u32 %v2539, 4294901760
    %2541 = vmatpush1.msra.mxu0 %v2540
    %2542 = vmatprep.subr.mxu0 0.0
    %v2543 = vand.u32 %v101, 4294901760
    %v2544 = vsub.f32 %v101, %v2543
    %v2545 = vand.u32 %v2544, 4294901760
    %2546 = vmatpush1.msra.mxu0 %v2545
    %2547 = vmatprep.subr.mxu0 0.0
    %v2548 = vand.u32 %v102, 4294901760
    %v2549 = vsub.f32 %v102, %v2548
    %v2550 = vand.u32 %v2549, 4294901760
    %2551 = vmatpush1.msra.mxu0 %v2550
    %2552 = vmatprep.subr.mxu0 0.0
    %v2553 = vand.u32 %v103, 4294901760
    %v2554 = vsub.f32 %v103, %v2553
    %v2555 = vand.u32 %v2554, 4294901760
    %2556 = vmatpush1.msra.mxu0 %v2555
    %2557 = vmatprep.subr.mxu0 0.0
    %v2558 = vand.u32 %v104, 4294901760
    %v2559 = vsub.f32 %v104, %v2558
    %v2560 = vand.u32 %v2559, 4294901760
    %2561 = vmatpush1.msra.mxu0 %v2560
    %2562 = vmatprep.subr.mxu0 0.0
    %v2563 = vand.u32 %v105, 4294901760
    %v2564 = vsub.f32 %v105, %v2563
    %v2565 = vand.u32 %v2564, 4294901760
    %2566 = vmatpush1.msra.mxu0 %v2565
    %2567 = vmatprep.subr.mxu0 0.0
    %v2568 = vand.u32 %v106, 4294901760
    %v2569 = vsub.f32 %v106, %v2568
    %v2570 = vand.u32 %v2569, 4294901760
    %2571 = vmatpush1.msra.mxu0 %v2570
    %2572 = vmatprep.subr.mxu0 0.0
    %v2573 = vand.u32 %v107, 4294901760
    %v2574 = vsub.f32 %v107, %v2573
    %v2575 = vand.u32 %v2574, 4294901760
    %2576 = vmatpush1.msra.mxu0 %v2575
    %2577 = vmatprep.subr.mxu0 0.0
    %v2578 = vand.u32 %v108, 4294901760
    %v2579 = vsub.f32 %v108, %v2578
    %v2580 = vand.u32 %v2579, 4294901760
    %2581 = vmatpush1.msra.mxu0 %v2580
    %2582 = vmatprep.subr.mxu0 0.0
    %v2583 = vand.u32 %v109, 4294901760
    %v2584 = vsub.f32 %v109, %v2583
    %v2585 = vand.u32 %v2584, 4294901760
    %2586 = vmatpush1.msra.mxu0 %v2585
    %2587 = vmatprep.subr.mxu0 0.0
    %v2588 = vand.u32 %v110, 4294901760
    %v2589 = vsub.f32 %v110, %v2588
    %v2590 = vand.u32 %v2589, 4294901760
    %2591 = vmatpush1.msra.mxu0 %v2590
    %2592 = vmatprep.subr.mxu0 0.0
    %v2593 = vand.u32 %v111, 4294901760
    %v2594 = vsub.f32 %v111, %v2593
    %v2595 = vand.u32 %v2594, 4294901760
    %2596 = vmatpush1.msra.mxu0 %v2595
    %2597 = vmatprep.subr.mxu0 0.0
    %v2598 = vand.u32 %v112, 4294901760
    %v2599 = vsub.f32 %v112, %v2598
    %v2600 = vand.u32 %v2599, 4294901760
    %2601 = vmatpush1.msra.mxu0 %v2600
    %2602 = vmatprep.subr.mxu0 0.0
    %v2603 = vand.u32 %v113, 4294901760
    %v2604 = vsub.f32 %v113, %v2603
    %v2605 = vand.u32 %v2604, 4294901760
    %2606 = vmatpush1.msra.mxu0 %v2605
    %2607 = vmatprep.subr.mxu0 0.0
    %v2608 = vand.u32 %v114, 4294901760
    %v2609 = vsub.f32 %v114, %v2608
    %v2610 = vand.u32 %v2609, 4294901760
    %2611 = vmatpush1.msra.mxu0 %v2610
    %2612 = vmatprep.subr.mxu0 0.0
    %v2613 = vand.u32 %v115, 4294901760
    %v2614 = vsub.f32 %v115, %v2613
    %v2615 = vand.u32 %v2614, 4294901760
    %2616 = vmatpush1.msra.mxu0 %v2615
    %2617 = vmatprep.subr.mxu0 0.0
    %v2618 = vand.u32 %v116, 4294901760
    %v2619 = vsub.f32 %v116, %v2618
    %v2620 = vand.u32 %v2619, 4294901760
    %2621 = vmatpush1.msra.mxu0 %v2620
    %2622 = vmatprep.subr.mxu0 0.0
    %v2623 = vand.u32 %v117, 4294901760
    %v2624 = vsub.f32 %v117, %v2623
    %v2625 = vand.u32 %v2624, 4294901760
    %2626 = vmatpush1.msra.mxu0 %v2625
    %2627 = vmatprep.subr.mxu0 0.0
    %v2628 = vand.u32 %v118, 4294901760
    %v2629 = vsub.f32 %v118, %v2628
    %v2630 = vand.u32 %v2629, 4294901760
    %2631 = vmatpush1.msra.mxu0 %v2630
    %v2632 = vand.u32 %v20, 4294901760
    %2633 = vmatprep.mubr.f32.mxu0 %v2632
    %v2634 = vand.u32 %v19, 4294901760
    %2635 = vmatmul.mubr.f32.gmra.mrb[0].mxu0 %v2634
    %v2636 = vpop.f32.mrb[0].mxu0
    %v2637 = vadd.f32 %v2469, %v2636
    %v2638 = vpop.f32.mrb[0].mxu0
    %2639 = vdwg.mxu0
    %2640 = vmatprep.subr.mxu0 0.0
    %v2641 = vand.u32 %v87, 4294901760
    %2642 = vmatpush1.msra.mxu0 %v2641
    %2643 = vmatprep.subr.mxu0 0.0
    %v2644 = vand.u32 %v88, 4294901760
    %2645 = vmatpush1.msra.mxu0 %v2644
    %2646 = vmatprep.subr.mxu0 0.0
    %v2647 = vand.u32 %v89, 4294901760
    %2648 = vmatpush1.msra.mxu0 %v2647
    %2649 = vmatprep.subr.mxu0 0.0
    %v2650 = vand.u32 %v90, 4294901760
    %2651 = vmatpush1.msra.mxu0 %v2650
    %2652 = vmatprep.subr.mxu0 0.0
    %v2653 = vand.u32 %v91, 4294901760
    %2654 = vmatpush1.msra.mxu0 %v2653
    %2655 = vmatprep.subr.mxu0 0.0
    %v2656 = vand.u32 %v92, 4294901760
    %2657 = vmatpush1.msra.mxu0 %v2656
    %2658 = vmatprep.subr.mxu0 0.0
    %v2659 = vand.u32 %v93, 4294901760
    %2660 = vmatpush1.msra.mxu0 %v2659
    %2661 = vmatprep.subr.mxu0 0.0
    %v2662 = vand.u32 %v94, 4294901760
    %2663 = vmatpush1.msra.mxu0 %v2662
    %2664 = vmatprep.subr.mxu0 0.0
    %v2665 = vand.u32 %v95, 4294901760
    %2666 = vmatpush1.msra.mxu0 %v2665
    %2667 = vmatprep.subr.mxu0 0.0
    %v2668 = vand.u32 %v96, 4294901760
    %2669 = vmatpush1.msra.mxu0 %v2668
    %2670 = vmatprep.subr.mxu0 0.0
    %v2671 = vand.u32 %v97, 4294901760
    %2672 = vmatpush1.msra.mxu0 %v2671
    %2673 = vmatprep.subr.mxu0 0.0
    %v2674 = vand.u32 %v98, 4294901760
    %2675 = vmatpush1.msra.mxu0 %v2674
    %2676 = vmatprep.subr.mxu0 0.0
    %v2677 = vand.u32 %v99, 4294901760
    %2678 = vmatpush1.msra.mxu0 %v2677
    %2679 = vmatprep.subr.mxu0 0.0
    %v2680 = vand.u32 %v100, 4294901760
    %2681 = vmatpush1.msra.mxu0 %v2680
    %2682 = vmatprep.subr.mxu0 0.0
    %v2683 = vand.u32 %v101, 4294901760
    %2684 = vmatpush1.msra.mxu0 %v2683
    %2685 = vmatprep.subr.mxu0 0.0
    %v2686 = vand.u32 %v102, 4294901760
    %2687 = vmatpush1.msra.mxu0 %v2686
    %2688 = vmatprep.subr.mxu0 0.0
    %v2689 = vand.u32 %v103, 4294901760
    %2690 = vmatpush1.msra.mxu0 %v2689
    %2691 = vmatprep.subr.mxu0 0.0
    %v2692 = vand.u32 %v104, 4294901760
    %2693 = vmatpush1.msra.mxu0 %v2692
    %2694 = vmatprep.subr.mxu0 0.0
    %v2695 = vand.u32 %v105, 4294901760
    %2696 = vmatpush1.msra.mxu0 %v2695
    %2697 = vmatprep.subr.mxu0 0.0
    %v2698 = vand.u32 %v106, 4294901760
    %2699 = vmatpush1.msra.mxu0 %v2698
    %2700 = vmatprep.subr.mxu0 0.0
    %v2701 = vand.u32 %v107, 4294901760
    %2702 = vmatpush1.msra.mxu0 %v2701
    %2703 = vmatprep.subr.mxu0 0.0
    %v2704 = vand.u32 %v108, 4294901760
    %2705 = vmatpush1.msra.mxu0 %v2704
    %2706 = vmatprep.subr.mxu0 0.0
    %v2707 = vand.u32 %v109, 4294901760
    %2708 = vmatpush1.msra.mxu0 %v2707
    %2709 = vmatprep.subr.mxu0 0.0
    %v2710 = vand.u32 %v110, 4294901760
    %2711 = vmatpush1.msra.mxu0 %v2710
    %2712 = vmatprep.subr.mxu0 0.0
    %v2713 = vand.u32 %v111, 4294901760
    %2714 = vmatpush1.msra.mxu0 %v2713
    %2715 = vmatprep.subr.mxu0 0.0
    %v2716 = vand.u32 %v112, 4294901760
    %2717 = vmatpush1.msra.mxu0 %v2716
    %2718 = vmatprep.subr.mxu0 0.0
    %v2719 = vand.u32 %v113, 4294901760
    %2720 = vmatpush1.msra.mxu0 %v2719
    %2721 = vmatprep.subr.mxu0 0.0
    %v2722 = vand.u32 %v114, 4294901760
    %2723 = vmatpush1.msra.mxu0 %v2722
    %2724 = vmatprep.subr.mxu0 0.0
    %v2725 = vand.u32 %v115, 4294901760
    %2726 = vmatpush1.msra.mxu0 %v2725
    %2727 = vmatprep.subr.mxu0 0.0
    %v2728 = vand.u32 %v116, 4294901760
    %2729 = vmatpush1.msra.mxu0 %v2728
    %2730 = vmatprep.subr.mxu0 0.0
    %v2731 = vand.u32 %v117, 4294901760
    %2732 = vmatpush1.msra.mxu0 %v2731
    %2733 = vmatprep.subr.mxu0 0.0
    %v2734 = vand.u32 %v118, 4294901760
    %2735 = vmatpush1.msra.mxu0 %v2734
    %v2736 = vand.u32 %v20, 4294901760
    %2737 = vmatprep.mubr.f32.mxu0 %v2736
    %v2738 = vand.u32 %v19, 4294901760
    %2739 = vmatmul.mubr.f32.gmra.mrb[0].mxu0 %v2738
    %v2740 = vpop.f32.mrb[0].mxu0
    %v2741 = vadd.f32 %v2637, %v2740
    %v2742 = vpop.f32.mrb[0].mxu0
    %2743 = vdwg.mxu0
    %2744 = vmatprep.subr.mxu0 0.0
    %v2745 = vand.u32 %v119, 4294901760
    %2746 = vmatpush1.msra.mxu0 %v2745
    %2747 = vmatprep.subr.mxu0 0.0
    %v2748 = vand.u32 %v120, 4294901760
    %2749 = vmatpush1.msra.mxu0 %v2748
    %2750 = vmatprep.subr.mxu0 0.0
    %v2751 = vand.u32 %v121, 4294901760
    %2752 = vmatpush1.msra.mxu0 %v2751
    %2753 = vmatprep.subr.mxu0 0.0
    %v2754 = vand.u32 %v122, 4294901760
    %2755 = vmatpush1.msra.mxu0 %v2754
    %2756 = vmatprep.subr.mxu0 0.0
    %v2757 = vand.u32 %v123, 4294901760
    %2758 = vmatpush1.msra.mxu0 %v2757
    %2759 = vmatprep.subr.mxu0 0.0
    %v2760 = vand.u32 %v124, 4294901760
    %2761 = vmatpush1.msra.mxu0 %v2760
    %2762 = vmatprep.subr.mxu0 0.0
    %v2763 = vand.u32 %v125, 4294901760
    %2764 = vmatpush1.msra.mxu0 %v2763
    %2765 = vmatprep.subr.mxu0 0.0
    %v2766 = vand.u32 %v126, 4294901760
    %2767 = vmatpush1.msra.mxu0 %v2766
    %2768 = vmatprep.subr.mxu0 0.0
    %v2769 = vand.u32 %v127, 4294901760
    %2770 = vmatpush1.msra.mxu0 %v2769
    %2771 = vmatprep.subr.mxu0 0.0
    %v2772 = vand.u32 %v128, 4294901760
    %2773 = vmatpush1.msra.mxu0 %v2772
    %2774 = vmatprep.subr.mxu0 0.0
    %v2775 = vand.u32 %v129, 4294901760
    %2776 = vmatpush1.msra.mxu0 %v2775
    %2777 = vmatprep.subr.mxu0 0.0
    %v2778 = vand.u32 %v130, 4294901760
    %2779 = vmatpush1.msra.mxu0 %v2778
    %2780 = vmatprep.subr.mxu0 0.0
    %v2781 = vand.u32 %v131, 4294901760
    %2782 = vmatpush1.msra.mxu0 %v2781
    %2783 = vmatprep.subr.mxu0 0.0
    %v2784 = vand.u32 %v132, 4294901760
    %2785 = vmatpush1.msra.mxu0 %v2784
    %2786 = vmatprep.subr.mxu0 0.0
    %v2787 = vand.u32 %v133, 4294901760
    %2788 = vmatpush1.msra.mxu0 %v2787
    %2789 = vmatprep.subr.mxu0 0.0
    %v2790 = vand.u32 %v134, 4294901760
    %2791 = vmatpush1.msra.mxu0 %v2790
    %2792 = vmatprep.subr.mxu0 0.0
    %v2793 = vand.u32 %v135, 4294901760
    %2794 = vmatpush1.msra.mxu0 %v2793
    %2795 = vmatprep.subr.mxu0 0.0
    %v2796 = vand.u32 %v136, 4294901760
    %2797 = vmatpush1.msra.mxu0 %v2796
    %2798 = vmatprep.subr.mxu0 0.0
    %v2799 = vand.u32 %v137, 4294901760
    %2800 = vmatpush1.msra.mxu0 %v2799
    %2801 = vmatprep.subr.mxu0 0.0
    %v2802 = vand.u32 %v138, 4294901760
    %2803 = vmatpush1.msra.mxu0 %v2802
    %2804 = vmatprep.subr.mxu0 0.0
    %v2805 = vand.u32 %v139, 4294901760
    %2806 = vmatpush1.msra.mxu0 %v2805
    %2807 = vmatprep.subr.mxu0 0.0
    %v2808 = vand.u32 %v140, 4294901760
    %2809 = vmatpush1.msra.mxu0 %v2808
    %2810 = vmatprep.subr.mxu0 0.0
    %v2811 = vand.u32 %v141, 4294901760
    %2812 = vmatpush1.msra.mxu0 %v2811
    %2813 = vmatprep.subr.mxu0 0.0
    %v2814 = vand.u32 %v142, 4294901760
    %2815 = vmatpush1.msra.mxu0 %v2814
    %2816 = vmatprep.subr.mxu0 0.0
    %v2817 = vand.u32 %v143, 4294901760
    %2818 = vmatpush1.msra.mxu0 %v2817
    %2819 = vmatprep.subr.mxu0 0.0
    %v2820 = vand.u32 %v144, 4294901760
    %2821 = vmatpush1.msra.mxu0 %v2820
    %2822 = vmatprep.subr.mxu0 0.0
    %v2823 = vand.u32 %v145, 4294901760
    %2824 = vmatpush1.msra.mxu0 %v2823
    %2825 = vmatprep.subr.mxu0 0.0
    %v2826 = vand.u32 %v146, 4294901760
    %2827 = vmatpush1.msra.mxu0 %v2826
    %2828 = vmatprep.subr.mxu0 0.0
    %v2829 = vand.u32 %v147, 4294901760
    %2830 = vmatpush1.msra.mxu0 %v2829
    %2831 = vmatprep.subr.mxu0 0.0
    %v2832 = vand.u32 %v148, 4294901760
    %2833 = vmatpush1.msra.mxu0 %v2832
    %2834 = vmatprep.subr.mxu0 0.0
    %v2835 = vand.u32 %v149, 4294901760
    %2836 = vmatpush1.msra.mxu0 %v2835
    %2837 = vmatprep.subr.mxu0 0.0
    %v2838 = vand.u32 %v150, 4294901760
    %2839 = vmatpush1.msra.mxu0 %v2838
    %v2840 = vand.u32 %v22, 4294901760
    %v2841 = vsub.f32 %v22, %v2840
    %v2842 = vand.u32 %v2841, 4294901760
    %v2843 = vsub.f32 %v2841, %v2842
    %v2844 = vand.u32 %v2843, 4294901760
    %2845 = vmatprep.mubr.f32.mxu0 %v2844
    %v2846 = vand.u32 %v21, 4294901760
    %v2847 = vsub.f32 %v21, %v2846
    %v2848 = vand.u32 %v2847, 4294901760
    %v2849 = vsub.f32 %v2847, %v2848
    %v2850 = vand.u32 %v2849, 4294901760
    %2851 = vmatmul.mubr.f32.gmra.mrb[0].mxu0 %v2850
    %v2852 = vpop.f32.mrb[0].mxu0
    %v2853 = vadd.f32 %v2741, %v2852
    %v2854 = vpop.f32.mrb[0].mxu0
    %2855 = vdwg.mxu0
    %2856 = vmatprep.subr.mxu0 0.0
    %v2857 = vand.u32 %v119, 4294901760
    %v2858 = vsub.f32 %v119, %v2857
    %v2859 = vand.u32 %v2858, 4294901760
    %v2860 = vsub.f32 %v2858, %v2859
    %v2861 = vand.u32 %v2860, 4294901760
    %2862 = vmatpush1.msra.mxu0 %v2861
    %2863 = vmatprep.subr.mxu0 0.0
    %v2864 = vand.u32 %v120, 4294901760
    %v2865 = vsub.f32 %v120, %v2864
    %v2866 = vand.u32 %v2865, 4294901760
    %v2867 = vsub.f32 %v2865, %v2866
    %v2868 = vand.u32 %v2867, 4294901760
    %2869 = vmatpush1.msra.mxu0 %v2868
    %2870 = vmatprep.subr.mxu0 0.0
    %v2871 = vand.u32 %v121, 4294901760
    %v2872 = vsub.f32 %v121, %v2871
    %v2873 = vand.u32 %v2872, 4294901760
    %v2874 = vsub.f32 %v2872, %v2873
    %v2875 = vand.u32 %v2874, 4294901760
    %2876 = vmatpush1.msra.mxu0 %v2875
    %2877 = vmatprep.subr.mxu0 0.0
    %v2878 = vand.u32 %v122, 4294901760
    %v2879 = vsub.f32 %v122, %v2878
    %v2880 = vand.u32 %v2879, 4294901760
    %v2881 = vsub.f32 %v2879, %v2880
    %v2882 = vand.u32 %v2881, 4294901760
    %2883 = vmatpush1.msra.mxu0 %v2882
    %2884 = vmatprep.subr.mxu0 0.0
    %v2885 = vand.u32 %v123, 4294901760
    %v2886 = vsub.f32 %v123, %v2885
    %v2887 = vand.u32 %v2886, 4294901760
    %v2888 = vsub.f32 %v2886, %v2887
    %v2889 = vand.u32 %v2888, 4294901760
    %2890 = vmatpush1.msra.mxu0 %v2889
    %2891 = vmatprep.subr.mxu0 0.0
    %v2892 = vand.u32 %v124, 4294901760
    %v2893 = vsub.f32 %v124, %v2892
    %v2894 = vand.u32 %v2893, 4294901760
    %v2895 = vsub.f32 %v2893, %v2894
    %v2896 = vand.u32 %v2895, 4294901760
    %2897 = vmatpush1.msra.mxu0 %v2896
    %2898 = vmatprep.subr.mxu0 0.0
    %v2899 = vand.u32 %v125, 4294901760
    %v2900 = vsub.f32 %v125, %v2899
    %v2901 = vand.u32 %v2900, 4294901760
    %v2902 = vsub.f32 %v2900, %v2901
    %v2903 = vand.u32 %v2902, 4294901760
    %2904 = vmatpush1.msra.mxu0 %v2903
    %2905 = vmatprep.subr.mxu0 0.0
    %v2906 = vand.u32 %v126, 4294901760
    %v2907 = vsub.f32 %v126, %v2906
    %v2908 = vand.u32 %v2907, 4294901760
    %v2909 = vsub.f32 %v2907, %v2908
    %v2910 = vand.u32 %v2909, 4294901760
    %2911 = vmatpush1.msra.mxu0 %v2910
    %2912 = vmatprep.subr.mxu0 0.0
    %v2913 = vand.u32 %v127, 4294901760
    %v2914 = vsub.f32 %v127, %v2913
    %v2915 = vand.u32 %v2914, 4294901760
    %v2916 = vsub.f32 %v2914, %v2915
    %v2917 = vand.u32 %v2916, 4294901760
    %2918 = vmatpush1.msra.mxu0 %v2917
    %2919 = vmatprep.subr.mxu0 0.0
    %v2920 = vand.u32 %v128, 4294901760
    %v2921 = vsub.f32 %v128, %v2920
    %v2922 = vand.u32 %v2921, 4294901760
    %v2923 = vsub.f32 %v2921, %v2922
    %v2924 = vand.u32 %v2923, 4294901760
    %2925 = vmatpush1.msra.mxu0 %v2924
    %2926 = vmatprep.subr.mxu0 0.0
    %v2927 = vand.u32 %v129, 4294901760
    %v2928 = vsub.f32 %v129, %v2927
    %v2929 = vand.u32 %v2928, 4294901760
    %v2930 = vsub.f32 %v2928, %v2929
    %v2931 = vand.u32 %v2930, 4294901760
    %2932 = vmatpush1.msra.mxu0 %v2931
    %2933 = vmatprep.subr.mxu0 0.0
    %v2934 = vand.u32 %v130, 4294901760
    %v2935 = vsub.f32 %v130, %v2934
    %v2936 = vand.u32 %v2935, 4294901760
    %v2937 = vsub.f32 %v2935, %v2936
    %v2938 = vand.u32 %v2937, 4294901760
    %2939 = vmatpush1.msra.mxu0 %v2938
    %2940 = vmatprep.subr.mxu0 0.0
    %v2941 = vand.u32 %v131, 4294901760
    %v2942 = vsub.f32 %v131, %v2941
    %v2943 = vand.u32 %v2942, 4294901760
    %v2944 = vsub.f32 %v2942, %v2943
    %v2945 = vand.u32 %v2944, 4294901760
    %2946 = vmatpush1.msra.mxu0 %v2945
    %2947 = vmatprep.subr.mxu0 0.0
    %v2948 = vand.u32 %v132, 4294901760
    %v2949 = vsub.f32 %v132, %v2948
    %v2950 = vand.u32 %v2949, 4294901760
    %v2951 = vsub.f32 %v2949, %v2950
    %v2952 = vand.u32 %v2951, 4294901760
    %2953 = vmatpush1.msra.mxu0 %v2952
    %2954 = vmatprep.subr.mxu0 0.0
    %v2955 = vand.u32 %v133, 4294901760
    %v2956 = vsub.f32 %v133, %v2955
    %v2957 = vand.u32 %v2956, 4294901760
    %v2958 = vsub.f32 %v2956, %v2957
    %v2959 = vand.u32 %v2958, 4294901760
    %2960 = vmatpush1.msra.mxu0 %v2959
    %2961 = vmatprep.subr.mxu0 0.0
    %v2962 = vand.u32 %v134, 4294901760
    %v2963 = vsub.f32 %v134, %v2962
    %v2964 = vand.u32 %v2963, 4294901760
    %v2965 = vsub.f32 %v2963, %v2964
    %v2966 = vand.u32 %v2965, 4294901760
    %2967 = vmatpush1.msra.mxu0 %v2966
    %2968 = vmatprep.subr.mxu0 0.0
    %v2969 = vand.u32 %v135, 4294901760
    %v2970 = vsub.f32 %v135, %v2969
    %v2971 = vand.u32 %v2970, 4294901760
    %v2972 = vsub.f32 %v2970, %v2971
    %v2973 = vand.u32 %v2972, 4294901760
    %2974 = vmatpush1.msra.mxu0 %v2973
    %2975 = vmatprep.subr.mxu0 0.0
    %v2976 = vand.u32 %v136, 4294901760
    %v2977 = vsub.f32 %v136, %v2976
    %v2978 = vand.u32 %v2977, 4294901760
    %v2979 = vsub.f32 %v2977, %v2978
    %v2980 = vand.u32 %v2979, 4294901760
    %2981 = vmatpush1.msra.mxu0 %v2980
    %2982 = vmatprep.subr.mxu0 0.0
    %v2983 = vand.u32 %v137, 4294901760
    %v2984 = vsub.f32 %v137, %v2983
    %v2985 = vand.u32 %v2984, 4294901760
    %v2986 = vsub.f32 %v2984, %v2985
    %v2987 = vand.u32 %v2986, 4294901760
    %2988 = vmatpush1.msra.mxu0 %v2987
    %2989 = vmatprep.subr.mxu0 0.0
    %v2990 = vand.u32 %v138, 4294901760
    %v2991 = vsub.f32 %v138, %v2990
    %v2992 = vand.u32 %v2991, 4294901760
    %v2993 = vsub.f32 %v2991, %v2992
    %v2994 = vand.u32 %v2993, 4294901760
    %2995 = vmatpush1.msra.mxu0 %v2994
    %2996 = vmatprep.subr.mxu0 0.0
    %v2997 = vand.u32 %v139, 4294901760
    %v2998 = vsub.f32 %v139, %v2997
    %v2999 = vand.u32 %v2998, 4294901760
    %v3000 = vsub.f32 %v2998, %v2999
    %v3001 = vand.u32 %v3000, 4294901760
    %3002 = vmatpush1.msra.mxu0 %v3001
    %3003 = vmatprep.subr.mxu0 0.0
    %v3004 = vand.u32 %v140, 4294901760
    %v3005 = vsub.f32 %v140, %v3004
    %v3006 = vand.u32 %v3005, 4294901760
    %v3007 = vsub.f32 %v3005, %v3006
    %v3008 = vand.u32 %v3007, 4294901760
    %3009 = vmatpush1.msra.mxu0 %v3008
    %3010 = vmatprep.subr.mxu0 0.0
    %v3011 = vand.u32 %v141, 4294901760
    %v3012 = vsub.f32 %v141, %v3011
    %v3013 = vand.u32 %v3012, 4294901760
    %v3014 = vsub.f32 %v3012, %v3013
    %v3015 = vand.u32 %v3014, 4294901760
    %3016 = vmatpush1.msra.mxu0 %v3015
    %3017 = vmatprep.subr.mxu0 0.0
    %v3018 = vand.u32 %v142, 4294901760
    %v3019 = vsub.f32 %v142, %v3018
    %v3020 = vand.u32 %v3019, 4294901760
    %v3021 = vsub.f32 %v3019, %v3020
    %v3022 = vand.u32 %v3021, 4294901760
    %3023 = vmatpush1.msra.mxu0 %v3022
    %3024 = vmatprep.subr.mxu0 0.0
    %v3025 = vand.u32 %v143, 4294901760
    %v3026 = vsub.f32 %v143, %v3025
    %v3027 = vand.u32 %v3026, 4294901760
    %v3028 = vsub.f32 %v3026, %v3027
    %v3029 = vand.u32 %v3028, 4294901760
    %3030 = vmatpush1.msra.mxu0 %v3029
    %3031 = vmatprep.subr.mxu0 0.0
    %v3032 = vand.u32 %v144, 4294901760
    %v3033 = vsub.f32 %v144, %v3032
    %v3034 = vand.u32 %v3033, 4294901760
    %v3035 = vsub.f32 %v3033, %v3034
    %v3036 = vand.u32 %v3035, 4294901760
    %3037 = vmatpush1.msra.mxu0 %v3036
    %3038 = vmatprep.subr.mxu0 0.0
    %v3039 = vand.u32 %v145, 4294901760
    %v3040 = vsub.f32 %v145, %v3039
    %v3041 = vand.u32 %v3040, 4294901760
    %v3042 = vsub.f32 %v3040, %v3041
    %v3043 = vand.u32 %v3042, 4294901760
    %3044 = vmatpush1.msra.mxu0 %v3043
    %3045 = vmatprep.subr.mxu0 0.0
    %v3046 = vand.u32 %v146, 4294901760
    %v3047 = vsub.f32 %v146, %v3046
    %v3048 = vand.u32 %v3047, 4294901760
    %v3049 = vsub.f32 %v3047, %v3048
    %v3050 = vand.u32 %v3049, 4294901760
    %3051 = vmatpush1.msra.mxu0 %v3050
    %3052 = vmatprep.subr.mxu0 0.0
    %v3053 = vand.u32 %v147, 4294901760
    %v3054 = vsub.f32 %v147, %v3053
    %v3055 = vand.u32 %v3054, 4294901760
    %v3056 = vsub.f32 %v3054, %v3055
    %v3057 = vand.u32 %v3056, 4294901760
    %3058 = vmatpush1.msra.mxu0 %v3057
    %3059 = vmatprep.subr.mxu0 0.0
    %v3060 = vand.u32 %v148, 4294901760
    %v3061 = vsub.f32 %v148, %v3060
    %v3062 = vand.u32 %v3061, 4294901760
    %v3063 = vsub.f32 %v3061, %v3062
    %v3064 = vand.u32 %v3063, 4294901760
    %3065 = vmatpush1.msra.mxu0 %v3064
    %3066 = vmatprep.subr.mxu0 0.0
    %v3067 = vand.u32 %v149, 4294901760
    %v3068 = vsub.f32 %v149, %v3067
    %v3069 = vand.u32 %v3068, 4294901760
    %v3070 = vsub.f32 %v3068, %v3069
    %v3071 = vand.u32 %v3070, 4294901760
    %3072 = vmatpush1.msra.mxu0 %v3071
    %3073 = vmatprep.subr.mxu0 0.0
    %v3074 = vand.u32 %v150, 4294901760
    %v3075 = vsub.f32 %v150, %v3074
    %v3076 = vand.u32 %v3075, 4294901760
    %v3077 = vsub.f32 %v3075, %v3076
    %v3078 = vand.u32 %v3077, 4294901760
    %3079 = vmatpush1.msra.mxu0 %v3078
    %v3080 = vand.u32 %v22, 4294901760
    %3081 = vmatprep.mubr.f32.mxu0 %v3080
    %v3082 = vand.u32 %v21, 4294901760
    %3083 = vmatmul.mubr.f32.gmra.mrb[0].mxu0 %v3082
    %v3084 = vpop.f32.mrb[0].mxu0
    %v3085 = vadd.f32 %v2853, %v3084
    %v3086 = vpop.f32.mrb[0].mxu0
    %3087 = vdwg.mxu0
    %3088 = vmatprep.subr.mxu0 0.0
    %v3089 = vand.u32 %v119, 4294901760
    %v3090 = vsub.f32 %v119, %v3089
    %3091 = vmatpush1.msra.mxu0 %v3090
    %3092 = vmatprep.subr.mxu0 0.0
    %v3093 = vand.u32 %v120, 4294901760
    %v3094 = vsub.f32 %v120, %v3093
    %3095 = vmatpush1.msra.mxu0 %v3094
    %3096 = vmatprep.subr.mxu0 0.0
    %v3097 = vand.u32 %v121, 4294901760
    %v3098 = vsub.f32 %v121, %v3097
    %3099 = vmatpush1.msra.mxu0 %v3098
    %3100 = vmatprep.subr.mxu0 0.0
    %v3101 = vand.u32 %v122, 4294901760
    %v3102 = vsub.f32 %v122, %v3101
    %3103 = vmatpush1.msra.mxu0 %v3102
    %3104 = vmatprep.subr.mxu0 0.0
    %v3105 = vand.u32 %v123, 4294901760
    %v3106 = vsub.f32 %v123, %v3105
    %3107 = vmatpush1.msra.mxu0 %v3106
    %3108 = vmatprep.subr.mxu0 0.0
    %v3109 = vand.u32 %v124, 4294901760
    %v3110 = vsub.f32 %v124, %v3109
    %3111 = vmatpush1.msra.mxu0 %v3110
    %3112 = vmatprep.subr.mxu0 0.0
    %v3113 = vand.u32 %v125, 4294901760
    %v3114 = vsub.f32 %v125, %v3113
    %3115 = vmatpush1.msra.mxu0 %v3114
    %3116 = vmatprep.subr.mxu0 0.0
    %v3117 = vand.u32 %v126, 4294901760
    %v3118 = vsub.f32 %v126, %v3117
    %3119 = vmatpush1.msra.mxu0 %v3118
    %3120 = vmatprep.subr.mxu0 0.0
    %v3121 = vand.u32 %v127, 4294901760
    %v3122 = vsub.f32 %v127, %v3121
    %3123 = vmatpush1.msra.mxu0 %v3122
    %3124 = vmatprep.subr.mxu0 0.0
    %v3125 = vand.u32 %v128, 4294901760
    %v3126 = vsub.f32 %v128, %v3125
    %3127 = vmatpush1.msra.mxu0 %v3126
    %3128 = vmatprep.subr.mxu0 0.0
    %v3129 = vand.u32 %v129, 4294901760
    %v3130 = vsub.f32 %v129, %v3129
    %3131 = vmatpush1.msra.mxu0 %v3130
    %3132 = vmatprep.subr.mxu0 0.0
    %v3133 = vand.u32 %v130, 4294901760
    %v3134 = vsub.f32 %v130, %v3133
    %3135 = vmatpush1.msra.mxu0 %v3134
    %3136 = vmatprep.subr.mxu0 0.0
    %v3137 = vand.u32 %v131, 4294901760
    %v3138 = vsub.f32 %v131, %v3137
    %3139 = vmatpush1.msra.mxu0 %v3138
    %3140 = vmatprep.subr.mxu0 0.0
    %v3141 = vand.u32 %v132, 4294901760
    %v3142 = vsub.f32 %v132, %v3141
    %3143 = vmatpush1.msra.mxu0 %v3142
    %3144 = vmatprep.subr.mxu0 0.0
    %v3145 = vand.u32 %v133, 4294901760
    %v3146 = vsub.f32 %v133, %v3145
    %3147 = vmatpush1.msra.mxu0 %v3146
    %3148 = vmatprep.subr.mxu0 0.0
    %v3149 = vand.u32 %v134, 4294901760
    %v3150 = vsub.f32 %v134, %v3149
    %3151 = vmatpush1.msra.mxu0 %v3150
    %3152 = vmatprep.subr.mxu0 0.0
    %v3153 = vand.u32 %v135, 4294901760
    %v3154 = vsub.f32 %v135, %v3153
    %3155 = vmatpush1.msra.mxu0 %v3154
    %3156 = vmatprep.subr.mxu0 0.0
    %v3157 = vand.u32 %v136, 4294901760
    %v3158 = vsub.f32 %v136, %v3157
    %3159 = vmatpush1.msra.mxu0 %v3158
    %3160 = vmatprep.subr.mxu0 0.0
    %v3161 = vand.u32 %v137, 4294901760
    %v3162 = vsub.f32 %v137, %v3161
    %3163 = vmatpush1.msra.mxu0 %v3162
    %3164 = vmatprep.subr.mxu0 0.0
    %v3165 = vand.u32 %v138, 4294901760
    %v3166 = vsub.f32 %v138, %v3165
    %3167 = vmatpush1.msra.mxu0 %v3166
    %3168 = vmatprep.subr.mxu0 0.0
    %v3169 = vand.u32 %v139, 4294901760
    %v3170 = vsub.f32 %v139, %v3169
    %3171 = vmatpush1.msra.mxu0 %v3170
    %3172 = vmatprep.subr.mxu0 0.0
    %v3173 = vand.u32 %v140, 4294901760
    %v3174 = vsub.f32 %v140, %v3173
    %3175 = vmatpush1.msra.mxu0 %v3174
    %3176 = vmatprep.subr.mxu0 0.0
    %v3177 = vand.u32 %v141, 4294901760
    %v3178 = vsub.f32 %v141, %v3177
    %3179 = vmatpush1.msra.mxu0 %v3178
    %3180 = vmatprep.subr.mxu0 0.0
    %v3181 = vand.u32 %v142, 4294901760
    %v3182 = vsub.f32 %v142, %v3181
    %3183 = vmatpush1.msra.mxu0 %v3182
    %3184 = vmatprep.subr.mxu0 0.0
    %v3185 = vand.u32 %v143, 4294901760
    %v3186 = vsub.f32 %v143, %v3185
    %3187 = vmatpush1.msra.mxu0 %v3186
    %3188 = vmatprep.subr.mxu0 0.0
    %v3189 = vand.u32 %v144, 4294901760
    %v3190 = vsub.f32 %v144, %v3189
    %3191 = vmatpush1.msra.mxu0 %v3190
    %3192 = vmatprep.subr.mxu0 0.0
    %v3193 = vand.u32 %v145, 4294901760
    %v3194 = vsub.f32 %v145, %v3193
    %3195 = vmatpush1.msra.mxu0 %v3194
    %3196 = vmatprep.subr.mxu0 0.0
    %v3197 = vand.u32 %v146, 4294901760
    %v3198 = vsub.f32 %v146, %v3197
    %3199 = vmatpush1.msra.mxu0 %v3198
    %3200 = vmatprep.subr.mxu0 0.0
    %v3201 = vand.u32 %v147, 4294901760
    %v3202 = vsub.f32 %v147, %v3201
    %3203 = vmatpush1.msra.mxu0 %v3202
    %3204 = vmatprep.subr.mxu0 0.0
    %v3205 = vand.u32 %v148, 4294901760
    %v3206 = vsub.f32 %v148, %v3205
    %3207 = vmatpush1.msra.mxu0 %v3206
    %3208 = vmatprep.subr.mxu0 0.0
    %v3209 = vand.u32 %v149, 4294901760
    %v3210 = vsub.f32 %v149, %v3209
    %3211 = vmatpush1.msra.mxu0 %v3210
    %3212 = vmatprep.subr.mxu0 0.0
    %v3213 = vand.u32 %v150, 4294901760
    %v3214 = vsub.f32 %v150, %v3213
    %3215 = vmatpush1.msra.mxu0 %v3214
    %v3216 = vand.u32 %v22, 4294901760
    %v3217 = vsub.f32 %v22, %v3216
    %3218 = vmatprep.mubr.f32.mxu0 %v3217
    %v3219 = vand.u32 %v21, 4294901760
    %v3220 = vsub.f32 %v21, %v3219
    %3221 = vmatmul.mubr.f32.gmra.mrb[0].mxu0 %v3220
    %v3222 = vpop.f32.mrb[0].mxu0
    %v3223 = vadd.f32 %v3085, %v3222
    %v3224 = vpop.f32.mrb[0].mxu0
    %3225 = vdwg.mxu0
    %3226 = vmatprep.subr.mxu0 0.0
    %v3227 = vand.u32 %v119, 4294901760
    %3228 = vmatpush1.msra.mxu0 %v3227
    %3229 = vmatprep.subr.mxu0 0.0
    %v3230 = vand.u32 %v120, 4294901760
    %3231 = vmatpush1.msra.mxu0 %v3230
    %3232 = vmatprep.subr.mxu0 0.0
    %v3233 = vand.u32 %v121, 4294901760
    %3234 = vmatpush1.msra.mxu0 %v3233
    %3235 = vmatprep.subr.mxu0 0.0
    %v3236 = vand.u32 %v122, 4294901760
    %3237 = vmatpush1.msra.mxu0 %v3236
    %3238 = vmatprep.subr.mxu0 0.0
    %v3239 = vand.u32 %v123, 4294901760
    %3240 = vmatpush1.msra.mxu0 %v3239
    %3241 = vmatprep.subr.mxu0 0.0
    %v3242 = vand.u32 %v124, 4294901760
    %3243 = vmatpush1.msra.mxu0 %v3242
    %3244 = vmatprep.subr.mxu0 0.0
    %v3245 = vand.u32 %v125, 4294901760
    %3246 = vmatpush1.msra.mxu0 %v3245
    %3247 = vmatprep.subr.mxu0 0.0
    %v3248 = vand.u32 %v126, 4294901760
    %3249 = vmatpush1.msra.mxu0 %v3248
    %3250 = vmatprep.subr.mxu0 0.0
    %v3251 = vand.u32 %v127, 4294901760
    %3252 = vmatpush1.msra.mxu0 %v3251
    %3253 = vmatprep.subr.mxu0 0.0
    %v3254 = vand.u32 %v128, 4294901760
    %3255 = vmatpush1.msra.mxu0 %v3254
    %3256 = vmatprep.subr.mxu0 0.0
    %v3257 = vand.u32 %v129, 4294901760
    %3258 = vmatpush1.msra.mxu0 %v3257
    %3259 = vmatprep.subr.mxu0 0.0
    %v3260 = vand.u32 %v130, 4294901760
    %3261 = vmatpush1.msra.mxu0 %v3260
    %3262 = vmatprep.subr.mxu0 0.0
    %v3263 = vand.u32 %v131, 4294901760
    %3264 = vmatpush1.msra.mxu0 %v3263
    %3265 = vmatprep.subr.mxu0 0.0
    %v3266 = vand.u32 %v132, 4294901760
    %3267 = vmatpush1.msra.mxu0 %v3266
    %3268 = vmatprep.subr.mxu0 0.0
    %v3269 = vand.u32 %v133, 4294901760
    %3270 = vmatpush1.msra.mxu0 %v3269
    %3271 = vmatprep.subr.mxu0 0.0
    %v3272 = vand.u32 %v134, 4294901760
    %3273 = vmatpush1.msra.mxu0 %v3272
    %3274 = vmatprep.subr.mxu0 0.0
    %v3275 = vand.u32 %v135, 4294901760
    %3276 = vmatpush1.msra.mxu0 %v3275
    %3277 = vmatprep.subr.mxu0 0.0
    %v3278 = vand.u32 %v136, 4294901760
    %3279 = vmatpush1.msra.mxu0 %v3278
    %3280 = vmatprep.subr.mxu0 0.0
    %v3281 = vand.u32 %v137, 4294901760
    %3282 = vmatpush1.msra.mxu0 %v3281
    %3283 = vmatprep.subr.mxu0 0.0
    %v3284 = vand.u32 %v138, 4294901760
    %3285 = vmatpush1.msra.mxu0 %v3284
    %3286 = vmatprep.subr.mxu0 0.0
    %v3287 = vand.u32 %v139, 4294901760
    %3288 = vmatpush1.msra.mxu0 %v3287
    %3289 = vmatprep.subr.mxu0 0.0
    %v3290 = vand.u32 %v140, 4294901760
    %3291 = vmatpush1.msra.mxu0 %v3290
    %3292 = vmatprep.subr.mxu0 0.0
    %v3293 = vand.u32 %v141, 4294901760
    %3294 = vmatpush1.msra.mxu0 %v3293
    %3295 = vmatprep.subr.mxu0 0.0
    %v3296 = vand.u32 %v142, 4294901760
    %3297 = vmatpush1.msra.mxu0 %v3296
    %3298 = vmatprep.subr.mxu0 0.0
    %v3299 = vand.u32 %v143, 4294901760
    %3300 = vmatpush1.msra.mxu0 %v3299
    %3301 = vmatprep.subr.mxu0 0.0
    %v3302 = vand.u32 %v144, 4294901760
    %3303 = vmatpush1.msra.mxu0 %v3302
    %3304 = vmatprep.subr.mxu0 0.0
    %v3305 = vand.u32 %v145, 4294901760
    %3306 = vmatpush1.msra.mxu0 %v3305
    %3307 = vmatprep.subr.mxu0 0.0
    %v3308 = vand.u32 %v146, 4294901760
    %3309 = vmatpush1.msra.mxu0 %v3308
    %3310 = vmatprep.subr.mxu0 0.0
    %v3311 = vand.u32 %v147, 4294901760
    %3312 = vmatpush1.msra.mxu0 %v3311
    %3313 = vmatprep.subr.mxu0 0.0
    %v3314 = vand.u32 %v148, 4294901760
    %3315 = vmatpush1.msra.mxu0 %v3314
    %3316 = vmatprep.subr.mxu0 0.0
    %v3317 = vand.u32 %v149, 4294901760
    %3318 = vmatpush1.msra.mxu0 %v3317
    %3319 = vmatprep.subr.mxu0 0.0
    %v3320 = vand.u32 %v150, 4294901760
    %3321 = vmatpush1.msra.mxu0 %v3320
    %v3322 = vand.u32 %v22, 4294901760
    %v3323 = vsub.f32 %v22, %v3322
    %v3324 = vand.u32 %v3323, 4294901760
    %3325 = vmatprep.mubr.f32.mxu0 %v3324
    %v3326 = vand.u32 %v21, 4294901760
    %v3327 = vsub.f32 %v21, %v3326
    %v3328 = vand.u32 %v3327, 4294901760
    %3329 = vmatmul.mubr.f32.gmra.mrb[0].mxu0 %v3328
    %v3330 = vpop.f32.mrb[0].mxu0
    %v3331 = vadd.f32 %v3223, %v3330
    %v3332 = vpop.f32.mrb[0].mxu0
    %3333 = vdwg.mxu0
    %3334 = vmatprep.subr.mxu0 0.0
    %v3335 = vand.u32 %v119, 4294901760
    %v3336 = vsub.f32 %v119, %v3335
    %v3337 = vand.u32 %v3336, 4294901760
    %3338 = vmatpush1.msra.mxu0 %v3337
    %3339 = vmatprep.subr.mxu0 0.0
    %v3340 = vand.u32 %v120, 4294901760
    %v3341 = vsub.f32 %v120, %v3340
    %v3342 = vand.u32 %v3341, 4294901760
    %3343 = vmatpush1.msra.mxu0 %v3342
    %3344 = vmatprep.subr.mxu0 0.0
    %v3345 = vand.u32 %v121, 4294901760
    %v3346 = vsub.f32 %v121, %v3345
    %v3347 = vand.u32 %v3346, 4294901760
    %3348 = vmatpush1.msra.mxu0 %v3347
    %3349 = vmatprep.subr.mxu0 0.0
    %v3350 = vand.u32 %v122, 4294901760
    %v3351 = vsub.f32 %v122, %v3350
    %v3352 = vand.u32 %v3351, 4294901760
    %3353 = vmatpush1.msra.mxu0 %v3352
    %3354 = vmatprep.subr.mxu0 0.0
    %v3355 = vand.u32 %v123, 4294901760
    %v3356 = vsub.f32 %v123, %v3355
    %v3357 = vand.u32 %v3356, 4294901760
    %3358 = vmatpush1.msra.mxu0 %v3357
    %3359 = vmatprep.subr.mxu0 0.0
    %v3360 = vand.u32 %v124, 4294901760
    %v3361 = vsub.f32 %v124, %v3360
    %v3362 = vand.u32 %v3361, 4294901760
    %3363 = vmatpush1.msra.mxu0 %v3362
    %3364 = vmatprep.subr.mxu0 0.0
    %v3365 = vand.u32 %v125, 4294901760
    %v3366 = vsub.f32 %v125, %v3365
    %v3367 = vand.u32 %v3366, 4294901760
    %3368 = vmatpush1.msra.mxu0 %v3367
    %3369 = vmatprep.subr.mxu0 0.0
    %v3370 = vand.u32 %v126, 4294901760
    %v3371 = vsub.f32 %v126, %v3370
    %v3372 = vand.u32 %v3371, 4294901760
    %3373 = vmatpush1.msra.mxu0 %v3372
    %3374 = vmatprep.subr.mxu0 0.0
    %v3375 = vand.u32 %v127, 4294901760
    %v3376 = vsub.f32 %v127, %v3375
    %v3377 = vand.u32 %v3376, 4294901760
    %3378 = vmatpush1.msra.mxu0 %v3377
    %3379 = vmatprep.subr.mxu0 0.0
    %v3380 = vand.u32 %v128, 4294901760
    %v3381 = vsub.f32 %v128, %v3380
    %v3382 = vand.u32 %v3381, 4294901760
    %3383 = vmatpush1.msra.mxu0 %v3382
    %3384 = vmatprep.subr.mxu0 0.0
    %v3385 = vand.u32 %v129, 4294901760
    %v3386 = vsub.f32 %v129, %v3385
    %v3387 = vand.u32 %v3386, 4294901760
    %3388 = vmatpush1.msra.mxu0 %v3387
    %3389 = vmatprep.subr.mxu0 0.0
    %v3390 = vand.u32 %v130, 4294901760
    %v3391 = vsub.f32 %v130, %v3390
    %v3392 = vand.u32 %v3391, 4294901760
    %3393 = vmatpush1.msra.mxu0 %v3392
    %3394 = vmatprep.subr.mxu0 0.0
    %v3395 = vand.u32 %v131, 4294901760
    %v3396 = vsub.f32 %v131, %v3395
    %v3397 = vand.u32 %v3396, 4294901760
    %3398 = vmatpush1.msra.mxu0 %v3397
    %3399 = vmatprep.subr.mxu0 0.0
    %v3400 = vand.u32 %v132, 4294901760
    %v3401 = vsub.f32 %v132, %v3400
    %v3402 = vand.u32 %v3401, 4294901760
    %3403 = vmatpush1.msra.mxu0 %v3402
    %3404 = vmatprep.subr.mxu0 0.0
    %v3405 = vand.u32 %v133, 4294901760
    %v3406 = vsub.f32 %v133, %v3405
    %v3407 = vand.u32 %v3406, 4294901760
    %3408 = vmatpush1.msra.mxu0 %v3407
    %3409 = vmatprep.subr.mxu0 0.0
    %v3410 = vand.u32 %v134, 4294901760
    %v3411 = vsub.f32 %v134, %v3410
    %v3412 = vand.u32 %v3411, 4294901760
    %3413 = vmatpush1.msra.mxu0 %v3412
    %3414 = vmatprep.subr.mxu0 0.0
    %v3415 = vand.u32 %v135, 4294901760
    %v3416 = vsub.f32 %v135, %v3415
    %v3417 = vand.u32 %v3416, 4294901760
    %3418 = vmatpush1.msra.mxu0 %v3417
    %3419 = vmatprep.subr.mxu0 0.0
    %v3420 = vand.u32 %v136, 4294901760
    %v3421 = vsub.f32 %v136, %v3420
    %v3422 = vand.u32 %v3421, 4294901760
    %3423 = vmatpush1.msra.mxu0 %v3422
    %3424 = vmatprep.subr.mxu0 0.0
    %v3425 = vand.u32 %v137, 4294901760
    %v3426 = vsub.f32 %v137, %v3425
    %v3427 = vand.u32 %v3426, 4294901760
    %3428 = vmatpush1.msra.mxu0 %v3427
    %3429 = vmatprep.subr.mxu0 0.0
    %v3430 = vand.u32 %v138, 4294901760
    %v3431 = vsub.f32 %v138, %v3430
    %v3432 = vand.u32 %v3431, 4294901760
    %3433 = vmatpush1.msra.mxu0 %v3432
    %3434 = vmatprep.subr.mxu0 0.0
    %v3435 = vand.u32 %v139, 4294901760
    %v3436 = vsub.f32 %v139, %v3435
    %v3437 = vand.u32 %v3436, 4294901760
    %3438 = vmatpush1.msra.mxu0 %v3437
    %3439 = vmatprep.subr.mxu0 0.0
    %v3440 = vand.u32 %v140, 4294901760
    %v3441 = vsub.f32 %v140, %v3440
    %v3442 = vand.u32 %v3441, 4294901760
    %3443 = vmatpush1.msra.mxu0 %v3442
    %3444 = vmatprep.subr.mxu0 0.0
    %v3445 = vand.u32 %v141, 4294901760
    %v3446 = vsub.f32 %v141, %v3445
    %v3447 = vand.u32 %v3446, 4294901760
    %3448 = vmatpush1.msra.mxu0 %v3447
    %3449 = vmatprep.subr.mxu0 0.0
    %v3450 = vand.u32 %v142, 4294901760
    %v3451 = vsub.f32 %v142, %v3450
    %v3452 = vand.u32 %v3451, 4294901760
    %3453 = vmatpush1.msra.mxu0 %v3452
    %3454 = vmatprep.subr.mxu0 0.0
    %v3455 = vand.u32 %v143, 4294901760
    %v3456 = vsub.f32 %v143, %v3455
    %v3457 = vand.u32 %v3456, 4294901760
    %3458 = vmatpush1.msra.mxu0 %v3457
    %3459 = vmatprep.subr.mxu0 0.0
    %v3460 = vand.u32 %v144, 4294901760
    %v3461 = vsub.f32 %v144, %v3460
    %v3462 = vand.u32 %v3461, 4294901760
    %3463 = vmatpush1.msra.mxu0 %v3462
    %3464 = vmatprep.subr.mxu0 0.0
    %v3465 = vand.u32 %v145, 4294901760
    %v3466 = vsub.f32 %v145, %v3465
    %v3467 = vand.u32 %v3466, 4294901760
    %3468 = vmatpush1.msra.mxu0 %v3467
    %3469 = vmatprep.subr.mxu0 0.0
    %v3470 = vand.u32 %v146, 4294901760
    %v3471 = vsub.f32 %v146, %v3470
    %v3472 = vand.u32 %v3471, 4294901760
    %3473 = vmatpush1.msra.mxu0 %v3472
    %3474 = vmatprep.subr.mxu0 0.0
    %v3475 = vand.u32 %v147, 4294901760
    %v3476 = vsub.f32 %v147, %v3475
    %v3477 = vand.u32 %v3476, 4294901760
    %3478 = vmatpush1.msra.mxu0 %v3477
    %3479 = vmatprep.subr.mxu0 0.0
    %v3480 = vand.u32 %v148, 4294901760
    %v3481 = vsub.f32 %v148, %v3480
    %v3482 = vand.u32 %v3481, 4294901760
    %3483 = vmatpush1.msra.mxu0 %v3482
    %3484 = vmatprep.subr.mxu0 0.0
    %v3485 = vand.u32 %v149, 4294901760
    %v3486 = vsub.f32 %v149, %v3485
    %v3487 = vand.u32 %v3486, 4294901760
    %3488 = vmatpush1.msra.mxu0 %v3487
    %3489 = vmatprep.subr.mxu0 0.0
    %v3490 = vand.u32 %v150, 4294901760
    %v3491 = vsub.f32 %v150, %v3490
    %v3492 = vand.u32 %v3491, 4294901760
    %3493 = vmatpush1.msra.mxu0 %v3492
    %v3494 = vand.u32 %v22, 4294901760
    %3495 = vmatprep.mubr.f32.mxu0 %v3494
    %v3496 = vand.u32 %v21, 4294901760
    %3497 = vmatmul.mubr.f32.gmra.mrb[0].mxu0 %v3496
    %v3498 = vpop.f32.mrb[0].mxu0
    %v3499 = vadd.f32 %v3331, %v3498
    %v3500 = vpop.f32.mrb[0].mxu0
    %3501 = vdwg.mxu0
    %3502 = vmatprep.subr.mxu0 0.0
    %v3503 = vand.u32 %v119, 4294901760
    %3504 = vmatpush1.msra.mxu0 %v3503
    %3505 = vmatprep.subr.mxu0 0.0
    %v3506 = vand.u32 %v120, 4294901760
    %3507 = vmatpush1.msra.mxu0 %v3506
    %3508 = vmatprep.subr.mxu0 0.0
    %v3509 = vand.u32 %v121, 4294901760
    %3510 = vmatpush1.msra.mxu0 %v3509
    %3511 = vmatprep.subr.mxu0 0.0
    %v3512 = vand.u32 %v122, 4294901760
    %3513 = vmatpush1.msra.mxu0 %v3512
    %3514 = vmatprep.subr.mxu0 0.0
    %v3515 = vand.u32 %v123, 4294901760
    %3516 = vmatpush1.msra.mxu0 %v3515
    %3517 = vmatprep.subr.mxu0 0.0
    %v3518 = vand.u32 %v124, 4294901760
    %3519 = vmatpush1.msra.mxu0 %v3518
    %3520 = vmatprep.subr.mxu0 0.0
    %v3521 = vand.u32 %v125, 4294901760
    %3522 = vmatpush1.msra.mxu0 %v3521
    %3523 = vmatprep.subr.mxu0 0.0
    %v3524 = vand.u32 %v126, 4294901760
    %3525 = vmatpush1.msra.mxu0 %v3524
    %3526 = vmatprep.subr.mxu0 0.0
    %v3527 = vand.u32 %v127, 4294901760
    %3528 = vmatpush1.msra.mxu0 %v3527
    %3529 = vmatprep.subr.mxu0 0.0
    %v3530 = vand.u32 %v128, 4294901760
    %3531 = vmatpush1.msra.mxu0 %v3530
    %3532 = vmatprep.subr.mxu0 0.0
    %v3533 = vand.u32 %v129, 4294901760
    %3534 = vmatpush1.msra.mxu0 %v3533
    %3535 = vmatprep.subr.mxu0 0.0
    %v3536 = vand.u32 %v130, 4294901760
    %3537 = vmatpush1.msra.mxu0 %v3536
    %3538 = vmatprep.subr.mxu0 0.0
    %v3539 = vand.u32 %v131, 4294901760
    %3540 = vmatpush1.msra.mxu0 %v3539
    %3541 = vmatprep.subr.mxu0 0.0
    %v3542 = vand.u32 %v132, 4294901760
    %3543 = vmatpush1.msra.mxu0 %v3542
    %3544 = vmatprep.subr.mxu0 0.0
    %v3545 = vand.u32 %v133, 4294901760
    %3546 = vmatpush1.msra.mxu0 %v3545
    %3547 = vmatprep.subr.mxu0 0.0
    %v3548 = vand.u32 %v134, 4294901760
    %3549 = vmatpush1.msra.mxu0 %v3548
    %3550 = vmatprep.subr.mxu0 0.0
    %v3551 = vand.u32 %v135, 4294901760
    %3552 = vmatpush1.msra.mxu0 %v3551
    %3553 = vmatprep.subr.mxu0 0.0
    %v3554 = vand.u32 %v136, 4294901760
    %3555 = vmatpush1.msra.mxu0 %v3554
    %3556 = vmatprep.subr.mxu0 0.0
    %v3557 = vand.u32 %v137, 4294901760
    %3558 = vmatpush1.msra.mxu0 %v3557
    %3559 = vmatprep.subr.mxu0 0.0
    %v3560 = vand.u32 %v138, 4294901760
    %3561 = vmatpush1.msra.mxu0 %v3560
    %3562 = vmatprep.subr.mxu0 0.0
    %v3563 = vand.u32 %v139, 4294901760
    %3564 = vmatpush1.msra.mxu0 %v3563
    %3565 = vmatprep.subr.mxu0 0.0
    %v3566 = vand.u32 %v140, 4294901760
    %3567 = vmatpush1.msra.mxu0 %v3566
    %3568 = vmatprep.subr.mxu0 0.0
    %v3569 = vand.u32 %v141, 4294901760
    %3570 = vmatpush1.msra.mxu0 %v3569
    %3571 = vmatprep.subr.mxu0 0.0
    %v3572 = vand.u32 %v142, 4294901760
    %3573 = vmatpush1.msra.mxu0 %v3572
    %3574 = vmatprep.subr.mxu0 0.0
    %v3575 = vand.u32 %v143, 4294901760
    %3576 = vmatpush1.msra.mxu0 %v3575
    %3577 = vmatprep.subr.mxu0 0.0
    %v3578 = vand.u32 %v144, 4294901760
    %3579 = vmatpush1.msra.mxu0 %v3578
    %3580 = vmatprep.subr.mxu0 0.0
    %v3581 = vand.u32 %v145, 4294901760
    %3582 = vmatpush1.msra.mxu0 %v3581
    %3583 = vmatprep.subr.mxu0 0.0
    %v3584 = vand.u32 %v146, 4294901760
    %3585 = vmatpush1.msra.mxu0 %v3584
    %3586 = vmatprep.subr.mxu0 0.0
    %v3587 = vand.u32 %v147, 4294901760
    %3588 = vmatpush1.msra.mxu0 %v3587
    %3589 = vmatprep.subr.mxu0 0.0
    %v3590 = vand.u32 %v148, 4294901760
    %3591 = vmatpush1.msra.mxu0 %v3590
    %3592 = vmatprep.subr.mxu0 0.0
    %v3593 = vand.u32 %v149, 4294901760
    %3594 = vmatpush1.msra.mxu0 %v3593
    %3595 = vmatprep.subr.mxu0 0.0
    %v3596 = vand.u32 %v150, 4294901760
    %3597 = vmatpush1.msra.mxu0 %v3596
    %v3598 = vand.u32 %v22, 4294901760
    %3599 = vmatprep.mubr.f32.mxu0 %v3598
    %v3600 = vand.u32 %v21, 4294901760
    %3601 = vmatmul.mubr.f32.gmra.mrb[0].mxu0 %v3600
    %v3602 = vpop.f32.mrb[0].mxu0
    %v3603 = vadd.f32 %v3499, %v3602
    %v3604 = vpop.f32.mrb[0].mxu0
    %3605 = vdwg.mxu0
    %v3606 = vxor.u32 %v3603, 2147483648
    %v3607 = vmul.f32 %v3606, 1.442695
    %v3608 = vpow.pop %v3607
    %v3609 = vadd.f32 %v3608, 1.0
    %v3610 = vrcp.pop %v3609
    %v3611 = vmul.f32 1.0, %v3610
    %vm3612 = vcmask 80896
    %3613 = vst.msk [vmem:[#allocation2] sm:$0xff] %vm3612, %v3611
    // Predicated region
    $region14: #{tpu_custom_call.1} parent=1 // pred_check
      _
    $region15: #{tpu_custom_call.1} parent=1 // pred_check_branch
      %3615 = sbr.rel (0) target = $region17
    $region16: #{tpu_custom_call.1} parent=1 // pred_region
      %s3617 = ssub.s32 128, 128
      %3618 = vsyncadd [#allocation3], %s3617
      %s3620 = sshll.u32 [#allocation2], 4
      %s3621 = int_to_ptr.vmem [resolvable:$true] %s3620
      %3623 = dma.vmem_to_hbm [thread:$0]  %s3621, 128, %s3, [#allocation3]
    $region17: #{tpu_custom_call.1} parent=1 // pred_fallthru
      _
    // Predicated region
    $region18: #{tpu_custom_call.1} parent=1 // pred_check
      _
    $region19: #{tpu_custom_call.1} parent=1 // pred_check_branch
      %3625 = sbr.rel (0) target = $region21
    $region20: #{tpu_custom_call.1} parent=1 // pred_region
      %3626 = dma.done [#allocation3], 128
    $region21: #{tpu_custom_call.1} parent=1 // pred_fallthru
      _
    %3627 = vsyncpa [#allocation3], 1

// kernel: tpu_custom_call.1
$region0: #{tpu_custom_call.1}
  #allocation0 [shape = 'u32[]', space=smem, size = 0x4, offset = 0x4, fixed_abs, tag = 'smem constant byte address 0x4 - core index']
  #allocation1 [shape = 'u32[144,128]{1,0:T(1,128)}', space=vmem, size = 0x12000, scoped, tag = 'internal scratch']
  %s0 = inlined_call_operand.vmem [shape: f32[8,1024], index: 0, kind: input, shape index: {}]
  %s1 = inlined_call_operand.vmem [shape: f32[1024,10], index: 1, kind: input, shape index: {}]
  %s2 = inlined_call_operand.vmem [shape: f32[1,10], index: 2, kind: input, shape index: {}]
  %s3 = inlined_call_operand.hbm [shape: f32[8,10], index: 3, kind: output, shape index: {}]
  %s4 = sld [smem:[#allocation0]]
  $region22: #{tpu_custom_call.1} parent=0
    _
  %s6 = ssub.s32 1, %s4
  %s7 = scalar_select 0, %s6, %s4
  $region1: #{tpu_custom_call.1} parent=0
    #allocation2 [shape = 'u8[4096]{0}', space=vmem, size = 0x1000, scoped, tag = 'output window, operand 0, single buffered']
    #allocation3 [shape = 's32[1]{0}', space=sflag, size = 0x4, scoped, tag = 'scoped memory for tpu_custom_call.1']
    %8 = vsyncpa [#allocation3], 0
    // Predicated region
    $region2: #{tpu_custom_call.1} parent=1 // pred_check
      _
    $region3: #{tpu_custom_call.1} parent=1 // pred_check_branch
      %10 = sbr.rel (0) target = $region5
    $region4: #{tpu_custom_call.1} parent=1 // pred_region
      _
    $region5: #{tpu_custom_call.1} parent=1 // pred_fallthru
      _
    // Predicated region
    $region6: #{tpu_custom_call.1} parent=1 // pred_check
      _
    $region7: #{tpu_custom_call.1} parent=1 // pred_check_branch
      %12 = sbr.rel (0) target = $region9
    $region8: #{tpu_custom_call.1} parent=1 // pred_region
      _
    $region9: #{tpu_custom_call.1} parent=1 // pred_fallthru
      _
    // Predicated region
    $region10: #{tpu_custom_call.1} parent=1 // pred_check
      _
    $region11: #{tpu_custom_call.1} parent=1 // pred_check_branch
      %14 = sbr.rel (0) target = $region13
    $region12: #{tpu_custom_call.1} parent=1 // pred_region
      _
    $region13: #{tpu_custom_call.1} parent=1 // pred_fallthru
      _
    %v15 = vld [vmem:[%s0] sm:$0xff]
    %v16 = vld [vmem:[%s0 + $0x8] sm:$0xff]
    %v17 = vld [vmem:[%s0 + $0x10] sm:$0xff]
    %v18 = vld [vmem:[%s0 + $0x18] sm:$0xff]
    %v19 = vld [vmem:[%s0 + $0x20] sm:$0xff]
    %v20 = vld [vmem:[%s0 + $0x28] sm:$0xff]
    %v21 = vld [vmem:[%s0 + $0x30] sm:$0xff]
    %v22 = vld [vmem:[%s0 + $0x38] sm:$0xff]
    %v23 = vld [vmem:[%s1] sm:$0xff]
    %v24 = vld [vmem:[%s1 + $0x8] sm:$0xff]
    %v25 = vld [vmem:[%s1 + $0x10] sm:$0xff]
    %v26 = vld [vmem:[%s1 + $0x18] sm:$0xff]
    %v27 = vld [vmem:[%s1 + $0x20] sm:$0xff]
    %v28 = vld [vmem:[%s1 + $0x28] sm:$0xff]
    %v29 = vld [vmem:[%s1 + $0x30] sm:$0xff]
    %v30 = vld [vmem:[%s1 + $0x38] sm:$0xff]
    %v31 = vld [vmem:[%s1 + $0x40] sm:$0xff]
    %v32 = vld [vmem:[%s1 + $0x48] sm:$0xff]
    %v33 = vld [vmem:[%s1 + $0x50] sm:$0xff]
    %v34 = vld [vmem:[%s1 + $0x58] sm:$0xff]
    %v35 = vld [vmem:[%s1 + $0x60] sm:$0xff]
    %v36 = vld [vmem:[%s1 + $0x68] sm:$0xff]
    %v37 = vld [vmem:[%s1 + $0x70] sm:$0xff]
    %v38 = vld [vmem:[%s1 + $0x78] sm:$0xff]
    %v39 = vld [vmem:[%s1 + $0x80] sm:$0xff]
    %v40 = vld [vmem:[%s1 + $0x88] sm:$0xff]
    %v41 = vld [vmem:[%s1 + $0x90] sm:$0xff]
    %v42 = vld [vmem:[%s1 + $0x98] sm:$0xff]
    %v43 = vld [vmem:[%s1 + $0xa0] sm:$0xff]
    %v44 = vld [vmem:[%s1 + $0xa8] sm:$0xff]
    %v45 = vld [vmem:[%s1 + $0xb0] sm:$0xff]
    %v46 = vld [vmem:[%s1 + $0xb8] sm:$0xff]
    %v47 = vld [vmem:[%s1 + $0xc0] sm:$0xff]
    %v48 = vld [vmem:[%s1 + $0xc8] sm:$0xff]
    %v49 = vld [vmem:[%s1 + $0xd0] sm:$0xff]
    %v50 = vld [vmem:[%s1 + $0xd8] sm:$0xff]
    %v51 = vld [vmem:[%s1 + $0xe0] sm:$0xff]
    %v52 = vld [vmem:[%s1 + $0xe8] sm:$0xff]
    %v53 = vld [vmem:[%s1 + $0xf0] sm:$0xff]
    %v54 = vld [vmem:[%s1 + $0xf8] sm:$0xff]
    %v55 = vld [vmem:[%s1 + $0x100] sm:$0xff]
    %v56 = vld [vmem:[%s1 + $0x108] sm:$0xff]
    %v57 = vld [vmem:[%s1 + $0x110] sm:$0xff]
    %v58 = vld [vmem:[%s1 + $0x118] sm:$0xff]
    %v59 = vld [vmem:[%s1 + $0x120] sm:$0xff]
    %v60 = vld [vmem:[%s1 + $0x128] sm:$0xff]
    %v61 = vld [vmem:[%s1 + $0x130] sm:$0xff]
    %v62 = vld [vmem:[%s1 + $0x138] sm:$0xff]
    %v63 = vld [vmem:[%s1 + $0x140] sm:$0xff]
    %v64 = vld [vmem:[%s1 + $0x148] sm:$0xff]
    %v65 = vld [vmem:[%s1 + $0x150] sm:$0xff]
    %v66 = vld [vmem:[%s1 + $0x158] sm:$0xff]
    %v67 = vld [vmem:[%s1 + $0x160] sm:$0xff]
    %v68 = vld [vmem:[%s1 + $0x168] sm:$0xff]
    %v69 = vld [vmem:[%s1 + $0x170] sm:$0xff]
    %v70 = vld [vmem:[%s1 + $0x178] sm:$0xff]
    %v71 = vld [vmem:[%s1 + $0x180] sm:$0xff]
    %v72 = vld [vmem:[%s1 + $0x188] sm:$0xff]
    %v73 = vld [vmem:[%s1 + $0x190] sm:$0xff]
    %v74 = vld [vmem:[%s1 + $0x198] sm:$0xff]
    %v75 = vld [vmem:[%s1 + $0x1a0] sm:$0xff]
    %v76 = vld [vmem:[%s1 + $0x1a8] sm:$0xff]
    %v77 = vld [vmem:[%s1 + $0x1b0] sm:$0xff]
    %v78 = vld [vmem:[%s1 + $0x1b8] sm:$0xff]
    %v79 = vld [vmem:[%s1 + $0x1c0] sm:$0xff]
    %v80 = vld [vmem:[%s1 + $0x1c8] sm:$0xff]
    %v81 = vld [vmem:[%s1 + $0x1d0] sm:$0xff]
    %v82 = vld [vmem:[%s1 + $0x1d8] sm:$0xff]
    %v83 = vld [vmem:[%s1 + $0x1e0] sm:$0xff]
    %v84 = vld [vmem:[%s1 + $0x1e8] sm:$0xff]
    %v85 = vld [vmem:[%s1 + $0x1f0] sm:$0xff]
    %v86 = vld [vmem:[%s1 + $0x1f8] sm:$0xff]
    %v87 = vld [vmem:[%s1 + $0x200] sm:$0xff]
    %v88 = vld [vmem:[%s1 + $0x208] sm:$0xff]
    %v89 = vld [vmem:[%s1 + $0x210] sm:$0xff]
    %v90 = vld [vmem:[%s1 + $0x218] sm:$0xff]
    %v91 = vld [vmem:[%s1 + $0x220] sm:$0xff]
    %v92 = vld [vmem:[%s1 + $0x228] sm:$0xff]
    %v93 = vld [vmem:[%s1 + $0x230] sm:$0xff]
    %v94 = vld [vmem:[%s1 + $0x238] sm:$0xff]
    %v95 = vld [vmem:[%s1 + $0x240] sm:$0xff]
    %v96 = vld [vmem:[%s1 + $0x248] sm:$0xff]
    %v97 = vld [vmem:[%s1 + $0x250] sm:$0xff]
    %v98 = vld [vmem:[%s1 + $0x258] sm:$0xff]
    %v99 = vld [vmem:[%s1 + $0x260] sm:$0xff]
    %v100 = vld [vmem:[%s1 + $0x268] sm:$0xff]
    %v101 = vld [vmem:[%s1 + $0x270] sm:$0xff]
    %v102 = vld [vmem:[%s1 + $0x278] sm:$0xff]
    %v103 = vld [vmem:[%s1 + $0x280] sm:$0xff]
    %v104 = vld [vmem:[%s1 + $0x288] sm:$0xff]
    %v105 = vld [vmem:[%s1 + $0x290] sm:$0xff]
    %v106 = vld [vmem:[%s1 + $0x298] sm:$0xff]
    %v107 = vld [vmem:[%s1 + $0x2a0] sm:$0xff]
    %v108 = vld [vmem:[%s1 + $0x2a8] sm:$0xff]
    %v109 = vld [vmem:[%s1 + $0x2b0] sm:$0xff]
    %v110 = vld [vmem:[%s1 + $0x2b8] sm:$0xff]
    %v111 = vld [vmem:[%s1 + $0x2c0] sm:$0xff]
    %v112 = vld [vmem:[%s1 + $0x2c8] sm:$0xff]
    %v113 = vld [vmem:[%s1 + $0x2d0] sm:$0xff]
    %v114 = vld [vmem:[%s1 + $0x2d8] sm:$0xff]
    %v115 = vld [vmem:[%s1 + $0x2e0] sm:$0xff]
    %v116 = vld [vmem:[%s1 + $0x2e8] sm:$0xff]
    %v117 = vld [vmem:[%s1 + $0x2f0] sm:$0xff]
    %v118 = vld [vmem:[%s1 + $0x2f8] sm:$0xff]
    %v119 = vld [vmem:[%s1 + $0x300] sm:$0xff]
    %v120 = vld [vmem:[%s1 + $0x308] sm:$0xff]
    %v121 = vld [vmem:[%s1 + $0x310] sm:$0xff]
    %v122 = vld [vmem:[%s1 + $0x318] sm:$0xff]
    %v123 = vld [vmem:[%s1 + $0x320] sm:$0xff]
    %v124 = vld [vmem:[%s1 + $0x328] sm:$0xff]
    %v125 = vld [vmem:[%s1 + $0x330] sm:$0xff]
    %v126 = vld [vmem:[%s1 + $0x338] sm:$0xff]
    %v127 = vld [vmem:[%s1 + $0x340] sm:$0xff]
    %v128 = vld [vmem:[%s1 + $0x348] sm:$0xff]
    %v129 = vld [vmem:[%s1 + $0x350] sm:$0xff]
    %v130 = vld [vmem:[%s1 + $0x358] sm:$0xff]
    %v131 = vld [vmem:[%s1 + $0x360] sm:$0xff]
    %v132 = vld [vmem:[%s1 + $0x368] sm:$0xff]
    %v133 = vld [vmem:[%s1 + $0x370] sm:$0xff]
    %v134 = vld [vmem:[%s1 + $0x378] sm:$0xff]
    %v135 = vld [vmem:[%s1 + $0x380] sm:$0xff]
    %v136 = vld [vmem:[%s1 + $0x388] sm:$0xff]
    %v137 = vld [vmem:[%s1 + $0x390] sm:$0xff]
    %v138 = vld [vmem:[%s1 + $0x398] sm:$0xff]
    %v139 = vld [vmem:[%s1 + $0x3a0] sm:$0xff]
    %v140 = vld [vmem:[%s1 + $0x3a8] sm:$0xff]
    %v141 = vld [vmem:[%s1 + $0x3b0] sm:$0xff]
    %v142 = vld [vmem:[%s1 + $0x3b8] sm:$0xff]
    %v143 = vld [vmem:[%s1 + $0x3c0] sm:$0xff]
    %v144 = vld [vmem:[%s1 + $0x3c8] sm:$0xff]
    %v145 = vld [vmem:[%s1 + $0x3d0] sm:$0xff]
    %v146 = vld [vmem:[%s1 + $0x3d8] sm:$0xff]
    %v147 = vld [vmem:[%s1 + $0x3e0] sm:$0xff]
    %v148 = vld [vmem:[%s1 + $0x3e8] sm:$0xff]
    %v149 = vld [vmem:[%s1 + $0x3f0] sm:$0xff]
    %v150 = vld [vmem:[%s1 + $0x3f8] sm:$0xff]
    %v151 = vld [vmem:[%s2] sm:$0x1]
    %v153 = vlaneseq
    %v154 = vshrl.u32 %v153, 7
    %v155 = vsub.s32 0, %v154
    %v156 = vrot.slane %v151, %v155
    %158 = vmatprep.subr.mxu0 0.0
    %v159 = vand.u32 %v23, 4294901760
    %160 = vmatpush1.msra.mxu0 %v159
    %161 = vmatprep.subr.mxu0 0.0
    %v162 = vand.u32 %v24, 4294901760
    %163 = vmatpush1.msra.mxu0 %v162
    %164 = vmatprep.subr.mxu0 0.0
    %v165 = vand.u32 %v25, 4294901760
    %166 = vmatpush1.msra.mxu0 %v165
    %167 = vmatprep.subr.mxu0 0.0
    %v168 = vand.u32 %v26, 4294901760
    %169 = vmatpush1.msra.mxu0 %v168
    %170 = vmatprep.subr.mxu0 0.0
    %v171 = vand.u32 %v27, 4294901760
    %172 = vmatpush1.msra.mxu0 %v171
    %173 = vmatprep.subr.mxu0 0.0
    %v174 = vand.u32 %v28, 4294901760
    %175 = vmatpush1.msra.mxu0 %v174
    %176 = vmatprep.subr.mxu0 0.0
    %v177 = vand.u32 %v29, 4294901760
    %178 = vmatpush1.msra.mxu0 %v177
    %179 = vmatprep.subr.mxu0 0.0
    %v180 = vand.u32 %v30, 4294901760
    %181 = vmatpush1.msra.mxu0 %v180
    %182 = vmatprep.subr.mxu0 0.0
    %v183 = vand.u32 %v31, 4294901760
    %184 = vmatpush1.msra.mxu0 %v183
    %185 = vmatprep.subr.mxu0 0.0
    %v186 = vand.u32 %v32, 4294901760
    %187 = vmatpush1.msra.mxu0 %v186
    %188 = vmatprep.subr.mxu0 0.0
    %v189 = vand.u32 %v33, 4294901760
    %190 = vmatpush1.msra.mxu0 %v189
    %191 = vmatprep.subr.mxu0 0.0
    %v192 = vand.u32 %v34, 4294901760
    %193 = vmatpush1.msra.mxu0 %v192
    %194 = vmatprep.subr.mxu0 0.0
    %v195 = vand.u32 %v35, 4294901760
    %196 = vmatpush1.msra.mxu0 %v195
    %197 = vmatprep.subr.mxu0 0.0
    %v198 = vand.u32 %v36, 4294901760
    %199 = vmatpush1.msra.mxu0 %v198
    %200 = vmatprep.subr.mxu0 0.0
    %v201 = vand.u32 %v37, 4294901760
    %202 = vmatpush1.msra.mxu0 %v201
    %203 = vmatprep.subr.mxu0 0.0
    %v204 = vand.u32 %v38, 4294901760
    %205 = vmatpush1.msra.mxu0 %v204
    %206 = vmatprep.subr.mxu0 0.0
    %v207 = vand.u32 %v39, 4294901760
    %208 = vmatpush1.msra.mxu0 %v207
    %209 = vmatprep.subr.mxu0 0.0
    %v210 = vand.u32 %v40, 4294901760
    %211 = vmatpush1.msra.mxu0 %v210
    %212 = vmatprep.subr.mxu0 0.0
    %v213 = vand.u32 %v41, 4294901760
    %214 = vmatpush1.msra.mxu0 %v213
    %215 = vmatprep.subr.mxu0 0.0
    %v216 = vand.u32 %v42, 4294901760
    %217 = vmatpush1.msra.mxu0 %v216
    %218 = vmatprep.subr.mxu0 0.0
    %v219 = vand.u32 %v43, 4294901760
    %220 = vmatpush1.msra.mxu0 %v219
    %221 = vmatprep.subr.mxu0 0.0
    %v222 = vand.u32 %v44, 4294901760
    %223 = vmatpush1.msra.mxu0 %v222
    %224 = vmatprep.subr.mxu0 0.0
    %v225 = vand.u32 %v45, 4294901760
    %226 = vmatpush1.msra.mxu0 %v225
    %227 = vmatprep.subr.mxu0 0.0
    %v228 = vand.u32 %v46, 4294901760
    %229 = vmatpush1.msra.mxu0 %v228
    %230 = vmatprep.subr.mxu0 0.0
    %v231 = vand.u32 %v47, 4294901760
    %232 = vmatpush1.msra.mxu0 %v231
    %233 = vmatprep.subr.mxu0 0.0
    %v234 = vand.u32 %v48, 4294901760
    %235 = vmatpush1.msra.mxu0 %v234
    %236 = vmatprep.subr.mxu0 0.0
    %v237 = vand.u32 %v49, 4294901760
    %238 = vmatpush1.msra.mxu0 %v237
    %239 = vmatprep.subr.mxu0 0.0
    %v240 = vand.u32 %v50, 4294901760
    %241 = vmatpush1.msra.mxu0 %v240
    %242 = vmatprep.subr.mxu0 0.0
    %v243 = vand.u32 %v51, 4294901760
    %244 = vmatpush1.msra.mxu0 %v243
    %245 = vmatprep.subr.mxu0 0.0
    %v246 = vand.u32 %v52, 4294901760
    %247 = vmatpush1.msra.mxu0 %v246
    %248 = vmatprep.subr.mxu0 0.0
    %v249 = vand.u32 %v53, 4294901760
    %250 = vmatpush1.msra.mxu0 %v249
    %251 = vmatprep.subr.mxu0 0.0
    %v252 = vand.u32 %v54, 4294901760
    %253 = vmatpush1.msra.mxu0 %v252
    %v254 = vand.u32 %v16, 4294901760
    %v255 = vsub.f32 %v16, %v254
    %v256 = vand.u32 %v255, 4294901760
    %v257 = vsub.f32 %v255, %v256
    %v258 = vand.u32 %v257, 4294901760
    %259 = vmatprep.mubr.f32.mxu0 %v258
    %v260 = vand.u32 %v15, 4294901760
    %v261 = vsub.f32 %v15, %v260
    %v262 = vand.u32 %v261, 4294901760
    %v263 = vsub.f32 %v261, %v262
    %v264 = vand.u32 %v263, 4294901760
    %265 = vmatmul.mubr.f32.gmra.mrb[0].mxu0 %v264
    %v266 = vpop.f32.mrb[0].mxu0
    %v267 = vadd.f32 %v156, %v266
    %v268 = vpop.f32.mrb[0].mxu0
    %269 = vdwg.mxu0
    %270 = vmatprep.subr.mxu0 0.0
    %v271 = vand.u32 %v23, 4294901760
    %v272 = vsub.f32 %v23, %v271
    %v273 = vand.u32 %v272, 4294901760
    %v274 = vsub.f32 %v272, %v273
    %v275 = vand.u32 %v274, 4294901760
    %276 = vmatpush1.msra.mxu0 %v275
    %277 = vmatprep.subr.mxu0 0.0
    %v278 = vand.u32 %v24, 4294901760
    %v279 = vsub.f32 %v24, %v278
    %v280 = vand.u32 %v279, 4294901760
    %v281 = vsub.f32 %v279, %v280
    %v282 = vand.u32 %v281, 4294901760
    %283 = vmatpush1.msra.mxu0 %v282
    %284 = vmatprep.subr.mxu0 0.0
    %v285 = vand.u32 %v25, 4294901760
    %v286 = vsub.f32 %v25, %v285
    %v287 = vand.u32 %v286, 4294901760
    %v288 = vsub.f32 %v286, %v287
    %v289 = vand.u32 %v288, 4294901760
    %290 = vmatpush1.msra.mxu0 %v289
    %291 = vmatprep.subr.mxu0 0.0
    %v292 = vand.u32 %v26, 4294901760
    %v293 = vsub.f32 %v26, %v292
    %v294 = vand.u32 %v293, 4294901760
    %v295 = vsub.f32 %v293, %v294
    %v296 = vand.u32 %v295, 4294901760
    %297 = vmatpush1.msra.mxu0 %v296
    %298 = vmatprep.subr.mxu0 0.0
    %v299 = vand.u32 %v27, 4294901760
    %v300 = vsub.f32 %v27, %v299
    %v301 = vand.u32 %v300, 4294901760
    %v302 = vsub.f32 %v300, %v301
    %v303 = vand.u32 %v302, 4294901760
    %304 = vmatpush1.msra.mxu0 %v303
    %305 = vmatprep.subr.mxu0 0.0
    %v306 = vand.u32 %v28, 4294901760
    %v307 = vsub.f32 %v28, %v306
    %v308 = vand.u32 %v307, 4294901760
    %v309 = vsub.f32 %v307, %v308
    %v310 = vand.u32 %v309, 4294901760
    %311 = vmatpush1.msra.mxu0 %v310
    %312 = vmatprep.subr.mxu0 0.0
    %v313 = vand.u32 %v29, 4294901760
    %v314 = vsub.f32 %v29, %v313
    %v315 = vand.u32 %v314, 4294901760
    %v316 = vsub.f32 %v314, %v315
    %v317 = vand.u32 %v316, 4294901760
    %318 = vmatpush1.msra.mxu0 %v317
    %319 = vmatprep.subr.mxu0 0.0
    %v320 = vand.u32 %v30, 4294901760
    %v321 = vsub.f32 %v30, %v320
    %v322 = vand.u32 %v321, 4294901760
    %v323 = vsub.f32 %v321, %v322
    %v324 = vand.u32 %v323, 4294901760
    %325 = vmatpush1.msra.mxu0 %v324
    %326 = vmatprep.subr.mxu0 0.0
    %v327 = vand.u32 %v31, 4294901760
    %v328 = vsub.f32 %v31, %v327
    %v329 = vand.u32 %v328, 4294901760
    %v330 = vsub.f32 %v328, %v329
    %v331 = vand.u32 %v330, 4294901760
    %332 = vmatpush1.msra.mxu0 %v331
    %333 = vmatprep.subr.mxu0 0.0
    %v334 = vand.u32 %v32, 4294901760
    %v335 = vsub.f32 %v32, %v334
    %v336 = vand.u32 %v335, 4294901760
    %v337 = vsub.f32 %v335, %v336
    %v338 = vand.u32 %v337, 4294901760
    %339 = vmatpush1.msra.mxu0 %v338
    %340 = vmatprep.subr.mxu0 0.0
    %v341 = vand.u32 %v33, 4294901760
    %v342 = vsub.f32 %v33, %v341
    %v343 = vand.u32 %v342, 4294901760
    %v344 = vsub.f32 %v342, %v343
    %v345 = vand.u32 %v344, 4294901760
    %346 = vmatpush1.msra.mxu0 %v345
    %347 = vmatprep.subr.mxu0 0.0
    %v348 = vand.u32 %v34, 4294901760
    %v349 = vsub.f32 %v34, %v348
    %v350 = vand.u32 %v349, 4294901760
    %v351 = vsub.f32 %v349, %v350
    %v352 = vand.u32 %v351, 4294901760
    %353 = vmatpush1.msra.mxu0 %v352
    %354 = vmatprep.subr.mxu0 0.0
    %v355 = vand.u32 %v35, 4294901760
    %v356 = vsub.f32 %v35, %v355
    %v357 = vand.u32 %v356, 4294901760
    %v358 = vsub.f32 %v356, %v357
    %v359 = vand.u32 %v358, 4294901760
    %360 = vmatpush1.msra.mxu0 %v359
    %361 = vmatprep.subr.mxu0 0.0
    %v362 = vand.u32 %v36, 4294901760
    %v363 = vsub.f32 %v36, %v362
    %v364 = vand.u32 %v363, 4294901760
    %v365 = vsub.f32 %v363, %v364
    %v366 = vand.u32 %v365, 4294901760
    %367 = vmatpush1.msra.mxu0 %v366
    %368 = vmatprep.subr.mxu0 0.0
    %v369 = vand.u32 %v37, 4294901760
    %v370 = vsub.f32 %v37, %v369
    %v371 = vand.u32 %v370, 4294901760
    %v372 = vsub.f32 %v370, %v371
    %v373 = vand.u32 %v372, 4294901760
    %374 = vmatpush1.msra.mxu0 %v373
    %375 = vmatprep.subr.mxu0 0.0
    %v376 = vand.u32 %v38, 4294901760
    %v377 = vsub.f32 %v38, %v376
    %v378 = vand.u32 %v377, 4294901760
    %v379 = vsub.f32 %v377, %v378
    %v380 = vand.u32 %v379, 4294901760
    %381 = vmatpush1.msra.mxu0 %v380
    %382 = vmatprep.subr.mxu0 0.0
    %v383 = vand.u32 %v39, 4294901760
    %v384 = vsub.f32 %v39, %v383
    %v385 = vand.u32 %v384, 4294901760
    %v386 = vsub.f32 %v384, %v385
    %v387 = vand.u32 %v386, 4294901760
    %388 = vmatpush1.msra.mxu0 %v387
    %389 = vmatprep.subr.mxu0 0.0
    %v390 = vand.u32 %v40, 4294901760
    %v391 = vsub.f32 %v40, %v390
    %v392 = vand.u32 %v391, 4294901760
    %v393 = vsub.f32 %v391, %v392
    %v394 = vand.u32 %v393, 4294901760
    %395 = vmatpush1.msra.mxu0 %v394
    %396 = vmatprep.subr.mxu0 0.0
    %v397 = vand.u32 %v41, 4294901760
    %v398 = vsub.f32 %v41, %v397
    %v399 = vand.u32 %v398, 4294901760
    %v400 = vsub.f32 %v398, %v399
    %v401 = vand.u32 %v400, 4294901760
    %402 = vmatpush1.msra.mxu0 %v401
    %403 = vmatprep.subr.mxu0 0.0
    %v404 = vand.u32 %v42, 4294901760
    %v405 = vsub.f32 %v42, %v404
    %v406 = vand.u32 %v405, 4294901760
    %v407 = vsub.f32 %v405, %v406
    %v408 = vand.u32 %v407, 4294901760
    %409 = vmatpush1.msra.mxu0 %v408
    %410 = vmatprep.subr.mxu0 0.0
    %v411 = vand.u32 %v43, 4294901760
    %v412 = vsub.f32 %v43, %v411
    %v413 = vand.u32 %v412, 4294901760
    %v414 = vsub.f32 %v412, %v413
    %v415 = vand.u32 %v414, 4294901760
    %416 = vmatpush1.msra.mxu0 %v415
    %417 = vmatprep.subr.mxu0 0.0
    %v418 = vand.u32 %v44, 4294901760
    %v419 = vsub.f32 %v44, %v418
    %v420 = vand.u32 %v419, 4294901760
    %v421 = vsub.f32 %v419, %v420
    %v422 = vand.u32 %v421, 4294901760
    %423 = vmatpush1.msra.mxu0 %v422
    %424 = vmatprep.subr.mxu0 0.0
    %v425 = vand.u32 %v45, 4294901760
    %v426 = vsub.f32 %v45, %v425
    %v427 = vand.u32 %v426, 4294901760
    %v428 = vsub.f32 %v426, %v427
    %v429 = vand.u32 %v428, 4294901760
    %430 = vmatpush1.msra.mxu0 %v429
    %431 = vmatprep.subr.mxu0 0.0
    %v432 = vand.u32 %v46, 4294901760
    %v433 = vsub.f32 %v46, %v432
    %v434 = vand.u32 %v433, 4294901760
    %v435 = vsub.f32 %v433, %v434
    %v436 = vand.u32 %v435, 4294901760
    %437 = vmatpush1.msra.mxu0 %v436
    %438 = vmatprep.subr.mxu0 0.0
    %v439 = vand.u32 %v47, 4294901760
    %v440 = vsub.f32 %v47, %v439
    %v441 = vand.u32 %v440, 4294901760
    %v442 = vsub.f32 %v440, %v441
    %v443 = vand.u32 %v442, 4294901760
    %444 = vmatpush1.msra.mxu0 %v443
    %445 = vmatprep.subr.mxu0 0.0
    %v446 = vand.u32 %v48, 4294901760
    %v447 = vsub.f32 %v48, %v446
    %v448 = vand.u32 %v447, 4294901760
    %v449 = vsub.f32 %v447, %v448
    %v450 = vand.u32 %v449, 4294901760
    %451 = vmatpush1.msra.mxu0 %v450
    %452 = vmatprep.subr.mxu0 0.0
    %v453 = vand.u32 %v49, 4294901760
    %v454 = vsub.f32 %v49, %v453
    %v455 = vand.u32 %v454, 4294901760
    %v456 = vsub.f32 %v454, %v455
    %v457 = vand.u32 %v456, 4294901760
    %458 = vmatpush1.msra.mxu0 %v457
    %459 = vmatprep.subr.mxu0 0.0
    %v460 = vand.u32 %v50, 4294901760
    %v461 = vsub.f32 %v50, %v460
    %v462 = vand.u32 %v461, 4294901760
    %v463 = vsub.f32 %v461, %v462
    %v464 = vand.u32 %v463, 4294901760
    %465 = vmatpush1.msra.mxu0 %v464
    %466 = vmatprep.subr.mxu0 0.0
    %v467 = vand.u32 %v51, 4294901760
    %v468 = vsub.f32 %v51, %v467
    %v469 = vand.u32 %v468, 4294901760
    %v470 = vsub.f32 %v468, %v469
    %v471 = vand.u32 %v470, 4294901760
    %472 = vmatpush1.msra.mxu0 %v471
    %473 = vmatprep.subr.mxu0 0.0
    %v474 = vand.u32 %v52, 4294901760
    %v475 = vsub.f32 %v52, %v474
    %v476 = vand.u32 %v475, 4294901760
    %v477 = vsub.f32 %v475, %v476
    %v478 = vand.u32 %v477, 4294901760
    %479 = vmatpush1.msra.mxu0 %v478
    %480 = vmatprep.subr.mxu0 0.0
    %v481 = vand.u32 %v53, 4294901760
    %v482 = vsub.f32 %v53, %v481
    %v483 = vand.u32 %v482, 4294901760
    %v484 = vsub.f32 %v482, %v483
    %v485 = vand.u32 %v484, 4294901760
    %486 = vmatpush1.msra.mxu0 %v485
    %487 = vmatprep.subr.mxu0 0.0
    %v488 = vand.u32 %v54, 4294901760
    %v489 = vsub.f32 %v54, %v488
    %v490 = vand.u32 %v489, 4294901760
    %v491 = vsub.f32 %v489, %v490
    %v492 = vand.u32 %v491, 4294901760
    %493 = vmatpush1.msra.mxu0 %v492
    %v494 = vand.u32 %v16, 4294901760
    %495 = vmatprep.mubr.f32.mxu0 %v494
    %v496 = vand.u32 %v15, 4294901760
    %497 = vmatmul.mubr.f32.gmra.mrb[0].mxu0 %v496
    %v498 = vpop.f32.mrb[0].mxu0
    %v499 = vadd.f32 %v267, %v498
    %v500 = vpop.f32.mrb[0].mxu0
    %501 = vdwg.mxu0
    %502 = vmatprep.subr.mxu0 0.0
    %v503 = vand.u32 %v23, 4294901760
    %v504 = vsub.f32 %v23, %v503
    %505 = vmatpush1.msra.mxu0 %v504
    %506 = vmatprep.subr.mxu0 0.0
    %v507 = vand.u32 %v24, 4294901760
    %v508 = vsub.f32 %v24, %v507
    %509 = vmatpush1.msra.mxu0 %v508
    %510 = vmatprep.subr.mxu0 0.0
    %v511 = vand.u32 %v25, 4294901760
    %v512 = vsub.f32 %v25, %v511
    %513 = vmatpush1.msra.mxu0 %v512
    %514 = vmatprep.subr.mxu0 0.0
    %v515 = vand.u32 %v26, 4294901760
    %v516 = vsub.f32 %v26, %v515
    %517 = vmatpush1.msra.mxu0 %v516
    %518 = vmatprep.subr.mxu0 0.0
    %v519 = vand.u32 %v27, 4294901760
    %v520 = vsub.f32 %v27, %v519
    %521 = vmatpush1.msra.mxu0 %v520
    %522 = vmatprep.subr.mxu0 0.0
    %v523 = vand.u32 %v28, 4294901760
    %v524 = vsub.f32 %v28, %v523
    %525 = vmatpush1.msra.mxu0 %v524
    %526 = vmatprep.subr.mxu0 0.0
    %v527 = vand.u32 %v29, 4294901760
    %v528 = vsub.f32 %v29, %v527
    %529 = vmatpush1.msra.mxu0 %v528
    %530 = vmatprep.subr.mxu0 0.0
    %v531 = vand.u32 %v30, 4294901760
    %v532 = vsub.f32 %v30, %v531
    %533 = vmatpush1.msra.mxu0 %v532
    %534 = vmatprep.subr.mxu0 0.0
    %v535 = vand.u32 %v31, 4294901760
    %v536 = vsub.f32 %v31, %v535
    %537 = vmatpush1.msra.mxu0 %v536
    %538 = vmatprep.subr.mxu0 0.0
    %v539 = vand.u32 %v32, 4294901760
    %v540 = vsub.f32 %v32, %v539
    %541 = vmatpush1.msra.mxu0 %v540
    %542 = vmatprep.subr.mxu0 0.0
    %v543 = vand.u32 %v33, 4294901760
    %v544 = vsub.f32 %v33, %v543
    %545 = vmatpush1.msra.mxu0 %v544
    %546 = vmatprep.subr.mxu0 0.0
    %v547 = vand.u32 %v34, 4294901760
    %v548 = vsub.f32 %v34, %v547
    %549 = vmatpush1.msra.mxu0 %v548
    %550 = vmatprep.subr.mxu0 0.0
    %v551 = vand.u32 %v35, 4294901760
    %v552 = vsub.f32 %v35, %v551
    %553 = vmatpush1.msra.mxu0 %v552
    %554 = vmatprep.subr.mxu0 0.0
    %v555 = vand.u32 %v36, 4294901760
    %v556 = vsub.f32 %v36, %v555
    %557 = vmatpush1.msra.mxu0 %v556
    %558 = vmatprep.subr.mxu0 0.0
    %v559 = vand.u32 %v37, 4294901760
    %v560 = vsub.f32 %v37, %v559
    %561 = vmatpush1.msra.mxu0 %v560
    %562 = vmatprep.subr.mxu0 0.0
    %v563 = vand.u32 %v38, 4294901760
    %v564 = vsub.f32 %v38, %v563
    %565 = vmatpush1.msra.mxu0 %v564
    %566 = vmatprep.subr.mxu0 0.0
    %v567 = vand.u32 %v39, 4294901760
    %v568 = vsub.f32 %v39, %v567
    %569 = vmatpush1.msra.mxu0 %v568
    %570 = vmatprep.subr.mxu0 0.0
    %v571 = vand.u32 %v40, 4294901760
    %v572 = vsub.f32 %v40, %v571
    %573 = vmatpush1.msra.mxu0 %v572
    %574 = vmatprep.subr.mxu0 0.0
    %v575 = vand.u32 %v41, 4294901760
    %v576 = vsub.f32 %v41, %v575
    %577 = vmatpush1.msra.mxu0 %v576
    %578 = vmatprep.subr.mxu0 0.0
    %v579 = vand.u32 %v42, 4294901760
    %v580 = vsub.f32 %v42, %v579
    %581 = vmatpush1.msra.mxu0 %v580
    %582 = vmatprep.subr.mxu0 0.0
    %v583 = vand.u32 %v43, 4294901760
    %v584 = vsub.f32 %v43, %v583
    %585 = vmatpush1.msra.mxu0 %v584
    %586 = vmatprep.subr.mxu0 0.0
    %v587 = vand.u32 %v44, 4294901760
    %v588 = vsub.f32 %v44, %v587
    %589 = vmatpush1.msra.mxu0 %v588
    %590 = vmatprep.subr.mxu0 0.0
    %v591 = vand.u32 %v45, 4294901760
    %v592 = vsub.f32 %v45, %v591
    %593 = vmatpush1.msra.mxu0 %v592
    %594 = vmatprep.subr.mxu0 0.0
    %v595 = vand.u32 %v46, 4294901760
    %v596 = vsub.f32 %v46, %v595
    %597 = vmatpush1.msra.mxu0 %v596
    %598 = vmatprep.subr.mxu0 0.0
    %v599 = vand.u32 %v47, 4294901760
    %v600 = vsub.f32 %v47, %v599
    %601 = vmatpush1.msra.mxu0 %v600
    %602 = vmatprep.subr.mxu0 0.0
    %v603 = vand.u32 %v48, 4294901760
    %v604 = vsub.f32 %v48, %v603
    %605 = vmatpush1.msra.mxu0 %v604
    %606 = vmatprep.subr.mxu0 0.0
    %v607 = vand.u32 %v49, 4294901760
    %v608 = vsub.f32 %v49, %v607
    %609 = vmatpush1.msra.mxu0 %v608
    %610 = vmatprep.subr.mxu0 0.0
    %v611 = vand.u32 %v50, 4294901760
    %v612 = vsub.f32 %v50, %v611
    %613 = vmatpush1.msra.mxu0 %v612
    %614 = vmatprep.subr.mxu0 0.0
    %v615 = vand.u32 %v51, 4294901760
    %v616 = vsub.f32 %v51, %v615
    %617 = vmatpush1.msra.mxu0 %v616
    %618 = vmatprep.subr.mxu0 0.0
    %v619 = vand.u32 %v52, 4294901760
    %v620 = vsub.f32 %v52, %v619
    %621 = vmatpush1.msra.mxu0 %v620
    %622 = vmatprep.subr.mxu0 0.0
    %v623 = vand.u32 %v53, 4294901760
    %v624 = vsub.f32 %v53, %v623
    %625 = vmatpush1.msra.mxu0 %v624
    %626 = vmatprep.subr.mxu0 0.0
    %v627 = vand.u32 %v54, 4294901760
    %v628 = vsub.f32 %v54, %v627
    %629 = vmatpush1.msra.mxu0 %v628
    %v630 = vand.u32 %v16, 4294901760
    %v631 = vsub.f32 %v16, %v630
    %632 = vmatprep.mubr.f32.mxu0 %v631
    %v633 = vand.u32 %v15, 4294901760
    %v634 = vsub.f32 %v15, %v633
    %635 = vmatmul.mubr.f32.gmra.mrb[0].mxu0 %v634
    %v636 = vpop.f32.mrb[0].mxu0
    %v637 = vadd.f32 %v499, %v636
    %v638 = vpop.f32.mrb[0].mxu0
    %639 = vdwg.mxu0
    %640 = vmatprep.subr.mxu0 0.0
    %v641 = vand.u32 %v23, 4294901760
    %642 = vmatpush1.msra.mxu0 %v641
    %643 = vmatprep.subr.mxu0 0.0
    %v644 = vand.u32 %v24, 4294901760
    %645 = vmatpush1.msra.mxu0 %v644
    %646 = vmatprep.subr.mxu0 0.0
    %v647 = vand.u32 %v25, 4294901760
    %648 = vmatpush1.msra.mxu0 %v647
    %649 = vmatprep.subr.mxu0 0.0
    %v650 = vand.u32 %v26, 4294901760
    %651 = vmatpush1.msra.mxu0 %v650
    %652 = vmatprep.subr.mxu0 0.0
    %v653 = vand.u32 %v27, 4294901760
    %654 = vmatpush1.msra.mxu0 %v653
    %655 = vmatprep.subr.mxu0 0.0
    %v656 = vand.u32 %v28, 4294901760
    %657 = vmatpush1.msra.mxu0 %v656
    %658 = vmatprep.subr.mxu0 0.0
    %v659 = vand.u32 %v29, 4294901760
    %660 = vmatpush1.msra.mxu0 %v659
    %661 = vmatprep.subr.mxu0 0.0
    %v662 = vand.u32 %v30, 4294901760
    %663 = vmatpush1.msra.mxu0 %v662
    %664 = vmatprep.subr.mxu0 0.0
    %v665 = vand.u32 %v31, 4294901760
    %666 = vmatpush1.msra.mxu0 %v665
    %667 = vmatprep.subr.mxu0 0.0
    %v668 = vand.u32 %v32, 4294901760
    %669 = vmatpush1.msra.mxu0 %v668
    %670 = vmatprep.subr.mxu0 0.0
    %v671 = vand.u32 %v33, 4294901760
    %672 = vmatpush1.msra.mxu0 %v671
    %673 = vmatprep.subr.mxu0 0.0
    %v674 = vand.u32 %v34, 4294901760
    %675 = vmatpush1.msra.mxu0 %v674
    %676 = vmatprep.subr.mxu0 0.0
    %v677 = vand.u32 %v35, 4294901760
    %678 = vmatpush1.msra.mxu0 %v677
    %679 = vmatprep.subr.mxu0 0.0
    %v680 = vand.u32 %v36, 4294901760
    %681 = vmatpush1.msra.mxu0 %v680
    %682 = vmatprep.subr.mxu0 0.0
    %v683 = vand.u32 %v37, 4294901760
    %684 = vmatpush1.msra.mxu0 %v683
    %685 = vmatprep.subr.mxu0 0.0
    %v686 = vand.u32 %v38, 4294901760
    %687 = vmatpush1.msra.mxu0 %v686
    %688 = vmatprep.subr.mxu0 0.0
    %v689 = vand.u32 %v39, 4294901760
    %690 = vmatpush1.msra.mxu0 %v689
    %691 = vmatprep.subr.mxu0 0.0
    %v692 = vand.u32 %v40, 4294901760
    %693 = vmatpush1.msra.mxu0 %v692
    %694 = vmatprep.subr.mxu0 0.0
    %v695 = vand.u32 %v41, 4294901760
    %696 = vmatpush1.msra.mxu0 %v695
    %697 = vmatprep.subr.mxu0 0.0
    %v698 = vand.u32 %v42, 4294901760
    %699 = vmatpush1.msra.mxu0 %v698
    %700 = vmatprep.subr.mxu0 0.0
    %v701 = vand.u32 %v43, 4294901760
    %702 = vmatpush1.msra.mxu0 %v701
    %703 = vmatprep.subr.mxu0 0.0
    %v704 = vand.u32 %v44, 4294901760
    %705 = vmatpush1.msra.mxu0 %v704
    %706 = vmatprep.subr.mxu0 0.0
    %v707 = vand.u32 %v45, 4294901760
    %708 = vmatpush1.msra.mxu0 %v707
    %709 = vmatprep.subr.mxu0 0.0
    %v710 = vand.u32 %v46, 4294901760
    %711 = vmatpush1.msra.mxu0 %v710
    %712 = vmatprep.subr.mxu0 0.0
    %v713 = vand.u32 %v47, 4294901760
    %714 = vmatpush1.msra.mxu0 %v713
    %715 = vmatprep.subr.mxu0 0.0
    %v716 = vand.u32 %v48, 4294901760
    %717 = vmatpush1.msra.mxu0 %v716
    %718 = vmatprep.subr.mxu0 0.0
    %v719 = vand.u32 %v49, 4294901760
    %720 = vmatpush1.msra.mxu0 %v719
    %721 = vmatprep.subr.mxu0 0.0
    %v722 = vand.u32 %v50, 4294901760
    %723 = vmatpush1.msra.mxu0 %v722
    %724 = vmatprep.subr.mxu0 0.0
    %v725 = vand.u32 %v51, 4294901760
    %726 = vmatpush1.msra.mxu0 %v725
    %727 = vmatprep.subr.mxu0 0.0
    %v728 = vand.u32 %v52, 4294901760
    %729 = vmatpush1.msra.mxu0 %v728
    %730 = vmatprep.subr.mxu0 0.0
    %v731 = vand.u32 %v53, 4294901760
    %732 = vmatpush1.msra.mxu0 %v731
    %733 = vmatprep.subr.mxu0 0.0
    %v734 = vand.u32 %v54, 4294901760
    %735 = vmatpush1.msra.mxu0 %v734
    %v736 = vand.u32 %v16, 4294901760
    %v737 = vsub.f32 %v16, %v736
    %v738 = vand.u32 %v737, 4294901760
    %739 = vmatprep.mubr.f32.mxu0 %v738
    %v740 = vand.u32 %v15, 4294901760
    %v741 = vsub.f32 %v15, %v740
    %v742 = vand.u32 %v741, 4294901760
    %743 = vmatmul.mubr.f32.gmra.mrb[0].mxu0 %v742
    %v744 = vpop.f32.mrb[0].mxu0
    %v745 = vadd.f32 %v637, %v744
    %v746 = vpop.f32.mrb[0].mxu0
    %747 = vdwg.mxu0
    %748 = vmatprep.subr.mxu0 0.0
    %v749 = vand.u32 %v23, 4294901760
    %v750 = vsub.f32 %v23, %v749
    %v751 = vand.u32 %v750, 4294901760
    %752 = vmatpush1.msra.mxu0 %v751
    %753 = vmatprep.subr.mxu0 0.0
    %v754 = vand.u32 %v24, 4294901760
    %v755 = vsub.f32 %v24, %v754
    %v756 = vand.u32 %v755, 4294901760
    %757 = vmatpush1.msra.mxu0 %v756
    %758 = vmatprep.subr.mxu0 0.0
    %v759 = vand.u32 %v25, 4294901760
    %v760 = vsub.f32 %v25, %v759
    %v761 = vand.u32 %v760, 4294901760
    %762 = vmatpush1.msra.mxu0 %v761
    %763 = vmatprep.subr.mxu0 0.0
    %v764 = vand.u32 %v26, 4294901760
    %v765 = vsub.f32 %v26, %v764
    %v766 = vand.u32 %v765, 4294901760
    %767 = vmatpush1.msra.mxu0 %v766
    %768 = vmatprep.subr.mxu0 0.0
    %v769 = vand.u32 %v27, 4294901760
    %v770 = vsub.f32 %v27, %v769
    %v771 = vand.u32 %v770, 4294901760
    %772 = vmatpush1.msra.mxu0 %v771
    %773 = vmatprep.subr.mxu0 0.0
    %v774 = vand.u32 %v28, 4294901760
    %v775 = vsub.f32 %v28, %v774
    %v776 = vand.u32 %v775, 4294901760
    %777 = vmatpush1.msra.mxu0 %v776
    %778 = vmatprep.subr.mxu0 0.0
    %v779 = vand.u32 %v29, 4294901760
    %v780 = vsub.f32 %v29, %v779
    %v781 = vand.u32 %v780, 4294901760
    %782 = vmatpush1.msra.mxu0 %v781
    %783 = vmatprep.subr.mxu0 0.0
    %v784 = vand.u32 %v30, 4294901760
    %v785 = vsub.f32 %v30, %v784
    %v786 = vand.u32 %v785, 4294901760
    %787 = vmatpush1.msra.mxu0 %v786
    %788 = vmatprep.subr.mxu0 0.0
    %v789 = vand.u32 %v31, 4294901760
    %v790 = vsub.f32 %v31, %v789
    %v791 = vand.u32 %v790, 4294901760
    %792 = vmatpush1.msra.mxu0 %v791
    %793 = vmatprep.subr.mxu0 0.0
    %v794 = vand.u32 %v32, 4294901760
    %v795 = vsub.f32 %v32, %v794
    %v796 = vand.u32 %v795, 4294901760
    %797 = vmatpush1.msra.mxu0 %v796
    %798 = vmatprep.subr.mxu0 0.0
    %v799 = vand.u32 %v33, 4294901760
    %v800 = vsub.f32 %v33, %v799
    %v801 = vand.u32 %v800, 4294901760
    %802 = vmatpush1.msra.mxu0 %v801
    %803 = vmatprep.subr.mxu0 0.0
    %v804 = vand.u32 %v34, 4294901760
    %v805 = vsub.f32 %v34, %v804
    %v806 = vand.u32 %v805, 4294901760
    %807 = vmatpush1.msra.mxu0 %v806
    %808 = vmatprep.subr.mxu0 0.0
    %v809 = vand.u32 %v35, 4294901760
    %v810 = vsub.f32 %v35, %v809
    %v811 = vand.u32 %v810, 4294901760
    %812 = vmatpush1.msra.mxu0 %v811
    %813 = vmatprep.subr.mxu0 0.0
    %v814 = vand.u32 %v36, 4294901760
    %v815 = vsub.f32 %v36, %v814
    %v816 = vand.u32 %v815, 4294901760
    %817 = vmatpush1.msra.mxu0 %v816
    %818 = vmatprep.subr.mxu0 0.0
    %v819 = vand.u32 %v37, 4294901760
    %v820 = vsub.f32 %v37, %v819
    %v821 = vand.u32 %v820, 4294901760
    %822 = vmatpush1.msra.mxu0 %v821
    %823 = vmatprep.subr.mxu0 0.0
    %v824 = vand.u32 %v38, 4294901760
    %v825 = vsub.f32 %v38, %v824
    %v826 = vand.u32 %v825, 4294901760
    %827 = vmatpush1.msra.mxu0 %v826
    %828 = vmatprep.subr.mxu0 0.0
    %v829 = vand.u32 %v39, 4294901760
    %v830 = vsub.f32 %v39, %v829
    %v831 = vand.u32 %v830, 4294901760
    %832 = vmatpush1.msra.mxu0 %v831
    %833 = vmatprep.subr.mxu0 0.0
    %v834 = vand.u32 %v40, 4294901760
    %v835 = vsub.f32 %v40, %v834
    %v836 = vand.u32 %v835, 4294901760
    %837 = vmatpush1.msra.mxu0 %v836
    %838 = vmatprep.subr.mxu0 0.0
    %v839 = vand.u32 %v41, 4294901760
    %v840 = vsub.f32 %v41, %v839
    %v841 = vand.u32 %v840, 4294901760
    %842 = vmatpush1.msra.mxu0 %v841
    %843 = vmatprep.subr.mxu0 0.0
    %v844 = vand.u32 %v42, 4294901760
    %v845 = vsub.f32 %v42, %v844
    %v846 = vand.u32 %v845, 4294901760
    %847 = vmatpush1.msra.mxu0 %v846
    %848 = vmatprep.subr.mxu0 0.0
    %v849 = vand.u32 %v43, 4294901760
    %v850 = vsub.f32 %v43, %v849
    %v851 = vand.u32 %v850, 4294901760
    %852 = vmatpush1.msra.mxu0 %v851
    %853 = vmatprep.subr.mxu0 0.0
    %v854 = vand.u32 %v44, 4294901760
    %v855 = vsub.f32 %v44, %v854
    %v856 = vand.u32 %v855, 4294901760
    %857 = vmatpush1.msra.mxu0 %v856
    %858 = vmatprep.subr.mxu0 0.0
    %v859 = vand.u32 %v45, 4294901760
    %v860 = vsub.f32 %v45, %v859
    %v861 = vand.u32 %v860, 4294901760
    %862 = vmatpush1.msra.mxu0 %v861
    %863 = vmatprep.subr.mxu0 0.0
    %v864 = vand.u32 %v46, 4294901760
    %v865 = vsub.f32 %v46, %v864
    %v866 = vand.u32 %v865, 4294901760
    %867 = vmatpush1.msra.mxu0 %v866
    %868 = vmatprep.subr.mxu0 0.0
    %v869 = vand.u32 %v47, 4294901760
    %v870 = vsub.f32 %v47, %v869
    %v871 = vand.u32 %v870, 4294901760
    %872 = vmatpush1.msra.mxu0 %v871
    %873 = vmatprep.subr.mxu0 0.0
    %v874 = vand.u32 %v48, 4294901760
    %v875 = vsub.f32 %v48, %v874
    %v876 = vand.u32 %v875, 4294901760
    %877 = vmatpush1.msra.mxu0 %v876
    %878 = vmatprep.subr.mxu0 0.0
    %v879 = vand.u32 %v49, 4294901760
    %v880 = vsub.f32 %v49, %v879
    %v881 = vand.u32 %v880, 4294901760
    %882 = vmatpush1.msra.mxu0 %v881
    %883 = vmatprep.subr.mxu0 0.0
    %v884 = vand.u32 %v50, 4294901760
    %v885 = vsub.f32 %v50, %v884
    %v886 = vand.u32 %v885, 4294901760
    %887 = vmatpush1.msra.mxu0 %v886
    %888 = vmatprep.subr.mxu0 0.0
    %v889 = vand.u32 %v51, 4294901760
    %v890 = vsub.f32 %v51, %v889
    %v891 = vand.u32 %v890, 4294901760
    %892 = vmatpush1.msra.mxu0 %v891
    %893 = vmatprep.subr.mxu0 0.0
    %v894 = vand.u32 %v52, 4294901760
    %v895 = vsub.f32 %v52, %v894
    %v896 = vand.u32 %v895, 4294901760
    %897 = vmatpush1.msra.mxu0 %v896
    %898 = vmatprep.subr.mxu0 0.0
    %v899 = vand.u32 %v53, 4294901760
    %v900 = vsub.f32 %v53, %v899
    %v901 = vand.u32 %v900, 4294901760
    %902 = vmatpush1.msra.mxu0 %v901
    %903 = vmatprep.subr.mxu0 0.0
    %v904 = vand.u32 %v54, 4294901760
    %v905 = vsub.f32 %v54, %v904
    %v906 = vand.u32 %v905, 4294901760
    %907 = vmatpush1.msra.mxu0 %v906
    %v908 = vand.u32 %v16, 4294901760
    %909 = vmatprep.mubr.f32.mxu0 %v908
    %v910 = vand.u32 %v15, 4294901760
    %911 = vmatmul.mubr.f32.gmra.mrb[0].mxu0 %v910
    %v912 = vpop.f32.mrb[0].mxu0
    %v913 = vadd.f32 %v745, %v912
    %v914 = vpop.f32.mrb[0].mxu0
    %915 = vdwg.mxu0
    %916 = vmatprep.subr.mxu0 0.0
    %v917 = vand.u32 %v23, 4294901760
    %918 = vmatpush1.msra.mxu0 %v917
    %919 = vmatprep.subr.mxu0 0.0
    %v920 = vand.u32 %v24, 4294901760
    %921 = vmatpush1.msra.mxu0 %v920
    %922 = vmatprep.subr.mxu0 0.0
    %v923 = vand.u32 %v25, 4294901760
    %924 = vmatpush1.msra.mxu0 %v923
    %925 = vmatprep.subr.mxu0 0.0
    %v926 = vand.u32 %v26, 4294901760
    %927 = vmatpush1.msra.mxu0 %v926
    %928 = vmatprep.subr.mxu0 0.0
    %v929 = vand.u32 %v27, 4294901760
    %930 = vmatpush1.msra.mxu0 %v929
    %931 = vmatprep.subr.mxu0 0.0
    %v932 = vand.u32 %v28, 4294901760
    %933 = vmatpush1.msra.mxu0 %v932
    %934 = vmatprep.subr.mxu0 0.0
    %v935 = vand.u32 %v29, 4294901760
    %936 = vmatpush1.msra.mxu0 %v935
    %937 = vmatprep.subr.mxu0 0.0
    %v938 = vand.u32 %v30, 4294901760
    %939 = vmatpush1.msra.mxu0 %v938
    %940 = vmatprep.subr.mxu0 0.0
    %v941 = vand.u32 %v31, 4294901760
    %942 = vmatpush1.msra.mxu0 %v941
    %943 = vmatprep.subr.mxu0 0.0
    %v944 = vand.u32 %v32, 4294901760
    %945 = vmatpush1.msra.mxu0 %v944
    %946 = vmatprep.subr.mxu0 0.0
    %v947 = vand.u32 %v33, 4294901760
    %948 = vmatpush1.msra.mxu0 %v947
    %949 = vmatprep.subr.mxu0 0.0
    %v950 = vand.u32 %v34, 4294901760
    %951 = vmatpush1.msra.mxu0 %v950
    %952 = vmatprep.subr.mxu0 0.0
    %v953 = vand.u32 %v35, 4294901760
    %954 = vmatpush1.msra.mxu0 %v953
    %955 = vmatprep.subr.mxu0 0.0
    %v956 = vand.u32 %v36, 4294901760
    %957 = vmatpush1.msra.mxu0 %v956
    %958 = vmatprep.subr.mxu0 0.0
    %v959 = vand.u32 %v37, 4294901760
    %960 = vmatpush1.msra.mxu0 %v959
    %961 = vmatprep.subr.mxu0 0.0
    %v962 = vand.u32 %v38, 4294901760
    %963 = vmatpush1.msra.mxu0 %v962
    %964 = vmatprep.subr.mxu0 0.0
    %v965 = vand.u32 %v39, 4294901760
    %966 = vmatpush1.msra.mxu0 %v965
    %967 = vmatprep.subr.mxu0 0.0
    %v968 = vand.u32 %v40, 4294901760
    %969 = vmatpush1.msra.mxu0 %v968
    %970 = vmatprep.subr.mxu0 0.0
    %v971 = vand.u32 %v41, 4294901760
    %972 = vmatpush1.msra.mxu0 %v971
    %973 = vmatprep.subr.mxu0 0.0
    %v974 = vand.u32 %v42, 4294901760
    %975 = vmatpush1.msra.mxu0 %v974
    %976 = vmatprep.subr.mxu0 0.0
    %v977 = vand.u32 %v43, 4294901760
    %978 = vmatpush1.msra.mxu0 %v977
    %979 = vmatprep.subr.mxu0 0.0
    %v980 = vand.u32 %v44, 4294901760
    %981 = vmatpush1.msra.mxu0 %v980
    %982 = vmatprep.subr.mxu0 0.0
    %v983 = vand.u32 %v45, 4294901760
    %984 = vmatpush1.msra.mxu0 %v983
    %985 = vmatprep.subr.mxu0 0.0
    %v986 = vand.u32 %v46, 4294901760
    %987 = vmatpush1.msra.mxu0 %v986
    %988 = vmatprep.subr.mxu0 0.0
    %v989 = vand.u32 %v47, 4294901760
    %990 = vmatpush1.msra.mxu0 %v989
    %991 = vmatprep.subr.mxu0 0.0
    %v992 = vand.u32 %v48, 4294901760
    %993 = vmatpush1.msra.mxu0 %v992
    %994 = vmatprep.subr.mxu0 0.0
    %v995 = vand.u32 %v49, 4294901760
    %996 = vmatpush1.msra.mxu0 %v995
    %997 = vmatprep.subr.mxu0 0.0
    %v998 = vand.u32 %v50, 4294901760
    %999 = vmatpush1.msra.mxu0 %v998
    %1000 = vmatprep.subr.mxu0 0.0
    %v1001 = vand.u32 %v51, 4294901760
    %1002 = vmatpush1.msra.mxu0 %v1001
    %1003 = vmatprep.subr.mxu0 0.0
    %v1004 = vand.u32 %v52, 4294901760
    %1005 = vmatpush1.msra.mxu0 %v1004
    %1006 = vmatprep.subr.mxu0 0.0
    %v1007 = vand.u32 %v53, 4294901760
    %1008 = vmatpush1.msra.mxu0 %v1007
    %1009 = vmatprep.subr.mxu0 0.0
    %v1010 = vand.u32 %v54, 4294901760
    %1011 = vmatpush1.msra.mxu0 %v1010
    %v1012 = vand.u32 %v16, 4294901760
    %1013 = vmatprep.mubr.f32.mxu0 %v1012
    %v1014 = vand.u32 %v15, 4294901760
    %1015 = vmatmul.mubr.f32.gmra.mrb[0].mxu0 %v1014
    %v1016 = vpop.f32.mrb[0].mxu0
    %v1017 = vadd.f32 %v913, %v1016
    %v1018 = vpop.f32.mrb[0].mxu0
    %1019 = vdwg.mxu0
    %1020 = vmatprep.subr.mxu0 0.0
    %v1021 = vand.u32 %v55, 4294901760
    %1022 = vmatpush1.msra.mxu0 %v1021
    %1023 = vmatprep.subr.mxu0 0.0
    %v1024 = vand.u32 %v56, 4294901760
    %1025 = vmatpush1.msra.mxu0 %v1024
    %1026 = vmatprep.subr.mxu0 0.0
    %v1027 = vand.u32 %v57, 4294901760
    %1028 = vmatpush1.msra.mxu0 %v1027
    %1029 = vmatprep.subr.mxu0 0.0
    %v1030 = vand.u32 %v58, 4294901760
    %1031 = vmatpush1.msra.mxu0 %v1030
    %1032 = vmatprep.subr.mxu0 0.0
    %v1033 = vand.u32 %v59, 4294901760
    %1034 = vmatpush1.msra.mxu0 %v1033
    %1035 = vmatprep.subr.mxu0 0.0
    %v1036 = vand.u32 %v60, 4294901760
    %1037 = vmatpush1.msra.mxu0 %v1036
    %1038 = vmatprep.subr.mxu0 0.0
    %v1039 = vand.u32 %v61, 4294901760
    %1040 = vmatpush1.msra.mxu0 %v1039
    %1041 = vmatprep.subr.mxu0 0.0
    %v1042 = vand.u32 %v62, 4294901760
    %1043 = vmatpush1.msra.mxu0 %v1042
    %1044 = vmatprep.subr.mxu0 0.0
    %v1045 = vand.u32 %v63, 4294901760
    %1046 = vmatpush1.msra.mxu0 %v1045
    %1047 = vmatprep.subr.mxu0 0.0
    %v1048 = vand.u32 %v64, 4294901760
    %1049 = vmatpush1.msra.mxu0 %v1048
    %1050 = vmatprep.subr.mxu0 0.0
    %v1051 = vand.u32 %v65, 4294901760
    %1052 = vmatpush1.msra.mxu0 %v1051
    %1053 = vmatprep.subr.mxu0 0.0
    %v1054 = vand.u32 %v66, 4294901760
    %1055 = vmatpush1.msra.mxu0 %v1054
    %1056 = vmatprep.subr.mxu0 0.0
    %v1057 = vand.u32 %v67, 4294901760
    %1058 = vmatpush1.msra.mxu0 %v1057
    %1059 = vmatprep.subr.mxu0 0.0
    %v1060 = vand.u32 %v68, 4294901760
    %1061 = vmatpush1.msra.mxu0 %v1060
    %1062 = vmatprep.subr.mxu0 0.0
    %v1063 = vand.u32 %v69, 4294901760
    %1064 = vmatpush1.msra.mxu0 %v1063
    %1065 = vmatprep.subr.mxu0 0.0
    %v1066 = vand.u32 %v70, 4294901760
    %1067 = vmatpush1.msra.mxu0 %v1066
    %1068 = vmatprep.subr.mxu0 0.0
    %v1069 = vand.u32 %v71, 4294901760
    %1070 = vmatpush1.msra.mxu0 %v1069
    %1071 = vmatprep.subr.mxu0 0.0
    %v1072 = vand.u32 %v72, 4294901760
    %1073 = vmatpush1.msra.mxu0 %v1072
    %1074 = vmatprep.subr.mxu0 0.0
    %v1075 = vand.u32 %v73, 4294901760
    %1076 = vmatpush1.msra.mxu0 %v1075
    %1077 = vmatprep.subr.mxu0 0.0
    %v1078 = vand.u32 %v74, 4294901760
    %1079 = vmatpush1.msra.mxu0 %v1078
    %1080 = vmatprep.subr.mxu0 0.0
    %v1081 = vand.u32 %v75, 4294901760
    %1082 = vmatpush1.msra.mxu0 %v1081
    %1083 = vmatprep.subr.mxu0 0.0
    %v1084 = vand.u32 %v76, 4294901760
    %1085 = vmatpush1.msra.mxu0 %v1084
    %1086 = vmatprep.subr.mxu0 0.0
    %v1087 = vand.u32 %v77, 4294901760
    %1088 = vmatpush1.msra.mxu0 %v1087
    %1089 = vmatprep.subr.mxu0 0.0
    %v1090 = vand.u32 %v78, 4294901760
    %1091 = vmatpush1.msra.mxu0 %v1090
    %1092 = vmatprep.subr.mxu0 0.0
    %v1093 = vand.u32 %v79, 4294901760
    %1094 = vmatpush1.msra.mxu0 %v1093
    %1095 = vmatprep.subr.mxu0 0.0
    %v1096 = vand.u32 %v80, 4294901760
    %1097 = vmatpush1.msra.mxu0 %v1096
    %1098 = vmatprep.subr.mxu0 0.0
    %v1099 = vand.u32 %v81, 4294901760
    %1100 = vmatpush1.msra.mxu0 %v1099
    %1101 = vmatprep.subr.mxu0 0.0
    %v1102 = vand.u32 %v82, 4294901760
    %1103 = vmatpush1.msra.mxu0 %v1102
    %1104 = vmatprep.subr.mxu0 0.0
    %v1105 = vand.u32 %v83, 4294901760
    %1106 = vmatpush1.msra.mxu0 %v1105
    %1107 = vmatprep.subr.mxu0 0.0
    %v1108 = vand.u32 %v84, 4294901760
    %1109 = vmatpush1.msra.mxu0 %v1108
    %1110 = vmatprep.subr.mxu0 0.0
    %v1111 = vand.u32 %v85, 4294901760
    %1112 = vmatpush1.msra.mxu0 %v1111
    %1113 = vmatprep.subr.mxu0 0.0
    %v1114 = vand.u32 %v86, 4294901760
    %1115 = vmatpush1.msra.mxu0 %v1114
    %v1116 = vand.u32 %v18, 4294901760
    %v1117 = vsub.f32 %v18, %v1116
    %v1118 = vand.u32 %v1117, 4294901760
    %v1119 = vsub.f32 %v1117, %v1118
    %v1120 = vand.u32 %v1119, 4294901760
    %1121 = vmatprep.mubr.f32.mxu0 %v1120
    %v1122 = vand.u32 %v17, 4294901760
    %v1123 = vsub.f32 %v17, %v1122
    %v1124 = vand.u32 %v1123, 4294901760
    %v1125 = vsub.f32 %v1123, %v1124
    %v1126 = vand.u32 %v1125, 4294901760
    %1127 = vmatmul.mubr.f32.gmra.mrb[0].mxu0 %v1126
    %v1128 = vpop.f32.mrb[0].mxu0
    %v1129 = vadd.f32 %v1017, %v1128
    %v1130 = vpop.f32.mrb[0].mxu0
    %1131 = vdwg.mxu0
    %1132 = vmatprep.subr.mxu0 0.0
    %v1133 = vand.u32 %v55, 4294901760
    %v1134 = vsub.f32 %v55, %v1133
    %v1135 = vand.u32 %v1134, 4294901760
    %v1136 = vsub.f32 %v1134, %v1135
    %v1137 = vand.u32 %v1136, 4294901760
    %1138 = vmatpush1.msra.mxu0 %v1137
    %1139 = vmatprep.subr.mxu0 0.0
    %v1140 = vand.u32 %v56, 4294901760
    %v1141 = vsub.f32 %v56, %v1140
    %v1142 = vand.u32 %v1141, 4294901760
    %v1143 = vsub.f32 %v1141, %v1142
    %v1144 = vand.u32 %v1143, 4294901760
    %1145 = vmatpush1.msra.mxu0 %v1144
    %1146 = vmatprep.subr.mxu0 0.0
    %v1147 = vand.u32 %v57, 4294901760
    %v1148 = vsub.f32 %v57, %v1147
    %v1149 = vand.u32 %v1148, 4294901760
    %v1150 = vsub.f32 %v1148, %v1149
    %v1151 = vand.u32 %v1150, 4294901760
    %1152 = vmatpush1.msra.mxu0 %v1151
    %1153 = vmatprep.subr.mxu0 0.0
    %v1154 = vand.u32 %v58, 4294901760
    %v1155 = vsub.f32 %v58, %v1154
    %v1156 = vand.u32 %v1155, 4294901760
    %v1157 = vsub.f32 %v1155, %v1156
    %v1158 = vand.u32 %v1157, 4294901760
    %1159 = vmatpush1.msra.mxu0 %v1158
    %1160 = vmatprep.subr.mxu0 0.0
    %v1161 = vand.u32 %v59, 4294901760
    %v1162 = vsub.f32 %v59, %v1161
    %v1163 = vand.u32 %v1162, 4294901760
    %v1164 = vsub.f32 %v1162, %v1163
    %v1165 = vand.u32 %v1164, 4294901760
    %1166 = vmatpush1.msra.mxu0 %v1165
    %1167 = vmatprep.subr.mxu0 0.0
    %v1168 = vand.u32 %v60, 4294901760
    %v1169 = vsub.f32 %v60, %v1168
    %v1170 = vand.u32 %v1169, 4294901760
    %v1171 = vsub.f32 %v1169, %v1170
    %v1172 = vand.u32 %v1171, 4294901760
    %1173 = vmatpush1.msra.mxu0 %v1172
    %1174 = vmatprep.subr.mxu0 0.0
    %v1175 = vand.u32 %v61, 4294901760
    %v1176 = vsub.f32 %v61, %v1175
    %v1177 = vand.u32 %v1176, 4294901760
    %v1178 = vsub.f32 %v1176, %v1177
    %v1179 = vand.u32 %v1178, 4294901760
    %1180 = vmatpush1.msra.mxu0 %v1179
    %1181 = vmatprep.subr.mxu0 0.0
    %v1182 = vand.u32 %v62, 4294901760
    %v1183 = vsub.f32 %v62, %v1182
    %v1184 = vand.u32 %v1183, 4294901760
    %v1185 = vsub.f32 %v1183, %v1184
    %v1186 = vand.u32 %v1185, 4294901760
    %1187 = vmatpush1.msra.mxu0 %v1186
    %1188 = vmatprep.subr.mxu0 0.0
    %v1189 = vand.u32 %v63, 4294901760
    %v1190 = vsub.f32 %v63, %v1189
    %v1191 = vand.u32 %v1190, 4294901760
    %v1192 = vsub.f32 %v1190, %v1191
    %v1193 = vand.u32 %v1192, 4294901760
    %1194 = vmatpush1.msra.mxu0 %v1193
    %1195 = vmatprep.subr.mxu0 0.0
    %v1196 = vand.u32 %v64, 4294901760
    %v1197 = vsub.f32 %v64, %v1196
    %v1198 = vand.u32 %v1197, 4294901760
    %v1199 = vsub.f32 %v1197, %v1198
    %v1200 = vand.u32 %v1199, 4294901760
    %1201 = vmatpush1.msra.mxu0 %v1200
    %1202 = vmatprep.subr.mxu0 0.0
    %v1203 = vand.u32 %v65, 4294901760
    %v1204 = vsub.f32 %v65, %v1203
    %v1205 = vand.u32 %v1204, 4294901760
    %v1206 = vsub.f32 %v1204, %v1205
    %v1207 = vand.u32 %v1206, 4294901760
    %1208 = vmatpush1.msra.mxu0 %v1207
    %1209 = vmatprep.subr.mxu0 0.0
    %v1210 = vand.u32 %v66, 4294901760
    %v1211 = vsub.f32 %v66, %v1210
    %v1212 = vand.u32 %v1211, 4294901760
    %v1213 = vsub.f32 %v1211, %v1212
    %v1214 = vand.u32 %v1213, 4294901760
    %1215 = vmatpush1.msra.mxu0 %v1214
    %1216 = vmatprep.subr.mxu0 0.0
    %v1217 = vand.u32 %v67, 4294901760
    %v1218 = vsub.f32 %v67, %v1217
    %v1219 = vand.u32 %v1218, 4294901760
    %v1220 = vsub.f32 %v1218, %v1219
    %v1221 = vand.u32 %v1220, 4294901760
    %1222 = vmatpush1.msra.mxu0 %v1221
    %1223 = vmatprep.subr.mxu0 0.0
    %v1224 = vand.u32 %v68, 4294901760
    %v1225 = vsub.f32 %v68, %v1224
    %v1226 = vand.u32 %v1225, 4294901760
    %v1227 = vsub.f32 %v1225, %v1226
    %v1228 = vand.u32 %v1227, 4294901760
    %1229 = vmatpush1.msra.mxu0 %v1228
    %1230 = vmatprep.subr.mxu0 0.0
    %v1231 = vand.u32 %v69, 4294901760
    %v1232 = vsub.f32 %v69, %v1231
    %v1233 = vand.u32 %v1232, 4294901760
    %v1234 = vsub.f32 %v1232, %v1233
    %v1235 = vand.u32 %v1234, 4294901760
    %1236 = vmatpush1.msra.mxu0 %v1235
    %1237 = vmatprep.subr.mxu0 0.0
    %v1238 = vand.u32 %v70, 4294901760
    %v1239 = vsub.f32 %v70, %v1238
    %v1240 = vand.u32 %v1239, 4294901760
    %v1241 = vsub.f32 %v1239, %v1240
    %v1242 = vand.u32 %v1241, 4294901760
    %1243 = vmatpush1.msra.mxu0 %v1242
    %1244 = vmatprep.subr.mxu0 0.0
    %v1245 = vand.u32 %v71, 4294901760
    %v1246 = vsub.f32 %v71, %v1245
    %v1247 = vand.u32 %v1246, 4294901760
    %v1248 = vsub.f32 %v1246, %v1247
    %v1249 = vand.u32 %v1248, 4294901760
    %1250 = vmatpush1.msra.mxu0 %v1249
    %1251 = vmatprep.subr.mxu0 0.0
    %v1252 = vand.u32 %v72, 4294901760
    %v1253 = vsub.f32 %v72, %v1252
    %v1254 = vand.u32 %v1253, 4294901760
    %v1255 = vsub.f32 %v1253, %v1254
    %v1256 = vand.u32 %v1255, 4294901760
    %1257 = vmatpush1.msra.mxu0 %v1256
    %1258 = vmatprep.subr.mxu0 0.0
    %v1259 = vand.u32 %v73, 4294901760
    %v1260 = vsub.f32 %v73, %v1259
    %v1261 = vand.u32 %v1260, 4294901760
    %v1262 = vsub.f32 %v1260, %v1261
    %v1263 = vand.u32 %v1262, 4294901760
    %1264 = vmatpush1.msra.mxu0 %v1263
    %1265 = vmatprep.subr.mxu0 0.0
    %v1266 = vand.u32 %v74, 4294901760
    %v1267 = vsub.f32 %v74, %v1266
    %v1268 = vand.u32 %v1267, 4294901760
    %v1269 = vsub.f32 %v1267, %v1268
    %v1270 = vand.u32 %v1269, 4294901760
    %1271 = vmatpush1.msra.mxu0 %v1270
    %1272 = vmatprep.subr.mxu0 0.0
    %v1273 = vand.u32 %v75, 4294901760
    %v1274 = vsub.f32 %v75, %v1273
    %v1275 = vand.u32 %v1274, 4294901760
    %v1276 = vsub.f32 %v1274, %v1275
    %v1277 = vand.u32 %v1276, 4294901760
    %1278 = vmatpush1.msra.mxu0 %v1277
    %1279 = vmatprep.subr.mxu0 0.0
    %v1280 = vand.u32 %v76, 4294901760
    %v1281 = vsub.f32 %v76, %v1280
    %v1282 = vand.u32 %v1281, 4294901760
    %v1283 = vsub.f32 %v1281, %v1282
    %v1284 = vand.u32 %v1283, 4294901760
    %1285 = vmatpush1.msra.mxu0 %v1284
    %1286 = vmatprep.subr.mxu0 0.0
    %v1287 = vand.u32 %v77, 4294901760
    %v1288 = vsub.f32 %v77, %v1287
    %v1289 = vand.u32 %v1288, 4294901760
    %v1290 = vsub.f32 %v1288, %v1289
    %v1291 = vand.u32 %v1290, 4294901760
    %1292 = vmatpush1.msra.mxu0 %v1291
    %1293 = vmatprep.subr.mxu0 0.0
    %v1294 = vand.u32 %v78, 4294901760
    %v1295 = vsub.f32 %v78, %v1294
    %v1296 = vand.u32 %v1295, 4294901760
    %v1297 = vsub.f32 %v1295, %v1296
    %v1298 = vand.u32 %v1297, 4294901760
    %1299 = vmatpush1.msra.mxu0 %v1298
    %1300 = vmatprep.subr.mxu0 0.0
    %v1301 = vand.u32 %v79, 4294901760
    %v1302 = vsub.f32 %v79, %v1301
    %v1303 = vand.u32 %v1302, 4294901760
    %v1304 = vsub.f32 %v1302, %v1303
    %v1305 = vand.u32 %v1304, 4294901760
    %1306 = vmatpush1.msra.mxu0 %v1305
    %1307 = vmatprep.subr.mxu0 0.0
    %v1308 = vand.u32 %v80, 4294901760
    %v1309 = vsub.f32 %v80, %v1308
    %v1310 = vand.u32 %v1309, 4294901760
    %v1311 = vsub.f32 %v1309, %v1310
    %v1312 = vand.u32 %v1311, 4294901760
    %1313 = vmatpush1.msra.mxu0 %v1312
    %1314 = vmatprep.subr.mxu0 0.0
    %v1315 = vand.u32 %v81, 4294901760
    %v1316 = vsub.f32 %v81, %v1315
    %v1317 = vand.u32 %v1316, 4294901760
    %v1318 = vsub.f32 %v1316, %v1317
    %v1319 = vand.u32 %v1318, 4294901760
    %1320 = vmatpush1.msra.mxu0 %v1319
    %1321 = vmatprep.subr.mxu0 0.0
    %v1322 = vand.u32 %v82, 4294901760
    %v1323 = vsub.f32 %v82, %v1322
    %v1324 = vand.u32 %v1323, 4294901760
    %v1325 = vsub.f32 %v1323, %v1324
    %v1326 = vand.u32 %v1325, 4294901760
    %1327 = vmatpush1.msra.mxu0 %v1326
    %1328 = vmatprep.subr.mxu0 0.0
    %v1329 = vand.u32 %v83, 4294901760
    %v1330 = vsub.f32 %v83, %v1329
    %v1331 = vand.u32 %v1330, 4294901760
    %v1332 = vsub.f32 %v1330, %v1331
    %v1333 = vand.u32 %v1332, 4294901760
    %1334 = vmatpush1.msra.mxu0 %v1333
    %1335 = vmatprep.subr.mxu0 0.0
    %v1336 = vand.u32 %v84, 4294901760
    %v1337 = vsub.f32 %v84, %v1336
    %v1338 = vand.u32 %v1337, 4294901760
    %v1339 = vsub.f32 %v1337, %v1338
    %v1340 = vand.u32 %v1339, 4294901760
    %1341 = vmatpush1.msra.mxu0 %v1340
    %1342 = vmatprep.subr.mxu0 0.0
    %v1343 = vand.u32 %v85, 4294901760
    %v1344 = vsub.f32 %v85, %v1343
    %v1345 = vand.u32 %v1344, 4294901760
    %v1346 = vsub.f32 %v1344, %v1345
    %v1347 = vand.u32 %v1346, 4294901760
    %1348 = vmatpush1.msra.mxu0 %v1347
    %1349 = vmatprep.subr.mxu0 0.0
    %v1350 = vand.u32 %v86, 4294901760
    %v1351 = vsub.f32 %v86, %v1350
    %v1352 = vand.u32 %v1351, 4294901760
    %v1353 = vsub.f32 %v1351, %v1352
    %v1354 = vand.u32 %v1353, 4294901760
    %1355 = vmatpush1.msra.mxu0 %v1354
    %v1356 = vand.u32 %v18, 4294901760
    %1357 = vmatprep.mubr.f32.mxu0 %v1356
    %v1358 = vand.u32 %v17, 4294901760
    %1359 = vmatmul.mubr.f32.gmra.mrb[0].mxu0 %v1358
    %v1360 = vpop.f32.mrb[0].mxu0
    %v1361 = vadd.f32 %v1129, %v1360
    %v1362 = vpop.f32.mrb[0].mxu0
    %1363 = vdwg.mxu0
    %1364 = vmatprep.subr.mxu0 0.0
    %v1365 = vand.u32 %v55, 4294901760
    %v1366 = vsub.f32 %v55, %v1365
    %1367 = vmatpush1.msra.mxu0 %v1366
    %1368 = vmatprep.subr.mxu0 0.0
    %v1369 = vand.u32 %v56, 4294901760
    %v1370 = vsub.f32 %v56, %v1369
    %1371 = vmatpush1.msra.mxu0 %v1370
    %1372 = vmatprep.subr.mxu0 0.0
    %v1373 = vand.u32 %v57, 4294901760
    %v1374 = vsub.f32 %v57, %v1373
    %1375 = vmatpush1.msra.mxu0 %v1374
    %1376 = vmatprep.subr.mxu0 0.0
    %v1377 = vand.u32 %v58, 4294901760
    %v1378 = vsub.f32 %v58, %v1377
    %1379 = vmatpush1.msra.mxu0 %v1378
    %1380 = vmatprep.subr.mxu0 0.0
    %v1381 = vand.u32 %v59, 4294901760
    %v1382 = vsub.f32 %v59, %v1381
    %1383 = vmatpush1.msra.mxu0 %v1382
    %1384 = vmatprep.subr.mxu0 0.0
    %v1385 = vand.u32 %v60, 4294901760
    %v1386 = vsub.f32 %v60, %v1385
    %1387 = vmatpush1.msra.mxu0 %v1386
    %1388 = vmatprep.subr.mxu0 0.0
    %v1389 = vand.u32 %v61, 4294901760
    %v1390 = vsub.f32 %v61, %v1389
    %1391 = vmatpush1.msra.mxu0 %v1390
    %1392 = vmatprep.subr.mxu0 0.0
    %v1393 = vand.u32 %v62, 4294901760
    %v1394 = vsub.f32 %v62, %v1393
    %1395 = vmatpush1.msra.mxu0 %v1394
    %1396 = vmatprep.subr.mxu0 0.0
    %v1397 = vand.u32 %v63, 4294901760
    %v1398 = vsub.f32 %v63, %v1397
    %1399 = vmatpush1.msra.mxu0 %v1398
    %1400 = vmatprep.subr.mxu0 0.0
    %v1401 = vand.u32 %v64, 4294901760
    %v1402 = vsub.f32 %v64, %v1401
    %1403 = vmatpush1.msra.mxu0 %v1402
    %1404 = vmatprep.subr.mxu0 0.0
    %v1405 = vand.u32 %v65, 4294901760
    %v1406 = vsub.f32 %v65, %v1405
    %1407 = vmatpush1.msra.mxu0 %v1406
    %1408 = vmatprep.subr.mxu0 0.0
    %v1409 = vand.u32 %v66, 4294901760
    %v1410 = vsub.f32 %v66, %v1409
    %1411 = vmatpush1.msra.mxu0 %v1410
    %1412 = vmatprep.subr.mxu0 0.0
    %v1413 = vand.u32 %v67, 4294901760
    %v1414 = vsub.f32 %v67, %v1413
    %1415 = vmatpush1.msra.mxu0 %v1414
    %1416 = vmatprep.subr.mxu0 0.0
    %v1417 = vand.u32 %v68, 4294901760
    %v1418 = vsub.f32 %v68, %v1417
    %1419 = vmatpush1.msra.mxu0 %v1418
    %1420 = vmatprep.subr.mxu0 0.0
    %v1421 = vand.u32 %v69, 4294901760
    %v1422 = vsub.f32 %v69, %v1421
    %1423 = vmatpush1.msra.mxu0 %v1422
    %1424 = vmatprep.subr.mxu0 0.0
    %v1425 = vand.u32 %v70, 4294901760
    %v1426 = vsub.f32 %v70, %v1425
    %1427 = vmatpush1.msra.mxu0 %v1426
    %1428 = vmatprep.subr.mxu0 0.0
    %v1429 = vand.u32 %v71, 4294901760
    %v1430 = vsub.f32 %v71, %v1429
    %1431 = vmatpush1.msra.mxu0 %v1430
    %1432 = vmatprep.subr.mxu0 0.0
    %v1433 = vand.u32 %v72, 4294901760
    %v1434 = vsub.f32 %v72, %v1433
    %1435 = vmatpush1.msra.mxu0 %v1434
    %1436 = vmatprep.subr.mxu0 0.0
    %v1437 = vand.u32 %v73, 4294901760
    %v1438 = vsub.f32 %v73, %v1437
    %1439 = vmatpush1.msra.mxu0 %v1438
    %1440 = vmatprep.subr.mxu0 0.0
    %v1441 = vand.u32 %v74, 4294901760
    %v1442 = vsub.f32 %v74, %v1441
    %1443 = vmatpush1.msra.mxu0 %v1442
    %1444 = vmatprep.subr.mxu0 0.0
    %v1445 = vand.u32 %v75, 4294901760
    %v1446 = vsub.f32 %v75, %v1445
    %1447 = vmatpush1.msra.mxu0 %v1446
    %1448 = vmatprep.subr.mxu0 0.0
    %v1449 = vand.u32 %v76, 4294901760
    %v1450 = vsub.f32 %v76, %v1449
    %1451 = vmatpush1.msra.mxu0 %v1450
    %1452 = vmatprep.subr.mxu0 0.0
    %v1453 = vand.u32 %v77, 4294901760
    %v1454 = vsub.f32 %v77, %v1453
    %1455 = vmatpush1.msra.mxu0 %v1454
    %1456 = vmatprep.subr.mxu0 0.0
    %v1457 = vand.u32 %v78, 4294901760
    %v1458 = vsub.f32 %v78, %v1457
    %1459 = vmatpush1.msra.mxu0 %v1458
    %1460 = vmatprep.subr.mxu0 0.0
    %v1461 = vand.u32 %v79, 4294901760
    %v1462 = vsub.f32 %v79, %v1461
    %1463 = vmatpush1.msra.mxu0 %v1462
    %1464 = vmatprep.subr.mxu0 0.0
    %v1465 = vand.u32 %v80, 4294901760
    %v1466 = vsub.f32 %v80, %v1465
    %1467 = vmatpush1.msra.mxu0 %v1466
    %1468 = vmatprep.subr.mxu0 0.0
    %v1469 = vand.u32 %v81, 4294901760
    %v1470 = vsub.f32 %v81, %v1469
    %1471 = vmatpush1.msra.mxu0 %v1470
    %1472 = vmatprep.subr.mxu0 0.0
    %v1473 = vand.u32 %v82, 4294901760
    %v1474 = vsub.f32 %v82, %v1473
    %1475 = vmatpush1.msra.mxu0 %v1474
    %1476 = vmatprep.subr.mxu0 0.0
    %v1477 = vand.u32 %v83, 4294901760
    %v1478 = vsub.f32 %v83, %v1477
    %1479 = vmatpush1.msra.mxu0 %v1478
    %1480 = vmatprep.subr.mxu0 0.0
    %v1481 = vand.u32 %v84, 4294901760
    %v1482 = vsub.f32 %v84, %v1481
    %1483 = vmatpush1.msra.mxu0 %v1482
    %1484 = vmatprep.subr.mxu0 0.0
    %v1485 = vand.u32 %v85, 4294901760
    %v1486 = vsub.f32 %v85, %v1485
    %1487 = vmatpush1.msra.mxu0 %v1486
    %1488 = vmatprep.subr.mxu0 0.0
    %v1489 = vand.u32 %v86, 4294901760
    %v1490 = vsub.f32 %v86, %v1489
    %1491 = vmatpush1.msra.mxu0 %v1490
    %v1492 = vand.u32 %v18, 4294901760
    %v1493 = vsub.f32 %v18, %v1492
    %1494 = vmatprep.mubr.f32.mxu0 %v1493
    %v1495 = vand.u32 %v17, 4294901760
    %v1496 = vsub.f32 %v17, %v1495
    %1497 = vmatmul.mubr.f32.gmra.mrb[0].mxu0 %v1496
    %v1498 = vpop.f32.mrb[0].mxu0
    %v1499 = vadd.f32 %v1361, %v1498
    %v1500 = vpop.f32.mrb[0].mxu0
    %1501 = vdwg.mxu0
    %1502 = vmatprep.subr.mxu0 0.0
    %v1503 = vand.u32 %v55, 4294901760
    %1504 = vmatpush1.msra.mxu0 %v1503
    %1505 = vmatprep.subr.mxu0 0.0
    %v1506 = vand.u32 %v56, 4294901760
    %1507 = vmatpush1.msra.mxu0 %v1506
    %1508 = vmatprep.subr.mxu0 0.0
    %v1509 = vand.u32 %v57, 4294901760
    %1510 = vmatpush1.msra.mxu0 %v1509
    %1511 = vmatprep.subr.mxu0 0.0
    %v1512 = vand.u32 %v58, 4294901760
    %1513 = vmatpush1.msra.mxu0 %v1512
    %1514 = vmatprep.subr.mxu0 0.0
    %v1515 = vand.u32 %v59, 4294901760
    %1516 = vmatpush1.msra.mxu0 %v1515
    %1517 = vmatprep.subr.mxu0 0.0
    %v1518 = vand.u32 %v60, 4294901760
    %1519 = vmatpush1.msra.mxu0 %v1518
    %1520 = vmatprep.subr.mxu0 0.0
    %v1521 = vand.u32 %v61, 4294901760
    %1522 = vmatpush1.msra.mxu0 %v1521
    %1523 = vmatprep.subr.mxu0 0.0
    %v1524 = vand.u32 %v62, 4294901760
    %1525 = vmatpush1.msra.mxu0 %v1524
    %1526 = vmatprep.subr.mxu0 0.0
    %v1527 = vand.u32 %v63, 4294901760
    %1528 = vmatpush1.msra.mxu0 %v1527
    %1529 = vmatprep.subr.mxu0 0.0
    %v1530 = vand.u32 %v64, 4294901760
    %1531 = vmatpush1.msra.mxu0 %v1530
    %1532 = vmatprep.subr.mxu0 0.0
    %v1533 = vand.u32 %v65, 4294901760
    %1534 = vmatpush1.msra.mxu0 %v1533
    %1535 = vmatprep.subr.mxu0 0.0
    %v1536 = vand.u32 %v66, 4294901760
    %1537 = vmatpush1.msra.mxu0 %v1536
    %1538 = vmatprep.subr.mxu0 0.0
    %v1539 = vand.u32 %v67, 4294901760
    %1540 = vmatpush1.msra.mxu0 %v1539
    %1541 = vmatprep.subr.mxu0 0.0
    %v1542 = vand.u32 %v68, 4294901760
    %1543 = vmatpush1.msra.mxu0 %v1542
    %1544 = vmatprep.subr.mxu0 0.0
    %v1545 = vand.u32 %v69, 4294901760
    %1546 = vmatpush1.msra.mxu0 %v1545
    %1547 = vmatprep.subr.mxu0 0.0
    %v1548 = vand.u32 %v70, 4294901760
    %1549 = vmatpush1.msra.mxu0 %v1548
    %1550 = vmatprep.subr.mxu0 0.0
    %v1551 = vand.u32 %v71, 4294901760
    %1552 = vmatpush1.msra.mxu0 %v1551
    %1553 = vmatprep.subr.mxu0 0.0
    %v1554 = vand.u32 %v72, 4294901760
    %1555 = vmatpush1.msra.mxu0 %v1554
    %1556 = vmatprep.subr.mxu0 0.0
    %v1557 = vand.u32 %v73, 4294901760
    %1558 = vmatpush1.msra.mxu0 %v1557
    %1559 = vmatprep.subr.mxu0 0.0
    %v1560 = vand.u32 %v74, 4294901760
    %1561 = vmatpush1.msra.mxu0 %v1560
    %1562 = vmatprep.subr.mxu0 0.0
    %v1563 = vand.u32 %v75, 4294901760
    %1564 = vmatpush1.msra.mxu0 %v1563
    %1565 = vmatprep.subr.mxu0 0.0
    %v1566 = vand.u32 %v76, 4294901760
    %1567 = vmatpush1.msra.mxu0 %v1566
    %1568 = vmatprep.subr.mxu0 0.0
    %v1569 = vand.u32 %v77, 4294901760
    %1570 = vmatpush1.msra.mxu0 %v1569
    %1571 = vmatprep.subr.mxu0 0.0
    %v1572 = vand.u32 %v78, 4294901760
    %1573 = vmatpush1.msra.mxu0 %v1572
    %1574 = vmatprep.subr.mxu0 0.0
    %v1575 = vand.u32 %v79, 4294901760
    %1576 = vmatpush1.msra.mxu0 %v1575
    %1577 = vmatprep.subr.mxu0 0.0
    %v1578 = vand.u32 %v80, 4294901760
    %1579 = vmatpush1.msra.mxu0 %v1578
    %1580 = vmatprep.subr.mxu0 0.0
    %v1581 = vand.u32 %v81, 4294901760
    %1582 = vmatpush1.msra.mxu0 %v1581
    %1583 = vmatprep.subr.mxu0 0.0
    %v1584 = vand.u32 %v82, 4294901760
    %1585 = vmatpush1.msra.mxu0 %v1584
    %1586 = vmatprep.subr.mxu0 0.0
    %v1587 = vand.u32 %v83, 4294901760
    %1588 = vmatpush1.msra.mxu0 %v1587
    %1589 = vmatprep.subr.mxu0 0.0
    %v1590 = vand.u32 %v84, 4294901760
    %1591 = vmatpush1.msra.mxu0 %v1590
    %1592 = vmatprep.subr.mxu0 0.0
    %v1593 = vand.u32 %v85, 4294901760
    %1594 = vmatpush1.msra.mxu0 %v1593
    %1595 = vmatprep.subr.mxu0 0.0
    %v1596 = vand.u32 %v86, 4294901760
    %1597 = vmatpush1.msra.mxu0 %v1596
    %v1598 = vand.u32 %v18, 4294901760
    %v1599 = vsub.f32 %v18, %v1598
    %v1600 = vand.u32 %v1599, 4294901760
    %1601 = vmatprep.mubr.f32.mxu0 %v1600
    %v1602 = vand.u32 %v17, 4294901760
    %v1603 = vsub.f32 %v17, %v1602
    %v1604 = vand.u32 %v1603, 4294901760
    %1605 = vmatmul.mubr.f32.gmra.mrb[0].mxu0 %v1604
    %v1606 = vpop.f32.mrb[0].mxu0
    %v1607 = vadd.f32 %v1499, %v1606
    %v1608 = vpop.f32.mrb[0].mxu0
    %1609 = vdwg.mxu0
    %1610 = vmatprep.subr.mxu0 0.0
    %v1611 = vand.u32 %v55, 4294901760
    %v1612 = vsub.f32 %v55, %v1611
    %v1613 = vand.u32 %v1612, 4294901760
    %1614 = vmatpush1.msra.mxu0 %v1613
    %1615 = vmatprep.subr.mxu0 0.0
    %v1616 = vand.u32 %v56, 4294901760
    %v1617 = vsub.f32 %v56, %v1616
    %v1618 = vand.u32 %v1617, 4294901760
    %1619 = vmatpush1.msra.mxu0 %v1618
    %1620 = vmatprep.subr.mxu0 0.0
    %v1621 = vand.u32 %v57, 4294901760
    %v1622 = vsub.f32 %v57, %v1621
    %v1623 = vand.u32 %v1622, 4294901760
    %1624 = vmatpush1.msra.mxu0 %v1623
    %1625 = vmatprep.subr.mxu0 0.0
    %v1626 = vand.u32 %v58, 4294901760
    %v1627 = vsub.f32 %v58, %v1626
    %v1628 = vand.u32 %v1627, 4294901760
    %1629 = vmatpush1.msra.mxu0 %v1628
    %1630 = vmatprep.subr.mxu0 0.0
    %v1631 = vand.u32 %v59, 4294901760
    %v1632 = vsub.f32 %v59, %v1631
    %v1633 = vand.u32 %v1632, 4294901760
    %1634 = vmatpush1.msra.mxu0 %v1633
    %1635 = vmatprep.subr.mxu0 0.0
    %v1636 = vand.u32 %v60, 4294901760
    %v1637 = vsub.f32 %v60, %v1636
    %v1638 = vand.u32 %v1637, 4294901760
    %1639 = vmatpush1.msra.mxu0 %v1638
    %1640 = vmatprep.subr.mxu0 0.0
    %v1641 = vand.u32 %v61, 4294901760
    %v1642 = vsub.f32 %v61, %v1641
    %v1643 = vand.u32 %v1642, 4294901760
    %1644 = vmatpush1.msra.mxu0 %v1643
    %1645 = vmatprep.subr.mxu0 0.0
    %v1646 = vand.u32 %v62, 4294901760
    %v1647 = vsub.f32 %v62, %v1646
    %v1648 = vand.u32 %v1647, 4294901760
    %1649 = vmatpush1.msra.mxu0 %v1648
    %1650 = vmatprep.subr.mxu0 0.0
    %v1651 = vand.u32 %v63, 4294901760
    %v1652 = vsub.f32 %v63, %v1651
    %v1653 = vand.u32 %v1652, 4294901760
    %1654 = vmatpush1.msra.mxu0 %v1653
    %1655 = vmatprep.subr.mxu0 0.0
    %v1656 = vand.u32 %v64, 4294901760
    %v1657 = vsub.f32 %v64, %v1656
    %v1658 = vand.u32 %v1657, 4294901760
    %1659 = vmatpush1.msra.mxu0 %v1658
    %1660 = vmatprep.subr.mxu0 0.0
    %v1661 = vand.u32 %v65, 4294901760
    %v1662 = vsub.f32 %v65, %v1661
    %v1663 = vand.u32 %v1662, 4294901760
    %1664 = vmatpush1.msra.mxu0 %v1663
    %1665 = vmatprep.subr.mxu0 0.0
    %v1666 = vand.u32 %v66, 4294901760
    %v1667 = vsub.f32 %v66, %v1666
    %v1668 = vand.u32 %v1667, 4294901760
    %1669 = vmatpush1.msra.mxu0 %v1668
    %1670 = vmatprep.subr.mxu0 0.0
    %v1671 = vand.u32 %v67, 4294901760
    %v1672 = vsub.f32 %v67, %v1671
    %v1673 = vand.u32 %v1672, 4294901760
    %1674 = vmatpush1.msra.mxu0 %v1673
    %1675 = vmatprep.subr.mxu0 0.0
    %v1676 = vand.u32 %v68, 4294901760
    %v1677 = vsub.f32 %v68, %v1676
    %v1678 = vand.u32 %v1677, 4294901760
    %1679 = vmatpush1.msra.mxu0 %v1678
    %1680 = vmatprep.subr.mxu0 0.0
    %v1681 = vand.u32 %v69, 4294901760
    %v1682 = vsub.f32 %v69, %v1681
    %v1683 = vand.u32 %v1682, 4294901760
    %1684 = vmatpush1.msra.mxu0 %v1683
    %1685 = vmatprep.subr.mxu0 0.0
    %v1686 = vand.u32 %v70, 4294901760
    %v1687 = vsub.f32 %v70, %v1686
    %v1688 = vand.u32 %v1687, 4294901760
    %1689 = vmatpush1.msra.mxu0 %v1688
    %1690 = vmatprep.subr.mxu0 0.0
    %v1691 = vand.u32 %v71, 4294901760
    %v1692 = vsub.f32 %v71, %v1691
    %v1693 = vand.u32 %v1692, 4294901760
    %1694 = vmatpush1.msra.mxu0 %v1693
    %1695 = vmatprep.subr.mxu0 0.0
    %v1696 = vand.u32 %v72, 4294901760
    %v1697 = vsub.f32 %v72, %v1696
    %v1698 = vand.u32 %v1697, 4294901760
    %1699 = vmatpush1.msra.mxu0 %v1698
    %1700 = vmatprep.subr.mxu0 0.0
    %v1701 = vand.u32 %v73, 4294901760
    %v1702 = vsub.f32 %v73, %v1701
    %v1703 = vand.u32 %v1702, 4294901760
    %1704 = vmatpush1.msra.mxu0 %v1703
    %1705 = vmatprep.subr.mxu0 0.0
    %v1706 = vand.u32 %v74, 4294901760
    %v1707 = vsub.f32 %v74, %v1706
    %v1708 = vand.u32 %v1707, 4294901760
    %1709 = vmatpush1.msra.mxu0 %v1708
    %1710 = vmatprep.subr.mxu0 0.0
    %v1711 = vand.u32 %v75, 4294901760
    %v1712 = vsub.f32 %v75, %v1711
    %v1713 = vand.u32 %v1712, 4294901760
    %1714 = vmatpush1.msra.mxu0 %v1713
    %1715 = vmatprep.subr.mxu0 0.0
    %v1716 = vand.u32 %v76, 4294901760
    %v1717 = vsub.f32 %v76, %v1716
    %v1718 = vand.u32 %v1717, 4294901760
    %1719 = vmatpush1.msra.mxu0 %v1718
    %1720 = vmatprep.subr.mxu0 0.0
    %v1721 = vand.u32 %v77, 4294901760
    %v1722 = vsub.f32 %v77, %v1721
    %v1723 = vand.u32 %v1722, 4294901760
    %1724 = vmatpush1.msra.mxu0 %v1723
    %1725 = vmatprep.subr.mxu0 0.0
    %v1726 = vand.u32 %v78, 4294901760
    %v1727 = vsub.f32 %v78, %v1726
    %v1728 = vand.u32 %v1727, 4294901760
    %1729 = vmatpush1.msra.mxu0 %v1728
    %1730 = vmatprep.subr.mxu0 0.0
    %v1731 = vand.u32 %v79, 4294901760
    %v1732 = vsub.f32 %v79, %v1731
    %v1733 = vand.u32 %v1732, 4294901760
    %1734 = vmatpush1.msra.mxu0 %v1733
    %1735 = vmatprep.subr.mxu0 0.0
    %v1736 = vand.u32 %v80, 4294901760
    %v1737 = vsub.f32 %v80, %v1736
    %v1738 = vand.u32 %v1737, 4294901760
    %1739 = vmatpush1.msra.mxu0 %v1738
    %1740 = vmatprep.subr.mxu0 0.0
    %v1741 = vand.u32 %v81, 4294901760
    %v1742 = vsub.f32 %v81, %v1741
    %v1743 = vand.u32 %v1742, 4294901760
    %1744 = vmatpush1.msra.mxu0 %v1743
    %1745 = vmatprep.subr.mxu0 0.0
    %v1746 = vand.u32 %v82, 4294901760
    %v1747 = vsub.f32 %v82, %v1746
    %v1748 = vand.u32 %v1747, 4294901760
    %1749 = vmatpush1.msra.mxu0 %v1748
    %1750 = vmatprep.subr.mxu0 0.0
    %v1751 = vand.u32 %v83, 4294901760
    %v1752 = vsub.f32 %v83, %v1751
    %v1753 = vand.u32 %v1752, 4294901760
    %1754 = vmatpush1.msra.mxu0 %v1753
    %1755 = vmatprep.subr.mxu0 0.0
    %v1756 = vand.u32 %v84, 4294901760
    %v1757 = vsub.f32 %v84, %v1756
    %v1758 = vand.u32 %v1757, 4294901760
    %1759 = vmatpush1.msra.mxu0 %v1758
    %1760 = vmatprep.subr.mxu0 0.0
    %v1761 = vand.u32 %v85, 4294901760
    %v1762 = vsub.f32 %v85, %v1761
    %v1763 = vand.u32 %v1762, 4294901760
    %1764 = vmatpush1.msra.mxu0 %v1763
    %1765 = vmatprep.subr.mxu0 0.0
    %v1766 = vand.u32 %v86, 4294901760
    %v1767 = vsub.f32 %v86, %v1766
    %v1768 = vand.u32 %v1767, 4294901760
    %1769 = vmatpush1.msra.mxu0 %v1768
    %v1770 = vand.u32 %v18, 4294901760
    %1771 = vmatprep.mubr.f32.mxu0 %v1770
    %v1772 = vand.u32 %v17, 4294901760
    %1773 = vmatmul.mubr.f32.gmra.mrb[0].mxu0 %v1772
    %v1774 = vpop.f32.mrb[0].mxu0
    %v1775 = vadd.f32 %v1607, %v1774
    %v1776 = vpop.f32.mrb[0].mxu0
    %1777 = vdwg.mxu0
    %1778 = vmatprep.subr.mxu0 0.0
    %v1779 = vand.u32 %v55, 4294901760
    %1780 = vmatpush1.msra.mxu0 %v1779
    %1781 = vmatprep.subr.mxu0 0.0
    %v1782 = vand.u32 %v56, 4294901760
    %1783 = vmatpush1.msra.mxu0 %v1782
    %1784 = vmatprep.subr.mxu0 0.0
    %v1785 = vand.u32 %v57, 4294901760
    %1786 = vmatpush1.msra.mxu0 %v1785
    %1787 = vmatprep.subr.mxu0 0.0
    %v1788 = vand.u32 %v58, 4294901760
    %1789 = vmatpush1.msra.mxu0 %v1788
    %1790 = vmatprep.subr.mxu0 0.0
    %v1791 = vand.u32 %v59, 4294901760
    %1792 = vmatpush1.msra.mxu0 %v1791
    %1793 = vmatprep.subr.mxu0 0.0
    %v1794 = vand.u32 %v60, 4294901760
    %1795 = vmatpush1.msra.mxu0 %v1794
    %1796 = vmatprep.subr.mxu0 0.0
    %v1797 = vand.u32 %v61, 4294901760
    %1798 = vmatpush1.msra.mxu0 %v1797
    %1799 = vmatprep.subr.mxu0 0.0
    %v1800 = vand.u32 %v62, 4294901760
    %1801 = vmatpush1.msra.mxu0 %v1800
    %1802 = vmatprep.subr.mxu0 0.0
    %v1803 = vand.u32 %v63, 4294901760
    %1804 = vmatpush1.msra.mxu0 %v1803
    %1805 = vmatprep.subr.mxu0 0.0
    %v1806 = vand.u32 %v64, 4294901760
    %1807 = vmatpush1.msra.mxu0 %v1806
    %1808 = vmatprep.subr.mxu0 0.0
    %v1809 = vand.u32 %v65, 4294901760
    %1810 = vmatpush1.msra.mxu0 %v1809
    %1811 = vmatprep.subr.mxu0 0.0
    %v1812 = vand.u32 %v66, 4294901760
    %1813 = vmatpush1.msra.mxu0 %v1812
    %1814 = vmatprep.subr.mxu0 0.0
    %v1815 = vand.u32 %v67, 4294901760
    %1816 = vmatpush1.msra.mxu0 %v1815
    %1817 = vmatprep.subr.mxu0 0.0
    %v1818 = vand.u32 %v68, 4294901760
    %1819 = vmatpush1.msra.mxu0 %v1818
    %1820 = vmatprep.subr.mxu0 0.0
    %v1821 = vand.u32 %v69, 4294901760
    %1822 = vmatpush1.msra.mxu0 %v1821
    %1823 = vmatprep.subr.mxu0 0.0
    %v1824 = vand.u32 %v70, 4294901760
    %1825 = vmatpush1.msra.mxu0 %v1824
    %1826 = vmatprep.subr.mxu0 0.0
    %v1827 = vand.u32 %v71, 4294901760
    %1828 = vmatpush1.msra.mxu0 %v1827
    %1829 = vmatprep.subr.mxu0 0.0
    %v1830 = vand.u32 %v72, 4294901760
    %1831 = vmatpush1.msra.mxu0 %v1830
    %1832 = vmatprep.subr.mxu0 0.0
    %v1833 = vand.u32 %v73, 4294901760
    %1834 = vmatpush1.msra.mxu0 %v1833
    %1835 = vmatprep.subr.mxu0 0.0
    %v1836 = vand.u32 %v74, 4294901760
    %1837 = vmatpush1.msra.mxu0 %v1836
    %1838 = vmatprep.subr.mxu0 0.0
    %v1839 = vand.u32 %v75, 4294901760
    %1840 = vmatpush1.msra.mxu0 %v1839
    %1841 = vmatprep.subr.mxu0 0.0
    %v1842 = vand.u32 %v76, 4294901760
    %1843 = vmatpush1.msra.mxu0 %v1842
    %1844 = vmatprep.subr.mxu0 0.0
    %v1845 = vand.u32 %v77, 4294901760
    %1846 = vmatpush1.msra.mxu0 %v1845
    %1847 = vmatprep.subr.mxu0 0.0
    %v1848 = vand.u32 %v78, 4294901760
    %1849 = vmatpush1.msra.mxu0 %v1848
    %1850 = vmatprep.subr.mxu0 0.0
    %v1851 = vand.u32 %v79, 4294901760
    %1852 = vmatpush1.msra.mxu0 %v1851
    %1853 = vmatprep.subr.mxu0 0.0
    %v1854 = vand.u32 %v80, 4294901760
    %1855 = vmatpush1.msra.mxu0 %v1854
    %1856 = vmatprep.subr.mxu0 0.0
    %v1857 = vand.u32 %v81, 4294901760
    %1858 = vmatpush1.msra.mxu0 %v1857
    %1859 = vmatprep.subr.mxu0 0.0
    %v1860 = vand.u32 %v82, 4294901760
    %1861 = vmatpush1.msra.mxu0 %v1860
    %1862 = vmatprep.subr.mxu0 0.0
    %v1863 = vand.u32 %v83, 4294901760
    %1864 = vmatpush1.msra.mxu0 %v1863
    %1865 = vmatprep.subr.mxu0 0.0
    %v1866 = vand.u32 %v84, 4294901760
    %1867 = vmatpush1.msra.mxu0 %v1866
    %1868 = vmatprep.subr.mxu0 0.0
    %v1869 = vand.u32 %v85, 4294901760
    %1870 = vmatpush1.msra.mxu0 %v1869
    %1871 = vmatprep.subr.mxu0 0.0
    %v1872 = vand.u32 %v86, 4294901760
    %1873 = vmatpush1.msra.mxu0 %v1872
    %v1874 = vand.u32 %v18, 4294901760
    %1875 = vmatprep.mubr.f32.mxu0 %v1874
    %v1876 = vand.u32 %v17, 4294901760
    %1877 = vmatmul.mubr.f32.gmra.mrb[0].mxu0 %v1876
    %v1878 = vpop.f32.mrb[0].mxu0
    %v1879 = vadd.f32 %v1775, %v1878
    %v1880 = vpop.f32.mrb[0].mxu0
    %1881 = vdwg.mxu0
    %1882 = vmatprep.subr.mxu0 0.0
    %v1883 = vand.u32 %v87, 4294901760
    %1884 = vmatpush1.msra.mxu0 %v1883
    %1885 = vmatprep.subr.mxu0 0.0
    %v1886 = vand.u32 %v88, 4294901760
    %1887 = vmatpush1.msra.mxu0 %v1886
    %1888 = vmatprep.subr.mxu0 0.0
    %v1889 = vand.u32 %v89, 4294901760
    %1890 = vmatpush1.msra.mxu0 %v1889
    %1891 = vmatprep.subr.mxu0 0.0
    %v1892 = vand.u32 %v90, 4294901760
    %1893 = vmatpush1.msra.mxu0 %v1892
    %1894 = vmatprep.subr.mxu0 0.0
    %v1895 = vand.u32 %v91, 4294901760
    %1896 = vmatpush1.msra.mxu0 %v1895
    %1897 = vmatprep.subr.mxu0 0.0
    %v1898 = vand.u32 %v92, 4294901760
    %1899 = vmatpush1.msra.mxu0 %v1898
    %1900 = vmatprep.subr.mxu0 0.0
    %v1901 = vand.u32 %v93, 4294901760
    %1902 = vmatpush1.msra.mxu0 %v1901
    %1903 = vmatprep.subr.mxu0 0.0
    %v1904 = vand.u32 %v94, 4294901760
    %1905 = vmatpush1.msra.mxu0 %v1904
    %1906 = vmatprep.subr.mxu0 0.0
    %v1907 = vand.u32 %v95, 4294901760
    %1908 = vmatpush1.msra.mxu0 %v1907
    %1909 = vmatprep.subr.mxu0 0.0
    %v1910 = vand.u32 %v96, 4294901760
    %1911 = vmatpush1.msra.mxu0 %v1910
    %1912 = vmatprep.subr.mxu0 0.0
    %v1913 = vand.u32 %v97, 4294901760
    %1914 = vmatpush1.msra.mxu0 %v1913
    %1915 = vmatprep.subr.mxu0 0.0
    %v1916 = vand.u32 %v98, 4294901760
    %1917 = vmatpush1.msra.mxu0 %v1916
    %1918 = vmatprep.subr.mxu0 0.0
    %v1919 = vand.u32 %v99, 4294901760
    %1920 = vmatpush1.msra.mxu0 %v1919
    %1921 = vmatprep.subr.mxu0 0.0
    %v1922 = vand.u32 %v100, 4294901760
    %1923 = vmatpush1.msra.mxu0 %v1922
    %1924 = vmatprep.subr.mxu0 0.0
    %v1925 = vand.u32 %v101, 4294901760
    %1926 = vmatpush1.msra.mxu0 %v1925
    %1927 = vmatprep.subr.mxu0 0.0
    %v1928 = vand.u32 %v102, 4294901760
    %1929 = vmatpush1.msra.mxu0 %v1928
    %1930 = vmatprep.subr.mxu0 0.0
    %v1931 = vand.u32 %v103, 4294901760
    %1932 = vmatpush1.msra.mxu0 %v1931
    %1933 = vmatprep.subr.mxu0 0.0
    %v1934 = vand.u32 %v104, 4294901760
    %1935 = vmatpush1.msra.mxu0 %v1934
    %1936 = vmatprep.subr.mxu0 0.0
    %v1937 = vand.u32 %v105, 4294901760
    %1938 = vmatpush1.msra.mxu0 %v1937
    %1939 = vmatprep.subr.mxu0 0.0
    %v1940 = vand.u32 %v106, 4294901760
    %1941 = vmatpush1.msra.mxu0 %v1940
    %1942 = vmatprep.subr.mxu0 0.0
    %v1943 = vand.u32 %v107, 4294901760
    %1944 = vmatpush1.msra.mxu0 %v1943
    %1945 = vmatprep.subr.mxu0 0.0
    %v1946 = vand.u32 %v108, 4294901760
    %1947 = vmatpush1.msra.mxu0 %v1946
    %1948 = vmatprep.subr.mxu0 0.0
    %v1949 = vand.u32 %v109, 4294901760
    %1950 = vmatpush1.msra.mxu0 %v1949
    %1951 = vmatprep.subr.mxu0 0.0
    %v1952 = vand.u32 %v110, 4294901760
    %1953 = vmatpush1.msra.mxu0 %v1952
    %1954 = vmatprep.subr.mxu0 0.0
    %v1955 = vand.u32 %v111, 4294901760
    %1956 = vmatpush1.msra.mxu0 %v1955
    %1957 = vmatprep.subr.mxu0 0.0
    %v1958 = vand.u32 %v112, 4294901760
    %1959 = vmatpush1.msra.mxu0 %v1958
    %1960 = vmatprep.subr.mxu0 0.0
    %v1961 = vand.u32 %v113, 4294901760
    %1962 = vmatpush1.msra.mxu0 %v1961
    %1963 = vmatprep.subr.mxu0 0.0
    %v1964 = vand.u32 %v114, 4294901760
    %1965 = vmatpush1.msra.mxu0 %v1964
    %1966 = vmatprep.subr.mxu0 0.0
    %v1967 = vand.u32 %v115, 4294901760
    %1968 = vmatpush1.msra.mxu0 %v1967
    %1969 = vmatprep.subr.mxu0 0.0
    %v1970 = vand.u32 %v116, 4294901760
    %1971 = vmatpush1.msra.mxu0 %v1970
    %1972 = vmatprep.subr.mxu0 0.0
    %v1973 = vand.u32 %v117, 4294901760
    %1974 = vmatpush1.msra.mxu0 %v1973
    %1975 = vmatprep.subr.mxu0 0.0
    %v1976 = vand.u32 %v118, 4294901760
    %1977 = vmatpush1.msra.mxu0 %v1976
    %v1978 = vand.u32 %v20, 4294901760
    %v1979 = vsub.f32 %v20, %v1978
    %v1980 = vand.u32 %v1979, 4294901760
    %v1981 = vsub.f32 %v1979, %v1980
    %v1982 = vand.u32 %v1981, 4294901760
    %1983 = vmatprep.mubr.f32.mxu0 %v1982
    %v1984 = vand.u32 %v19, 4294901760
    %v1985 = vsub.f32 %v19, %v1984
    %v1986 = vand.u32 %v1985, 4294901760
    %v1987 = vsub.f32 %v1985, %v1986
    %v1988 = vand.u32 %v1987, 4294901760
    %1989 = vmatmul.mubr.f32.gmra.mrb[0].mxu0 %v1988
    %v1990 = vpop.f32.mrb[0].mxu0
    %v1991 = vadd.f32 %v1879, %v1990
    %v1992 = vpop.f32.mrb[0].mxu0
    %1993 = vdwg.mxu0
    %1994 = vmatprep.subr.mxu0 0.0
    %v1995 = vand.u32 %v87, 4294901760
    %v1996 = vsub.f32 %v87, %v1995
    %v1997 = vand.u32 %v1996, 4294901760
    %v1998 = vsub.f32 %v1996, %v1997
    %v1999 = vand.u32 %v1998, 4294901760
    %2000 = vmatpush1.msra.mxu0 %v1999
    %2001 = vmatprep.subr.mxu0 0.0
    %v2002 = vand.u32 %v88, 4294901760
    %v2003 = vsub.f32 %v88, %v2002
    %v2004 = vand.u32 %v2003, 4294901760
    %v2005 = vsub.f32 %v2003, %v2004
    %v2006 = vand.u32 %v2005, 4294901760
    %2007 = vmatpush1.msra.mxu0 %v2006
    %2008 = vmatprep.subr.mxu0 0.0
    %v2009 = vand.u32 %v89, 4294901760
    %v2010 = vsub.f32 %v89, %v2009
    %v2011 = vand.u32 %v2010, 4294901760
    %v2012 = vsub.f32 %v2010, %v2011
    %v2013 = vand.u32 %v2012, 4294901760
    %2014 = vmatpush1.msra.mxu0 %v2013
    %2015 = vmatprep.subr.mxu0 0.0
    %v2016 = vand.u32 %v90, 4294901760
    %v2017 = vsub.f32 %v90, %v2016
    %v2018 = vand.u32 %v2017, 4294901760
    %v2019 = vsub.f32 %v2017, %v2018
    %v2020 = vand.u32 %v2019, 4294901760
    %2021 = vmatpush1.msra.mxu0 %v2020
    %2022 = vmatprep.subr.mxu0 0.0
    %v2023 = vand.u32 %v91, 4294901760
    %v2024 = vsub.f32 %v91, %v2023
    %v2025 = vand.u32 %v2024, 4294901760
    %v2026 = vsub.f32 %v2024, %v2025
    %v2027 = vand.u32 %v2026, 4294901760
    %2028 = vmatpush1.msra.mxu0 %v2027
    %2029 = vmatprep.subr.mxu0 0.0
    %v2030 = vand.u32 %v92, 4294901760
    %v2031 = vsub.f32 %v92, %v2030
    %v2032 = vand.u32 %v2031, 4294901760
    %v2033 = vsub.f32 %v2031, %v2032
    %v2034 = vand.u32 %v2033, 4294901760
    %2035 = vmatpush1.msra.mxu0 %v2034
    %2036 = vmatprep.subr.mxu0 0.0
    %v2037 = vand.u32 %v93, 4294901760
    %v2038 = vsub.f32 %v93, %v2037
    %v2039 = vand.u32 %v2038, 4294901760
    %v2040 = vsub.f32 %v2038, %v2039
    %v2041 = vand.u32 %v2040, 4294901760
    %2042 = vmatpush1.msra.mxu0 %v2041
    %2043 = vmatprep.subr.mxu0 0.0
    %v2044 = vand.u32 %v94, 4294901760
    %v2045 = vsub.f32 %v94, %v2044
    %v2046 = vand.u32 %v2045, 4294901760
    %v2047 = vsub.f32 %v2045, %v2046
    %v2048 = vand.u32 %v2047, 4294901760
    %2049 = vmatpush1.msra.mxu0 %v2048
    %2050 = vmatprep.subr.mxu0 0.0
    %v2051 = vand.u32 %v95, 4294901760
    %v2052 = vsub.f32 %v95, %v2051
    %v2053 = vand.u32 %v2052, 4294901760
    %v2054 = vsub.f32 %v2052, %v2053
    %v2055 = vand.u32 %v2054, 4294901760
    %2056 = vmatpush1.msra.mxu0 %v2055
    %2057 = vmatprep.subr.mxu0 0.0
    %v2058 = vand.u32 %v96, 4294901760
    %v2059 = vsub.f32 %v96, %v2058
    %v2060 = vand.u32 %v2059, 4294901760
    %v2061 = vsub.f32 %v2059, %v2060
    %v2062 = vand.u32 %v2061, 4294901760
    %2063 = vmatpush1.msra.mxu0 %v2062
    %2064 = vmatprep.subr.mxu0 0.0
    %v2065 = vand.u32 %v97, 4294901760
    %v2066 = vsub.f32 %v97, %v2065
    %v2067 = vand.u32 %v2066, 4294901760
    %v2068 = vsub.f32 %v2066, %v2067
    %v2069 = vand.u32 %v2068, 4294901760
    %2070 = vmatpush1.msra.mxu0 %v2069
    %2071 = vmatprep.subr.mxu0 0.0
    %v2072 = vand.u32 %v98, 4294901760
    %v2073 = vsub.f32 %v98, %v2072
    %v2074 = vand.u32 %v2073, 4294901760
    %v2075 = vsub.f32 %v2073, %v2074
    %v2076 = vand.u32 %v2075, 4294901760
    %2077 = vmatpush1.msra.mxu0 %v2076
    %2078 = vmatprep.subr.mxu0 0.0
    %v2079 = vand.u32 %v99, 4294901760
    %v2080 = vsub.f32 %v99, %v2079
    %v2081 = vand.u32 %v2080, 4294901760
    %v2082 = vsub.f32 %v2080, %v2081
    %v2083 = vand.u32 %v2082, 4294901760
    %2084 = vmatpush1.msra.mxu0 %v2083
    %2085 = vmatprep.subr.mxu0 0.0
    %v2086 = vand.u32 %v100, 4294901760
    %v2087 = vsub.f32 %v100, %v2086
    %v2088 = vand.u32 %v2087, 4294901760
    %v2089 = vsub.f32 %v2087, %v2088
    %v2090 = vand.u32 %v2089, 4294901760
    %2091 = vmatpush1.msra.mxu0 %v2090
    %2092 = vmatprep.subr.mxu0 0.0
    %v2093 = vand.u32 %v101, 4294901760
    %v2094 = vsub.f32 %v101, %v2093
    %v2095 = vand.u32 %v2094, 4294901760
    %v2096 = vsub.f32 %v2094, %v2095
    %v2097 = vand.u32 %v2096, 4294901760
    %2098 = vmatpush1.msra.mxu0 %v2097
    %2099 = vmatprep.subr.mxu0 0.0
    %v2100 = vand.u32 %v102, 4294901760
    %v2101 = vsub.f32 %v102, %v2100
    %v2102 = vand.u32 %v2101, 4294901760
    %v2103 = vsub.f32 %v2101, %v2102
    %v2104 = vand.u32 %v2103, 4294901760
    %2105 = vmatpush1.msra.mxu0 %v2104
    %2106 = vmatprep.subr.mxu0 0.0
    %v2107 = vand.u32 %v103, 4294901760
    %v2108 = vsub.f32 %v103, %v2107
    %v2109 = vand.u32 %v2108, 4294901760
    %v2110 = vsub.f32 %v2108, %v2109
    %v2111 = vand.u32 %v2110, 4294901760
    %2112 = vmatpush1.msra.mxu0 %v2111
    %2113 = vmatprep.subr.mxu0 0.0
    %v2114 = vand.u32 %v104, 4294901760
    %v2115 = vsub.f32 %v104, %v2114
    %v2116 = vand.u32 %v2115, 4294901760
    %v2117 = vsub.f32 %v2115, %v2116
    %v2118 = vand.u32 %v2117, 4294901760
    %2119 = vmatpush1.msra.mxu0 %v2118
    %2120 = vmatprep.subr.mxu0 0.0
    %v2121 = vand.u32 %v105, 4294901760
    %v2122 = vsub.f32 %v105, %v2121
    %v2123 = vand.u32 %v2122, 4294901760
    %v2124 = vsub.f32 %v2122, %v2123
    %v2125 = vand.u32 %v2124, 4294901760
    %2126 = vmatpush1.msra.mxu0 %v2125
    %2127 = vmatprep.subr.mxu0 0.0
    %v2128 = vand.u32 %v106, 4294901760
    %v2129 = vsub.f32 %v106, %v2128
    %v2130 = vand.u32 %v2129, 4294901760
    %v2131 = vsub.f32 %v2129, %v2130
    %v2132 = vand.u32 %v2131, 4294901760
    %2133 = vmatpush1.msra.mxu0 %v2132
    %2134 = vmatprep.subr.mxu0 0.0
    %v2135 = vand.u32 %v107, 4294901760
    %v2136 = vsub.f32 %v107, %v2135
    %v2137 = vand.u32 %v2136, 4294901760
    %v2138 = vsub.f32 %v2136, %v2137
    %v2139 = vand.u32 %v2138, 4294901760
    %2140 = vmatpush1.msra.mxu0 %v2139
    %2141 = vmatprep.subr.mxu0 0.0
    %v2142 = vand.u32 %v108, 4294901760
    %v2143 = vsub.f32 %v108, %v2142
    %v2144 = vand.u32 %v2143, 4294901760
    %v2145 = vsub.f32 %v2143, %v2144
    %v2146 = vand.u32 %v2145, 4294901760
    %2147 = vmatpush1.msra.mxu0 %v2146
    %2148 = vmatprep.subr.mxu0 0.0
    %v2149 = vand.u32 %v109, 4294901760
    %v2150 = vsub.f32 %v109, %v2149
    %v2151 = vand.u32 %v2150, 4294901760
    %v2152 = vsub.f32 %v2150, %v2151
    %v2153 = vand.u32 %v2152, 4294901760
    %2154 = vmatpush1.msra.mxu0 %v2153
    %2155 = vmatprep.subr.mxu0 0.0
    %v2156 = vand.u32 %v110, 4294901760
    %v2157 = vsub.f32 %v110, %v2156
    %v2158 = vand.u32 %v2157, 4294901760
    %v2159 = vsub.f32 %v2157, %v2158
    %v2160 = vand.u32 %v2159, 4294901760
    %2161 = vmatpush1.msra.mxu0 %v2160
    %2162 = vmatprep.subr.mxu0 0.0
    %v2163 = vand.u32 %v111, 4294901760
    %v2164 = vsub.f32 %v111, %v2163
    %v2165 = vand.u32 %v2164, 4294901760
    %v2166 = vsub.f32 %v2164, %v2165
    %v2167 = vand.u32 %v2166, 4294901760
    %2168 = vmatpush1.msra.mxu0 %v2167
    %2169 = vmatprep.subr.mxu0 0.0
    %v2170 = vand.u32 %v112, 4294901760
    %v2171 = vsub.f32 %v112, %v2170
    %v2172 = vand.u32 %v2171, 4294901760
    %v2173 = vsub.f32 %v2171, %v2172
    %v2174 = vand.u32 %v2173, 4294901760
    %2175 = vmatpush1.msra.mxu0 %v2174
    %2176 = vmatprep.subr.mxu0 0.0
    %v2177 = vand.u32 %v113, 4294901760
    %v2178 = vsub.f32 %v113, %v2177
    %v2179 = vand.u32 %v2178, 4294901760
    %v2180 = vsub.f32 %v2178, %v2179
    %v2181 = vand.u32 %v2180, 4294901760
    %2182 = vmatpush1.msra.mxu0 %v2181
    %2183 = vmatprep.subr.mxu0 0.0
    %v2184 = vand.u32 %v114, 4294901760
    %v2185 = vsub.f32 %v114, %v2184
    %v2186 = vand.u32 %v2185, 4294901760
    %v2187 = vsub.f32 %v2185, %v2186
    %v2188 = vand.u32 %v2187, 4294901760
    %2189 = vmatpush1.msra.mxu0 %v2188
    %2190 = vmatprep.subr.mxu0 0.0
    %v2191 = vand.u32 %v115, 4294901760
    %v2192 = vsub.f32 %v115, %v2191
    %v2193 = vand.u32 %v2192, 4294901760
    %v2194 = vsub.f32 %v2192, %v2193
    %v2195 = vand.u32 %v2194, 4294901760
    %2196 = vmatpush1.msra.mxu0 %v2195
    %2197 = vmatprep.subr.mxu0 0.0
    %v2198 = vand.u32 %v116, 4294901760
    %v2199 = vsub.f32 %v116, %v2198
    %v2200 = vand.u32 %v2199, 4294901760
    %v2201 = vsub.f32 %v2199, %v2200
    %v2202 = vand.u32 %v2201, 4294901760
    %2203 = vmatpush1.msra.mxu0 %v2202
    %2204 = vmatprep.subr.mxu0 0.0
    %v2205 = vand.u32 %v117, 4294901760
    %v2206 = vsub.f32 %v117, %v2205
    %v2207 = vand.u32 %v2206, 4294901760
    %v2208 = vsub.f32 %v2206, %v2207
    %v2209 = vand.u32 %v2208, 4294901760
    %2210 = vmatpush1.msra.mxu0 %v2209
    %2211 = vmatprep.subr.mxu0 0.0
    %v2212 = vand.u32 %v118, 4294901760
    %v2213 = vsub.f32 %v118, %v2212
    %v2214 = vand.u32 %v2213, 4294901760
    %v2215 = vsub.f32 %v2213, %v2214
    %v2216 = vand.u32 %v2215, 4294901760
    %2217 = vmatpush1.msra.mxu0 %v2216
    %v2218 = vand.u32 %v20, 4294901760
    %2219 = vmatprep.mubr.f32.mxu0 %v2218
    %v2220 = vand.u32 %v19, 4294901760
    %2221 = vmatmul.mubr.f32.gmra.mrb[0].mxu0 %v2220
    %v2222 = vpop.f32.mrb[0].mxu0
    %v2223 = vadd.f32 %v1991, %v2222
    %v2224 = vpop.f32.mrb[0].mxu0
    %2225 = vdwg.mxu0
    %2226 = vmatprep.subr.mxu0 0.0
    %v2227 = vand.u32 %v87, 4294901760
    %v2228 = vsub.f32 %v87, %v2227
    %2229 = vmatpush1.msra.mxu0 %v2228
    %2230 = vmatprep.subr.mxu0 0.0
    %v2231 = vand.u32 %v88, 4294901760
    %v2232 = vsub.f32 %v88, %v2231
    %2233 = vmatpush1.msra.mxu0 %v2232
    %2234 = vmatprep.subr.mxu0 0.0
    %v2235 = vand.u32 %v89, 4294901760
    %v2236 = vsub.f32 %v89, %v2235
    %2237 = vmatpush1.msra.mxu0 %v2236
    %2238 = vmatprep.subr.mxu0 0.0
    %v2239 = vand.u32 %v90, 4294901760
    %v2240 = vsub.f32 %v90, %v2239
    %2241 = vmatpush1.msra.mxu0 %v2240
    %2242 = vmatprep.subr.mxu0 0.0
    %v2243 = vand.u32 %v91, 4294901760
    %v2244 = vsub.f32 %v91, %v2243
    %2245 = vmatpush1.msra.mxu0 %v2244
    %2246 = vmatprep.subr.mxu0 0.0
    %v2247 = vand.u32 %v92, 4294901760
    %v2248 = vsub.f32 %v92, %v2247
    %2249 = vmatpush1.msra.mxu0 %v2248
    %2250 = vmatprep.subr.mxu0 0.0
    %v2251 = vand.u32 %v93, 4294901760
    %v2252 = vsub.f32 %v93, %v2251
    %2253 = vmatpush1.msra.mxu0 %v2252
    %2254 = vmatprep.subr.mxu0 0.0
    %v2255 = vand.u32 %v94, 4294901760
    %v2256 = vsub.f32 %v94, %v2255
    %2257 = vmatpush1.msra.mxu0 %v2256
    %2258 = vmatprep.subr.mxu0 0.0
    %v2259 = vand.u32 %v95, 4294901760
    %v2260 = vsub.f32 %v95, %v2259
    %2261 = vmatpush1.msra.mxu0 %v2260
    %2262 = vmatprep.subr.mxu0 0.0
    %v2263 = vand.u32 %v96, 4294901760
    %v2264 = vsub.f32 %v96, %v2263
    %2265 = vmatpush1.msra.mxu0 %v2264
    %2266 = vmatprep.subr.mxu0 0.0
    %v2267 = vand.u32 %v97, 4294901760
    %v2268 = vsub.f32 %v97, %v2267
    %2269 = vmatpush1.msra.mxu0 %v2268
    %2270 = vmatprep.subr.mxu0 0.0
    %v2271 = vand.u32 %v98, 4294901760
    %v2272 = vsub.f32 %v98, %v2271
    %2273 = vmatpush1.msra.mxu0 %v2272
    %2274 = vmatprep.subr.mxu0 0.0
    %v2275 = vand.u32 %v99, 4294901760
    %v2276 = vsub.f32 %v99, %v2275
    %2277 = vmatpush1.msra.mxu0 %v2276
    %2278 = vmatprep.subr.mxu0 0.0
    %v2279 = vand.u32 %v100, 4294901760
    %v2280 = vsub.f32 %v100, %v2279
    %2281 = vmatpush1.msra.mxu0 %v2280
    %2282 = vmatprep.subr.mxu0 0.0
    %v2283 = vand.u32 %v101, 4294901760
    %v2284 = vsub.f32 %v101, %v2283
    %2285 = vmatpush1.msra.mxu0 %v2284
    %2286 = vmatprep.subr.mxu0 0.0
    %v2287 = vand.u32 %v102, 4294901760
    %v2288 = vsub.f32 %v102, %v2287
    %2289 = vmatpush1.msra.mxu0 %v2288
    %2290 = vmatprep.subr.mxu0 0.0
    %v2291 = vand.u32 %v103, 4294901760
    %v2292 = vsub.f32 %v103, %v2291
    %2293 = vmatpush1.msra.mxu0 %v2292
    %2294 = vmatprep.subr.mxu0 0.0
    %v2295 = vand.u32 %v104, 4294901760
    %v2296 = vsub.f32 %v104, %v2295
    %2297 = vmatpush1.msra.mxu0 %v2296
    %2298 = vmatprep.subr.mxu0 0.0
    %v2299 = vand.u32 %v105, 4294901760
    %v2300 = vsub.f32 %v105, %v2299
    %2301 = vmatpush1.msra.mxu0 %v2300
    %2302 = vmatprep.subr.mxu0 0.0
    %v2303 = vand.u32 %v106, 4294901760
    %v2304 = vsub.f32 %v106, %v2303
    %2305 = vmatpush1.msra.mxu0 %v2304
    %2306 = vmatprep.subr.mxu0 0.0
    %v2307 = vand.u32 %v107, 4294901760
    %v2308 = vsub.f32 %v107, %v2307
    %2309 = vmatpush1.msra.mxu0 %v2308
    %2310 = vmatprep.subr.mxu0 0.0
    %v2311 = vand.u32 %v108, 4294901760
    %v2312 = vsub.f32 %v108, %v2311
    %2313 = vmatpush1.msra.mxu0 %v2312
    %2314 = vmatprep.subr.mxu0 0.0
    %v2315 = vand.u32 %v109, 4294901760
    %v2316 = vsub.f32 %v109, %v2315
    %2317 = vmatpush1.msra.mxu0 %v2316
    %2318 = vmatprep.subr.mxu0 0.0
    %v2319 = vand.u32 %v110, 4294901760
    %v2320 = vsub.f32 %v110, %v2319
    %2321 = vmatpush1.msra.mxu0 %v2320
    %2322 = vmatprep.subr.mxu0 0.0
    %v2323 = vand.u32 %v111, 4294901760
    %v2324 = vsub.f32 %v111, %v2323
    %2325 = vmatpush1.msra.mxu0 %v2324
    %2326 = vmatprep.subr.mxu0 0.0
    %v2327 = vand.u32 %v112, 4294901760
    %v2328 = vsub.f32 %v112, %v2327
    %2329 = vmatpush1.msra.mxu0 %v2328
    %2330 = vmatprep.subr.mxu0 0.0
    %v2331 = vand.u32 %v113, 4294901760
    %v2332 = vsub.f32 %v113, %v2331
    %2333 = vmatpush1.msra.mxu0 %v2332
    %2334 = vmatprep.subr.mxu0 0.0
    %v2335 = vand.u32 %v114, 4294901760
    %v2336 = vsub.f32 %v114, %v2335
    %2337 = vmatpush1.msra.mxu0 %v2336
    %2338 = vmatprep.subr.mxu0 0.0
    %v2339 = vand.u32 %v115, 4294901760
    %v2340 = vsub.f32 %v115, %v2339
    %2341 = vmatpush1.msra.mxu0 %v2340
    %2342 = vmatprep.subr.mxu0 0.0
    %v2343 = vand.u32 %v116, 4294901760
    %v2344 = vsub.f32 %v116, %v2343
    %2345 = vmatpush1.msra.mxu0 %v2344
    %2346 = vmatprep.subr.mxu0 0.0
    %v2347 = vand.u32 %v117, 4294901760
    %v2348 = vsub.f32 %v117, %v2347
    %2349 = vmatpush1.msra.mxu0 %v2348
    %2350 = vmatprep.subr.mxu0 0.0
    %v2351 = vand.u32 %v118, 4294901760
    %v2352 = vsub.f32 %v118, %v2351
    %2353 = vmatpush1.msra.mxu0 %v2352
    %v2354 = vand.u32 %v20, 4294901760
    %v2355 = vsub.f32 %v20, %v2354
    %2356 = vmatprep.mubr.f32.mxu0 %v2355
    %v2357 = vand.u32 %v19, 4294901760
    %v2358 = vsub.f32 %v19, %v2357
    %2359 = vmatmul.mubr.f32.gmra.mrb[0].mxu0 %v2358
    %v2360 = vpop.f32.mrb[0].mxu0
    %v2361 = vadd.f32 %v2223, %v2360
    %v2362 = vpop.f32.mrb[0].mxu0
    %2363 = vdwg.mxu0
    %2364 = vmatprep.subr.mxu0 0.0
    %v2365 = vand.u32 %v87, 4294901760
    %2366 = vmatpush1.msra.mxu0 %v2365
    %2367 = vmatprep.subr.mxu0 0.0
    %v2368 = vand.u32 %v88, 4294901760
    %2369 = vmatpush1.msra.mxu0 %v2368
    %2370 = vmatprep.subr.mxu0 0.0
    %v2371 = vand.u32 %v89, 4294901760
    %2372 = vmatpush1.msra.mxu0 %v2371
    %2373 = vmatprep.subr.mxu0 0.0
    %v2374 = vand.u32 %v90, 4294901760
    %2375 = vmatpush1.msra.mxu0 %v2374
    %2376 = vmatprep.subr.mxu0 0.0
    %v2377 = vand.u32 %v91, 4294901760
    %2378 = vmatpush1.msra.mxu0 %v2377
    %2379 = vmatprep.subr.mxu0 0.0
    %v2380 = vand.u32 %v92, 4294901760
    %2381 = vmatpush1.msra.mxu0 %v2380
    %2382 = vmatprep.subr.mxu0 0.0
    %v2383 = vand.u32 %v93, 4294901760
    %2384 = vmatpush1.msra.mxu0 %v2383
    %2385 = vmatprep.subr.mxu0 0.0
    %v2386 = vand.u32 %v94, 4294901760
    %2387 = vmatpush1.msra.mxu0 %v2386
    %2388 = vmatprep.subr.mxu0 0.0
    %v2389 = vand.u32 %v95, 4294901760
    %2390 = vmatpush1.msra.mxu0 %v2389
    %2391 = vmatprep.subr.mxu0 0.0
    %v2392 = vand.u32 %v96, 4294901760
    %2393 = vmatpush1.msra.mxu0 %v2392
    %2394 = vmatprep.subr.mxu0 0.0
    %v2395 = vand.u32 %v97, 4294901760
    %2396 = vmatpush1.msra.mxu0 %v2395
    %2397 = vmatprep.subr.mxu0 0.0
    %v2398 = vand.u32 %v98, 4294901760
    %2399 = vmatpush1.msra.mxu0 %v2398
    %2400 = vmatprep.subr.mxu0 0.0
    %v2401 = vand.u32 %v99, 4294901760
    %2402 = vmatpush1.msra.mxu0 %v2401
    %2403 = vmatprep.subr.mxu0 0.0
    %v2404 = vand.u32 %v100, 4294901760
    %2405 = vmatpush1.msra.mxu0 %v2404
    %2406 = vmatprep.subr.mxu0 0.0
    %v2407 = vand.u32 %v101, 4294901760
    %2408 = vmatpush1.msra.mxu0 %v2407
    %2409 = vmatprep.subr.mxu0 0.0
    %v2410 = vand.u32 %v102, 4294901760
    %2411 = vmatpush1.msra.mxu0 %v2410
    %2412 = vmatprep.subr.mxu0 0.0
    %v2413 = vand.u32 %v103, 4294901760
    %2414 = vmatpush1.msra.mxu0 %v2413
    %2415 = vmatprep.subr.mxu0 0.0
    %v2416 = vand.u32 %v104, 4294901760
    %2417 = vmatpush1.msra.mxu0 %v2416
    %2418 = vmatprep.subr.mxu0 0.0
    %v2419 = vand.u32 %v105, 4294901760
    %2420 = vmatpush1.msra.mxu0 %v2419
    %2421 = vmatprep.subr.mxu0 0.0
    %v2422 = vand.u32 %v106, 4294901760
    %2423 = vmatpush1.msra.mxu0 %v2422
    %2424 = vmatprep.subr.mxu0 0.0
    %v2425 = vand.u32 %v107, 4294901760
    %2426 = vmatpush1.msra.mxu0 %v2425
    %2427 = vmatprep.subr.mxu0 0.0
    %v2428 = vand.u32 %v108, 4294901760
    %2429 = vmatpush1.msra.mxu0 %v2428
    %2430 = vmatprep.subr.mxu0 0.0
    %v2431 = vand.u32 %v109, 4294901760
    %2432 = vmatpush1.msra.mxu0 %v2431
    %2433 = vmatprep.subr.mxu0 0.0
    %v2434 = vand.u32 %v110, 4294901760
    %2435 = vmatpush1.msra.mxu0 %v2434
    %2436 = vmatprep.subr.mxu0 0.0
    %v2437 = vand.u32 %v111, 4294901760
    %2438 = vmatpush1.msra.mxu0 %v2437
    %2439 = vmatprep.subr.mxu0 0.0
    %v2440 = vand.u32 %v112, 4294901760
    %2441 = vmatpush1.msra.mxu0 %v2440
    %2442 = vmatprep.subr.mxu0 0.0
    %v2443 = vand.u32 %v113, 4294901760
    %2444 = vmatpush1.msra.mxu0 %v2443
    %2445 = vmatprep.subr.mxu0 0.0
    %v2446 = vand.u32 %v114, 4294901760
    %2447 = vmatpush1.msra.mxu0 %v2446
    %2448 = vmatprep.subr.mxu0 0.0
    %v2449 = vand.u32 %v115, 4294901760
    %2450 = vmatpush1.msra.mxu0 %v2449
    %2451 = vmatprep.subr.mxu0 0.0
    %v2452 = vand.u32 %v116, 4294901760
    %2453 = vmatpush1.msra.mxu0 %v2452
    %2454 = vmatprep.subr.mxu0 0.0
    %v2455 = vand.u32 %v117, 4294901760
    %2456 = vmatpush1.msra.mxu0 %v2455
    %2457 = vmatprep.subr.mxu0 0.0
    %v2458 = vand.u32 %v118, 4294901760
    %2459 = vmatpush1.msra.mxu0 %v2458
    %v2460 = vand.u32 %v20, 4294901760
    %v2461 = vsub.f32 %v20, %v2460
    %v2462 = vand.u32 %v2461, 4294901760
    %2463 = vmatprep.mubr.f32.mxu0 %v2462
    %v2464 = vand.u32 %v19, 4294901760
    %v2465 = vsub.f32 %v19, %v2464
    %v2466 = vand.u32 %v2465, 4294901760
    %2467 = vmatmul.mubr.f32.gmra.mrb[0].mxu0 %v2466
    %v2468 = vpop.f32.mrb[0].mxu0
    %v2469 = vadd.f32 %v2361, %v2468
    %v2470 = vpop.f32.mrb[0].mxu0
    %2471 = vdwg.mxu0
    %2472 = vmatprep.subr.mxu0 0.0
    %v2473 = vand.u32 %v87, 4294901760
    %v2474 = vsub.f32 %v87, %v2473
    %v2475 = vand.u32 %v2474, 4294901760
    %2476 = vmatpush1.msra.mxu0 %v2475
    %2477 = vmatprep.subr.mxu0 0.0
    %v2478 = vand.u32 %v88, 4294901760
    %v2479 = vsub.f32 %v88, %v2478
    %v2480 = vand.u32 %v2479, 4294901760
    %2481 = vmatpush1.msra.mxu0 %v2480
    %2482 = vmatprep.subr.mxu0 0.0
    %v2483 = vand.u32 %v89, 4294901760
    %v2484 = vsub.f32 %v89, %v2483
    %v2485 = vand.u32 %v2484, 4294901760
    %2486 = vmatpush1.msra.mxu0 %v2485
    %2487 = vmatprep.subr.mxu0 0.0
    %v2488 = vand.u32 %v90, 4294901760
    %v2489 = vsub.f32 %v90, %v2488
    %v2490 = vand.u32 %v2489, 4294901760
    %2491 = vmatpush1.msra.mxu0 %v2490
    %2492 = vmatprep.subr.mxu0 0.0
    %v2493 = vand.u32 %v91, 4294901760
    %v2494 = vsub.f32 %v91, %v2493
    %v2495 = vand.u32 %v2494, 4294901760
    %2496 = vmatpush1.msra.mxu0 %v2495
    %2497 = vmatprep.subr.mxu0 0.0
    %v2498 = vand.u32 %v92, 4294901760
    %v2499 = vsub.f32 %v92, %v2498
    %v2500 = vand.u32 %v2499, 4294901760
    %2501 = vmatpush1.msra.mxu0 %v2500
    %2502 = vmatprep.subr.mxu0 0.0
    %v2503 = vand.u32 %v93, 4294901760
    %v2504 = vsub.f32 %v93, %v2503
    %v2505 = vand.u32 %v2504, 4294901760
    %2506 = vmatpush1.msra.mxu0 %v2505
    %2507 = vmatprep.subr.mxu0 0.0
    %v2508 = vand.u32 %v94, 4294901760
    %v2509 = vsub.f32 %v94, %v2508
    %v2510 = vand.u32 %v2509, 4294901760
    %2511 = vmatpush1.msra.mxu0 %v2510
    %2512 = vmatprep.subr.mxu0 0.0
    %v2513 = vand.u32 %v95, 4294901760
    %v2514 = vsub.f32 %v95, %v2513
    %v2515 = vand.u32 %v2514, 4294901760
    %2516 = vmatpush1.msra.mxu0 %v2515
    %2517 = vmatprep.subr.mxu0 0.0
    %v2518 = vand.u32 %v96, 4294901760
    %v2519 = vsub.f32 %v96, %v2518
    %v2520 = vand.u32 %v2519, 4294901760
    %2521 = vmatpush1.msra.mxu0 %v2520
    %2522 = vmatprep.subr.mxu0 0.0
    %v2523 = vand.u32 %v97, 4294901760
    %v2524 = vsub.f32 %v97, %v2523
    %v2525 = vand.u32 %v2524, 4294901760
    %2526 = vmatpush1.msra.mxu0 %v2525
    %2527 = vmatprep.subr.mxu0 0.0
    %v2528 = vand.u32 %v98, 4294901760
    %v2529 = vsub.f32 %v98, %v2528
    %v2530 = vand.u32 %v2529, 4294901760
    %2531 = vmatpush1.msra.mxu0 %v2530
    %2532 = vmatprep.subr.mxu0 0.0
    %v2533 = vand.u32 %v99, 4294901760
    %v2534 = vsub.f32 %v99, %v2533
    %v2535 = vand.u32 %v2534, 4294901760
    %2536 = vmatpush1.msra.mxu0 %v2535
    %2537 = vmatprep.subr.mxu0 0.0
    %v2538 = vand.u32 %v100, 4294901760
    %v2539 = vsub.f32 %v100, %v2538
    %v2540 = vand.u32 %v2539, 4294901760
    %2541 = vmatpush1.msra.mxu0 %v2540
    %2542 = vmatprep.subr.mxu0 0.0
    %v2543 = vand.u32 %v101, 4294901760
    %v2544 = vsub.f32 %v101, %v2543
    %v2545 = vand.u32 %v2544, 4294901760
    %2546 = vmatpush1.msra.mxu0 %v2545
    %2547 = vmatprep.subr.mxu0 0.0
    %v2548 = vand.u32 %v102, 4294901760
    %v2549 = vsub.f32 %v102, %v2548
    %v2550 = vand.u32 %v2549, 4294901760
    %2551 = vmatpush1.msra.mxu0 %v2550
    %2552 = vmatprep.subr.mxu0 0.0
    %v2553 = vand.u32 %v103, 4294901760
    %v2554 = vsub.f32 %v103, %v2553
    %v2555 = vand.u32 %v2554, 4294901760
    %2556 = vmatpush1.msra.mxu0 %v2555
    %2557 = vmatprep.subr.mxu0 0.0
    %v2558 = vand.u32 %v104, 4294901760
    %v2559 = vsub.f32 %v104, %v2558
    %v2560 = vand.u32 %v2559, 4294901760
    %2561 = vmatpush1.msra.mxu0 %v2560
    %2562 = vmatprep.subr.mxu0 0.0
    %v2563 = vand.u32 %v105, 4294901760
    %v2564 = vsub.f32 %v105, %v2563
    %v2565 = vand.u32 %v2564, 4294901760
    %2566 = vmatpush1.msra.mxu0 %v2565
    %2567 = vmatprep.subr.mxu0 0.0
    %v2568 = vand.u32 %v106, 4294901760
    %v2569 = vsub.f32 %v106, %v2568
    %v2570 = vand.u32 %v2569, 4294901760
    %2571 = vmatpush1.msra.mxu0 %v2570
    %2572 = vmatprep.subr.mxu0 0.0
    %v2573 = vand.u32 %v107, 4294901760
    %v2574 = vsub.f32 %v107, %v2573
    %v2575 = vand.u32 %v2574, 4294901760
    %2576 = vmatpush1.msra.mxu0 %v2575
    %2577 = vmatprep.subr.mxu0 0.0
    %v2578 = vand.u32 %v108, 4294901760
    %v2579 = vsub.f32 %v108, %v2578
    %v2580 = vand.u32 %v2579, 4294901760
    %2581 = vmatpush1.msra.mxu0 %v2580
    %2582 = vmatprep.subr.mxu0 0.0
    %v2583 = vand.u32 %v109, 4294901760
    %v2584 = vsub.f32 %v109, %v2583
    %v2585 = vand.u32 %v2584, 4294901760
    %2586 = vmatpush1.msra.mxu0 %v2585
    %2587 = vmatprep.subr.mxu0 0.0
    %v2588 = vand.u32 %v110, 4294901760
    %v2589 = vsub.f32 %v110, %v2588
    %v2590 = vand.u32 %v2589, 4294901760
    %2591 = vmatpush1.msra.mxu0 %v2590
    %2592 = vmatprep.subr.mxu0 0.0
    %v2593 = vand.u32 %v111, 4294901760
    %v2594 = vsub.f32 %v111, %v2593
    %v2595 = vand.u32 %v2594, 4294901760
    %2596 = vmatpush1.msra.mxu0 %v2595
    %2597 = vmatprep.subr.mxu0 0.0
    %v2598 = vand.u32 %v112, 4294901760
    %v2599 = vsub.f32 %v112, %v2598
    %v2600 = vand.u32 %v2599, 4294901760
    %2601 = vmatpush1.msra.mxu0 %v2600
    %2602 = vmatprep.subr.mxu0 0.0
    %v2603 = vand.u32 %v113, 4294901760
    %v2604 = vsub.f32 %v113, %v2603
    %v2605 = vand.u32 %v2604, 4294901760
    %2606 = vmatpush1.msra.mxu0 %v2605
    %2607 = vmatprep.subr.mxu0 0.0
    %v2608 = vand.u32 %v114, 4294901760
    %v2609 = vsub.f32 %v114, %v2608
    %v2610 = vand.u32 %v2609, 4294901760
    %2611 = vmatpush1.msra.mxu0 %v2610
    %2612 = vmatprep.subr.mxu0 0.0
    %v2613 = vand.u32 %v115, 4294901760
    %v2614 = vsub.f32 %v115, %v2613
    %v2615 = vand.u32 %v2614, 4294901760
    %2616 = vmatpush1.msra.mxu0 %v2615
    %2617 = vmatprep.subr.mxu0 0.0
    %v2618 = vand.u32 %v116, 4294901760
    %v2619 = vsub.f32 %v116, %v2618
    %v2620 = vand.u32 %v2619, 4294901760
    %2621 = vmatpush1.msra.mxu0 %v2620
    %2622 = vmatprep.subr.mxu0 0.0
    %v2623 = vand.u32 %v117, 4294901760
    %v2624 = vsub.f32 %v117, %v2623
    %v2625 = vand.u32 %v2624, 4294901760
    %2626 = vmatpush1.msra.mxu0 %v2625
    %2627 = vmatprep.subr.mxu0 0.0
    %v2628 = vand.u32 %v118, 4294901760
    %v2629 = vsub.f32 %v118, %v2628
    %v2630 = vand.u32 %v2629, 4294901760
    %2631 = vmatpush1.msra.mxu0 %v2630
    %v2632 = vand.u32 %v20, 4294901760
    %2633 = vmatprep.mubr.f32.mxu0 %v2632
    %v2634 = vand.u32 %v19, 4294901760
    %2635 = vmatmul.mubr.f32.gmra.mrb[0].mxu0 %v2634
    %v2636 = vpop.f32.mrb[0].mxu0
    %v2637 = vadd.f32 %v2469, %v2636
    %v2638 = vpop.f32.mrb[0].mxu0
    %2639 = vdwg.mxu0
    %2640 = vmatprep.subr.mxu0 0.0
    %v2641 = vand.u32 %v87, 4294901760
    %2642 = vmatpush1.msra.mxu0 %v2641
    %2643 = vmatprep.subr.mxu0 0.0
    %v2644 = vand.u32 %v88, 4294901760
    %2645 = vmatpush1.msra.mxu0 %v2644
    %2646 = vmatprep.subr.mxu0 0.0
    %v2647 = vand.u32 %v89, 4294901760
    %2648 = vmatpush1.msra.mxu0 %v2647
    %2649 = vmatprep.subr.mxu0 0.0
    %v2650 = vand.u32 %v90, 4294901760
    %2651 = vmatpush1.msra.mxu0 %v2650
    %2652 = vmatprep.subr.mxu0 0.0
    %v2653 = vand.u32 %v91, 4294901760
    %2654 = vmatpush1.msra.mxu0 %v2653
    %2655 = vmatprep.subr.mxu0 0.0
    %v2656 = vand.u32 %v92, 4294901760
    %2657 = vmatpush1.msra.mxu0 %v2656
    %2658 = vmatprep.subr.mxu0 0.0
    %v2659 = vand.u32 %v93, 4294901760
    %2660 = vmatpush1.msra.mxu0 %v2659
    %2661 = vmatprep.subr.mxu0 0.0
    %v2662 = vand.u32 %v94, 4294901760
    %2663 = vmatpush1.msra.mxu0 %v2662
    %2664 = vmatprep.subr.mxu0 0.0
    %v2665 = vand.u32 %v95, 4294901760
    %2666 = vmatpush1.msra.mxu0 %v2665
    %2667 = vmatprep.subr.mxu0 0.0
    %v2668 = vand.u32 %v96, 4294901760
    %2669 = vmatpush1.msra.mxu0 %v2668
    %2670 = vmatprep.subr.mxu0 0.0
    %v2671 = vand.u32 %v97, 4294901760
    %2672 = vmatpush1.msra.mxu0 %v2671
    %2673 = vmatprep.subr.mxu0 0.0
    %v2674 = vand.u32 %v98, 4294901760
    %2675 = vmatpush1.msra.mxu0 %v2674
    %2676 = vmatprep.subr.mxu0 0.0
    %v2677 = vand.u32 %v99, 4294901760
    %2678 = vmatpush1.msra.mxu0 %v2677
    %2679 = vmatprep.subr.mxu0 0.0
    %v2680 = vand.u32 %v100, 4294901760
    %2681 = vmatpush1.msra.mxu0 %v2680
    %2682 = vmatprep.subr.mxu0 0.0
    %v2683 = vand.u32 %v101, 4294901760
    %2684 = vmatpush1.msra.mxu0 %v2683
    %2685 = vmatprep.subr.mxu0 0.0
    %v2686 = vand.u32 %v102, 4294901760
    %2687 = vmatpush1.msra.mxu0 %v2686
    %2688 = vmatprep.subr.mxu0 0.0
    %v2689 = vand.u32 %v103, 4294901760
    %2690 = vmatpush1.msra.mxu0 %v2689
    %2691 = vmatprep.subr.mxu0 0.0
    %v2692 = vand.u32 %v104, 4294901760
    %2693 = vmatpush1.msra.mxu0 %v2692
    %2694 = vmatprep.subr.mxu0 0.0
    %v2695 = vand.u32 %v105, 4294901760
    %2696 = vmatpush1.msra.mxu0 %v2695
    %2697 = vmatprep.subr.mxu0 0.0
    %v2698 = vand.u32 %v106, 4294901760
    %2699 = vmatpush1.msra.mxu0 %v2698
    %2700 = vmatprep.subr.mxu0 0.0
    %v2701 = vand.u32 %v107, 4294901760
    %2702 = vmatpush1.msra.mxu0 %v2701
    %2703 = vmatprep.subr.mxu0 0.0
    %v2704 = vand.u32 %v108, 4294901760
    %2705 = vmatpush1.msra.mxu0 %v2704
    %2706 = vmatprep.subr.mxu0 0.0
    %v2707 = vand.u32 %v109, 4294901760
    %2708 = vmatpush1.msra.mxu0 %v2707
    %2709 = vmatprep.subr.mxu0 0.0
    %v2710 = vand.u32 %v110, 4294901760
    %2711 = vmatpush1.msra.mxu0 %v2710
    %2712 = vmatprep.subr.mxu0 0.0
    %v2713 = vand.u32 %v111, 4294901760
    %2714 = vmatpush1.msra.mxu0 %v2713
    %2715 = vmatprep.subr.mxu0 0.0
    %v2716 = vand.u32 %v112, 4294901760
    %2717 = vmatpush1.msra.mxu0 %v2716
    %2718 = vmatprep.subr.mxu0 0.0
    %v2719 = vand.u32 %v113, 4294901760
    %2720 = vmatpush1.msra.mxu0 %v2719
    %2721 = vmatprep.subr.mxu0 0.0
    %v2722 = vand.u32 %v114, 4294901760
    %2723 = vmatpush1.msra.mxu0 %v2722
    %2724 = vmatprep.subr.mxu0 0.0
    %v2725 = vand.u32 %v115, 4294901760
    %2726 = vmatpush1.msra.mxu0 %v2725
    %2727 = vmatprep.subr.mxu0 0.0
    %v2728 = vand.u32 %v116, 4294901760
    %2729 = vmatpush1.msra.mxu0 %v2728
    %2730 = vmatprep.subr.mxu0 0.0
    %v2731 = vand.u32 %v117, 4294901760
    %2732 = vmatpush1.msra.mxu0 %v2731
    %2733 = vmatprep.subr.mxu0 0.0
    %v2734 = vand.u32 %v118, 4294901760
    %2735 = vmatpush1.msra.mxu0 %v2734
    %v2736 = vand.u32 %v20, 4294901760
    %2737 = vmatprep.mubr.f32.mxu0 %v2736
    %v2738 = vand.u32 %v19, 4294901760
    %2739 = vmatmul.mubr.f32.gmra.mrb[0].mxu0 %v2738
    %v2740 = vpop.f32.mrb[0].mxu0
    %v2741 = vadd.f32 %v2637, %v2740
    %v2742 = vpop.f32.mrb[0].mxu0
    %2743 = vdwg.mxu0
    %2744 = vmatprep.subr.mxu0 0.0
    %v2745 = vand.u32 %v119, 4294901760
    %2746 = vmatpush1.msra.mxu0 %v2745
    %2747 = vmatprep.subr.mxu0 0.0
    %v2748 = vand.u32 %v120, 4294901760
    %2749 = vmatpush1.msra.mxu0 %v2748
    %2750 = vmatprep.subr.mxu0 0.0
    %v2751 = vand.u32 %v121, 4294901760
    %2752 = vmatpush1.msra.mxu0 %v2751
    %2753 = vmatprep.subr.mxu0 0.0
    %v2754 = vand.u32 %v122, 4294901760
    %2755 = vmatpush1.msra.mxu0 %v2754
    %2756 = vmatprep.subr.mxu0 0.0
    %v2757 = vand.u32 %v123, 4294901760
    %2758 = vmatpush1.msra.mxu0 %v2757
    %2759 = vmatprep.subr.mxu0 0.0
    %v2760 = vand.u32 %v124, 4294901760
    %2761 = vmatpush1.msra.mxu0 %v2760
    %2762 = vmatprep.subr.mxu0 0.0
    %v2763 = vand.u32 %v125, 4294901760
    %2764 = vmatpush1.msra.mxu0 %v2763
    %2765 = vmatprep.subr.mxu0 0.0
    %v2766 = vand.u32 %v126, 4294901760
    %2767 = vmatpush1.msra.mxu0 %v2766
    %2768 = vmatprep.subr.mxu0 0.0
    %v2769 = vand.u32 %v127, 4294901760
    %2770 = vmatpush1.msra.mxu0 %v2769
    %2771 = vmatprep.subr.mxu0 0.0
    %v2772 = vand.u32 %v128, 4294901760
    %2773 = vmatpush1.msra.mxu0 %v2772
    %2774 = vmatprep.subr.mxu0 0.0
    %v2775 = vand.u32 %v129, 4294901760
    %2776 = vmatpush1.msra.mxu0 %v2775
    %2777 = vmatprep.subr.mxu0 0.0
    %v2778 = vand.u32 %v130, 4294901760
    %2779 = vmatpush1.msra.mxu0 %v2778
    %2780 = vmatprep.subr.mxu0 0.0
    %v2781 = vand.u32 %v131, 4294901760
    %2782 = vmatpush1.msra.mxu0 %v2781
    %2783 = vmatprep.subr.mxu0 0.0
    %v2784 = vand.u32 %v132, 4294901760
    %2785 = vmatpush1.msra.mxu0 %v2784
    %2786 = vmatprep.subr.mxu0 0.0
    %v2787 = vand.u32 %v133, 4294901760
    %2788 = vmatpush1.msra.mxu0 %v2787
    %2789 = vmatprep.subr.mxu0 0.0
    %v2790 = vand.u32 %v134, 4294901760
    %2791 = vmatpush1.msra.mxu0 %v2790
    %2792 = vmatprep.subr.mxu0 0.0
    %v2793 = vand.u32 %v135, 4294901760
    %2794 = vmatpush1.msra.mxu0 %v2793
    %2795 = vmatprep.subr.mxu0 0.0
    %v2796 = vand.u32 %v136, 4294901760
    %2797 = vmatpush1.msra.mxu0 %v2796
    %2798 = vmatprep.subr.mxu0 0.0
    %v2799 = vand.u32 %v137, 4294901760
    %2800 = vmatpush1.msra.mxu0 %v2799
    %2801 = vmatprep.subr.mxu0 0.0
    %v2802 = vand.u32 %v138, 4294901760
    %2803 = vmatpush1.msra.mxu0 %v2802
    %2804 = vmatprep.subr.mxu0 0.0
    %v2805 = vand.u32 %v139, 4294901760
    %2806 = vmatpush1.msra.mxu0 %v2805
    %2807 = vmatprep.subr.mxu0 0.0
    %v2808 = vand.u32 %v140, 4294901760
    %2809 = vmatpush1.msra.mxu0 %v2808
    %2810 = vmatprep.subr.mxu0 0.0
    %v2811 = vand.u32 %v141, 4294901760
    %2812 = vmatpush1.msra.mxu0 %v2811
    %2813 = vmatprep.subr.mxu0 0.0
    %v2814 = vand.u32 %v142, 4294901760
    %2815 = vmatpush1.msra.mxu0 %v2814
    %2816 = vmatprep.subr.mxu0 0.0
    %v2817 = vand.u32 %v143, 4294901760
    %2818 = vmatpush1.msra.mxu0 %v2817
    %2819 = vmatprep.subr.mxu0 0.0
    %v2820 = vand.u32 %v144, 4294901760
    %2821 = vmatpush1.msra.mxu0 %v2820
    %2822 = vmatprep.subr.mxu0 0.0
    %v2823 = vand.u32 %v145, 4294901760
    %2824 = vmatpush1.msra.mxu0 %v2823
    %2825 = vmatprep.subr.mxu0 0.0
    %v2826 = vand.u32 %v146, 4294901760
    %2827 = vmatpush1.msra.mxu0 %v2826
    %2828 = vmatprep.subr.mxu0 0.0
    %v2829 = vand.u32 %v147, 4294901760
    %2830 = vmatpush1.msra.mxu0 %v2829
    %2831 = vmatprep.subr.mxu0 0.0
    %v2832 = vand.u32 %v148, 4294901760
    %2833 = vmatpush1.msra.mxu0 %v2832
    %2834 = vmatprep.subr.mxu0 0.0
    %v2835 = vand.u32 %v149, 4294901760
    %2836 = vmatpush1.msra.mxu0 %v2835
    %2837 = vmatprep.subr.mxu0 0.0
    %v2838 = vand.u32 %v150, 4294901760
    %2839 = vmatpush1.msra.mxu0 %v2838
    %v2840 = vand.u32 %v22, 4294901760
    %v2841 = vsub.f32 %v22, %v2840
    %v2842 = vand.u32 %v2841, 4294901760
    %v2843 = vsub.f32 %v2841, %v2842
    %v2844 = vand.u32 %v2843, 4294901760
    %2845 = vmatprep.mubr.f32.mxu0 %v2844
    %v2846 = vand.u32 %v21, 4294901760
    %v2847 = vsub.f32 %v21, %v2846
    %v2848 = vand.u32 %v2847, 4294901760
    %v2849 = vsub.f32 %v2847, %v2848
    %v2850 = vand.u32 %v2849, 4294901760
    %2851 = vmatmul.mubr.f32.gmra.mrb[0].mxu0 %v2850
    %v2852 = vpop.f32.mrb[0].mxu0
    %v2853 = vadd.f32 %v2741, %v2852
    %v2854 = vpop.f32.mrb[0].mxu0
    %2855 = vdwg.mxu0
    %2856 = vmatprep.subr.mxu0 0.0
    %v2857 = vand.u32 %v119, 4294901760
    %v2858 = vsub.f32 %v119, %v2857
    %v2859 = vand.u32 %v2858, 4294901760
    %v2860 = vsub.f32 %v2858, %v2859
    %v2861 = vand.u32 %v2860, 4294901760
    %2862 = vmatpush1.msra.mxu0 %v2861
    %2863 = vmatprep.subr.mxu0 0.0
    %v2864 = vand.u32 %v120, 4294901760
    %v2865 = vsub.f32 %v120, %v2864
    %v2866 = vand.u32 %v2865, 4294901760
    %v2867 = vsub.f32 %v2865, %v2866
    %v2868 = vand.u32 %v2867, 4294901760
    %2869 = vmatpush1.msra.mxu0 %v2868
    %2870 = vmatprep.subr.mxu0 0.0
    %v2871 = vand.u32 %v121, 4294901760
    %v2872 = vsub.f32 %v121, %v2871
    %v2873 = vand.u32 %v2872, 4294901760
    %v2874 = vsub.f32 %v2872, %v2873
    %v2875 = vand.u32 %v2874, 4294901760
    %2876 = vmatpush1.msra.mxu0 %v2875
    %2877 = vmatprep.subr.mxu0 0.0
    %v2878 = vand.u32 %v122, 4294901760
    %v2879 = vsub.f32 %v122, %v2878
    %v2880 = vand.u32 %v2879, 4294901760
    %v2881 = vsub.f32 %v2879, %v2880
    %v2882 = vand.u32 %v2881, 4294901760
    %2883 = vmatpush1.msra.mxu0 %v2882
    %2884 = vmatprep.subr.mxu0 0.0
    %v2885 = vand.u32 %v123, 4294901760
    %v2886 = vsub.f32 %v123, %v2885
    %v2887 = vand.u32 %v2886, 4294901760
    %v2888 = vsub.f32 %v2886, %v2887
    %v2889 = vand.u32 %v2888, 4294901760
    %2890 = vmatpush1.msra.mxu0 %v2889
    %2891 = vmatprep.subr.mxu0 0.0
    %v2892 = vand.u32 %v124, 4294901760
    %v2893 = vsub.f32 %v124, %v2892
    %v2894 = vand.u32 %v2893, 4294901760
    %v2895 = vsub.f32 %v2893, %v2894
    %v2896 = vand.u32 %v2895, 4294901760
    %2897 = vmatpush1.msra.mxu0 %v2896
    %2898 = vmatprep.subr.mxu0 0.0
    %v2899 = vand.u32 %v125, 4294901760
    %v2900 = vsub.f32 %v125, %v2899
    %v2901 = vand.u32 %v2900, 4294901760
    %v2902 = vsub.f32 %v2900, %v2901
    %v2903 = vand.u32 %v2902, 4294901760
    %2904 = vmatpush1.msra.mxu0 %v2903
    %2905 = vmatprep.subr.mxu0 0.0
    %v2906 = vand.u32 %v126, 4294901760
    %v2907 = vsub.f32 %v126, %v2906
    %v2908 = vand.u32 %v2907, 4294901760
    %v2909 = vsub.f32 %v2907, %v2908
    %v2910 = vand.u32 %v2909, 4294901760
    %2911 = vmatpush1.msra.mxu0 %v2910
    %2912 = vmatprep.subr.mxu0 0.0
    %v2913 = vand.u32 %v127, 4294901760
    %v2914 = vsub.f32 %v127, %v2913
    %v2915 = vand.u32 %v2914, 4294901760
    %v2916 = vsub.f32 %v2914, %v2915
    %v2917 = vand.u32 %v2916, 4294901760
    %2918 = vmatpush1.msra.mxu0 %v2917
    %2919 = vmatprep.subr.mxu0 0.0
    %v2920 = vand.u32 %v128, 4294901760
    %v2921 = vsub.f32 %v128, %v2920
    %v2922 = vand.u32 %v2921, 4294901760
    %v2923 = vsub.f32 %v2921, %v2922
    %v2924 = vand.u32 %v2923, 4294901760
    %2925 = vmatpush1.msra.mxu0 %v2924
    %2926 = vmatprep.subr.mxu0 0.0
    %v2927 = vand.u32 %v129, 4294901760
    %v2928 = vsub.f32 %v129, %v2927
    %v2929 = vand.u32 %v2928, 4294901760
    %v2930 = vsub.f32 %v2928, %v2929
    %v2931 = vand.u32 %v2930, 4294901760
    %2932 = vmatpush1.msra.mxu0 %v2931
    %2933 = vmatprep.subr.mxu0 0.0
    %v2934 = vand.u32 %v130, 4294901760
    %v2935 = vsub.f32 %v130, %v2934
    %v2936 = vand.u32 %v2935, 4294901760
    %v2937 = vsub.f32 %v2935, %v2936
    %v2938 = vand.u32 %v2937, 4294901760
    %2939 = vmatpush1.msra.mxu0 %v2938
    %2940 = vmatprep.subr.mxu0 0.0
    %v2941 = vand.u32 %v131, 4294901760
    %v2942 = vsub.f32 %v131, %v2941
    %v2943 = vand.u32 %v2942, 4294901760
    %v2944 = vsub.f32 %v2942, %v2943
    %v2945 = vand.u32 %v2944, 4294901760
    %2946 = vmatpush1.msra.mxu0 %v2945
    %2947 = vmatprep.subr.mxu0 0.0
    %v2948 = vand.u32 %v132, 4294901760
    %v2949 = vsub.f32 %v132, %v2948
    %v2950 = vand.u32 %v2949, 4294901760
    %v2951 = vsub.f32 %v2949, %v2950
    %v2952 = vand.u32 %v2951, 4294901760
    %2953 = vmatpush1.msra.mxu0 %v2952
    %2954 = vmatprep.subr.mxu0 0.0
    %v2955 = vand.u32 %v133, 4294901760
    %v2956 = vsub.f32 %v133, %v2955
    %v2957 = vand.u32 %v2956, 4294901760
    %v2958 = vsub.f32 %v2956, %v2957
    %v2959 = vand.u32 %v2958, 4294901760
    %2960 = vmatpush1.msra.mxu0 %v2959
    %2961 = vmatprep.subr.mxu0 0.0
    %v2962 = vand.u32 %v134, 4294901760
    %v2963 = vsub.f32 %v134, %v2962
    %v2964 = vand.u32 %v2963, 4294901760
    %v2965 = vsub.f32 %v2963, %v2964
    %v2966 = vand.u32 %v2965, 4294901760
    %2967 = vmatpush1.msra.mxu0 %v2966
    %2968 = vmatprep.subr.mxu0 0.0
    %v2969 = vand.u32 %v135, 4294901760
    %v2970 = vsub.f32 %v135, %v2969
    %v2971 = vand.u32 %v2970, 4294901760
    %v2972 = vsub.f32 %v2970, %v2971
    %v2973 = vand.u32 %v2972, 4294901760
    %2974 = vmatpush1.msra.mxu0 %v2973
    %2975 = vmatprep.subr.mxu0 0.0
    %v2976 = vand.u32 %v136, 4294901760
    %v2977 = vsub.f32 %v136, %v2976
    %v2978 = vand.u32 %v2977, 4294901760
    %v2979 = vsub.f32 %v2977, %v2978
    %v2980 = vand.u32 %v2979, 4294901760
    %2981 = vmatpush1.msra.mxu0 %v2980
    %2982 = vmatprep.subr.mxu0 0.0
    %v2983 = vand.u32 %v137, 4294901760
    %v2984 = vsub.f32 %v137, %v2983
    %v2985 = vand.u32 %v2984, 4294901760
    %v2986 = vsub.f32 %v2984, %v2985
    %v2987 = vand.u32 %v2986, 4294901760
    %2988 = vmatpush1.msra.mxu0 %v2987
    %2989 = vmatprep.subr.mxu0 0.0
    %v2990 = vand.u32 %v138, 4294901760
    %v2991 = vsub.f32 %v138, %v2990
    %v2992 = vand.u32 %v2991, 4294901760
    %v2993 = vsub.f32 %v2991, %v2992
    %v2994 = vand.u32 %v2993, 4294901760
    %2995 = vmatpush1.msra.mxu0 %v2994
    %2996 = vmatprep.subr.mxu0 0.0
    %v2997 = vand.u32 %v139, 4294901760
    %v2998 = vsub.f32 %v139, %v2997
    %v2999 = vand.u32 %v2998, 4294901760
    %v3000 = vsub.f32 %v2998, %v2999
    %v3001 = vand.u32 %v3000, 4294901760
    %3002 = vmatpush1.msra.mxu0 %v3001
    %3003 = vmatprep.subr.mxu0 0.0
    %v3004 = vand.u32 %v140, 4294901760
    %v3005 = vsub.f32 %v140, %v3004
    %v3006 = vand.u32 %v3005, 4294901760
    %v3007 = vsub.f32 %v3005, %v3006
    %v3008 = vand.u32 %v3007, 4294901760
    %3009 = vmatpush1.msra.mxu0 %v3008
    %3010 = vmatprep.subr.mxu0 0.0
    %v3011 = vand.u32 %v141, 4294901760
    %v3012 = vsub.f32 %v141, %v3011
    %v3013 = vand.u32 %v3012, 4294901760
    %v3014 = vsub.f32 %v3012, %v3013
    %v3015 = vand.u32 %v3014, 4294901760
    %3016 = vmatpush1.msra.mxu0 %v3015
    %3017 = vmatprep.subr.mxu0 0.0
    %v3018 = vand.u32 %v142, 4294901760
    %v3019 = vsub.f32 %v142, %v3018
    %v3020 = vand.u32 %v3019, 4294901760
    %v3021 = vsub.f32 %v3019, %v3020
    %v3022 = vand.u32 %v3021, 4294901760
    %3023 = vmatpush1.msra.mxu0 %v3022
    %3024 = vmatprep.subr.mxu0 0.0
    %v3025 = vand.u32 %v143, 4294901760
    %v3026 = vsub.f32 %v143, %v3025
    %v3027 = vand.u32 %v3026, 4294901760
    %v3028 = vsub.f32 %v3026, %v3027
    %v3029 = vand.u32 %v3028, 4294901760
    %3030 = vmatpush1.msra.mxu0 %v3029
    %3031 = vmatprep.subr.mxu0 0.0
    %v3032 = vand.u32 %v144, 4294901760
    %v3033 = vsub.f32 %v144, %v3032
    %v3034 = vand.u32 %v3033, 4294901760
    %v3035 = vsub.f32 %v3033, %v3034
    %v3036 = vand.u32 %v3035, 4294901760
    %3037 = vmatpush1.msra.mxu0 %v3036
    %3038 = vmatprep.subr.mxu0 0.0
    %v3039 = vand.u32 %v145, 4294901760
    %v3040 = vsub.f32 %v145, %v3039
    %v3041 = vand.u32 %v3040, 4294901760
    %v3042 = vsub.f32 %v3040, %v3041
    %v3043 = vand.u32 %v3042, 4294901760
    %3044 = vmatpush1.msra.mxu0 %v3043
    %3045 = vmatprep.subr.mxu0 0.0
    %v3046 = vand.u32 %v146, 4294901760
    %v3047 = vsub.f32 %v146, %v3046
    %v3048 = vand.u32 %v3047, 4294901760
    %v3049 = vsub.f32 %v3047, %v3048
    %v3050 = vand.u32 %v3049, 4294901760
    %3051 = vmatpush1.msra.mxu0 %v3050
    %3052 = vmatprep.subr.mxu0 0.0
    %v3053 = vand.u32 %v147, 4294901760
    %v3054 = vsub.f32 %v147, %v3053
    %v3055 = vand.u32 %v3054, 4294901760
    %v3056 = vsub.f32 %v3054, %v3055
    %v3057 = vand.u32 %v3056, 4294901760
    %3058 = vmatpush1.msra.mxu0 %v3057
    %3059 = vmatprep.subr.mxu0 0.0
    %v3060 = vand.u32 %v148, 4294901760
    %v3061 = vsub.f32 %v148, %v3060
    %v3062 = vand.u32 %v3061, 4294901760
    %v3063 = vsub.f32 %v3061, %v3062
    %v3064 = vand.u32 %v3063, 4294901760
    %3065 = vmatpush1.msra.mxu0 %v3064
    %3066 = vmatprep.subr.mxu0 0.0
    %v3067 = vand.u32 %v149, 4294901760
    %v3068 = vsub.f32 %v149, %v3067
    %v3069 = vand.u32 %v3068, 4294901760
    %v3070 = vsub.f32 %v3068, %v3069
    %v3071 = vand.u32 %v3070, 4294901760
    %3072 = vmatpush1.msra.mxu0 %v3071
    %3073 = vmatprep.subr.mxu0 0.0
    %v3074 = vand.u32 %v150, 4294901760
    %v3075 = vsub.f32 %v150, %v3074
    %v3076 = vand.u32 %v3075, 4294901760
    %v3077 = vsub.f32 %v3075, %v3076
    %v3078 = vand.u32 %v3077, 4294901760
    %3079 = vmatpush1.msra.mxu0 %v3078
    %v3080 = vand.u32 %v22, 4294901760
    %3081 = vmatprep.mubr.f32.mxu0 %v3080
    %v3082 = vand.u32 %v21, 4294901760
    %3083 = vmatmul.mubr.f32.gmra.mrb[0].mxu0 %v3082
    %v3084 = vpop.f32.mrb[0].mxu0
    %v3085 = vadd.f32 %v2853, %v3084
    %v3086 = vpop.f32.mrb[0].mxu0
    %3087 = vdwg.mxu0
    %3088 = vmatprep.subr.mxu0 0.0
    %v3089 = vand.u32 %v119, 4294901760
    %v3090 = vsub.f32 %v119, %v3089
    %3091 = vmatpush1.msra.mxu0 %v3090
    %3092 = vmatprep.subr.mxu0 0.0
    %v3093 = vand.u32 %v120, 4294901760
    %v3094 = vsub.f32 %v120, %v3093
    %3095 = vmatpush1.msra.mxu0 %v3094
    %3096 = vmatprep.subr.mxu0 0.0
    %v3097 = vand.u32 %v121, 4294901760
    %v3098 = vsub.f32 %v121, %v3097
    %3099 = vmatpush1.msra.mxu0 %v3098
    %3100 = vmatprep.subr.mxu0 0.0
    %v3101 = vand.u32 %v122, 4294901760
    %v3102 = vsub.f32 %v122, %v3101
    %3103 = vmatpush1.msra.mxu0 %v3102
    %3104 = vmatprep.subr.mxu0 0.0
    %v3105 = vand.u32 %v123, 4294901760
    %v3106 = vsub.f32 %v123, %v3105
    %3107 = vmatpush1.msra.mxu0 %v3106
    %3108 = vmatprep.subr.mxu0 0.0
    %v3109 = vand.u32 %v124, 4294901760
    %v3110 = vsub.f32 %v124, %v3109
    %3111 = vmatpush1.msra.mxu0 %v3110
    %3112 = vmatprep.subr.mxu0 0.0
    %v3113 = vand.u32 %v125, 4294901760
    %v3114 = vsub.f32 %v125, %v3113
    %3115 = vmatpush1.msra.mxu0 %v3114
    %3116 = vmatprep.subr.mxu0 0.0
    %v3117 = vand.u32 %v126, 4294901760
    %v3118 = vsub.f32 %v126, %v3117
    %3119 = vmatpush1.msra.mxu0 %v3118
    %3120 = vmatprep.subr.mxu0 0.0
    %v3121 = vand.u32 %v127, 4294901760
    %v3122 = vsub.f32 %v127, %v3121
    %3123 = vmatpush1.msra.mxu0 %v3122
    %3124 = vmatprep.subr.mxu0 0.0
    %v3125 = vand.u32 %v128, 4294901760
    %v3126 = vsub.f32 %v128, %v3125
    %3127 = vmatpush1.msra.mxu0 %v3126
    %3128 = vmatprep.subr.mxu0 0.0
    %v3129 = vand.u32 %v129, 4294901760
    %v3130 = vsub.f32 %v129, %v3129
    %3131 = vmatpush1.msra.mxu0 %v3130
    %3132 = vmatprep.subr.mxu0 0.0
    %v3133 = vand.u32 %v130, 4294901760
    %v3134 = vsub.f32 %v130, %v3133
    %3135 = vmatpush1.msra.mxu0 %v3134
    %3136 = vmatprep.subr.mxu0 0.0
    %v3137 = vand.u32 %v131, 4294901760
    %v3138 = vsub.f32 %v131, %v3137
    %3139 = vmatpush1.msra.mxu0 %v3138
    %3140 = vmatprep.subr.mxu0 0.0
    %v3141 = vand.u32 %v132, 4294901760
    %v3142 = vsub.f32 %v132, %v3141
    %3143 = vmatpush1.msra.mxu0 %v3142
    %3144 = vmatprep.subr.mxu0 0.0
    %v3145 = vand.u32 %v133, 4294901760
    %v3146 = vsub.f32 %v133, %v3145
    %3147 = vmatpush1.msra.mxu0 %v3146
    %3148 = vmatprep.subr.mxu0 0.0
    %v3149 = vand.u32 %v134, 4294901760
    %v3150 = vsub.f32 %v134, %v3149
    %3151 = vmatpush1.msra.mxu0 %v3150
    %3152 = vmatprep.subr.mxu0 0.0
    %v3153 = vand.u32 %v135, 4294901760
    %v3154 = vsub.f32 %v135, %v3153
    %3155 = vmatpush1.msra.mxu0 %v3154
    %3156 = vmatprep.subr.mxu0 0.0
    %v3157 = vand.u32 %v136, 4294901760
    %v3158 = vsub.f32 %v136, %v3157
    %3159 = vmatpush1.msra.mxu0 %v3158
    %3160 = vmatprep.subr.mxu0 0.0
    %v3161 = vand.u32 %v137, 4294901760
    %v3162 = vsub.f32 %v137, %v3161
    %3163 = vmatpush1.msra.mxu0 %v3162
    %3164 = vmatprep.subr.mxu0 0.0
    %v3165 = vand.u32 %v138, 4294901760
    %v3166 = vsub.f32 %v138, %v3165
    %3167 = vmatpush1.msra.mxu0 %v3166
    %3168 = vmatprep.subr.mxu0 0.0
    %v3169 = vand.u32 %v139, 4294901760
    %v3170 = vsub.f32 %v139, %v3169
    %3171 = vmatpush1.msra.mxu0 %v3170
    %3172 = vmatprep.subr.mxu0 0.0
    %v3173 = vand.u32 %v140, 4294901760
    %v3174 = vsub.f32 %v140, %v3173
    %3175 = vmatpush1.msra.mxu0 %v3174
    %3176 = vmatprep.subr.mxu0 0.0
    %v3177 = vand.u32 %v141, 4294901760
    %v3178 = vsub.f32 %v141, %v3177
    %3179 = vmatpush1.msra.mxu0 %v3178
    %3180 = vmatprep.subr.mxu0 0.0
    %v3181 = vand.u32 %v142, 4294901760
    %v3182 = vsub.f32 %v142, %v3181
    %3183 = vmatpush1.msra.mxu0 %v3182
    %3184 = vmatprep.subr.mxu0 0.0
    %v3185 = vand.u32 %v143, 4294901760
    %v3186 = vsub.f32 %v143, %v3185
    %3187 = vmatpush1.msra.mxu0 %v3186
    %3188 = vmatprep.subr.mxu0 0.0
    %v3189 = vand.u32 %v144, 4294901760
    %v3190 = vsub.f32 %v144, %v3189
    %3191 = vmatpush1.msra.mxu0 %v3190
    %3192 = vmatprep.subr.mxu0 0.0
    %v3193 = vand.u32 %v145, 4294901760
    %v3194 = vsub.f32 %v145, %v3193
    %3195 = vmatpush1.msra.mxu0 %v3194
    %3196 = vmatprep.subr.mxu0 0.0
    %v3197 = vand.u32 %v146, 4294901760
    %v3198 = vsub.f32 %v146, %v3197
    %3199 = vmatpush1.msra.mxu0 %v3198
    %3200 = vmatprep.subr.mxu0 0.0
    %v3201 = vand.u32 %v147, 4294901760
    %v3202 = vsub.f32 %v147, %v3201
    %3203 = vmatpush1.msra.mxu0 %v3202
    %3204 = vmatprep.subr.mxu0 0.0
    %v3205 = vand.u32 %v148, 4294901760
    %v3206 = vsub.f32 %v148, %v3205
    %3207 = vmatpush1.msra.mxu0 %v3206
    %3208 = vmatprep.subr.mxu0 0.0
    %v3209 = vand.u32 %v149, 4294901760
    %v3210 = vsub.f32 %v149, %v3209
    %3211 = vmatpush1.msra.mxu0 %v3210
    %3212 = vmatprep.subr.mxu0 0.0
    %v3213 = vand.u32 %v150, 4294901760
    %v3214 = vsub.f32 %v150, %v3213
    %3215 = vmatpush1.msra.mxu0 %v3214
    %v3216 = vand.u32 %v22, 4294901760
    %v3217 = vsub.f32 %v22, %v3216
    %3218 = vmatprep.mubr.f32.mxu0 %v3217
    %v3219 = vand.u32 %v21, 4294901760
    %v3220 = vsub.f32 %v21, %v3219
    %3221 = vmatmul.mubr.f32.gmra.mrb[0].mxu0 %v3220
    %v3222 = vpop.f32.mrb[0].mxu0
    %v3223 = vadd.f32 %v3085, %v3222
    %v3224 = vpop.f32.mrb[0].mxu0
    %3225 = vdwg.mxu0
    %3226 = vmatprep.subr.mxu0 0.0
    %v3227 = vand.u32 %v119, 4294901760
    %3228 = vmatpush1.msra.mxu0 %v3227
    %3229 = vmatprep.subr.mxu0 0.0
    %v3230 = vand.u32 %v120, 4294901760
    %3231 = vmatpush1.msra.mxu0 %v3230
    %3232 = vmatprep.subr.mxu0 0.0
    %v3233 = vand.u32 %v121, 4294901760
    %3234 = vmatpush1.msra.mxu0 %v3233
    %3235 = vmatprep.subr.mxu0 0.0
    %v3236 = vand.u32 %v122, 4294901760
    %3237 = vmatpush1.msra.mxu0 %v3236
    %3238 = vmatprep.subr.mxu0 0.0
    %v3239 = vand.u32 %v123, 4294901760
    %3240 = vmatpush1.msra.mxu0 %v3239
    %3241 = vmatprep.subr.mxu0 0.0
    %v3242 = vand.u32 %v124, 4294901760
    %3243 = vmatpush1.msra.mxu0 %v3242
    %3244 = vmatprep.subr.mxu0 0.0
    %v3245 = vand.u32 %v125, 4294901760
    %3246 = vmatpush1.msra.mxu0 %v3245
    %3247 = vmatprep.subr.mxu0 0.0
    %v3248 = vand.u32 %v126, 4294901760
    %3249 = vmatpush1.msra.mxu0 %v3248
    %3250 = vmatprep.subr.mxu0 0.0
    %v3251 = vand.u32 %v127, 4294901760
    %3252 = vmatpush1.msra.mxu0 %v3251
    %3253 = vmatprep.subr.mxu0 0.0
    %v3254 = vand.u32 %v128, 4294901760
    %3255 = vmatpush1.msra.mxu0 %v3254
    %3256 = vmatprep.subr.mxu0 0.0
    %v3257 = vand.u32 %v129, 4294901760
    %3258 = vmatpush1.msra.mxu0 %v3257
    %3259 = vmatprep.subr.mxu0 0.0
    %v3260 = vand.u32 %v130, 4294901760
    %3261 = vmatpush1.msra.mxu0 %v3260
    %3262 = vmatprep.subr.mxu0 0.0
    %v3263 = vand.u32 %v131, 4294901760
    %3264 = vmatpush1.msra.mxu0 %v3263
    %3265 = vmatprep.subr.mxu0 0.0
    %v3266 = vand.u32 %v132, 4294901760
    %3267 = vmatpush1.msra.mxu0 %v3266
    %3268 = vmatprep.subr.mxu0 0.0
    %v3269 = vand.u32 %v133, 4294901760
    %3270 = vmatpush1.msra.mxu0 %v3269
    %3271 = vmatprep.subr.mxu0 0.0
    %v3272 = vand.u32 %v134, 4294901760
    %3273 = vmatpush1.msra.mxu0 %v3272
    %3274 = vmatprep.subr.mxu0 0.0
    %v3275 = vand.u32 %v135, 4294901760
    %3276 = vmatpush1.msra.mxu0 %v3275
    %3277 = vmatprep.subr.mxu0 0.0
    %v3278 = vand.u32 %v136, 4294901760
    %3279 = vmatpush1.msra.mxu0 %v3278
    %3280 = vmatprep.subr.mxu0 0.0
    %v3281 = vand.u32 %v137, 4294901760
    %3282 = vmatpush1.msra.mxu0 %v3281
    %3283 = vmatprep.subr.mxu0 0.0
    %v3284 = vand.u32 %v138, 4294901760
    %3285 = vmatpush1.msra.mxu0 %v3284
    %3286 = vmatprep.subr.mxu0 0.0
    %v3287 = vand.u32 %v139, 4294901760
    %3288 = vmatpush1.msra.mxu0 %v3287
    %3289 = vmatprep.subr.mxu0 0.0
    %v3290 = vand.u32 %v140, 4294901760
    %3291 = vmatpush1.msra.mxu0 %v3290
    %3292 = vmatprep.subr.mxu0 0.0
    %v3293 = vand.u32 %v141, 4294901760
    %3294 = vmatpush1.msra.mxu0 %v3293
    %3295 = vmatprep.subr.mxu0 0.0
    %v3296 = vand.u32 %v142, 4294901760
    %3297 = vmatpush1.msra.mxu0 %v3296
    %3298 = vmatprep.subr.mxu0 0.0
    %v3299 = vand.u32 %v143, 4294901760
    %3300 = vmatpush1.msra.mxu0 %v3299
    %3301 = vmatprep.subr.mxu0 0.0
    %v3302 = vand.u32 %v144, 4294901760
    %3303 = vmatpush1.msra.mxu0 %v3302
    %3304 = vmatprep.subr.mxu0 0.0
    %v3305 = vand.u32 %v145, 4294901760
    %3306 = vmatpush1.msra.mxu0 %v3305
    %3307 = vmatprep.subr.mxu0 0.0
    %v3308 = vand.u32 %v146, 4294901760
    %3309 = vmatpush1.msra.mxu0 %v3308
    %3310 = vmatprep.subr.mxu0 0.0
    %v3311 = vand.u32 %v147, 4294901760
    %3312 = vmatpush1.msra.mxu0 %v3311
    %3313 = vmatprep.subr.mxu0 0.0
    %v3314 = vand.u32 %v148, 4294901760
    %3315 = vmatpush1.msra.mxu0 %v3314
    %3316 = vmatprep.subr.mxu0 0.0
    %v3317 = vand.u32 %v149, 4294901760
    %3318 = vmatpush1.msra.mxu0 %v3317
    %3319 = vmatprep.subr.mxu0 0.0
    %v3320 = vand.u32 %v150, 4294901760
    %3321 = vmatpush1.msra.mxu0 %v3320
    %v3322 = vand.u32 %v22, 4294901760
    %v3323 = vsub.f32 %v22, %v3322
    %v3324 = vand.u32 %v3323, 4294901760
    %3325 = vmatprep.mubr.f32.mxu0 %v3324
    %v3326 = vand.u32 %v21, 4294901760
    %v3327 = vsub.f32 %v21, %v3326
    %v3328 = vand.u32 %v3327, 4294901760
    %3329 = vmatmul.mubr.f32.gmra.mrb[0].mxu0 %v3328
    %v3330 = vpop.f32.mrb[0].mxu0
    %v3331 = vadd.f32 %v3223, %v3330
    %v3332 = vpop.f32.mrb[0].mxu0
    %3333 = vdwg.mxu0
    %3334 = vmatprep.subr.mxu0 0.0
    %v3335 = vand.u32 %v119, 4294901760
    %v3336 = vsub.f32 %v119, %v3335
    %v3337 = vand.u32 %v3336, 4294901760
    %3338 = vmatpush1.msra.mxu0 %v3337
    %3339 = vmatprep.subr.mxu0 0.0
    %v3340 = vand.u32 %v120, 4294901760
    %v3341 = vsub.f32 %v120, %v3340
    %v3342 = vand.u32 %v3341, 4294901760
    %3343 = vmatpush1.msra.mxu0 %v3342
    %3344 = vmatprep.subr.mxu0 0.0
    %v3345 = vand.u32 %v121, 4294901760
    %v3346 = vsub.f32 %v121, %v3345
    %v3347 = vand.u32 %v3346, 4294901760
    %3348 = vmatpush1.msra.mxu0 %v3347
    %3349 = vmatprep.subr.mxu0 0.0
    %v3350 = vand.u32 %v122, 4294901760
    %v3351 = vsub.f32 %v122, %v3350
    %v3352 = vand.u32 %v3351, 4294901760
    %3353 = vmatpush1.msra.mxu0 %v3352
    %3354 = vmatprep.subr.mxu0 0.0
    %v3355 = vand.u32 %v123, 4294901760
    %v3356 = vsub.f32 %v123, %v3355
    %v3357 = vand.u32 %v3356, 4294901760
    %3358 = vmatpush1.msra.mxu0 %v3357
    %3359 = vmatprep.subr.mxu0 0.0
    %v3360 = vand.u32 %v124, 4294901760
    %v3361 = vsub.f32 %v124, %v3360
    %v3362 = vand.u32 %v3361, 4294901760
    %3363 = vmatpush1.msra.mxu0 %v3362
    %3364 = vmatprep.subr.mxu0 0.0
    %v3365 = vand.u32 %v125, 4294901760
    %v3366 = vsub.f32 %v125, %v3365
    %v3367 = vand.u32 %v3366, 4294901760
    %3368 = vmatpush1.msra.mxu0 %v3367
    %3369 = vmatprep.subr.mxu0 0.0
    %v3370 = vand.u32 %v126, 4294901760
    %v3371 = vsub.f32 %v126, %v3370
    %v3372 = vand.u32 %v3371, 4294901760
    %3373 = vmatpush1.msra.mxu0 %v3372
    %3374 = vmatprep.subr.mxu0 0.0
    %v3375 = vand.u32 %v127, 4294901760
    %v3376 = vsub.f32 %v127, %v3375
    %v3377 = vand.u32 %v3376, 4294901760
    %3378 = vmatpush1.msra.mxu0 %v3377
    %3379 = vmatprep.subr.mxu0 0.0
    %v3380 = vand.u32 %v128, 4294901760
    %v3381 = vsub.f32 %v128, %v3380
    %v3382 = vand.u32 %v3381, 4294901760
    %3383 = vmatpush1.msra.mxu0 %v3382
    %3384 = vmatprep.subr.mxu0 0.0
    %v3385 = vand.u32 %v129, 4294901760
    %v3386 = vsub.f32 %v129, %v3385
    %v3387 = vand.u32 %v3386, 4294901760
    %3388 = vmatpush1.msra.mxu0 %v3387
    %3389 = vmatprep.subr.mxu0 0.0
    %v3390 = vand.u32 %v130, 4294901760
    %v3391 = vsub.f32 %v130, %v3390
    %v3392 = vand.u32 %v3391, 4294901760
    %3393 = vmatpush1.msra.mxu0 %v3392
    %3394 = vmatprep.subr.mxu0 0.0
    %v3395 = vand.u32 %v131, 4294901760
    %v3396 = vsub.f32 %v131, %v3395
    %v3397 = vand.u32 %v3396, 4294901760
    %3398 = vmatpush1.msra.mxu0 %v3397
    %3399 = vmatprep.subr.mxu0 0.0
    %v3400 = vand.u32 %v132, 4294901760
    %v3401 = vsub.f32 %v132, %v3400
    %v3402 = vand.u32 %v3401, 4294901760
    %3403 = vmatpush1.msra.mxu0 %v3402
    %3404 = vmatprep.subr.mxu0 0.0
    %v3405 = vand.u32 %v133, 4294901760
    %v3406 = vsub.f32 %v133, %v3405
    %v3407 = vand.u32 %v3406, 4294901760
    %3408 = vmatpush1.msra.mxu0 %v3407
    %3409 = vmatprep.subr.mxu0 0.0
    %v3410 = vand.u32 %v134, 4294901760
    %v3411 = vsub.f32 %v134, %v3410
    %v3412 = vand.u32 %v3411, 4294901760
    %3413 = vmatpush1.msra.mxu0 %v3412
    %3414 = vmatprep.subr.mxu0 0.0
    %v3415 = vand.u32 %v135, 4294901760
    %v3416 = vsub.f32 %v135, %v3415
    %v3417 = vand.u32 %v3416, 4294901760
    %3418 = vmatpush1.msra.mxu0 %v3417
    %3419 = vmatprep.subr.mxu0 0.0
    %v3420 = vand.u32 %v136, 4294901760
    %v3421 = vsub.f32 %v136, %v3420
    %v3422 = vand.u32 %v3421, 4294901760
    %3423 = vmatpush1.msra.mxu0 %v3422
    %3424 = vmatprep.subr.mxu0 0.0
    %v3425 = vand.u32 %v137, 4294901760
    %v3426 = vsub.f32 %v137, %v3425
    %v3427 = vand.u32 %v3426, 4294901760
    %3428 = vmatpush1.msra.mxu0 %v3427
    %3429 = vmatprep.subr.mxu0 0.0
    %v3430 = vand.u32 %v138, 4294901760
    %v3431 = vsub.f32 %v138, %v3430
    %v3432 = vand.u32 %v3431, 4294901760
    %3433 = vmatpush1.msra.mxu0 %v3432
    %3434 = vmatprep.subr.mxu0 0.0
    %v3435 = vand.u32 %v139, 4294901760
    %v3436 = vsub.f32 %v139, %v3435
    %v3437 = vand.u32 %v3436, 4294901760
    %3438 = vmatpush1.msra.mxu0 %v3437
    %3439 = vmatprep.subr.mxu0 0.0
    %v3440 = vand.u32 %v140, 4294901760
    %v3441 = vsub.f32 %v140, %v3440
    %v3442 = vand.u32 %v3441, 4294901760
    %3443 = vmatpush1.msra.mxu0 %v3442
    %3444 = vmatprep.subr.mxu0 0.0
    %v3445 = vand.u32 %v141, 4294901760
    %v3446 = vsub.f32 %v141, %v3445
    %v3447 = vand.u32 %v3446, 4294901760
    %3448 = vmatpush1.msra.mxu0 %v3447
    %3449 = vmatprep.subr.mxu0 0.0
    %v3450 = vand.u32 %v142, 4294901760
    %v3451 = vsub.f32 %v142, %v3450
    %v3452 = vand.u32 %v3451, 4294901760
    %3453 = vmatpush1.msra.mxu0 %v3452
    %3454 = vmatprep.subr.mxu0 0.0
    %v3455 = vand.u32 %v143, 4294901760
    %v3456 = vsub.f32 %v143, %v3455
    %v3457 = vand.u32 %v3456, 4294901760
    %3458 = vmatpush1.msra.mxu0 %v3457
    %3459 = vmatprep.subr.mxu0 0.0
    %v3460 = vand.u32 %v144, 4294901760
    %v3461 = vsub.f32 %v144, %v3460
    %v3462 = vand.u32 %v3461, 4294901760
    %3463 = vmatpush1.msra.mxu0 %v3462
    %3464 = vmatprep.subr.mxu0 0.0
    %v3465 = vand.u32 %v145, 4294901760
    %v3466 = vsub.f32 %v145, %v3465
    %v3467 = vand.u32 %v3466, 4294901760
    %3468 = vmatpush1.msra.mxu0 %v3467
    %3469 = vmatprep.subr.mxu0 0.0
    %v3470 = vand.u32 %v146, 4294901760
    %v3471 = vsub.f32 %v146, %v3470
    %v3472 = vand.u32 %v3471, 4294901760
    %3473 = vmatpush1.msra.mxu0 %v3472
    %3474 = vmatprep.subr.mxu0 0.0
    %v3475 = vand.u32 %v147, 4294901760
    %v3476 = vsub.f32 %v147, %v3475
    %v3477 = vand.u32 %v3476, 4294901760
    %3478 = vmatpush1.msra.mxu0 %v3477
    %3479 = vmatprep.subr.mxu0 0.0
    %v3480 = vand.u32 %v148, 4294901760
    %v3481 = vsub.f32 %v148, %v3480
    %v3482 = vand.u32 %v3481, 4294901760
    %3483 = vmatpush1.msra.mxu0 %v3482
    %3484 = vmatprep.subr.mxu0 0.0
    %v3485 = vand.u32 %v149, 4294901760
    %v3486 = vsub.f32 %v149, %v3485
    %v3487 = vand.u32 %v3486, 4294901760
    %3488 = vmatpush1.msra.mxu0 %v3487
    %3489 = vmatprep.subr.mxu0 0.0
    %v3490 = vand.u32 %v150, 4294901760
    %v3491 = vsub.f32 %v150, %v3490
    %v3492 = vand.u32 %v3491, 4294901760
    %3493 = vmatpush1.msra.mxu0 %v3492
    %v3494 = vand.u32 %v22, 4294901760
    %3495 = vmatprep.mubr.f32.mxu0 %v3494
    %v3496 = vand.u32 %v21, 4294901760
    %3497 = vmatmul.mubr.f32.gmra.mrb[0].mxu0 %v3496
    %v3498 = vpop.f32.mrb[0].mxu0
    %v3499 = vadd.f32 %v3331, %v3498
    %v3500 = vpop.f32.mrb[0].mxu0
    %3501 = vdwg.mxu0
    %3502 = vmatprep.subr.mxu0 0.0
    %v3503 = vand.u32 %v119, 4294901760
    %3504 = vmatpush1.msra.mxu0 %v3503
    %3505 = vmatprep.subr.mxu0 0.0
    %v3506 = vand.u32 %v120, 4294901760
    %3507 = vmatpush1.msra.mxu0 %v3506
    %3508 = vmatprep.subr.mxu0 0.0
    %v3509 = vand.u32 %v121, 4294901760
    %3510 = vmatpush1.msra.mxu0 %v3509
    %3511 = vmatprep.subr.mxu0 0.0
    %v3512 = vand.u32 %v122, 4294901760
    %3513 = vmatpush1.msra.mxu0 %v3512
    %3514 = vmatprep.subr.mxu0 0.0
    %v3515 = vand.u32 %v123, 4294901760
    %3516 = vmatpush1.msra.mxu0 %v3515
    %3517 = vmatprep.subr.mxu0 0.0
    %v3518 = vand.u32 %v124, 4294901760
    %3519 = vmatpush1.msra.mxu0 %v3518
    %3520 = vmatprep.subr.mxu0 0.0
    %v3521 = vand.u32 %v125, 4294901760
    %3522 = vmatpush1.msra.mxu0 %v3521
    %3523 = vmatprep.subr.mxu0 0.0
    %v3524 = vand.u32 %v126, 4294901760
    %3525 = vmatpush1.msra.mxu0 %v3524
    %3526 = vmatprep.subr.mxu0 0.0
    %v3527 = vand.u32 %v127, 4294901760
    %3528 = vmatpush1.msra.mxu0 %v3527
    %3529 = vmatprep.subr.mxu0 0.0
    %v3530 = vand.u32 %v128, 4294901760
    %3531 = vmatpush1.msra.mxu0 %v3530
    %3532 = vmatprep.subr.mxu0 0.0
    %v3533 = vand.u32 %v129, 4294901760
    %3534 = vmatpush1.msra.mxu0 %v3533
    %3535 = vmatprep.subr.mxu0 0.0
    %v3536 = vand.u32 %v130, 4294901760
    %3537 = vmatpush1.msra.mxu0 %v3536
    %3538 = vmatprep.subr.mxu0 0.0
    %v3539 = vand.u32 %v131, 4294901760
    %3540 = vmatpush1.msra.mxu0 %v3539
    %3541 = vmatprep.subr.mxu0 0.0
    %v3542 = vand.u32 %v132, 4294901760
    %3543 = vmatpush1.msra.mxu0 %v3542
    %3544 = vmatprep.subr.mxu0 0.0
    %v3545 = vand.u32 %v133, 4294901760
    %3546 = vmatpush1.msra.mxu0 %v3545
    %3547 = vmatprep.subr.mxu0 0.0
    %v3548 = vand.u32 %v134, 4294901760
    %3549 = vmatpush1.msra.mxu0 %v3548
    %3550 = vmatprep.subr.mxu0 0.0
    %v3551 = vand.u32 %v135, 4294901760
    %3552 = vmatpush1.msra.mxu0 %v3551
    %3553 = vmatprep.subr.mxu0 0.0
    %v3554 = vand.u32 %v136, 4294901760
    %3555 = vmatpush1.msra.mxu0 %v3554
    %3556 = vmatprep.subr.mxu0 0.0
    %v3557 = vand.u32 %v137, 4294901760
    %3558 = vmatpush1.msra.mxu0 %v3557
    %3559 = vmatprep.subr.mxu0 0.0
    %v3560 = vand.u32 %v138, 4294901760
    %3561 = vmatpush1.msra.mxu0 %v3560
    %3562 = vmatprep.subr.mxu0 0.0
    %v3563 = vand.u32 %v139, 4294901760
    %3564 = vmatpush1.msra.mxu0 %v3563
    %3565 = vmatprep.subr.mxu0 0.0
    %v3566 = vand.u32 %v140, 4294901760
    %3567 = vmatpush1.msra.mxu0 %v3566
    %3568 = vmatprep.subr.mxu0 0.0
    %v3569 = vand.u32 %v141, 4294901760
    %3570 = vmatpush1.msra.mxu0 %v3569
    %3571 = vmatprep.subr.mxu0 0.0
    %v3572 = vand.u32 %v142, 4294901760
    %3573 = vmatpush1.msra.mxu0 %v3572
    %3574 = vmatprep.subr.mxu0 0.0
    %v3575 = vand.u32 %v143, 4294901760
    %3576 = vmatpush1.msra.mxu0 %v3575
    %3577 = vmatprep.subr.mxu0 0.0
    %v3578 = vand.u32 %v144, 4294901760
    %3579 = vmatpush1.msra.mxu0 %v3578
    %3580 = vmatprep.subr.mxu0 0.0
    %v3581 = vand.u32 %v145, 4294901760
    %3582 = vmatpush1.msra.mxu0 %v3581
    %3583 = vmatprep.subr.mxu0 0.0
    %v3584 = vand.u32 %v146, 4294901760
    %3585 = vmatpush1.msra.mxu0 %v3584
    %3586 = vmatprep.subr.mxu0 0.0
    %v3587 = vand.u32 %v147, 4294901760
    %3588 = vmatpush1.msra.mxu0 %v3587
    %3589 = vmatprep.subr.mxu0 0.0
    %v3590 = vand.u32 %v148, 4294901760
    %3591 = vmatpush1.msra.mxu0 %v3590
    %3592 = vmatprep.subr.mxu0 0.0
    %v3593 = vand.u32 %v149, 4294901760
    %3594 = vmatpush1.msra.mxu0 %v3593
    %3595 = vmatprep.subr.mxu0 0.0
    %v3596 = vand.u32 %v150, 4294901760
    %3597 = vmatpush1.msra.mxu0 %v3596
    %v3598 = vand.u32 %v22, 4294901760
    %3599 = vmatprep.mubr.f32.mxu0 %v3598
    %v3600 = vand.u32 %v21, 4294901760
    %3601 = vmatmul.mubr.f32.gmra.mrb[0].mxu0 %v3600
    %v3602 = vpop.f32.mrb[0].mxu0
    %v3603 = vadd.f32 %v3499, %v3602
    %v3604 = vpop.f32.mrb[0].mxu0
    %3605 = vdwg.mxu0
    %v3606 = vxor.u32 %v3603, 2147483648
    %v3607 = vmul.f32 %v3606, 1.442695
    %v3608 = vpow.pop %v3607
    %v3609 = vadd.f32 %v3608, 1.0
    %v3610 = vrcp.pop %v3609
    %v3611 = vmul.f32 1.0, %v3610
    %vm3612 = vcmask 80896
    %3613 = vst.msk [vmem:[#allocation2] sm:$0xff] %vm3612, %v3611
    // Predicated region
    $region14: #{tpu_custom_call.1} parent=1 // pred_check
      _
    $region15: #{tpu_custom_call.1} parent=1 // pred_check_branch
      %3615 = sbr.rel (0) target = $region17
    $region16: #{tpu_custom_call.1} parent=1 // pred_region
      %s3617 = ssub.s32 128, 128
      %3618 = vsyncadd [#allocation3], %s3617
      %s3620 = sshll.u32 [#allocation2], 4
      %s3621 = int_to_ptr.vmem [resolvable:$true] %s3620
      %3623 = dma.vmem_to_hbm [thread:$0]  %s3621, 128, %s3, [#allocation3]
    $region17: #{tpu_custom_call.1} parent=1 // pred_fallthru
      _
    // Predicated region
    $region18: #{tpu_custom_call.1} parent=1 // pred_check
      _
    $region19: #{tpu_custom_call.1} parent=1 // pred_check_branch
      %3625 = sbr.rel (0) target = $region21
    $region20: #{tpu_custom_call.1} parent=1 // pred_region
      %3626 = dma.done [#allocation3], 128
    $region21: #{tpu_custom_call.1} parent=1 // pred_fallthru
      _
    %3627 = vsyncpa [#allocation3], 1

</llo_original>
